<compile_context>
chip_gen: v5e
topology: v5e:2x2
jax: 0.10.0
libtpu: 0.0.40
codegen_flags: <defaults>
</compile_context>

<pallas_src>
import functools

import jax
import jax.numpy as jnp
from jax.experimental import pallas as pl
from jax.experimental.pallas import tpu as pltpu

EPS = 1e-5
VMEM_LIMIT = 32 * 1024 * 1024  # safe scoped-VMEM budget on v5e/v6e/v7x


# --------------------------------------------------------------------------
# Kernels
# --------------------------------------------------------------------------
def _row_mask(tile_n, n_valid):
    """(tile_n, 1) f32 mask of rows that belong to the un-padded point set."""
    t = pl.program_id(1)
    row = t * tile_n + jax.lax.broadcasted_iota(jnp.int32, (tile_n, 1), 0)
    return (row < n_valid).astype(jnp.float32)


def conv12_stats_kernel(x_ref, sc1_ref, sh1_ref, w1_ref, w2_ref,
                        s2_ref, m2_ref, *, tile_n, n_valid, needs_mask):
    """conv1 -> folded BN1 -> ReLU -> conv2; emit per-tile BN2 partials
    (sum and centered second moment) -- no activation ever leaves VMEM."""
    z1 = jnp.dot(x_ref[...], w1_ref[...], preferred_element_type=jnp.float32)
    h1 = jnp.maximum(z1 * sc1_ref[...] + sh1_ref[...], 0.0)
    if needs_mask:
        mask = _row_mask(tile_n, n_valid)
        h1 = h1 * mask                              # padded rows -> z2 == 0
        t = pl.program_id(1)
        cnt = jnp.minimum(tile_n, n_valid - t * tile_n).astype(jnp.float32)
    else:
        cnt = jnp.float32(tile_n)

    z2 = jnp.dot(h1.astype(jnp.bfloat16), w2_ref[...],
                 preferred_element_type=jnp.float32)       # (tile_n, 128) f32

    s = jnp.sum(z2, axis=0, keepdims=True)                 # (1, 128)
    d = z2 - s / cnt                                       # centered (Chan)
    if needs_mask:
        d = d * mask
    s2_ref[...] = s
    m2_ref[...] = jnp.sum(d * d, axis=0, keepdims=True)


def conv123_pool_kernel(x_ref, sc1_ref, sh1_ref, sc2_ref, sh2_ref,
                        w1_ref, w2_ref, w3_ref,
                        s3_ref, m3_ref, bmax_ref, bmin_ref,
                        *, tile_n, n_valid, needs_mask):
    """Recompute conv1/conv2, apply folded BN2+ReLU, conv3; emit per-tile BN3
    partials and per-(batch,tile) max/min of pre-BN z3 (exact pool recon)."""
    z1 = jnp.dot(x_ref[...], w1_ref[...], preferred_element_type=jnp.float32)
    h1 = jnp.maximum(z1 * sc1_ref[...] + sh1_ref[...], 0.0)
    if needs_mask:
        mask = _row_mask(tile_n, n_valid)
        h1 = h1 * mask
        t = pl.program_id(1)
        cnt = jnp.minimum(tile_n, n_valid - t * tile_n).astype(jnp.float32)
    else:
        mask = None
        cnt = jnp.float32(tile_n)

    z2 = jnp.dot(h1.astype(jnp.bfloat16), w2_ref[...],
                 preferred_element_type=jnp.float32)
    h2 = jnp.maximum(z2 * sc2_ref[...] + sh2_ref[...], 0.0)
    if needs_mask:
        h2 = h2 * mask                              # padded rows -> z3 == 0
    z3 = jnp.dot(h2.astype(jnp.bfloat16), w3_ref[...],
                 preferred_element_type=jnp.float32)      # (tile_n, 1024) f32

    s = jnp.sum(z3, axis=0, keepdims=True)
    d = z3 - s / cnt
    if needs_mask:
        d = d * mask
        valid = mask > 0.0
        zmax = jnp.max(jnp.where(valid, z3, -jnp.inf), axis=0, keepdims=True)
        zmin = jnp.min(jnp.where(valid, z3, jnp.inf), axis=0, keepdims=True)
    else:
        zmax = jnp.max(z3, axis=0, keepdims=True)
        zmin = jnp.min(z3, axis=0, keepdims=True)

    s3_ref[...] = s
    m3_ref[...] = jnp.sum(d * d, axis=0, keepdims=True)
    bmax_ref[...] = zmax
    bmin_ref[...] = zmin


def fc_head_kernel(bmax_ref, bmin_ref, sc3_ref, sh3_ref,
                   wf1_ref, gf1_ref, bef1_ref,
                   wf2_ref, gf2_ref, bef2_ref,
                   wf3_ref, bf3_ref, out_ref, *, k):
    """Max-pool reconstruction + fc_bn1 + fc_bn2 + fc3 (+ identity)."""
    sc3 = sc3_ref[...]
    # max_n relu(z*s + t) == relu(select(s>=0, max_n z, min_n z)*s + t)
    zsel = jnp.where(sc3 >= 0.0, bmax_ref[...], bmin_ref[...])   # (B, 1024)
    pooled = jnp.maximum(zsel * sc3 + sh3_ref[...], 0.0)

    def bn_relu(z, g, be):
        # train-mode BatchNorm1d over the batch dim (centered var), folded.
        mean = jnp.mean(z, axis=0, keepdims=True)
        var = jnp.mean((z - mean) ** 2, axis=0, keepdims=True)
        scale = g * jax.lax.rsqrt(var + EPS)
        return jnp.maximum(z * scale + (be - mean * scale), 0.0)

    z1 = jnp.dot(pooled.astype(jnp.bfloat16), wf1_ref[...],
                 preferred_element_type=jnp.float32)             # (B, 512)
    h1 = bn_relu(z1, gf1_ref[...], bef1_ref[...])
    z2 = jnp.dot(h1.astype(jnp.bfloat16), wf2_ref[...],
                 preferred_element_type=jnp.float32)             # (B, 256)
    h2 = bn_relu(z2, gf2_ref[...], bef2_ref[...])
    m = jnp.dot(h2.astype(jnp.bfloat16), wf3_ref[...],
                preferred_element_type=jnp.float32) + bf3_ref[...]  # (B, k*k)

    bs = out_ref.shape[0]
    idx = jax.lax.broadcasted_iota(jnp.int32, (bs, k * k), 1)
    eye_flat = jnp.where(idx % (k + 1) == 0, 1.0, 0.0).astype(jnp.float32)
    out_ref[...] = m + eye_flat


# --------------------------------------------------------------------------
# pallas_call wrappers & host-side folding glue
# --------------------------------------------------------------------------
def _round_up(x, m):
    return ((x + m - 1) // m) * m


def _choose_tiles(n, cap12, cap3):
    """Point-tile sizes: heavy conv3 pass (cap3) plus a light conv1+2 pass
    whose tile is a multiple of the conv3 tile so one padded N serves both."""
    cap3 = max(16, (cap3 // 16) * 16)
    cap12 = max(cap3, (cap12 // 16) * 16)
    t3 = min(cap3, _round_up(n, 16))
    n_pad = _round_up(n, t3)            # <= t3-1 padded rows, masked in-kernel
    m = n_pad // t3
    g = 1
    for d in range(m, 0, -1):
        if m % d == 0 and t3 * d <= cap12:
            g = d
            break
    return n_pad, t3 * g, t3


def _run_conv12(xp, sc1, sh1, w1b, w2b, *, tile_n, n_valid):
    B, n_pad, c_in = xp.shape
    c_out = w2b.shape[1]
    T = n_pad // tile_n
    kernel = functools.partial(conv12_stats_kernel, tile_n=tile_n,
                               n_valid=n_valid, needs_mask=(n_pad != n_valid))
    stat_spec = pl.BlockSpec((None, None, 1, c_out), lambda b, t: (b, t, 0, 0))
    stat_shape = jax.ShapeDtypeStruct((B, T, 1, c_out), jnp.float32)
    return pl.pallas_call(
        kernel,
        grid=(B, T),
        in_specs=[
            pl.BlockSpec((None, tile_n, c_in), lambda b, t: (b, t, 0)),
            pl.BlockSpec((1, 64), lambda b, t: (0, 0)),
            pl.BlockSpec((1, 64), lambda b, t: (0, 0)),
            pl.BlockSpec((c_in, 64), lambda b, t: (0, 0)),
            pl.BlockSpec((64, c_out), lambda b, t: (0, 0)),
        ],
        out_specs=[stat_spec, stat_spec],
        out_shape=[stat_shape, stat_shape],
        compiler_params=pltpu.CompilerParams(
            dimension_semantics=("parallel", "parallel"),
            vmem_limit_bytes=VMEM_LIMIT),
    )(xp, sc1, sh1, w1b, w2b)


def _run_conv123(xp, sc1, sh1, sc2, sh2, w1b, w2b, w3b, *, tile_n, n_valid):
    B, n_pad, c_in = xp.shape
    c_out = w3b.shape[1]
    T = n_pad // tile_n
    kernel = functools.partial(conv123_pool_kernel, tile_n=tile_n,
                               n_valid=n_valid, needs_mask=(n_pad != n_valid))
    stat_spec = pl.BlockSpec((None, None, 1, c_out), lambda b, t: (b, t, 0, 0))
    stat_shape = jax.ShapeDtypeStruct((B, T, 1, c_out), jnp.float32)
    return pl.pallas_call(
        kernel,
        grid=(B, T),
        in_specs=[
            pl.BlockSpec((None, tile_n, c_in), lambda b, t: (b, t, 0)),
            pl.BlockSpec((1, 64), lambda b, t: (0, 0)),
            pl.BlockSpec((1, 64), lambda b, t: (0, 0)),
            pl.BlockSpec((1, 128), lambda b, t: (0, 0)),
            pl.BlockSpec((1, 128), lambda b, t: (0, 0)),
            pl.BlockSpec((c_in, 64), lambda b, t: (0, 0)),
            pl.BlockSpec((64, 128), lambda b, t: (0, 0)),
            pl.BlockSpec((128, c_out), lambda b, t: (0, 0)),
        ],
        out_specs=[stat_spec] * 4,
        out_shape=[stat_shape] * 4,
        compiler_params=pltpu.CompilerParams(
            dimension_semantics=("parallel", "parallel"),
            vmem_limit_bytes=VMEM_LIMIT),
    )(xp, sc1, sh1, sc2, sh2, w1b, w2b, w3b)


def _run_fc_head(bmax, bmin, sc3, sh3, wf1, gf1, bef1, wf2, gf2, bef2,
                 wf3, bf3, *, k):
    B = bmax.shape[0]
    return pl.pallas_call(
        functools.partial(fc_head_kernel, k=k),
        out_shape=jax.ShapeDtypeStruct((B, k * k), jnp.float32),
        in_specs=[pl.BlockSpec(memory_space=pltpu.MemorySpace.VMEM)] * 12,
        out_specs=pl.BlockSpec(memory_space=pltpu.MemorySpace.VMEM),
        compiler_params=pltpu.CompilerParams(vmem_limit_bytes=VMEM_LIMIT),
    )(bmax, bmin, sc3, sh3, wf1, gf1, bef1, wf2, gf2, bef2, wf3, bf3)


def _bn_fold_from_partials(s_part, m2_part, counts, total_count, gamma, beta):
    """Chan-style merge of per-(batch,tile) centered partial statistics into a
    folded train-mode BN (1,C) scale/shift (biased var, eps=1e-5)."""
    s = s_part[:, :, 0, :]                                   # (B, T, C)
    m2 = m2_part[:, :, 0, :]
    cnt = jnp.asarray(counts, jnp.float32)[None, :, None]    # (1, T, 1)
    mean = jnp.sum(s, axis=(0, 1), keepdims=True) / total_count
    m2_tot = jnp.sum(m2 + cnt * (s / cnt - mean) ** 2, axis=(0, 1))
    var = jnp.maximum(m2_tot / total_count, 0.0)
    mean = mean.reshape(1, -1)
    scale = gamma * jax.lax.rsqrt(var.reshape(1, -1) + EPS)
    shift = beta - mean * scale
    return scale, shift


def _bn1_fold_analytic(x, w1, gamma, beta, total_count):
    """Exact train-mode BN1 fold from input moments (conv1 is linear):
    mean(z1) = mean(x) @ W1, var(z1) = diag(W1^T Cov(x) W1)."""
    x32 = x.astype(jnp.bfloat16).astype(jnp.float32)   # match in-kernel rounding
    w = w1.astype(jnp.bfloat16).astype(jnp.float32)
    mx = jnp.sum(x32, axis=(0, 2)) / total_count                  # (k,)
    exx = jnp.einsum('bcn,bdn->cd', x32, x32) / total_count       # (k, k)
    cov = exx - jnp.outer(mx, mx)
    mean_z = (mx @ w).reshape(1, -1)                              # (1, 64)
    var_z = jnp.maximum(jnp.einsum('cd,cj,dj->j', cov, w, w), 0.0)
    scale = gamma * jax.lax.rsqrt(var_z.reshape(1, -1) + EPS)
    shift = beta - mean_z * scale
    return scale, shift


# --------------------------------------------------------------------------
# Parameters + forward
# --------------------------------------------------------------------------
def init_params(key, k=3):
    """Deterministic synthetic parameters with TNet.__init__'s shapes."""
    layer_dims = [(k, 64), (64, 128), (128, 1024),
                  (1024, 512), (512, 256), (256, k * k)]
    has_bn = [True, True, True, True, True, False]
    params = []
    for (din, dout), bn in zip(layer_dims, has_bn):
        key, kw, kb, kg, kbe = jax.random.split(key, 5)
        w = jax.random.normal(kw, (din, dout), jnp.float32) * 0.1
        b = jax.random.normal(kb, (1, dout), jnp.float32) * 0.05
        params += [w, b]
        if bn:
            gamma = 0.5 + jax.random.uniform(kg, (1, dout), jnp.float32)
            beta = jax.random.normal(kbe, (1, dout), jnp.float32) * 0.05
            params += [gamma, beta]
    return params


def tnet_forward(x, params, k=3, tile_cap_conv12=2048, tile_cap_conv3=512):
    """x: (B, k, N) float32 (torch NCW layout). Returns (B, k, k)."""
    B, kk, N = x.shape
    assert kk == k
    (w1, b1, g1, be1, w2, b2, g2, be2, w3, b3, g3, be3,
     wf1, bf1, gf1, bef1, wf2, bf2, gf2, bef2, wf3, bf3) = params
    # Pre-BN biases cancel exactly under train-mode BatchNorm -> drop them.
    del b1, b2, b3, bf1, bf2
    # TODO(synk): torch BatchNorm running_mean/running_var momentum updates
    # (training side effects) are not produced; forward output only.

    n_pad, t12, t3 = _choose_tiles(N, tile_cap_conv12, tile_cap_conv3)
    n_rows = float(B * N)

    # channels-last bf16 input; channels padded to 8, points padded (zeros)
    # up to a tile multiple (padded rows masked inside the kernels).
    k_pad = max(8, _round_up(k, 8))
    xp = jnp.transpose(x, (0, 2, 1))
    xp = jnp.pad(xp, ((0, 0), (0, n_pad - N), (0, k_pad - k)))
    xp = xp.astype(jnp.bfloat16)

    # bf16 VMEM-resident weights for the MXU (BN math stays f32).
    w1b = jnp.pad(w1, ((0, k_pad - k), (0, 0))).astype(jnp.bfloat16)
    w2b = w2.astype(jnp.bfloat16)
    w3b = w3.astype(jnp.bfloat16)
    wf1b = wf1.astype(jnp.bfloat16)
    wf2b = wf2.astype(jnp.bfloat16)
    wf3b = wf3.astype(jnp.bfloat16)

    # BN1 folded analytically from the tiny k x k input moments (plain JAX:
    # O(B*N*k^2) on an already-tiny tensor).
    sc1, sh1 = _bn1_fold_analytic(x, w1, g1, be1, n_rows)

    # pass A: conv1+BN1+ReLU+conv2 -> only per-tile BN2 partial stats to HBM.
    counts12 = [min(t12, N - t * t12) for t in range(n_pad // t12)]
    s2, m2 = _run_conv12(xp, sc1, sh1, w1b, w2b, tile_n=t12, n_valid=N)
    sc2, sh2 = _bn_fold_from_partials(s2, m2, counts12, n_rows, g2, be2)

    # pass B: recompute conv1/conv2, BN2+ReLU, conv3 -> BN3 partial stats and
    # per-(batch,tile) max/min of pre-BN z3 (exact max-pool reconstruction).
    counts3 = [min(t3, N - t * t3) for t in range(n_pad // t3)]
    s3, m3, bmax_p, bmin_p = _run_conv123(xp, sc1, sh1, sc2, sh2,
                                          w1b, w2b, w3b, tile_n=t3, n_valid=N)
    sc3, sh3 = _bn_fold_from_partials(s3, m3, counts3, n_rows, g3, be3)
    bmax = jnp.max(bmax_p[:, :, 0, :], axis=1)                  # (B, 1024)
    bmin = jnp.min(bmin_p[:, :, 0, :], axis=1)

    out_flat = _run_fc_head(bmax, bmin, sc3, sh3, wf1b, gf1, bef1,
                            wf2b, gf2, bef2, wf3b, bf3, k=k)
    return out_flat.reshape(B, k, k)


if __name__ == "__main__":
    key = jax.random.PRNGKey(0)
    k = 3
    B, N = 2, 250          # N not a tile multiple -> exercises row masking
    key, kx, kp = jax.random.split(key, 3)
    x = jax.random.normal(kx, (B, k, N), jnp.float32)   # torch-style (B, C=k, N)
    params = init_params(kp, k=k)

    # Small tile caps -> 2 point-tiles per batch: exercises the per-tile
    # partial-stat (Chan) merge, padded-row masking and cross-tile max/min.
    fwd = jax.jit(functools.partial(tnet_forward, k=k,
                                    tile_cap_conv12=128, tile_cap_conv3=128))
    out = fwd(x, params)
    out = jax.block_until_ready(out)
    assert out.shape == (B, k, k) and out.dtype == jnp.float32
    assert bool(jnp.all(jnp.isfinite(out)))
    print("KERNEL_OK")
</pallas_src>

<mosaic_0001>
module attributes {stable_mosaic.version = 11 : i64} {
  func.func @conv12_stats_kernel(%arg0: i32, %arg1: i32, %arg2: memref<1x128x8xbf16, #tpu.memory_space<vmem>>, %arg3: memref<1x64xf32, #tpu.memory_space<vmem>>, %arg4: memref<1x64xf32, #tpu.memory_space<vmem>>, %arg5: memref<8x64xbf16, #tpu.memory_space<vmem>>, %arg6: memref<64x128xbf16, #tpu.memory_space<vmem>>, %arg7: memref<1x1x1x128xf32, #tpu.memory_space<vmem>>, %arg8: memref<1x1x1x128xf32, #tpu.memory_space<vmem>>) attributes {dimension_semantics = [#tpu.dimension_semantics<parallel>, #tpu.dimension_semantics<parallel>], iteration_bounds = array<i64: 2, 2>, scalar_prefetch = 0 : i64, scratch_operands = 0 : i64, tpu.core_type = #tpu.core_type<tc>, window_params = [{transform_indices = @transform_0, window_bounds = array<i64: 1, 128, 8>}, {pipeline_mode = #tpu.pipeline_mode<synchronous>, transform_indices = @transform_1, window_bounds = array<i64: 1, 64>}, {pipeline_mode = #tpu.pipeline_mode<synchronous>, transform_indices = @transform_2, window_bounds = array<i64: 1, 64>}, {pipeline_mode = #tpu.pipeline_mode<synchronous>, transform_indices = @transform_3, window_bounds = array<i64: 8, 64>}, {pipeline_mode = #tpu.pipeline_mode<synchronous>, transform_indices = @transform_4, window_bounds = array<i64: 64, 128>}, {transform_indices = @transform_5, window_bounds = array<i64: 1, 1, 1, 128>}, {transform_indices = @transform_6, window_bounds = array<i64: 1, 1, 1, 128>}]} {
    %c0 = arith.constant 0 : index
    %c0_0 = arith.constant 0 : index
    %c0_1 = arith.constant 0 : index
    %0 = vector.load %arg2[%c0, %c0_0, %c0_1] : memref<1x128x8xbf16, #tpu.memory_space<vmem>>, vector<1x128x8xbf16>
    %1 = vector.shape_cast %0 : vector<1x128x8xbf16> to vector<128x8xbf16>
    %c0_2 = arith.constant 0 : index
    %c0_3 = arith.constant 0 : index
    %2 = vector.load %arg5[%c0_2, %c0_3] : memref<8x64xbf16, #tpu.memory_space<vmem>>, vector<8x64xbf16>
    %cst = arith.constant dense<0.000000e+00> : vector<128x64xf32>
    %3 = tpu.matmul %1, %2, %cst {dimension_numbers = #tpu.dot_dimension_numbers<[1], [0], [0], [1], [0, 0, 1, 1], [], []>} : vector<128x8xbf16>, vector<8x64xbf16>, vector<128x64xf32> -> vector<128x64xf32>
    %c0_4 = arith.constant 0 : index
    %c0_5 = arith.constant 0 : index
    %4 = vector.load %arg3[%c0_4, %c0_5] : memref<1x64xf32, #tpu.memory_space<vmem>>, vector<1x64xf32>
    %5 = vector.broadcast %4 : vector<1x64xf32> to vector<128x64xf32>
    %6 = arith.mulf %3, %5 : vector<128x64xf32>
    %c0_6 = arith.constant 0 : index
    %c0_7 = arith.constant 0 : index
    %7 = vector.load %arg4[%c0_6, %c0_7] : memref<1x64xf32, #tpu.memory_space<vmem>>, vector<1x64xf32>
    %8 = vector.broadcast %7 : vector<1x64xf32> to vector<128x64xf32>
    %9 = arith.addf %6, %8 : vector<128x64xf32>
    %cst_8 = arith.constant 0.000000e+00 : f32
    %10 = vector.broadcast %cst_8 : f32 to vector<128x64xf32>
    %11 = arith.maximumf %9, %10 : vector<128x64xf32>
    %c128_i32 = arith.constant 128 : i32
    %12 = arith.muli %arg1, %c128_i32 : i32
    %13 = tpu.iota {dimensions = array<i32: 0>} : vector<128x1xi32>
    %14 = vector.broadcast %12 : i32 to vector<128x1xi32>
    %15 = arith.addi %14, %13 : vector<128x1xi32>
    %c250_i32 = arith.constant 250 : i32
    %16 = vector.broadcast %c250_i32 : i32 to vector<128x1xi32>
    %17 = arith.cmpi slt, %15, %16 : vector<128x1xi32>
    %18 = arith.extui %17 : vector<128x1xi1> to vector<128x1xi32>
    %19 = arith.sitofp %18 : vector<128x1xi32> to vector<128x1xf32>
    %20 = vector.broadcast %19 : vector<128x1xf32> to vector<128x64xf32>
    %21 = arith.mulf %11, %20 : vector<128x64xf32>
    %c128_i32_9 = arith.constant 128 : i32
    %22 = arith.muli %arg1, %c128_i32_9 : i32
    %c250_i32_10 = arith.constant 250 : i32
    %23 = arith.subi %c250_i32_10, %22 : i32
    %c128_i32_11 = arith.constant 128 : i32
    %24 = arith.minsi %c128_i32_11, %23 : i32
    %25 = arith.sitofp %24 : i32 to f32
    %26 = arith.truncf %21 : vector<128x64xf32> to vector<128x64xbf16>
    %c0_12 = arith.constant 0 : index
    %c0_13 = arith.constant 0 : index
    %27 = vector.load %arg6[%c0_12, %c0_13] : memref<64x128xbf16, #tpu.memory_space<vmem>>, vector<64x128xbf16>
    %cst_14 = arith.constant dense<0.000000e+00> : vector<128x128xf32>
    %28 = tpu.matmul %26, %27, %cst_14 {dimension_numbers = #tpu.dot_dimension_numbers<[1], [0], [0], [1], [0, 0, 1, 1], [], []>} : vector<128x64xbf16>, vector<64x128xbf16>, vector<128x128xf32> -> vector<128x128xf32>
    %cst_15 = arith.constant dense<0.000000e+00> : vector<128xf32>
    %29 = vector.multi_reduction <add>, %28, %cst_15 [0] : vector<128x128xf32> to vector<128xf32>
    %30 = vector.shape_cast %29 : vector<128xf32> to vector<1x128xf32>
    %31 = vector.broadcast %25 : f32 to vector<1x128xf32>
    %32 = arith.divf %30, %31 : vector<1x128xf32>
    %33 = vector.broadcast %32 : vector<1x128xf32> to vector<128x128xf32>
    %34 = arith.subf %28, %33 : vector<128x128xf32>
    %35 = vector.broadcast %19 : vector<128x1xf32> to vector<128x128xf32>
    %36 = arith.mulf %34, %35 : vector<128x128xf32>
    %c0_16 = arith.constant 0 : index
    %c0_17 = arith.constant 0 : index
    %c0_18 = arith.constant 0 : index
    %c0_19 = arith.constant 0 : index
    %37 = vector.load %arg7[%c0_16, %c0_17, %c0_18, %c0_19] : memref<1x1x1x128xf32, #tpu.memory_space<vmem>>, vector<1x1x1x128xf32>
    %38 = vector.shape_cast %37 : vector<1x1x1x128xf32> to vector<1x128xf32>
    %39 = vector.shape_cast %30 : vector<1x128xf32> to vector<1x1x1x128xf32>
    tpu.vector_store %arg7[%c0_16, %c0_17, %c0_18, %c0_19], %39 {strides = array<i32>} : memref<1x1x1x128xf32, #tpu.memory_space<vmem>>, vector<1x1x1x128xf32>,
    %40 = arith.mulf %36, %36 : vector<128x128xf32>
    %cst_20 = arith.constant dense<0.000000e+00> : vector<128xf32>
    %41 = vector.multi_reduction <add>, %40, %cst_20 [0] : vector<128x128xf32> to vector<128xf32>
    %42 = vector.shape_cast %41 : vector<128xf32> to vector<1x128xf32>
    %c0_21 = arith.constant 0 : index
    %c0_22 = arith.constant 0 : index
    %c0_23 = arith.constant 0 : index
    %c0_24 = arith.constant 0 : index
    %43 = vector.load %arg8[%c0_21, %c0_22, %c0_23, %c0_24] : memref<1x1x1x128xf32, #tpu.memory_space<vmem>>, vector<1x1x1x128xf32>
    %44 = vector.shape_cast %43 : vector<1x1x1x128xf32> to vector<1x128xf32>
    %45 = vector.shape_cast %42 : vector<1x128xf32> to vector<1x1x1x128xf32>
    tpu.vector_store %arg8[%c0_21, %c0_22, %c0_23, %c0_24], %45 {strides = array<i32>} : memref<1x1x1x128xf32, #tpu.memory_space<vmem>>, vector<1x1x1x128xf32>,
    return
  }
  func.func @transform_0(%arg0: i32, %arg1: i32) -> (i32, i32, i32) {
    %c0_i32 = arith.constant 0 : i32
    %c0_i32_0 = arith.constant 0 : i32
    return %arg0, %arg1, %c0_i32 : i32, i32, i32
  }
  func.func @transform_1(%arg0: i32, %arg1: i32) -> (i32, i32) {
    %c0_i32 = arith.constant 0 : i32
    %c0_i32_0 = arith.constant 0 : i32
    %c0_i32_1 = arith.constant 0 : i32
    return %c0_i32, %c0_i32_0 : i32, i32
  }
  func.func @transform_2(%arg0: i32, %arg1: i32) -> (i32, i32) {
    %c0_i32 = arith.constant 0 : i32
    %c0_i32_0 = arith.constant 0 : i32
    %c0_i32_1 = arith.constant 0 : i32
    return %c0_i32, %c0_i32_0 : i32, i32
  }
  func.func @transform_3(%arg0: i32, %arg1: i32) -> (i32, i32) {
    %c0_i32 = arith.constant 0 : i32
    %c0_i32_0 = arith.constant 0 : i32
    %c0_i32_1 = arith.constant 0 : i32
    return %c0_i32, %c0_i32_0 : i32, i32
  }
  func.func @transform_4(%arg0: i32, %arg1: i32) -> (i32, i32) {
    %c0_i32 = arith.constant 0 : i32
    %c0_i32_0 = arith.constant 0 : i32
    %c0_i32_1 = arith.constant 0 : i32
    return %c0_i32, %c0_i32_0 : i32, i32
  }
  func.func @transform_5(%arg0: i32, %arg1: i32) -> (i32, i32, i32, i32) {
    %c0_i32 = arith.constant 0 : i32
    %c0_i32_0 = arith.constant 0 : i32
    %c0_i32_1 = arith.constant 0 : i32
    return %arg0, %arg1, %c0_i32, %c0_i32_0 : i32, i32, i32, i32
  }
  func.func @transform_6(%arg0: i32, %arg1: i32) -> (i32, i32, i32, i32) {
    %c0_i32 = arith.constant 0 : i32
    %c0_i32_0 = arith.constant 0 : i32
    %c0_i32_1 = arith.constant 0 : i32
    return %arg0, %arg1, %c0_i32, %c0_i32_0 : i32, i32, i32, i32
  }
}

module attributes {stable_mosaic.version = 11 : i64} {
  func.func @conv123_pool_kernel(%arg0: i32, %arg1: i32, %arg2: memref<1x128x8xbf16, #tpu.memory_space<vmem>>, %arg3: memref<1x64xf32, #tpu.memory_space<vmem>>, %arg4: memref<1x64xf32, #tpu.memory_space<vmem>>, %arg5: memref<1x128xf32, #tpu.memory_space<vmem>>, %arg6: memref<1x128xf32, #tpu.memory_space<vmem>>, %arg7: memref<8x64xbf16, #tpu.memory_space<vmem>>, %arg8: memref<64x128xbf16, #tpu.memory_space<vmem>>, %arg9: memref<128x1024xbf16, #tpu.memory_space<vmem>>, %arg10: memref<1x1x1x1024xf32, #tpu.memory_space<vmem>>, %arg11: memref<1x1x1x1024xf32, #tpu.memory_space<vmem>>, %arg12: memref<1x1x1x1024xf32, #tpu.memory_space<vmem>>, %arg13: memref<1x1x1x1024xf32, #tpu.memory_space<vmem>>) attributes {dimension_semantics = [#tpu.dimension_semantics<parallel>, #tpu.dimension_semantics<parallel>], iteration_bounds = array<i64: 2, 2>, scalar_prefetch = 0 : i64, scratch_operands = 0 : i64, tpu.core_type = #tpu.core_type<tc>, window_params = [{transform_indices = @transform_0, window_bounds = array<i64: 1, 128, 8>}, {pipeline_mode = #tpu.pipeline_mode<synchronous>, transform_indices = @transform_1, window_bounds = array<i64: 1, 64>}, {pipeline_mode = #tpu.pipeline_mode<synchronous>, transform_indices = @transform_2, window_bounds = array<i64: 1, 64>}, {pipeline_mode = #tpu.pipeline_mode<synchronous>, transform_indices = @transform_3, window_bounds = array<i64: 1, 128>}, {pipeline_mode = #tpu.pipeline_mode<synchronous>, transform_indices = @transform_4, window_bounds = array<i64: 1, 128>}, {pipeline_mode = #tpu.pipeline_mode<synchronous>, transform_indices = @transform_5, window_bounds = array<i64: 8, 64>}, {pipeline_mode = #tpu.pipeline_mode<synchronous>, transform_indices = @transform_6, window_bounds = array<i64: 64, 128>}, {pipeline_mode = #tpu.pipeline_mode<synchronous>, transform_indices = @transform_7, window_bounds = array<i64: 128, 1024>}, {transform_indices = @transform_8, window_bounds = array<i64: 1, 1, 1, 1024>}, {transform_indices = @transform_9, window_bounds = array<i64: 1, 1, 1, 1024>}, {transform_indices = @transform_10, window_bounds = array<i64: 1, 1, 1, 1024>}, {transform_indices = @transform_11, window_bounds = array<i64: 1, 1, 1, 1024>}]} {
    %c0 = arith.constant 0 : index
    %c0_0 = arith.constant 0 : index
    %c0_1 = arith.constant 0 : index
    %0 = vector.load %arg2[%c0, %c0_0, %c0_1] : memref<1x128x8xbf16, #tpu.memory_space<vmem>>, vector<1x128x8xbf16>
    %1 = vector.shape_cast %0 : vector<1x128x8xbf16> to vector<128x8xbf16>
    %c0_2 = arith.constant 0 : index
    %c0_3 = arith.constant 0 : index
    %2 = vector.load %arg7[%c0_2, %c0_3] : memref<8x64xbf16, #tpu.memory_space<vmem>>, vector<8x64xbf16>
    %cst = arith.constant dense<0.000000e+00> : vector<128x64xf32>
    %3 = tpu.matmul %1, %2, %cst {dimension_numbers = #tpu.dot_dimension_numbers<[1], [0], [0], [1], [0, 0, 1, 1], [], []>} : vector<128x8xbf16>, vector<8x64xbf16>, vector<128x64xf32> -> vector<128x64xf32>
    %c0_4 = arith.constant 0 : index
    %c0_5 = arith.constant 0 : index
    %4 = vector.load %arg3[%c0_4, %c0_5] : memref<1x64xf32, #tpu.memory_space<vmem>>, vector<1x64xf32>
    %5 = vector.broadcast %4 : vector<1x64xf32> to vector<128x64xf32>
    %6 = arith.mulf %3, %5 : vector<128x64xf32>
    %c0_6 = arith.constant 0 : index
    %c0_7 = arith.constant 0 : index
    %7 = vector.load %arg4[%c0_6, %c0_7] : memref<1x64xf32, #tpu.memory_space<vmem>>, vector<1x64xf32>
    %8 = vector.broadcast %7 : vector<1x64xf32> to vector<128x64xf32>
    %9 = arith.addf %6, %8 : vector<128x64xf32>
    %cst_8 = arith.constant 0.000000e+00 : f32
    %10 = vector.broadcast %cst_8 : f32 to vector<128x64xf32>
    %11 = arith.maximumf %9, %10 : vector<128x64xf32>
    %c128_i32 = arith.constant 128 : i32
    %12 = arith.muli %arg1, %c128_i32 : i32
    %13 = tpu.iota {dimensions = array<i32: 0>} : vector<128x1xi32>
    %14 = vector.broadcast %12 : i32 to vector<128x1xi32>
    %15 = arith.addi %14, %13 : vector<128x1xi32>
    %c250_i32 = arith.constant 250 : i32
    %16 = vector.broadcast %c250_i32 : i32 to vector<128x1xi32>
    %17 = arith.cmpi slt, %15, %16 : vector<128x1xi32>
    %18 = arith.extui %17 : vector<128x1xi1> to vector<128x1xi32>
    %19 = arith.sitofp %18 : vector<128x1xi32> to vector<128x1xf32>
    %20 = vector.broadcast %19 : vector<128x1xf32> to vector<128x64xf32>
    %21 = arith.mulf %11, %20 : vector<128x64xf32>
    %c128_i32_9 = arith.constant 128 : i32
    %22 = arith.muli %arg1, %c128_i32_9 : i32
    %c250_i32_10 = arith.constant 250 : i32
    %23 = arith.subi %c250_i32_10, %22 : i32
    %c128_i32_11 = arith.constant 128 : i32
    %24 = arith.minsi %c128_i32_11, %23 : i32
    %25 = arith.sitofp %24 : i32 to f32
    %26 = arith.truncf %21 : vector<128x64xf32> to vector<128x64xbf16>
    %c0_12 = arith.constant 0 : index
    %c0_13 = arith.constant 0 : index
    %27 = vector.load %arg8[%c0_12, %c0_13] : memref<64x128xbf16, #tpu.memory_space<vmem>>, vector<64x128xbf16>
    %cst_14 = arith.constant dense<0.000000e+00> : vector<128x128xf32>
    %28 = tpu.matmul %26, %27, %cst_14 {dimension_numbers = #tpu.dot_dimension_numbers<[1], [0], [0], [1], [0, 0, 1, 1], [], []>} : vector<128x64xbf16>, vector<64x128xbf16>, vector<128x128xf32> -> vector<128x128xf32>
    %c0_15 = arith.constant 0 : index
    %c0_16 = arith.constant 0 : index
    %29 = vector.load %arg5[%c0_15, %c0_16] : memref<1x128xf32, #tpu.memory_space<vmem>>, vector<1x128xf32>
    %30 = vector.broadcast %29 : vector<1x128xf32> to vector<128x128xf32>
    %31 = arith.mulf %28, %30 : vector<128x128xf32>
    %c0_17 = arith.constant 0 : index
    %c0_18 = arith.constant 0 : index
    %32 = vector.load %arg6[%c0_17, %c0_18] : memref<1x128xf32, #tpu.memory_space<vmem>>, vector<1x128xf32>
    %33 = vector.broadcast %32 : vector<1x128xf32> to vector<128x128xf32>
    %34 = arith.addf %31, %33 : vector<128x128xf32>
    %cst_19 = arith.constant 0.000000e+00 : f32
    %35 = vector.broadcast %cst_19 : f32 to vector<128x128xf32>
    %36 = arith.maximumf %34, %35 : vector<128x128xf32>
    %37 = vector.broadcast %19 : vector<128x1xf32> to vector<128x128xf32>
    %38 = arith.mulf %36, %37 : vector<128x128xf32>
    %39 = arith.truncf %38 : vector<128x128xf32> to vector<128x128xbf16>
    %c0_20 = arith.constant 0 : index
    %c0_21 = arith.constant 0 : index
    %40 = vector.load %arg9[%c0_20, %c0_21] : memref<128x1024xbf16, #tpu.memory_space<vmem>>, vector<128x1024xbf16>
    %cst_22 = arith.constant dense<0.000000e+00> : vector<128x1024xf32>
    %41 = tpu.matmul %39, %40, %cst_22 {dimension_numbers = #tpu.dot_dimension_numbers<[1], [0], [0], [1], [0, 0, 1, 1], [], []>} : vector<128x128xbf16>, vector<128x1024xbf16>, vector<128x1024xf32> -> vector<128x1024xf32>
    %cst_23 = arith.constant dense<0.000000e+00> : vector<1024xf32>
    %42 = vector.multi_reduction <add>, %41, %cst_23 [0] : vector<128x1024xf32> to vector<1024xf32>
    %43 = vector.shape_cast %42 : vector<1024xf32> to vector<1x1024xf32>
    %44 = vector.broadcast %25 : f32 to vector<1x1024xf32>
    %45 = arith.divf %43, %44 : vector<1x1024xf32>
    %46 = vector.broadcast %45 : vector<1x1024xf32> to vector<128x1024xf32>
    %47 = arith.subf %41, %46 : vector<128x1024xf32>
    %48 = vector.broadcast %19 : vector<128x1xf32> to vector<128x1024xf32>
    %49 = arith.mulf %47, %48 : vector<128x1024xf32>
    %cst_24 = arith.constant 0.000000e+00 : f32
    %50 = vector.broadcast %cst_24 : f32 to vector<128x1xf32>
    %51 = arith.cmpf ogt, %19, %50 : vector<128x1xf32>
    %cst_25 = arith.constant 0xFF800000 : f32
    %52 = vector.shape_cast %51 : vector<128x1xi1> to vector<128x1xi1>
    %53 = vector.broadcast %52 : vector<128x1xi1> to vector<128x1024xi1>
    %54 = vector.broadcast %cst_25 : f32 to vector<128x1024xf32>
    %55 = arith.select %53, %41, %54 : vector<128x1024xi1>, vector<128x1024xf32>
    %cst_26 = arith.constant dense<0xFF800000> : vector<1024xf32>
    %56 = vector.multi_reduction <maximumf>, %55, %cst_26 [0] : vector<128x1024xf32> to vector<1024xf32>
    %57 = vector.shape_cast %56 : vector<1024xf32> to vector<1x1024xf32>
    %cst_27 = arith.constant 0x7F800000 : f32
    %58 = vector.shape_cast %51 : vector<128x1xi1> to vector<128x1xi1>
    %59 = vector.broadcast %58 : vector<128x1xi1> to vector<128x1024xi1>
    %60 = vector.broadcast %cst_27 : f32 to vector<128x1024xf32>
    %61 = arith.select %59, %41, %60 : vector<128x1024xi1>, vector<128x1024xf32>
    %cst_28 = arith.constant dense<0x7F800000> : vector<1024xf32>
    %62 = vector.multi_reduction <minimumf>, %61, %cst_28 [0] : vector<128x1024xf32> to vector<1024xf32>
    %63 = vector.shape_cast %62 : vector<1024xf32> to vector<1x1024xf32>
    %c0_29 = arith.constant 0 : index
    %c0_30 = arith.constant 0 : index
    %c0_31 = arith.constant 0 : index
    %c0_32 = arith.constant 0 : index
    %64 = vector.load %arg10[%c0_29, %c0_30, %c0_31, %c0_32] : memref<1x1x1x1024xf32, #tpu.memory_space<vmem>>, vector<1x1x1x1024xf32>
    %65 = vector.shape_cast %64 : vector<1x1x1x1024xf32> to vector<1x1024xf32>
    %66 = vector.shape_cast %43 : vector<1x1024xf32> to vector<1x1x1x1024xf32>
    tpu.vector_store %arg10[%c0_29, %c0_30, %c0_31, %c0_32], %66 {strides = array<i32>} : memref<1x1x1x1024xf32, #tpu.memory_space<vmem>>, vector<1x1x1x1024xf32>,
    %67 = arith.mulf %49, %49 : vector<128x1024xf32>
    %cst_33 = arith.constant dense<0.000000e+00> : vector<1024xf32>
    %68 = vector.multi_reduction <add>, %67, %cst_33 [0] : vector<128x1024xf32> to vector<1024xf32>
    %69 = vector.shape_cast %68 : vector<1024xf32> to vector<1x1024xf32>
    %c0_34 = arith.constant 0 : index
    %c0_35 = arith.constant 0 : index
    %c0_36 = arith.constant 0 : index
    %c0_37 = arith.constant 0 : index
    %70 = vector.load %arg11[%c0_34, %c0_35, %c0_36, %c0_37] : memref<1x1x1x1024xf32, #tpu.memory_space<vmem>>, vector<1x1x1x1024xf32>
    %71 = vector.shape_cast %70 : vector<1x1x1x1024xf32> to vector<1x1024xf32>
    %72 = vector.shape_cast %69 : vector<1x1024xf32> to vector<1x1x1x1024xf32>
    tpu.vector_store %arg11[%c0_34, %c0_35, %c0_36, %c0_37], %72 {strides = array<i32>} : memref<1x1x1x1024xf32, #tpu.memory_space<vmem>>, vector<1x1x1x1024xf32>,
    %c0_38 = arith.constant 0 : index
    %c0_39 = arith.constant 0 : index
    %c0_40 = arith.constant 0 : index
    %c0_41 = arith.constant 0 : index
    %73 = vector.load %arg12[%c0_38, %c0_39, %c0_40, %c0_41] : memref<1x1x1x1024xf32, #tpu.memory_space<vmem>>, vector<1x1x1x1024xf32>
    %74 = vector.shape_cast %73 : vector<1x1x1x1024xf32> to vector<1x1024xf32>
    %75 = vector.shape_cast %57 : vector<1x1024xf32> to vector<1x1x1x1024xf32>
    tpu.vector_store %arg12[%c0_38, %c0_39, %c0_40, %c0_41], %75 {strides = array<i32>} : memref<1x1x1x1024xf32, #tpu.memory_space<vmem>>, vector<1x1x1x1024xf32>,
    %c0_42 = arith.constant 0 : index
    %c0_43 = arith.constant 0 : index
    %c0_44 = arith.constant 0 : index
    %c0_45 = arith.constant 0 : index
    %76 = vector.load %arg13[%c0_42, %c0_43, %c0_44, %c0_45] : memref<1x1x1x1024xf32, #tpu.memory_space<vmem>>, vector<1x1x1x1024xf32>
    %77 = vector.shape_cast %76 : vector<1x1x1x1024xf32> to vector<1x1024xf32>
    %78 = vector.shape_cast %63 : vector<1x1024xf32> to vector<1x1x1x1024xf32>
    tpu.vector_store %arg13[%c0_42, %c0_43, %c0_44, %c0_45], %78 {strides = array<i32>} : memref<1x1x1x1024xf32, #tpu.memory_space<vmem>>, vector<1x1x1x1024xf32>,
    return
  }
  func.func @transform_0(%arg0: i32, %arg1: i32) -> (i32, i32, i32) {
    %c0_i32 = arith.constant 0 : i32
    %c0_i32_0 = arith.constant 0 : i32
    return %arg0, %arg1, %c0_i32 : i32, i32, i32
  }
  func.func @transform_1(%arg0: i32, %arg1: i32) -> (i32, i32) {
    %c0_i32 = arith.constant 0 : i32
    %c0_i32_0 = arith.constant 0 : i32
    %c0_i32_1 = arith.constant 0 : i32
    return %c0_i32, %c0_i32_0 : i32, i32
  }
  func.func @transform_2(%arg0: i32, %arg1: i32) -> (i32, i32) {
    %c0_i32 = arith.constant 0 : i32
    %c0_i32_0 = arith.constant 0 : i32
    %c0_i32_1 = arith.constant 0 : i32
    return %c0_i32, %c0_i32_0 : i32, i32
  }
  func.func @transform_3(%arg0: i32, %arg1: i32) -> (i32, i32) {
    %c0_i32 = arith.constant 0 : i32
    %c0_i32_0 = arith.constant 0 : i32
    %c0_i32_1 = arith.constant 0 : i32
    return %c0_i32, %c0_i32_0 : i32, i32
  }
  func.func @transform_4(%arg0: i32, %arg1: i32) -> (i32, i32) {
    %c0_i32 = arith.constant 0 : i32
    %c0_i32_0 = arith.constant 0 : i32
    %c0_i32_1 = arith.constant 0 : i32
    return %c0_i32, %c0_i32_0 : i32, i32
  }
  func.func @transform_5(%arg0: i32, %arg1: i32) -> (i32, i32) {
    %c0_i32 = arith.constant 0 : i32
    %c0_i32_0 = arith.constant 0 : i32
    %c0_i32_1 = arith.constant 0 : i32
    return %c0_i32, %c0_i32_0 : i32, i32
  }
  func.func @transform_6(%arg0: i32, %arg1: i32) -> (i32, i32) {
    %c0_i32 = arith.constant 0 : i32
    %c0_i32_0 = arith.constant 0 : i32
    %c0_i32_1 = arith.constant 0 : i32
    return %c0_i32, %c0_i32_0 : i32, i32
  }
  func.func @transform_7(%arg0: i32, %arg1: i32) -> (i32, i32) {
    %c0_i32 = arith.constant 0 : i32
    %c0_i32_0 = arith.constant 0 : i32
    %c0_i32_1 = arith.constant 0 : i32
    return %c0_i32, %c0_i32_0 : i32, i32
  }
  func.func @transform_8(%arg0: i32, %arg1: i32) -> (i32, i32, i32, i32) {
    %c0_i32 = arith.constant 0 : i32
    %c0_i32_0 = arith.constant 0 : i32
    %c0_i32_1 = arith.constant 0 : i32
    return %arg0, %arg1, %c0_i32, %c0_i32_0 : i32, i32, i32, i32
  }
  func.func @transform_9(%arg0: i32, %arg1: i32) -> (i32, i32, i32, i32) {
    %c0_i32 = arith.constant 0 : i32
    %c0_i32_0 = arith.constant 0 : i32
    %c0_i32_1 = arith.constant 0 : i32
    return %arg0, %arg1, %c0_i32, %c0_i32_0 : i32, i32, i32, i32
  }
  func.func @transform_10(%arg0: i32, %arg1: i32) -> (i32, i32, i32, i32) {
    %c0_i32 = arith.constant 0 : i32
    %c0_i32_0 = arith.constant 0 : i32
    %c0_i32_1 = arith.constant 0 : i32
    return %arg0, %arg1, %c0_i32, %c0_i32_0 : i32, i32, i32, i32
  }
  func.func @transform_11(%arg0: i32, %arg1: i32) -> (i32, i32, i32, i32) {
    %c0_i32 = arith.constant 0 : i32
    %c0_i32_0 = arith.constant 0 : i32
    %c0_i32_1 = arith.constant 0 : i32
    return %arg0, %arg1, %c0_i32, %c0_i32_0 : i32, i32, i32, i32
  }
}

module attributes {stable_mosaic.version = 11 : i64} {
  func.func @fc_head_kernel(%arg0: memref<2x1024xf32, #tpu.memory_space<vmem>>, %arg1: memref<2x1024xf32, #tpu.memory_space<vmem>>, %arg2: memref<1x1024xf32, #tpu.memory_space<vmem>>, %arg3: memref<1x1024xf32, #tpu.memory_space<vmem>>, %arg4: memref<1024x512xbf16, #tpu.memory_space<vmem>>, %arg5: memref<1x512xf32, #tpu.memory_space<vmem>>, %arg6: memref<1x512xf32, #tpu.memory_space<vmem>>, %arg7: memref<512x256xbf16, #tpu.memory_space<vmem>>, %arg8: memref<1x256xf32, #tpu.memory_space<vmem>>, %arg9: memref<1x256xf32, #tpu.memory_space<vmem>>, %arg10: memref<256x9xbf16, #tpu.memory_space<vmem>>, %arg11: memref<1x9xf32, #tpu.memory_space<vmem>>, %arg12: memref<2x9xf32, #tpu.memory_space<vmem>>) attributes {dimension_semantics = [], scalar_prefetch = 0 : i64, scratch_operands = 0 : i64, tpu.core_type = #tpu.core_type<tc>} {
    %c0 = arith.constant 0 : index
    %c0_0 = arith.constant 0 : index
    %0 = vector.load %arg2[%c0, %c0_0] : memref<1x1024xf32, #tpu.memory_space<vmem>>, vector<1x1024xf32>
    %cst = arith.constant 0.000000e+00 : f32
    %1 = vector.broadcast %cst : f32 to vector<1x1024xf32>
    %2 = arith.cmpf oge, %0, %1 : vector<1x1024xf32>
    %c0_1 = arith.constant 0 : index
    %c0_2 = arith.constant 0 : index
    %3 = vector.load %arg0[%c0_1, %c0_2] : memref<2x1024xf32, #tpu.memory_space<vmem>>, vector<2x1024xf32>
    %c0_3 = arith.constant 0 : index
    %c0_4 = arith.constant 0 : index
    %4 = vector.load %arg1[%c0_3, %c0_4] : memref<2x1024xf32, #tpu.memory_space<vmem>>, vector<2x1024xf32>
    %5 = vector.shape_cast %2 : vector<1x1024xi1> to vector<1x1024xi1>
    %6 = vector.broadcast %5 : vector<1x1024xi1> to vector<2x1024xi1>
    %7 = arith.select %6, %3, %4 : vector<2x1024xi1>, vector<2x1024xf32>
    %8 = vector.broadcast %0 : vector<1x1024xf32> to vector<2x1024xf32>
    %9 = arith.mulf %7, %8 : vector<2x1024xf32>
    %c0_5 = arith.constant 0 : index
    %c0_6 = arith.constant 0 : index
    %10 = vector.load %arg3[%c0_5, %c0_6] : memref<1x1024xf32, #tpu.memory_space<vmem>>, vector<1x1024xf32>
    %11 = vector.broadcast %10 : vector<1x1024xf32> to vector<2x1024xf32>
    %12 = arith.addf %9, %11 : vector<2x1024xf32>
    %cst_7 = arith.constant 0.000000e+00 : f32
    %13 = vector.broadcast %cst_7 : f32 to vector<2x1024xf32>
    %14 = arith.maximumf %12, %13 : vector<2x1024xf32>
    %15 = arith.truncf %14 : vector<2x1024xf32> to vector<2x1024xbf16>
    %c0_8 = arith.constant 0 : index
    %c0_9 = arith.constant 0 : index
    %16 = vector.load %arg4[%c0_8, %c0_9] : memref<1024x512xbf16, #tpu.memory_space<vmem>>, vector<1024x512xbf16>
    %cst_10 = arith.constant dense<0.000000e+00> : vector<2x512xf32>
    %17 = tpu.matmul %15, %16, %cst_10 {dimension_numbers = #tpu.dot_dimension_numbers<[1], [0], [0], [1], [0, 0, 1, 1], [], []>} : vector<2x1024xbf16>, vector<1024x512xbf16>, vector<2x512xf32> -> vector<2x512xf32>
    %c0_11 = arith.constant 0 : index
    %c0_12 = arith.constant 0 : index
    %18 = vector.load %arg5[%c0_11, %c0_12] : memref<1x512xf32, #tpu.memory_space<vmem>>, vector<1x512xf32>
    %c0_13 = arith.constant 0 : index
    %c0_14 = arith.constant 0 : index
    %19 = vector.load %arg6[%c0_13, %c0_14] : memref<1x512xf32, #tpu.memory_space<vmem>>, vector<1x512xf32>
    %cst_15 = arith.constant dense<0.000000e+00> : vector<512xf32>
    %20 = vector.multi_reduction <add>, %17, %cst_15 [0] : vector<2x512xf32> to vector<512xf32>
    %21 = vector.shape_cast %20 : vector<512xf32> to vector<1x512xf32>
    %cst_16 = arith.constant 2.000000e+00 : f32
    %22 = vector.broadcast %cst_16 : f32 to vector<1x512xf32>
    %23 = arith.divf %21, %22 : vector<1x512xf32>
    %24 = vector.broadcast %23 : vector<1x512xf32> to vector<2x512xf32>
    %25 = arith.subf %17, %24 : vector<2x512xf32>
    %26 = arith.mulf %25, %25 : vector<2x512xf32>
    %cst_17 = arith.constant dense<0.000000e+00> : vector<512xf32>
    %27 = vector.multi_reduction <add>, %26, %cst_17 [0] : vector<2x512xf32> to vector<512xf32>
    %28 = vector.shape_cast %27 : vector<512xf32> to vector<1x512xf32>
    %cst_18 = arith.constant 2.000000e+00 : f32
    %29 = vector.broadcast %cst_18 : f32 to vector<1x512xf32>
    %30 = arith.divf %28, %29 : vector<1x512xf32>
    %cst_19 = arith.constant 9.99999974E-6 : f32
    %31 = vector.broadcast %cst_19 : f32 to vector<1x512xf32>
    %32 = arith.addf %30, %31 : vector<1x512xf32>
    %33 = math.rsqrt %32 : vector<1x512xf32>
    %34 = arith.mulf %18, %33 : vector<1x512xf32>
    %35 = vector.broadcast %34 : vector<1x512xf32> to vector<2x512xf32>
    %36 = arith.mulf %17, %35 : vector<2x512xf32>
    %37 = arith.mulf %23, %34 : vector<1x512xf32>
    %38 = arith.subf %19, %37 : vector<1x512xf32>
    %39 = vector.broadcast %38 : vector<1x512xf32> to vector<2x512xf32>
    %40 = arith.addf %36, %39 : vector<2x512xf32>
    %cst_20 = arith.constant 0.000000e+00 : f32
    %41 = vector.broadcast %cst_20 : f32 to vector<2x512xf32>
    %42 = arith.maximumf %40, %41 : vector<2x512xf32>
    %43 = arith.truncf %42 : vector<2x512xf32> to vector<2x512xbf16>
    %c0_21 = arith.constant 0 : index
    %c0_22 = arith.constant 0 : index
    %44 = vector.load %arg7[%c0_21, %c0_22] : memref<512x256xbf16, #tpu.memory_space<vmem>>, vector<512x256xbf16>
    %cst_23 = arith.constant dense<0.000000e+00> : vector<2x256xf32>
    %45 = tpu.matmul %43, %44, %cst_23 {dimension_numbers = #tpu.dot_dimension_numbers<[1], [0], [0], [1], [0, 0, 1, 1], [], []>} : vector<2x512xbf16>, vector<512x256xbf16>, vector<2x256xf32> -> vector<2x256xf32>
    %c0_24 = arith.constant 0 : index
    %c0_25 = arith.constant 0 : index
    %46 = vector.load %arg8[%c0_24, %c0_25] : memref<1x256xf32, #tpu.memory_space<vmem>>, vector<1x256xf32>
    %c0_26 = arith.constant 0 : index
    %c0_27 = arith.constant 0 : index
    %47 = vector.load %arg9[%c0_26, %c0_27] : memref<1x256xf32, #tpu.memory_space<vmem>>, vector<1x256xf32>
    %cst_28 = arith.constant dense<0.000000e+00> : vector<256xf32>
    %48 = vector.multi_reduction <add>, %45, %cst_28 [0] : vector<2x256xf32> to vector<256xf32>
    %49 = vector.shape_cast %48 : vector<256xf32> to vector<1x256xf32>
    %cst_29 = arith.constant 2.000000e+00 : f32
    %50 = vector.broadcast %cst_29 : f32 to vector<1x256xf32>
    %51 = arith.divf %49, %50 : vector<1x256xf32>
    %52 = vector.broadcast %51 : vector<1x256xf32> to vector<2x256xf32>
    %53 = arith.subf %45, %52 : vector<2x256xf32>
    %54 = arith.mulf %53, %53 : vector<2x256xf32>
    %cst_30 = arith.constant dense<0.000000e+00> : vector<256xf32>
    %55 = vector.multi_reduction <add>, %54, %cst_30 [0] : vector<2x256xf32> to vector<256xf32>
    %56 = vector.shape_cast %55 : vector<256xf32> to vector<1x256xf32>
    %cst_31 = arith.constant 2.000000e+00 : f32
    %57 = vector.broadcast %cst_31 : f32 to vector<1x256xf32>
    %58 = arith.divf %56, %57 : vector<1x256xf32>
    %cst_32 = arith.constant 9.99999974E-6 : f32
    %59 = vector.broadcast %cst_32 : f32 to vector<1x256xf32>
    %60 = arith.addf %58, %59 : vector<1x256xf32>
    %61 = math.rsqrt %60 : vector<1x256xf32>
    %62 = arith.mulf %46, %61 : vector<1x256xf32>
    %63 = vector.broadcast %62 : vector<1x256xf32> to vector<2x256xf32>
    %64 = arith.mulf %45, %63 : vector<2x256xf32>
    %65 = arith.mulf %51, %62 : vector<1x256xf32>
    %66 = arith.subf %47, %65 : vector<1x256xf32>
    %67 = vector.broadcast %66 : vector<1x256xf32> to vector<2x256xf32>
    %68 = arith.addf %64, %67 : vector<2x256xf32>
    %cst_33 = arith.constant 0.000000e+00 : f32
    %69 = vector.broadcast %cst_33 : f32 to vector<2x256xf32>
    %70 = arith.maximumf %68, %69 : vector<2x256xf32>
    %71 = arith.truncf %70 : vector<2x256xf32> to vector<2x256xbf16>
    %c0_34 = arith.constant 0 : index
    %c0_35 = arith.constant 0 : index
    %72 = vector.load %arg10[%c0_34, %c0_35] : memref<256x9xbf16, #tpu.memory_space<vmem>>, vector<256x9xbf16>
    %cst_36 = arith.constant dense<0.000000e+00> : vector<2x9xf32>
    %73 = tpu.matmul %71, %72, %cst_36 {dimension_numbers = #tpu.dot_dimension_numbers<[1], [0], [0], [1], [0, 0, 1, 1], [], []>} : vector<2x256xbf16>, vector<256x9xbf16>, vector<2x9xf32> -> vector<2x9xf32>
    %c0_37 = arith.constant 0 : index
    %c0_38 = arith.constant 0 : index
    %74 = vector.load %arg11[%c0_37, %c0_38] : memref<1x9xf32, #tpu.memory_space<vmem>>, vector<1x9xf32>
    %75 = vector.broadcast %74 : vector<1x9xf32> to vector<2x9xf32>
    %76 = arith.addf %73, %75 : vector<2x9xf32>
    %77 = tpu.iota {dimensions = array<i32: 1>} : vector<2x9xi32>
    %c4_i32 = arith.constant 4 : i32
    %c0_i32 = arith.constant 0 : i32
    %78 = arith.cmpi eq, %c4_i32, %c0_i32 : i32
    %c1_i32 = arith.constant 1 : i32
    %79 = arith.select %78, %c1_i32, %c4_i32 : i32
    %80 = vector.broadcast %79 : i32 to vector<2x9xi32>
    %81 = arith.remsi %77, %80 : vector<2x9xi32>
    %c0_i32_39 = arith.constant 0 : i32
    %82 = vector.broadcast %c0_i32_39 : i32 to vector<2x9xi32>
    %83 = arith.cmpi ne, %81, %82 : vector<2x9xi32>
    %c0_i32_40 = arith.constant 0 : i32
    %84 = vector.broadcast %c0_i32_40 : i32 to vector<2x9xi32>
    %85 = arith.cmpi slt, %81, %84 : vector<2x9xi32>
    %c0_i32_41 = arith.constant 0 : i32
    %86 = arith.cmpi slt, %79, %c0_i32_41 : i32
    %87 = vector.broadcast %86 : i1 to vector<2x9xi1>
    %88 = vector.broadcast %87 : vector<2x9xi1> to vector<2x9xi1>
    %89 = arith.xori %85, %88 : vector<2x9xi1>
    %90 = arith.andi %89, %83 : vector<2x9xi1>
    %91 = vector.broadcast %79 : i32 to vector<2x9xi32>
    %92 = arith.addi %81, %91 : vector<2x9xi32>
    %93 = arith.select %90, %92, %81 : vector<2x9xi1>, vector<2x9xi32>
    %c0_i32_42 = arith.constant 0 : i32
    %94 = vector.broadcast %c0_i32_42 : i32 to vector<2x9xi32>
    %95 = arith.cmpi eq, %93, %94 : vector<2x9xi32>
    %cst_43 = arith.constant 1.000000e+00 : f32
    %cst_44 = arith.constant 0.000000e+00 : f32
    %96 = vector.broadcast %cst_43 : f32 to vector<2x9xf32>
    %97 = vector.broadcast %cst_44 : f32 to vector<2x9xf32>
    %98 = arith.select %95, %96, %97 : vector<2x9xi1>, vector<2x9xf32>
    %99 = arith.addf %76, %98 : vector<2x9xf32>
    %c0_45 = arith.constant 0 : index
    %c0_46 = arith.constant 0 : index
    %100 = vector.load %arg12[%c0_45, %c0_46] : memref<2x9xf32, #tpu.memory_space<vmem>>, vector<2x9xf32>
    tpu.vector_store %arg12[%c0_45, %c0_46], %99 {strides = array<i32>} : memref<2x9xf32, #tpu.memory_space<vmem>>, vector<2x9xf32>,
    return
  }
}

</mosaic_0001>

<llo_original>
// kernel: tnet_forward.3
$region0: #{tnet_forward.3}
  #allocation0 [shape = 'u32[]', space=smem, size = 0x4, offset = 0x4, fixed_abs, tag = 'smem constant byte address 0x4 - core index']
  #allocation1 [shape = 'u32[72,128]{1,0:T(1,128)}', space=vmem, size = 0x9000, scoped, tag = 'internal scratch']
  %s0 = inlined_call_operand.vmem [shape: bf16[2,256,8], index: 0, kind: input, shape index: {}]
  %s1 = inlined_call_operand.vmem [shape: f32[1,64], index: 1, kind: input, shape index: {}]
  %s2 = inlined_call_operand.vmem [shape: f32[1,64], index: 2, kind: input, shape index: {}]
  %s3 = inlined_call_operand.vmem [shape: bf16[8,64], index: 3, kind: input, shape index: {}]
  %s4 = inlined_call_operand.vmem [shape: bf16[64,128], index: 4, kind: input, shape index: {}]
  %s5 = inlined_call_operand.vmem [shape: f32[2,2,1,128], index: 5, kind: output, shape index: {0}]
  %s6 = inlined_call_operand.vmem [shape: f32[2,2,1,128], index: 6, kind: output, shape index: {1}]
  %7 = xla_tuple %s5, %s6
  %s8 = sld [smem:[#allocation0]]
  $region61: #{tnet_forward.3} parent=0
    _
  %s10 = ssub.s32 1, %s8
  %s11 = scalar_select 0, %s10, %s8
  loop: start=0, step=1, limit=6
  $region2: #{tnet_forward.3} parent=0 // loop_pre_header
    _
  $region3: #{tnet_forward.3} parent=0 // loop_header
    %s13 = sphi 0, %s17
    %p14 = scmp.ge.s32.totalorder %s13, 6
    %s20 = sphi 0, %s32
    %s21 = sphi 0, %s28
    %s22 = sphi 0, %s20
    %s23 = sphi 0, %s21
    %s24 = sphi 0, %s22
    %s25 = sphi 0, %s23
    %s37 = sphi 0, %s39
    %s40 = sphi 0, %s37
    %s41 = sphi 0, %s40
    %s57 = sphi 0, %s41
    %s61 = sphi 0, %s61
    %s63 = sphi 0, %s61
    %s64 = sphi 0, %s63
    %s78 = sphi 0, %s64
    %s82 = sphi 0, %s82
    %s84 = sphi 0, %s82
    %s85 = sphi 0, %s84
    %s99 = sphi 0, %s85
    %s103 = sphi 0, %s103
    %s105 = sphi 0, %s103
    %s106 = sphi 0, %s105
    %s120 = sphi 0, %s106
    %s124 = sphi 0, %s124
    %s126 = sphi 0, %s124
    %s127 = sphi 0, %s126
    %s141 = sphi 0, %s127
    %s149 = sphi 0, %s151
    %s152 = sphi 0, %s149
    %s153 = sphi 0, %s152
    %s169 = sphi 0, %s153
    %s177 = sphi 0, %s179
    %s180 = sphi 0, %s177
    %s181 = sphi 0, %s180
    %s197 = sphi 0, %s181
  $region4: #{tnet_forward.3} parent=0 // loop_header_branch
    %16 = sbr.rel (%p14) target = $region8
  $region5: #{tnet_forward.3} parent=0 // loop_body
    %s18 = ssub.s32 %s13, 1
    %s19 = ssub.s32 %s13, 2
    %s26 = sadd.s32 1, %s21
    %p27 = scmp.ge.s32.totalorder %s26, 2
    %s28 = scalar_select %p27, 0, %s26
    %s29 = sadd.s32 1, %s20
    %s30 = scalar_select %p27, %s29, %s20
    %p31 = scmp.ge.s32.totalorder %s30, 2
    %s32 = scalar_select %p31, 0, %s30
    %s33 = ssub.s32 %s20, %s32
    %s34 = ssub.s32 %s21, %s28
    %s35 = sor.u32 %s33, %s34
    %p36 = scmp.eq.s32.totalorder %s35, 0
    %s38 = sadd.s32 %s37, 1
    %s39 = scalar_select %p36, %s37, %s38
    %p42 = pneg %p36
    %p43 = scmp.eq.s32.totalorder %s13, 3
    %p44 = por %p42, %p43
    %p45 = scmp.ne.s32.totalorder %s37, %s40
    %p46 = scmp.eq.s32.totalorder %s13, 0
    %p47 = por %p45, %p46
    %p48 = scmp.ne.s32.totalorder %s37, %s40
    %p49 = scmp.eq.s32.totalorder %s18, 3
    %p50 = por %p48, %p49
    %p51 = scmp.ne.s32.totalorder %s40, %s41
    %p52 = scmp.eq.s32.totalorder %s18, 0
    %p53 = por %p51, %p52
    %p54 = scmp.ne.s32.totalorder %s40, %s41
    %p55 = scmp.eq.s32.totalorder %s19, 3
    %p56 = por %p54, %p55
    %p58 = scmp.ne.s32.totalorder %s41, %s57
    %p59 = scmp.eq.s32.totalorder %s19, 0
    %p60 = por %p58, %p59
    %s62 = sadd.s32 %s61, 1
    %p65 = scmp.eq.s32.totalorder %s13, 3
    %p66 = scmp.ne.s32.totalorder %s61, %s63
    %p67 = scmp.eq.s32.totalorder %s13, 0
    %p68 = por %p66, %p67
    %p69 = scmp.ne.s32.totalorder %s61, %s63
    %p70 = scmp.eq.s32.totalorder %s18, 3
    %p71 = por %p69, %p70
    %p72 = scmp.ne.s32.totalorder %s63, %s64
    %p73 = scmp.eq.s32.totalorder %s18, 0
    %p74 = por %p72, %p73
    %p75 = scmp.ne.s32.totalorder %s63, %s64
    %p76 = scmp.eq.s32.totalorder %s19, 3
    %p77 = por %p75, %p76
    %p79 = scmp.ne.s32.totalorder %s64, %s78
    %p80 = scmp.eq.s32.totalorder %s19, 0
    %p81 = por %p79, %p80
    %s83 = sadd.s32 %s82, 1
    %p86 = scmp.eq.s32.totalorder %s13, 3
    %p87 = scmp.ne.s32.totalorder %s82, %s84
    %p88 = scmp.eq.s32.totalorder %s13, 0
    %p89 = por %p87, %p88
    %p90 = scmp.ne.s32.totalorder %s82, %s84
    %p91 = scmp.eq.s32.totalorder %s18, 3
    %p92 = por %p90, %p91
    %p93 = scmp.ne.s32.totalorder %s84, %s85
    %p94 = scmp.eq.s32.totalorder %s18, 0
    %p95 = por %p93, %p94
    %p96 = scmp.ne.s32.totalorder %s84, %s85
    %p97 = scmp.eq.s32.totalorder %s19, 3
    %p98 = por %p96, %p97
    %p100 = scmp.ne.s32.totalorder %s85, %s99
    %p101 = scmp.eq.s32.totalorder %s19, 0
    %p102 = por %p100, %p101
    %s104 = sadd.s32 %s103, 1
    %p107 = scmp.eq.s32.totalorder %s13, 3
    %p108 = scmp.ne.s32.totalorder %s103, %s105
    %p109 = scmp.eq.s32.totalorder %s13, 0
    %p110 = por %p108, %p109
    %p111 = scmp.ne.s32.totalorder %s103, %s105
    %p112 = scmp.eq.s32.totalorder %s18, 3
    %p113 = por %p111, %p112
    %p114 = scmp.ne.s32.totalorder %s105, %s106
    %p115 = scmp.eq.s32.totalorder %s18, 0
    %p116 = por %p114, %p115
    %p117 = scmp.ne.s32.totalorder %s105, %s106
    %p118 = scmp.eq.s32.totalorder %s19, 3
    %p119 = por %p117, %p118
    %p121 = scmp.ne.s32.totalorder %s106, %s120
    %p122 = scmp.eq.s32.totalorder %s19, 0
    %p123 = por %p121, %p122
    %s125 = sadd.s32 %s124, 1
    %p128 = scmp.eq.s32.totalorder %s13, 3
    %p129 = scmp.ne.s32.totalorder %s124, %s126
    %p130 = scmp.eq.s32.totalorder %s13, 0
    %p131 = por %p129, %p130
    %p132 = scmp.ne.s32.totalorder %s124, %s126
    %p133 = scmp.eq.s32.totalorder %s18, 3
    %p134 = por %p132, %p133
    %p135 = scmp.ne.s32.totalorder %s126, %s127
    %p136 = scmp.eq.s32.totalorder %s18, 0
    %p137 = por %p135, %p136
    %p138 = scmp.ne.s32.totalorder %s126, %s127
    %p139 = scmp.eq.s32.totalorder %s19, 3
    %p140 = por %p138, %p139
    %p142 = scmp.ne.s32.totalorder %s127, %s141
    %p143 = scmp.eq.s32.totalorder %s19, 0
    %p144 = por %p142, %p143
    %s145 = ssub.s32 %s20, %s32
    %s146 = ssub.s32 %s21, %s28
    %s147 = sor.u32 %s145, %s146
    %p148 = scmp.eq.s32.totalorder %s147, 0
    %s150 = sadd.s32 %s149, 1
    %s151 = scalar_select %p148, %s149, %s150
    %p154 = pneg %p148
    %p155 = scmp.eq.s32.totalorder %s13, 3
    %p156 = por %p154, %p155
    %p157 = scmp.ne.s32.totalorder %s149, %s152
    %p158 = scmp.eq.s32.totalorder %s13, 0
    %p159 = por %p157, %p158
    %p160 = scmp.ne.s32.totalorder %s149, %s152
    %p161 = scmp.eq.s32.totalorder %s18, 3
    %p162 = por %p160, %p161
    %p163 = scmp.ne.s32.totalorder %s152, %s153
    %p164 = scmp.eq.s32.totalorder %s18, 0
    %p165 = por %p163, %p164
    %p166 = scmp.ne.s32.totalorder %s152, %s153
    %p167 = scmp.eq.s32.totalorder %s19, 3
    %p168 = por %p166, %p167
    %p170 = scmp.ne.s32.totalorder %s153, %s169
    %p171 = scmp.eq.s32.totalorder %s19, 0
    %p172 = por %p170, %p171
    %s173 = ssub.s32 %s20, %s32
    %s174 = ssub.s32 %s21, %s28
    %s175 = sor.u32 %s173, %s174
    %p176 = scmp.eq.s32.totalorder %s175, 0
    %s178 = sadd.s32 %s177, 1
    %s179 = scalar_select %p176, %s177, %s178
    %p182 = pneg %p176
    %p183 = scmp.eq.s32.totalorder %s13, 3
    %p184 = por %p182, %p183
    %p185 = scmp.ne.s32.totalorder %s177, %s180
    %p186 = scmp.eq.s32.totalorder %s13, 0
    %p187 = por %p185, %p186
    %p188 = scmp.ne.s32.totalorder %s177, %s180
    %p189 = scmp.eq.s32.totalorder %s18, 3
    %p190 = por %p188, %p189
    %p191 = scmp.ne.s32.totalorder %s180, %s181
    %p192 = scmp.eq.s32.totalorder %s18, 0
    %p193 = por %p191, %p192
    %p194 = scmp.ne.s32.totalorder %s180, %s181
    %p195 = scmp.eq.s32.totalorder %s19, 3
    %p196 = por %p194, %p195
    %p198 = scmp.ne.s32.totalorder %s181, %s197
    %p199 = scmp.eq.s32.totalorder %s19, 0
    %p200 = por %p198, %p199
    %p201 = scmp.le.s32.totalorder 1, %s13
    %p202 = scmp.lt.s32.totalorder %s13, 5
    %p203 = pnand %p201, %p202
    %p204 = pneg %p203
    // Predicated region
    $region9: #{tnet_forward.3} parent=5 // pred_check
      _
    $region10: #{tnet_forward.3} parent=5 // pred_check_branch
      %206 = sbr.rel (%p203) target = $region12
    $region11: #{tnet_forward.3} parent=5 // pred_region
      %s207 = ssub.s32 %s13, 1
      // Predicated region
      $region13: #{tnet_forward.3} parent=11 // pred_check
        %p208 = pneg %p74
      $region14: #{tnet_forward.3} parent=11 // pred_check_branch
        %210 = sbr.rel (%p208) target = $region16
      $region15: #{tnet_forward.3} parent=11 // pred_region
        _
      $region16: #{tnet_forward.3} parent=11 // pred_fallthru
        _
      // Predicated region
      $region17: #{tnet_forward.3} parent=11 // pred_check
        %p211 = pneg %p95
      $region18: #{tnet_forward.3} parent=11 // pred_check_branch
        %213 = sbr.rel (%p211) target = $region20
      $region19: #{tnet_forward.3} parent=11 // pred_region
        _
      $region20: #{tnet_forward.3} parent=11 // pred_fallthru
        _
      // Predicated region
      $region21: #{tnet_forward.3} parent=11 // pred_check
        %p214 = pneg %p116
      $region22: #{tnet_forward.3} parent=11 // pred_check_branch
        %216 = sbr.rel (%p214) target = $region24
      $region23: #{tnet_forward.3} parent=11 // pred_region
        _
      $region24: #{tnet_forward.3} parent=11 // pred_fallthru
        _
      // Predicated region
      $region25: #{tnet_forward.3} parent=11 // pred_check
        %p217 = pneg %p137
      $region26: #{tnet_forward.3} parent=11 // pred_check_branch
        %219 = sbr.rel (%p217) target = $region28
      $region27: #{tnet_forward.3} parent=11 // pred_region
        _
      $region28: #{tnet_forward.3} parent=11 // pred_fallthru
        _
    $region12: #{tnet_forward.3} parent=5 // pred_fallthru
      _
    %p220 = scmp.lt.s32.totalorder %s13, 4
    // Predicated region
    $region29: #{tnet_forward.3} parent=5 // pred_check
      %p221 = pneg %p220
    $region30: #{tnet_forward.3} parent=5 // pred_check_branch
      %223 = sbr.rel (%p221) target = $region32
    $region31: #{tnet_forward.3} parent=5 // pred_region
      // Predicated region
      $region33: #{tnet_forward.3} parent=31 // pred_check
        %p224 = pneg %p47
      $region34: #{tnet_forward.3} parent=31 // pred_check_branch
        %226 = sbr.rel (%p224) target = $region36
      $region35: #{tnet_forward.3} parent=31 // pred_region
        %s227 = smul.u32 16, %s21
        %p228 = scmp.lt.s32.totalorder %s20, 1
        %s229 = scalar_select %p228, %s20, 1
        %p230 = scmp.lt.s32.totalorder %s227, 31
        %s231 = scalar_select %p230, %s227, 31
        %s232 = smul.addr %s229, 32
        %s233 = sadd.s32 %s231, %s232
        %s234 = smul.addr %s233, 4
        %s235 = scalar_lea.vmem %s0, %s234
        %s236 = smul.u32 16, %s21
      $region36: #{tnet_forward.3} parent=31 // pred_fallthru
        _
    $region32: #{tnet_forward.3} parent=5 // pred_fallthru
      _
    %p237 = scmp.le.s32.totalorder 1, %s13
    %p238 = scmp.lt.s32.totalorder %s13, 5
    %p239 = pnand %p237, %p238
    %p240 = pneg %p239
    // Predicated region
    $region37: #{tnet_forward.3} parent=5 // pred_check
      _
    $region38: #{tnet_forward.3} parent=5 // pred_check_branch
      %242 = sbr.rel (%p239) target = $region40
    $region39: #{tnet_forward.3} parent=5 // pred_region
      %s243 = ssub.s32 %s13, 1
      %s244 = smul.u32 16, %s23
      %p245 = scmp.lt.s32.totalorder %s22, 1
      %s246 = scalar_select %p245, %s22, 1
      %p247 = scmp.lt.s32.totalorder %s244, 31
      %s248 = scalar_select %p247, %s244, 31
      %s249 = smul.addr %s246, 32
      %s250 = sadd.s32 %s248, %s249
      %s251 = smul.addr %s250, 4
      %s252 = scalar_lea.vmem %s0, %s251
      %p253 = pneg %p53
      %p254 = pneg %p50
      %p255 = pneg %p74
      %p256 = pneg %p71
      %p257 = pneg %p95
      %p258 = pneg %p92
      %p259 = pneg %p116
      %p260 = pneg %p113
      %p261 = pneg %p137
      %p262 = pneg %p134
      %p263 = pneg %p165
      %p264 = pneg %p162
      %p265 = scmp.lt.s32.totalorder %s22, 1
      %s266 = scalar_select %p265, %s22, 1
      %p267 = scmp.lt.s32.totalorder %s23, 1
      %s268 = scalar_select %p267, %s23, 1
      %s269 = smul.addr %s266, 2
      %s270 = sadd.s32 %s268, %s269
      %s271 = scalar_lea.vmem %s5, %s270
      %p272 = pneg %p193
      %p273 = pneg %p190
      %p274 = scmp.lt.s32.totalorder %s22, 1
      %s275 = scalar_select %p274, %s22, 1
      %p276 = scmp.lt.s32.totalorder %s23, 1
      %s277 = scalar_select %p276, %s23, 1
      %s278 = smul.addr %s275, 2
      %s279 = sadd.s32 %s277, %s278
      %s280 = scalar_lea.vmem %s6, %s279
      %s281 = smul.u32 16, %s23
      %p282 = scmp.lt.s32.totalorder %s22, 1
      %s283 = scalar_select %p282, %s22, 1
      %p284 = scmp.lt.s32.totalorder %s281, 31
      %s285 = scalar_select %p284, %s281, 31
      %s286 = smul.addr %s283, 32
      %s287 = sadd.s32 %s285, %s286
      %s288 = smul.addr %s287, 4
      %s289 = scalar_lea.vmem %s0, %s288
      %s290 = smul.u32 16, %s23
      %p291 = scmp.lt.s32.totalorder %s22, 1
      %s292 = scalar_select %p291, %s22, 1
      %p293 = scmp.lt.s32.totalorder %s23, 1
      %s294 = scalar_select %p293, %s23, 1
      %s295 = smul.addr %s292, 2
      %s296 = sadd.s32 %s294, %s295
      %s297 = scalar_lea.vmem %s5, %s296
      %p298 = scmp.lt.s32.totalorder %s22, 1
      %s299 = scalar_select %p298, %s22, 1
      %p300 = scmp.lt.s32.totalorder %s23, 1
      %s301 = scalar_select %p300, %s23, 1
      %s302 = smul.addr %s299, 2
      %s303 = sadd.s32 %s301, %s302
      %s304 = scalar_lea.vmem %s6, %s303
      %v306 = vld [vmem:[%s289] sm:$0xf]
      %v307 = vld [vmem:[%s289 + $0x4] sm:$0xf]
      %v308 = vld [vmem:[%s289 + $0x8] sm:$0xf]
      %v309 = vld [vmem:[%s289 + $0xc] sm:$0xf]
      %v310 = vld [vmem:[%s289 + $0x10] sm:$0xf]
      %v311 = vld [vmem:[%s289 + $0x14] sm:$0xf]
      %v312 = vld [vmem:[%s289 + $0x18] sm:$0xf]
      %v313 = vld [vmem:[%s289 + $0x1c] sm:$0xf]
      %v314 = vld [vmem:[%s289 + $0x20] sm:$0xf]
      %v315 = vld [vmem:[%s289 + $0x24] sm:$0xf]
      %v316 = vld [vmem:[%s289 + $0x28] sm:$0xf]
      %v317 = vld [vmem:[%s289 + $0x2c] sm:$0xf]
      %v318 = vld [vmem:[%s289 + $0x30] sm:$0xf]
      %v319 = vld [vmem:[%s289 + $0x34] sm:$0xf]
      %v320 = vld [vmem:[%s289 + $0x38] sm:$0xf]
      %v321 = vld [vmem:[%s289 + $0x3c] sm:$0xf]
      %v322 = vld [vmem:[%s3] sm:$0xf]
      %v339 = vunpack.c.l.b16 %v306
      %v340 = vunpack.c.l.b16 %v307
      %v341 = vunpack.c.l.b16 %v308
      %v342 = vunpack.c.l.b16 %v309
      %v343 = vunpack.c.l.b16 %v310
      %v344 = vunpack.c.l.b16 %v311
      %v345 = vunpack.c.l.b16 %v312
      %v346 = vunpack.c.l.b16 %v313
      %v347 = vunpack.c.l.b16 %v314
      %v348 = vunpack.c.l.b16 %v315
      %v349 = vunpack.c.l.b16 %v316
      %v350 = vunpack.c.l.b16 %v317
      %v351 = vunpack.c.l.b16 %v318
      %v352 = vunpack.c.l.b16 %v319
      %v353 = vunpack.c.l.b16 %v320
      %v354 = vunpack.c.l.b16 %v321
      %v355 = vpack.c.b16 %v340, %v339
      %v356 = vpack.c.b16 %v342, %v341
      %v357 = vpack.c.b16 %v344, %v343
      %v358 = vpack.c.b16 %v346, %v345
      %v359 = vpack.c.b16 %v348, %v347
      %v360 = vpack.c.b16 %v350, %v349
      %v361 = vpack.c.b16 %v352, %v351
      %v362 = vpack.c.b16 %v354, %v353
      %vm363 = vcmask 64512
      %v365 = vsel %vm363, %v355, 0
      %v368 = vsel %vm363, %v356, 0
      %v371 = vsel %vm363, %v357, 0
      %v374 = vsel %vm363, %v358, 0
      %v377 = vsel %vm363, %v359, 0
      %v380 = vsel %vm363, %v360, 0
      %v383 = vsel %vm363, %v361, 0
      %v386 = vsel %vm363, %v362, 0
      %vm388 = vcmask 1043456
      %v390 = vsel %vm388, %v322, 0
      %392 = vmatpush.bf16.msra.mxu0 0
      %393 = vmatpush.bf16.msra.mxu0 0
      %394 = vmatpush.bf16.msra.mxu0 0
      %395 = vmatpush.bf16.msra.mxu0 0
      %396 = vmatpush.bf16.msra.mxu0 0
      %397 = vmatpush.bf16.msra.mxu0 0
      %398 = vmatpush.bf16.msra.mxu0 0
      %399 = vmatpush.bf16.msra.mxu0 %v390
      %400 = vmatmul.bf16.gmra.mxu0 %v365
      %v401 = vpop.f32.mrf.mxu0
      %v402 = vadd.f32 0.0, %v401
      %v403 = vpop.f32.mrf.mxu0
      %v404 = vadd.f32 0.0, %v403
      %405 = vmatmul.bf16.gmra.mxu0 %v368
      %v406 = vpop.f32.mrf.mxu0
      %v407 = vadd.f32 0.0, %v406
      %v408 = vpop.f32.mrf.mxu0
      %v409 = vadd.f32 0.0, %v408
      %410 = vmatmul.bf16.gmra.mxu0 %v371
      %v411 = vpop.f32.mrf.mxu0
      %v412 = vadd.f32 0.0, %v411
      %v413 = vpop.f32.mrf.mxu0
      %v414 = vadd.f32 0.0, %v413
      %415 = vmatmul.bf16.gmra.mxu0 %v374
      %v416 = vpop.f32.mrf.mxu0
      %v417 = vadd.f32 0.0, %v416
      %v418 = vpop.f32.mrf.mxu0
      %v419 = vadd.f32 0.0, %v418
      %420 = vmatmul.bf16.gmra.mxu0 %v377
      %v421 = vpop.f32.mrf.mxu0
      %v422 = vadd.f32 0.0, %v421
      %v423 = vpop.f32.mrf.mxu0
      %v424 = vadd.f32 0.0, %v423
      %425 = vmatmul.bf16.gmra.mxu0 %v380
      %v426 = vpop.f32.mrf.mxu0
      %v427 = vadd.f32 0.0, %v426
      %v428 = vpop.f32.mrf.mxu0
      %v429 = vadd.f32 0.0, %v428
      %430 = vmatmul.bf16.gmra.mxu0 %v383
      %v431 = vpop.f32.mrf.mxu0
      %v432 = vadd.f32 0.0, %v431
      %v433 = vpop.f32.mrf.mxu0
      %v434 = vadd.f32 0.0, %v433
      %435 = vmatmul.bf16.gmra.mxu0 %v386
      %v436 = vpop.f32.mrf.mxu0
      %v437 = vadd.f32 0.0, %v436
      %v438 = vpop.f32.mrf.mxu0
      %v439 = vadd.f32 0.0, %v438
      %440 = vdwg.mxu0
      %v441 = vld [vmem:[%s1] sm:$0x1]
      %v443 = vperm.slane %v441, 0
      %v445 = vmul.f32 %v402, %v443
      %v446 = vmul.f32 %v404, %v443
      %v447 = vmul.f32 %v407, %v443
      %v448 = vmul.f32 %v409, %v443
      %v449 = vmul.f32 %v412, %v443
      %v450 = vmul.f32 %v414, %v443
      %v451 = vmul.f32 %v417, %v443
      %v452 = vmul.f32 %v419, %v443
      %v453 = vmul.f32 %v422, %v443
      %v454 = vmul.f32 %v424, %v443
      %v455 = vmul.f32 %v427, %v443
      %v456 = vmul.f32 %v429, %v443
      %v457 = vmul.f32 %v432, %v443
      %v458 = vmul.f32 %v434, %v443
      %v459 = vmul.f32 %v437, %v443
      %v460 = vmul.f32 %v439, %v443
      %v461 = vld [vmem:[%s2] sm:$0x1]
      %v463 = vperm.slane %v461, 0
      %v465 = vadd.f32 %v445, %v463
      %v466 = vadd.f32 %v446, %v463
      %v467 = vadd.f32 %v447, %v463
      %v468 = vadd.f32 %v448, %v463
      %v469 = vadd.f32 %v449, %v463
      %v470 = vadd.f32 %v450, %v463
      %v471 = vadd.f32 %v451, %v463
      %v472 = vadd.f32 %v452, %v463
      %v473 = vadd.f32 %v453, %v463
      %v474 = vadd.f32 %v454, %v463
      %v475 = vadd.f32 %v455, %v463
      %v476 = vadd.f32 %v456, %v463
      %v477 = vadd.f32 %v457, %v463
      %v478 = vadd.f32 %v458, %v463
      %v479 = vadd.f32 %v459, %v463
      %v480 = vadd.f32 %v460, %v463
      %v481 = vmax.f32 %v465, 0.0
      %v482 = vmax.f32 %v466, 0.0
      %v483 = vmax.f32 %v467, 0.0
      %v484 = vmax.f32 %v468, 0.0
      %v485 = vmax.f32 %v469, 0.0
      %v486 = vmax.f32 %v470, 0.0
      %v487 = vmax.f32 %v471, 0.0
      %v488 = vmax.f32 %v472, 0.0
      %v489 = vmax.f32 %v473, 0.0
      %v490 = vmax.f32 %v474, 0.0
      %v491 = vmax.f32 %v475, 0.0
      %v492 = vmax.f32 %v476, 0.0
      %v493 = vmax.f32 %v477, 0.0
      %v494 = vmax.f32 %v478, 0.0
      %v495 = vmax.f32 %v479, 0.0
      %v496 = vmax.f32 %v480, 0.0
      %s497 = smul.u32 %s23, 128
      %v498 = vlaneseq
      %v499 = vshrl.u32 %v498, 7
      %v500 = vadd.s32 %v499, 8
      %v501 = vadd.s32 %v499, 16
      %v502 = vadd.s32 %v499, 24
      %v503 = vadd.s32 %v499, 32
      %v504 = vadd.s32 %v499, 40
      %v505 = vadd.s32 %v499, 48
      %v506 = vadd.s32 %v499, 56
      %v507 = vadd.s32 %v499, 64
      %v508 = vadd.s32 %v499, 72
      %v509 = vadd.s32 %v499, 80
      %v510 = vadd.s32 %v499, 88
      %v511 = vadd.s32 %v499, 96
      %v512 = vadd.s32 %v499, 104
      %v513 = vadd.s32 %v499, 112
      %v514 = vadd.s32 %v499, 120
      %v515 = vstv %s497
      %v516 = vadd.s32 %v515, %v499
      %v517 = vadd.s32 %v515, %v500
      %v518 = vadd.s32 %v515, %v501
      %v519 = vadd.s32 %v515, %v502
      %v520 = vadd.s32 %v515, %v503
      %v521 = vadd.s32 %v515, %v504
      %v522 = vadd.s32 %v515, %v505
      %v523 = vadd.s32 %v515, %v506
      %v524 = vadd.s32 %v515, %v507
      %v525 = vadd.s32 %v515, %v508
      %v526 = vadd.s32 %v515, %v509
      %v527 = vadd.s32 %v515, %v510
      %v528 = vadd.s32 %v515, %v511
      %v529 = vadd.s32 %v515, %v512
      %v530 = vadd.s32 %v515, %v513
      %v531 = vadd.s32 %v515, %v514
      %vm532 = vcmp.lt.s32.totalorder %v516, 250
      %vm533 = vcmp.lt.s32.totalorder %v517, 250
      %vm534 = vcmp.lt.s32.totalorder %v518, 250
      %vm535 = vcmp.lt.s32.totalorder %v519, 250
      %vm536 = vcmp.lt.s32.totalorder %v520, 250
      %vm537 = vcmp.lt.s32.totalorder %v521, 250
      %vm538 = vcmp.lt.s32.totalorder %v522, 250
      %vm539 = vcmp.lt.s32.totalorder %v523, 250
      %vm540 = vcmp.lt.s32.totalorder %v524, 250
      %vm541 = vcmp.lt.s32.totalorder %v525, 250
      %vm542 = vcmp.lt.s32.totalorder %v526, 250
      %vm543 = vcmp.lt.s32.totalorder %v527, 250
      %vm544 = vcmp.lt.s32.totalorder %v528, 250
      %vm545 = vcmp.lt.s32.totalorder %v529, 250
      %vm546 = vcmp.lt.s32.totalorder %v530, 250
      %vm547 = vcmp.lt.s32.totalorder %v531, 250
      %v548 = vsel %vm532, 1, 0
      %v549 = vsel %vm533, 1, 0
      %v550 = vsel %vm534, 1, 0
      %v551 = vsel %vm535, 1, 0
      %v552 = vsel %vm536, 1, 0
      %v553 = vsel %vm537, 1, 0
      %v554 = vsel %vm538, 1, 0
      %v555 = vsel %vm539, 1, 0
      %v556 = vsel %vm540, 1, 0
      %v557 = vsel %vm541, 1, 0
      %v558 = vsel %vm542, 1, 0
      %v559 = vsel %vm543, 1, 0
      %v560 = vsel %vm544, 1, 0
      %v561 = vsel %vm545, 1, 0
      %v562 = vsel %vm546, 1, 0
      %v563 = vsel %vm547, 1, 0
      %v564 = vcvt.s32.f32 %v548
      %v565 = vcvt.s32.f32 %v549
      %v566 = vcvt.s32.f32 %v550
      %v567 = vcvt.s32.f32 %v551
      %v568 = vcvt.s32.f32 %v552
      %v569 = vcvt.s32.f32 %v553
      %v570 = vcvt.s32.f32 %v554
      %v571 = vcvt.s32.f32 %v555
      %v572 = vcvt.s32.f32 %v556
      %v573 = vcvt.s32.f32 %v557
      %v574 = vcvt.s32.f32 %v558
      %v575 = vcvt.s32.f32 %v559
      %v576 = vcvt.s32.f32 %v560
      %v577 = vcvt.s32.f32 %v561
      %v578 = vcvt.s32.f32 %v562
      %v579 = vcvt.s32.f32 %v563
      %v580 = vmul.f32 %v481, %v564
      %v581 = vmul.f32 %v482, %v565
      %v582 = vmul.f32 %v483, %v566
      %v583 = vmul.f32 %v484, %v567
      %v584 = vmul.f32 %v485, %v568
      %v585 = vmul.f32 %v486, %v569
      %v586 = vmul.f32 %v487, %v570
      %v587 = vmul.f32 %v488, %v571
      %v588 = vmul.f32 %v489, %v572
      %v589 = vmul.f32 %v490, %v573
      %v590 = vmul.f32 %v491, %v574
      %v591 = vmul.f32 %v492, %v575
      %v592 = vmul.f32 %v493, %v576
      %v593 = vmul.f32 %v494, %v577
      %v594 = vmul.f32 %v495, %v578
      %v595 = vmul.f32 %v496, %v579
      %s596 = ssub.s32 250, %s497
      %p597 = scmp.lt.s32.totalorder %s596, 128
      %s598 = scalar_select %p597, %s596, 128
      %s599 = scvt.s32.f32 %s598
      %v600 = vpack.c.bf16 %v581, %v580
      %v601 = vpack.c.bf16 %v583, %v582
      %v602 = vpack.c.bf16 %v585, %v584
      %v603 = vpack.c.bf16 %v587, %v586
      %v604 = vpack.c.bf16 %v589, %v588
      %v605 = vpack.c.bf16 %v591, %v590
      %v606 = vpack.c.bf16 %v593, %v592
      %v607 = vpack.c.bf16 %v595, %v594
      %v608 = vld [vmem:[%s4] sm:$0xf]
      %v609 = vld [vmem:[%s4 + $0x4] sm:$0xf]
      %v610 = vld [vmem:[%s4 + $0x8] sm:$0xf]
      %v611 = vld [vmem:[%s4 + $0xc] sm:$0xf]
      %v612 = vld [vmem:[%s4 + $0x10] sm:$0xf]
      %v613 = vld [vmem:[%s4 + $0x14] sm:$0xf]
      %v614 = vld [vmem:[%s4 + $0x18] sm:$0xf]
      %v615 = vld [vmem:[%s4 + $0x1c] sm:$0xf]
      %v624 = vunpack.c.l.b16 %v608
      %v625 = vunpack.c.l.b16 %v609
      %v626 = vunpack.c.l.b16 %v610
      %v627 = vunpack.c.l.b16 %v611
      %v628 = vunpack.c.l.b16 %v612
      %v629 = vunpack.c.l.b16 %v613
      %v630 = vunpack.c.l.b16 %v614
      %v631 = vunpack.c.l.b16 %v615
      %v632 = vpack.c.b16 %v625, %v624
      %v633 = vpack.c.b16 %v627, %v626
      %v634 = vpack.c.b16 %v629, %v628
      %v635 = vpack.c.b16 %v631, %v630
      %vm640 = vcmask 523264
      %v642 = vsel %vm640, %v600, 0
      %v645 = vsel %vm640, %v601, 0
      %v648 = vsel %vm640, %v602, 0
      %v651 = vsel %vm640, %v603, 0
      %v654 = vsel %vm640, %v604, 0
      %v657 = vsel %vm640, %v605, 0
      %v660 = vsel %vm640, %v606, 0
      %v663 = vsel %vm640, %v607, 0
      %665 = vmatpush.bf16.msra.mxu0 0
      %666 = vmatpush.bf16.msra.mxu0 0
      %667 = vmatpush.bf16.msra.mxu0 0
      %668 = vmatpush.bf16.msra.mxu0 0
      %669 = vmatpush.bf16.msra.mxu0 %v635
      %670 = vmatpush.bf16.msra.mxu0 %v634
      %671 = vmatpush.bf16.msra.mxu0 %v633
      %672 = vmatpush.bf16.msra.mxu0 %v632
      %673 = vmatmul.bf16.gmra.mxu0 %v642
      %v674 = vpop.f32.mrf.mxu0
      %v675 = vadd.f32 0.0, %v674
      %v676 = vpop.f32.mrf.mxu0
      %v677 = vadd.f32 0.0, %v676
      %678 = vmatmul.bf16.gmra.mxu0 %v645
      %v679 = vpop.f32.mrf.mxu0
      %v680 = vadd.f32 0.0, %v679
      %v681 = vpop.f32.mrf.mxu0
      %v682 = vadd.f32 0.0, %v681
      %683 = vmatmul.bf16.gmra.mxu0 %v648
      %v684 = vpop.f32.mrf.mxu0
      %v685 = vadd.f32 0.0, %v684
      %v686 = vpop.f32.mrf.mxu0
      %v687 = vadd.f32 0.0, %v686
      %688 = vmatmul.bf16.gmra.mxu0 %v651
      %v689 = vpop.f32.mrf.mxu0
      %v690 = vadd.f32 0.0, %v689
      %v691 = vpop.f32.mrf.mxu0
      %v692 = vadd.f32 0.0, %v691
      %693 = vmatmul.bf16.gmra.mxu0 %v654
      %v694 = vpop.f32.mrf.mxu0
      %v695 = vadd.f32 0.0, %v694
      %v696 = vpop.f32.mrf.mxu0
      %v697 = vadd.f32 0.0, %v696
      %698 = vmatmul.bf16.gmra.mxu0 %v657
      %v699 = vpop.f32.mrf.mxu0
      %v700 = vadd.f32 0.0, %v699
      %v701 = vpop.f32.mrf.mxu0
      %v702 = vadd.f32 0.0, %v701
      %703 = vmatmul.bf16.gmra.mxu0 %v660
      %v704 = vpop.f32.mrf.mxu0
      %v705 = vadd.f32 0.0, %v704
      %v706 = vpop.f32.mrf.mxu0
      %v707 = vadd.f32 0.0, %v706
      %708 = vmatmul.bf16.gmra.mxu0 %v663
      %v709 = vpop.f32.mrf.mxu0
      %v710 = vadd.f32 0.0, %v709
      %v711 = vpop.f32.mrf.mxu0
      %v712 = vadd.f32 0.0, %v711
      %713 = vdwg.mxu0
      %v714 = vadd.f32 %v675, %v677
      %v715 = vadd.f32 %v714, %v680
      %v716 = vadd.f32 %v715, %v682
      %v717 = vadd.f32 %v716, %v685
      %v718 = vadd.f32 %v717, %v687
      %v719 = vadd.f32 %v718, %v690
      %v720 = vadd.f32 %v719, %v692
      %v721 = vadd.f32 %v720, %v695
      %v722 = vadd.f32 %v721, %v697
      %v723 = vadd.f32 %v722, %v700
      %v724 = vadd.f32 %v723, %v702
      %v725 = vadd.f32 %v724, %v705
      %v726 = vadd.f32 %v725, %v707
      %v727 = vadd.f32 %v726, %v710
      %v728 = vadd.f32 %v727, %v712
      %v729 = vrot.slane %v728, 4
      %v730 = vadd.f32 %v728, %v729
      %v731 = vrot.slane %v730, 2
      %v732 = vadd.f32 %v730, %v731
      %v733 = vrot.slane %v732, 1
      %v734 = vadd.f32 %v732, %v733
      %v735 = vstv %s599
      %v736 = vrcp.pop %v735
      %v737 = vmul.f32 %v735, %v736
      %v738 = vsub.f32 1.0, %v737
      %v739 = vmul.f32 %v736, %v738
      %v740 = vadd.f32 %v736, %v739
      %vm741 = vweird.f32 %v735
      %vm742 = vweird.f32 %v736
      %vm743 = vmor %vm741, %vm742
      %v744 = vsel %vm743, %v736, %v740
      %v745 = vand.u32 2147483647, %v735
      %vm746 = vcmp.eq.f32.partialorder %v745, 8.507059e+37
      %v747 = vand.u32 %v735, 2147483648
      %v748 = vor.u32 1.1754944e-38, %v747
      %v749 = vsel %vm746, %v748, %v744
      %v750 = vmul.f32 %v734, %v749
      %v751 = vsub.f32 %v675, %v750
      %v752 = vsub.f32 %v677, %v750
      %v753 = vsub.f32 %v680, %v750
      %v754 = vsub.f32 %v682, %v750
      %v755 = vsub.f32 %v685, %v750
      %v756 = vsub.f32 %v687, %v750
      %v757 = vsub.f32 %v690, %v750
      %v758 = vsub.f32 %v692, %v750
      %v759 = vsub.f32 %v695, %v750
      %v760 = vsub.f32 %v697, %v750
      %v761 = vsub.f32 %v700, %v750
      %v762 = vsub.f32 %v702, %v750
      %v763 = vsub.f32 %v705, %v750
      %v764 = vsub.f32 %v707, %v750
      %v765 = vsub.f32 %v710, %v750
      %v766 = vsub.f32 %v712, %v750
      %v767 = vmul.f32 %v751, %v564
      %v768 = vmul.f32 %v752, %v565
      %v769 = vmul.f32 %v753, %v566
      %v770 = vmul.f32 %v754, %v567
      %v771 = vmul.f32 %v755, %v568
      %v772 = vmul.f32 %v756, %v569
      %v773 = vmul.f32 %v757, %v570
      %v774 = vmul.f32 %v758, %v571
      %v775 = vmul.f32 %v759, %v572
      %v776 = vmul.f32 %v760, %v573
      %v777 = vmul.f32 %v761, %v574
      %v778 = vmul.f32 %v762, %v575
      %v779 = vmul.f32 %v763, %v576
      %v780 = vmul.f32 %v764, %v577
      %v781 = vmul.f32 %v765, %v578
      %v782 = vmul.f32 %v766, %v579
      %783 = vst [vmem:[%s297] sm:$0x1] %v734
      %v784 = vmul.f32 %v767, %v767
      %v785 = vmul.f32 %v768, %v768
      %v786 = vmul.f32 %v769, %v769
      %v787 = vmul.f32 %v770, %v770
      %v788 = vmul.f32 %v771, %v771
      %v789 = vmul.f32 %v772, %v772
      %v790 = vmul.f32 %v773, %v773
      %v791 = vmul.f32 %v774, %v774
      %v792 = vmul.f32 %v775, %v775
      %v793 = vmul.f32 %v776, %v776
      %v794 = vmul.f32 %v777, %v777
      %v795 = vmul.f32 %v778, %v778
      %v796 = vmul.f32 %v779, %v779
      %v797 = vmul.f32 %v780, %v780
      %v798 = vmul.f32 %v781, %v781
      %v799 = vmul.f32 %v782, %v782
      %v800 = vadd.f32 %v784, %v785
      %v801 = vadd.f32 %v800, %v786
      %v802 = vadd.f32 %v801, %v787
      %v803 = vadd.f32 %v802, %v788
      %v804 = vadd.f32 %v803, %v789
      %v805 = vadd.f32 %v804, %v790
      %v806 = vadd.f32 %v805, %v791
      %v807 = vadd.f32 %v806, %v792
      %v808 = vadd.f32 %v807, %v793
      %v809 = vadd.f32 %v808, %v794
      %v810 = vadd.f32 %v809, %v795
      %v811 = vadd.f32 %v810, %v796
      %v812 = vadd.f32 %v811, %v797
      %v813 = vadd.f32 %v812, %v798
      %v814 = vadd.f32 %v813, %v799
      %v815 = vrot.slane %v814, 4
      %v816 = vadd.f32 %v814, %v815
      %v817 = vrot.slane %v816, 2
      %v818 = vadd.f32 %v816, %v817
      %v819 = vrot.slane %v818, 1
      %v820 = vadd.f32 %v818, %v819
      %821 = vst [vmem:[%s304] sm:$0x1] %v820
      %p822 = scmp.lt.s32.totalorder %s22, 1
      %s823 = scalar_select %p822, %s22, 1
      %p824 = scmp.lt.s32.totalorder %s23, 1
      %s825 = scalar_select %p824, %s23, 1
      %s826 = smul.addr %s823, 2
      %s827 = sadd.s32 %s825, %s826
      %s828 = scalar_lea.vmem %s5, %s827
      %p829 = scmp.lt.s32.totalorder %s22, 1
      %s830 = scalar_select %p829, %s22, 1
      %p831 = scmp.lt.s32.totalorder %s23, 1
      %s832 = scalar_select %p831, %s23, 1
      %s833 = smul.addr %s830, 2
      %s834 = sadd.s32 %s832, %s833
      %s835 = scalar_lea.vmem %s6, %s834
      // Predicated region
      $region41: #{tnet_forward.3} parent=39 // pred_check
        %p836 = pneg %p162
      $region42: #{tnet_forward.3} parent=39 // pred_check_branch
        %838 = sbr.rel (%p836) target = $region44
      $region43: #{tnet_forward.3} parent=39 // pred_region
        _
      $region44: #{tnet_forward.3} parent=39 // pred_fallthru
        _
      // Predicated region
      $region45: #{tnet_forward.3} parent=39 // pred_check
        %p839 = pneg %p190
      $region46: #{tnet_forward.3} parent=39 // pred_check_branch
        %841 = sbr.rel (%p839) target = $region48
      $region47: #{tnet_forward.3} parent=39 // pred_region
        _
      $region48: #{tnet_forward.3} parent=39 // pred_fallthru
        _
    $region40: #{tnet_forward.3} parent=5 // pred_fallthru
      _
    %p842 = scmp.le.s32.totalorder 2, %s13
    // Predicated region
    $region49: #{tnet_forward.3} parent=5 // pred_check
      %p843 = pneg %p842
    $region50: #{tnet_forward.3} parent=5 // pred_check_branch
      %845 = sbr.rel (%p843) target = $region52
    $region51: #{tnet_forward.3} parent=5 // pred_region
      %s846 = ssub.s32 %s13, 2
      // Predicated region
      $region53: #{tnet_forward.3} parent=51 // pred_check
        %p847 = pneg %p168
      $region54: #{tnet_forward.3} parent=51 // pred_check_branch
        %849 = sbr.rel (%p847) target = $region56
      $region55: #{tnet_forward.3} parent=51 // pred_region
        %p850 = scmp.lt.s32.totalorder %s24, 1
        %s851 = scalar_select %p850, %s24, 1
        %p852 = scmp.lt.s32.totalorder %s25, 1
        %s853 = scalar_select %p852, %s25, 1
        %s854 = smul.addr %s851, 2
        %s855 = sadd.s32 %s853, %s854
        %s856 = scalar_lea.vmem %s5, %s855
      $region56: #{tnet_forward.3} parent=51 // pred_fallthru
        _
      // Predicated region
      $region57: #{tnet_forward.3} parent=51 // pred_check
        %p857 = pneg %p196
      $region58: #{tnet_forward.3} parent=51 // pred_check_branch
        %859 = sbr.rel (%p857) target = $region60
      $region59: #{tnet_forward.3} parent=51 // pred_region
        %p860 = scmp.lt.s32.totalorder %s24, 1
        %s861 = scalar_select %p860, %s24, 1
        %p862 = scmp.lt.s32.totalorder %s25, 1
        %s863 = scalar_select %p862, %s25, 1
        %s864 = smul.addr %s861, 2
        %s865 = sadd.s32 %s863, %s864
        %s866 = scalar_lea.vmem %s6, %s865
      $region60: #{tnet_forward.3} parent=51 // pred_fallthru
        _
    $region52: #{tnet_forward.3} parent=5 // pred_fallthru
      _
  $region6: #{tnet_forward.3} parent=0 // loop_footer
    %s17 = sadd.s32 1, %s13
  $region7: #{tnet_forward.3} parent=0 // loop_footer_branch
    %12 = sbr.rel target = $region3
  $region8: #{tnet_forward.3} parent=0 // loop_exit
    _

// kernel: tnet_forward.4
$region0: #{tnet_forward.4}
  #allocation0 [shape = 'u32[]', space=smem, size = 0x4, offset = 0x4, fixed_abs, tag = 'smem constant byte address 0x4 - core index']
  #allocation1 [shape = 'u32[72,128]{1,0:T(1,128)}', space=vmem, size = 0x9000, scoped, tag = 'internal scratch']
  %s0 = inlined_call_operand.vmem [shape: bf16[2,256,8], index: 0, kind: input, shape index: {}]
  %s1 = inlined_call_operand.vmem [shape: f32[1,64], index: 1, kind: input, shape index: {}]
  %s2 = inlined_call_operand.vmem [shape: f32[1,64], index: 2, kind: input, shape index: {}]
  %s3 = inlined_call_operand.vmem [shape: f32[1,128], index: 3, kind: input, shape index: {}]
  %s4 = inlined_call_operand.vmem [shape: f32[1,128], index: 4, kind: input, shape index: {}]
  %s5 = inlined_call_operand.vmem [shape: bf16[8,64], index: 5, kind: input, shape index: {}]
  %s6 = inlined_call_operand.vmem [shape: bf16[64,128], index: 6, kind: input, shape index: {}]
  %s7 = inlined_call_operand.vmem [shape: bf16[128,1024], index: 7, kind: input, shape index: {}]
  %s8 = inlined_call_operand.vmem [shape: f32[2,2,1,1024], index: 8, kind: output, shape index: {0}]
  %s9 = inlined_call_operand.vmem [shape: f32[2,2,1,1024], index: 9, kind: output, shape index: {1}]
  %s10 = inlined_call_operand.vmem [shape: f32[2,2,1,1024], index: 10, kind: output, shape index: {2}]
  %s11 = inlined_call_operand.vmem [shape: f32[2,2,1,1024], index: 11, kind: output, shape index: {3}]
  %12 = xla_tuple %s8, %s9, %s10, %s11
  %s13 = sld [smem:[#allocation0]]
  $region89: #{tnet_forward.4} parent=0
    _
  %s15 = ssub.s32 1, %s13
  %s16 = scalar_select 0, %s15, %s13
  loop: start=0, step=1, limit=6
  $region2: #{tnet_forward.4} parent=0 // loop_pre_header
    _
  $region3: #{tnet_forward.4} parent=0 // loop_header
    %s18 = sphi 0, %s22
    %p19 = scmp.ge.s32.totalorder %s18, 6
    %s25 = sphi 0, %s37
    %s26 = sphi 0, %s33
    %s27 = sphi 0, %s25
    %s28 = sphi 0, %s26
    %s29 = sphi 0, %s27
    %s30 = sphi 0, %s28
    %s42 = sphi 0, %s44
    %s45 = sphi 0, %s42
    %s46 = sphi 0, %s45
    %s62 = sphi 0, %s46
    %s66 = sphi 0, %s66
    %s68 = sphi 0, %s66
    %s69 = sphi 0, %s68
    %s83 = sphi 0, %s69
    %s87 = sphi 0, %s87
    %s89 = sphi 0, %s87
    %s90 = sphi 0, %s89
    %s104 = sphi 0, %s90
    %s108 = sphi 0, %s108
    %s110 = sphi 0, %s108
    %s111 = sphi 0, %s110
    %s125 = sphi 0, %s111
    %s129 = sphi 0, %s129
    %s131 = sphi 0, %s129
    %s132 = sphi 0, %s131
    %s146 = sphi 0, %s132
    %s150 = sphi 0, %s150
    %s152 = sphi 0, %s150
    %s153 = sphi 0, %s152
    %s167 = sphi 0, %s153
    %s171 = sphi 0, %s171
    %s173 = sphi 0, %s171
    %s174 = sphi 0, %s173
    %s188 = sphi 0, %s174
    %s192 = sphi 0, %s192
    %s194 = sphi 0, %s192
    %s195 = sphi 0, %s194
    %s209 = sphi 0, %s195
    %s217 = sphi 0, %s219
    %s220 = sphi 0, %s217
    %s221 = sphi 0, %s220
    %s237 = sphi 0, %s221
    %s245 = sphi 0, %s247
    %s248 = sphi 0, %s245
    %s249 = sphi 0, %s248
    %s265 = sphi 0, %s249
    %s273 = sphi 0, %s275
    %s276 = sphi 0, %s273
    %s277 = sphi 0, %s276
    %s293 = sphi 0, %s277
    %s301 = sphi 0, %s303
    %s304 = sphi 0, %s301
    %s305 = sphi 0, %s304
    %s321 = sphi 0, %s305
  $region4: #{tnet_forward.4} parent=0 // loop_header_branch
    %21 = sbr.rel (%p19) target = $region8
  $region5: #{tnet_forward.4} parent=0 // loop_body
    %s23 = ssub.s32 %s18, 1
    %s24 = ssub.s32 %s18, 2
    %s31 = sadd.s32 1, %s26
    %p32 = scmp.ge.s32.totalorder %s31, 2
    %s33 = scalar_select %p32, 0, %s31
    %s34 = sadd.s32 1, %s25
    %s35 = scalar_select %p32, %s34, %s25
    %p36 = scmp.ge.s32.totalorder %s35, 2
    %s37 = scalar_select %p36, 0, %s35
    %s38 = ssub.s32 %s25, %s37
    %s39 = ssub.s32 %s26, %s33
    %s40 = sor.u32 %s38, %s39
    %p41 = scmp.eq.s32.totalorder %s40, 0
    %s43 = sadd.s32 %s42, 1
    %s44 = scalar_select %p41, %s42, %s43
    %p47 = pneg %p41
    %p48 = scmp.eq.s32.totalorder %s18, 3
    %p49 = por %p47, %p48
    %p50 = scmp.ne.s32.totalorder %s42, %s45
    %p51 = scmp.eq.s32.totalorder %s18, 0
    %p52 = por %p50, %p51
    %p53 = scmp.ne.s32.totalorder %s42, %s45
    %p54 = scmp.eq.s32.totalorder %s23, 3
    %p55 = por %p53, %p54
    %p56 = scmp.ne.s32.totalorder %s45, %s46
    %p57 = scmp.eq.s32.totalorder %s23, 0
    %p58 = por %p56, %p57
    %p59 = scmp.ne.s32.totalorder %s45, %s46
    %p60 = scmp.eq.s32.totalorder %s24, 3
    %p61 = por %p59, %p60
    %p63 = scmp.ne.s32.totalorder %s46, %s62
    %p64 = scmp.eq.s32.totalorder %s24, 0
    %p65 = por %p63, %p64
    %s67 = sadd.s32 %s66, 1
    %p70 = scmp.eq.s32.totalorder %s18, 3
    %p71 = scmp.ne.s32.totalorder %s66, %s68
    %p72 = scmp.eq.s32.totalorder %s18, 0
    %p73 = por %p71, %p72
    %p74 = scmp.ne.s32.totalorder %s66, %s68
    %p75 = scmp.eq.s32.totalorder %s23, 3
    %p76 = por %p74, %p75
    %p77 = scmp.ne.s32.totalorder %s68, %s69
    %p78 = scmp.eq.s32.totalorder %s23, 0
    %p79 = por %p77, %p78
    %p80 = scmp.ne.s32.totalorder %s68, %s69
    %p81 = scmp.eq.s32.totalorder %s24, 3
    %p82 = por %p80, %p81
    %p84 = scmp.ne.s32.totalorder %s69, %s83
    %p85 = scmp.eq.s32.totalorder %s24, 0
    %p86 = por %p84, %p85
    %s88 = sadd.s32 %s87, 1
    %p91 = scmp.eq.s32.totalorder %s18, 3
    %p92 = scmp.ne.s32.totalorder %s87, %s89
    %p93 = scmp.eq.s32.totalorder %s18, 0
    %p94 = por %p92, %p93
    %p95 = scmp.ne.s32.totalorder %s87, %s89
    %p96 = scmp.eq.s32.totalorder %s23, 3
    %p97 = por %p95, %p96
    %p98 = scmp.ne.s32.totalorder %s89, %s90
    %p99 = scmp.eq.s32.totalorder %s23, 0
    %p100 = por %p98, %p99
    %p101 = scmp.ne.s32.totalorder %s89, %s90
    %p102 = scmp.eq.s32.totalorder %s24, 3
    %p103 = por %p101, %p102
    %p105 = scmp.ne.s32.totalorder %s90, %s104
    %p106 = scmp.eq.s32.totalorder %s24, 0
    %p107 = por %p105, %p106
    %s109 = sadd.s32 %s108, 1
    %p112 = scmp.eq.s32.totalorder %s18, 3
    %p113 = scmp.ne.s32.totalorder %s108, %s110
    %p114 = scmp.eq.s32.totalorder %s18, 0
    %p115 = por %p113, %p114
    %p116 = scmp.ne.s32.totalorder %s108, %s110
    %p117 = scmp.eq.s32.totalorder %s23, 3
    %p118 = por %p116, %p117
    %p119 = scmp.ne.s32.totalorder %s110, %s111
    %p120 = scmp.eq.s32.totalorder %s23, 0
    %p121 = por %p119, %p120
    %p122 = scmp.ne.s32.totalorder %s110, %s111
    %p123 = scmp.eq.s32.totalorder %s24, 3
    %p124 = por %p122, %p123
    %p126 = scmp.ne.s32.totalorder %s111, %s125
    %p127 = scmp.eq.s32.totalorder %s24, 0
    %p128 = por %p126, %p127
    %s130 = sadd.s32 %s129, 1
    %p133 = scmp.eq.s32.totalorder %s18, 3
    %p134 = scmp.ne.s32.totalorder %s129, %s131
    %p135 = scmp.eq.s32.totalorder %s18, 0
    %p136 = por %p134, %p135
    %p137 = scmp.ne.s32.totalorder %s129, %s131
    %p138 = scmp.eq.s32.totalorder %s23, 3
    %p139 = por %p137, %p138
    %p140 = scmp.ne.s32.totalorder %s131, %s132
    %p141 = scmp.eq.s32.totalorder %s23, 0
    %p142 = por %p140, %p141
    %p143 = scmp.ne.s32.totalorder %s131, %s132
    %p144 = scmp.eq.s32.totalorder %s24, 3
    %p145 = por %p143, %p144
    %p147 = scmp.ne.s32.totalorder %s132, %s146
    %p148 = scmp.eq.s32.totalorder %s24, 0
    %p149 = por %p147, %p148
    %s151 = sadd.s32 %s150, 1
    %p154 = scmp.eq.s32.totalorder %s18, 3
    %p155 = scmp.ne.s32.totalorder %s150, %s152
    %p156 = scmp.eq.s32.totalorder %s18, 0
    %p157 = por %p155, %p156
    %p158 = scmp.ne.s32.totalorder %s150, %s152
    %p159 = scmp.eq.s32.totalorder %s23, 3
    %p160 = por %p158, %p159
    %p161 = scmp.ne.s32.totalorder %s152, %s153
    %p162 = scmp.eq.s32.totalorder %s23, 0
    %p163 = por %p161, %p162
    %p164 = scmp.ne.s32.totalorder %s152, %s153
    %p165 = scmp.eq.s32.totalorder %s24, 3
    %p166 = por %p164, %p165
    %p168 = scmp.ne.s32.totalorder %s153, %s167
    %p169 = scmp.eq.s32.totalorder %s24, 0
    %p170 = por %p168, %p169
    %s172 = sadd.s32 %s171, 1
    %p175 = scmp.eq.s32.totalorder %s18, 3
    %p176 = scmp.ne.s32.totalorder %s171, %s173
    %p177 = scmp.eq.s32.totalorder %s18, 0
    %p178 = por %p176, %p177
    %p179 = scmp.ne.s32.totalorder %s171, %s173
    %p180 = scmp.eq.s32.totalorder %s23, 3
    %p181 = por %p179, %p180
    %p182 = scmp.ne.s32.totalorder %s173, %s174
    %p183 = scmp.eq.s32.totalorder %s23, 0
    %p184 = por %p182, %p183
    %p185 = scmp.ne.s32.totalorder %s173, %s174
    %p186 = scmp.eq.s32.totalorder %s24, 3
    %p187 = por %p185, %p186
    %p189 = scmp.ne.s32.totalorder %s174, %s188
    %p190 = scmp.eq.s32.totalorder %s24, 0
    %p191 = por %p189, %p190
    %s193 = sadd.s32 %s192, 1
    %p196 = scmp.eq.s32.totalorder %s18, 3
    %p197 = scmp.ne.s32.totalorder %s192, %s194
    %p198 = scmp.eq.s32.totalorder %s18, 0
    %p199 = por %p197, %p198
    %p200 = scmp.ne.s32.totalorder %s192, %s194
    %p201 = scmp.eq.s32.totalorder %s23, 3
    %p202 = por %p200, %p201
    %p203 = scmp.ne.s32.totalorder %s194, %s195
    %p204 = scmp.eq.s32.totalorder %s23, 0
    %p205 = por %p203, %p204
    %p206 = scmp.ne.s32.totalorder %s194, %s195
    %p207 = scmp.eq.s32.totalorder %s24, 3
    %p208 = por %p206, %p207
    %p210 = scmp.ne.s32.totalorder %s195, %s209
    %p211 = scmp.eq.s32.totalorder %s24, 0
    %p212 = por %p210, %p211
    %s213 = ssub.s32 %s25, %s37
    %s214 = ssub.s32 %s26, %s33
    %s215 = sor.u32 %s213, %s214
    %p216 = scmp.eq.s32.totalorder %s215, 0
    %s218 = sadd.s32 %s217, 1
    %s219 = scalar_select %p216, %s217, %s218
    %p222 = pneg %p216
    %p223 = scmp.eq.s32.totalorder %s18, 3
    %p224 = por %p222, %p223
    %p225 = scmp.ne.s32.totalorder %s217, %s220
    %p226 = scmp.eq.s32.totalorder %s18, 0
    %p227 = por %p225, %p226
    %p228 = scmp.ne.s32.totalorder %s217, %s220
    %p229 = scmp.eq.s32.totalorder %s23, 3
    %p230 = por %p228, %p229
    %p231 = scmp.ne.s32.totalorder %s220, %s221
    %p232 = scmp.eq.s32.totalorder %s23, 0
    %p233 = por %p231, %p232
    %p234 = scmp.ne.s32.totalorder %s220, %s221
    %p235 = scmp.eq.s32.totalorder %s24, 3
    %p236 = por %p234, %p235
    %p238 = scmp.ne.s32.totalorder %s221, %s237
    %p239 = scmp.eq.s32.totalorder %s24, 0
    %p240 = por %p238, %p239
    %s241 = ssub.s32 %s25, %s37
    %s242 = ssub.s32 %s26, %s33
    %s243 = sor.u32 %s241, %s242
    %p244 = scmp.eq.s32.totalorder %s243, 0
    %s246 = sadd.s32 %s245, 1
    %s247 = scalar_select %p244, %s245, %s246
    %p250 = pneg %p244
    %p251 = scmp.eq.s32.totalorder %s18, 3
    %p252 = por %p250, %p251
    %p253 = scmp.ne.s32.totalorder %s245, %s248
    %p254 = scmp.eq.s32.totalorder %s18, 0
    %p255 = por %p253, %p254
    %p256 = scmp.ne.s32.totalorder %s245, %s248
    %p257 = scmp.eq.s32.totalorder %s23, 3
    %p258 = por %p256, %p257
    %p259 = scmp.ne.s32.totalorder %s248, %s249
    %p260 = scmp.eq.s32.totalorder %s23, 0
    %p261 = por %p259, %p260
    %p262 = scmp.ne.s32.totalorder %s248, %s249
    %p263 = scmp.eq.s32.totalorder %s24, 3
    %p264 = por %p262, %p263
    %p266 = scmp.ne.s32.totalorder %s249, %s265
    %p267 = scmp.eq.s32.totalorder %s24, 0
    %p268 = por %p266, %p267
    %s269 = ssub.s32 %s25, %s37
    %s270 = ssub.s32 %s26, %s33
    %s271 = sor.u32 %s269, %s270
    %p272 = scmp.eq.s32.totalorder %s271, 0
    %s274 = sadd.s32 %s273, 1
    %s275 = scalar_select %p272, %s273, %s274
    %p278 = pneg %p272
    %p279 = scmp.eq.s32.totalorder %s18, 3
    %p280 = por %p278, %p279
    %p281 = scmp.ne.s32.totalorder %s273, %s276
    %p282 = scmp.eq.s32.totalorder %s18, 0
    %p283 = por %p281, %p282
    %p284 = scmp.ne.s32.totalorder %s273, %s276
    %p285 = scmp.eq.s32.totalorder %s23, 3
    %p286 = por %p284, %p285
    %p287 = scmp.ne.s32.totalorder %s276, %s277
    %p288 = scmp.eq.s32.totalorder %s23, 0
    %p289 = por %p287, %p288
    %p290 = scmp.ne.s32.totalorder %s276, %s277
    %p291 = scmp.eq.s32.totalorder %s24, 3
    %p292 = por %p290, %p291
    %p294 = scmp.ne.s32.totalorder %s277, %s293
    %p295 = scmp.eq.s32.totalorder %s24, 0
    %p296 = por %p294, %p295
    %s297 = ssub.s32 %s25, %s37
    %s298 = ssub.s32 %s26, %s33
    %s299 = sor.u32 %s297, %s298
    %p300 = scmp.eq.s32.totalorder %s299, 0
    %s302 = sadd.s32 %s301, 1
    %s303 = scalar_select %p300, %s301, %s302
    %p306 = pneg %p300
    %p307 = scmp.eq.s32.totalorder %s18, 3
    %p308 = por %p306, %p307
    %p309 = scmp.ne.s32.totalorder %s301, %s304
    %p310 = scmp.eq.s32.totalorder %s18, 0
    %p311 = por %p309, %p310
    %p312 = scmp.ne.s32.totalorder %s301, %s304
    %p313 = scmp.eq.s32.totalorder %s23, 3
    %p314 = por %p312, %p313
    %p315 = scmp.ne.s32.totalorder %s304, %s305
    %p316 = scmp.eq.s32.totalorder %s23, 0
    %p317 = por %p315, %p316
    %p318 = scmp.ne.s32.totalorder %s304, %s305
    %p319 = scmp.eq.s32.totalorder %s24, 3
    %p320 = por %p318, %p319
    %p322 = scmp.ne.s32.totalorder %s305, %s321
    %p323 = scmp.eq.s32.totalorder %s24, 0
    %p324 = por %p322, %p323
    %p325 = scmp.le.s32.totalorder 1, %s18
    %p326 = scmp.lt.s32.totalorder %s18, 5
    %p327 = pnand %p325, %p326
    %p328 = pneg %p327
    // Predicated region
    $region9: #{tnet_forward.4} parent=5 // pred_check
      _
    $region10: #{tnet_forward.4} parent=5 // pred_check_branch
      %330 = sbr.rel (%p327) target = $region12
    $region11: #{tnet_forward.4} parent=5 // pred_region
      %s331 = ssub.s32 %s18, 1
      // Predicated region
      $region13: #{tnet_forward.4} parent=11 // pred_check
        %p332 = pneg %p79
      $region14: #{tnet_forward.4} parent=11 // pred_check_branch
        %334 = sbr.rel (%p332) target = $region16
      $region15: #{tnet_forward.4} parent=11 // pred_region
        _
      $region16: #{tnet_forward.4} parent=11 // pred_fallthru
        _
      // Predicated region
      $region17: #{tnet_forward.4} parent=11 // pred_check
        %p335 = pneg %p100
      $region18: #{tnet_forward.4} parent=11 // pred_check_branch
        %337 = sbr.rel (%p335) target = $region20
      $region19: #{tnet_forward.4} parent=11 // pred_region
        _
      $region20: #{tnet_forward.4} parent=11 // pred_fallthru
        _
      // Predicated region
      $region21: #{tnet_forward.4} parent=11 // pred_check
        %p338 = pneg %p121
      $region22: #{tnet_forward.4} parent=11 // pred_check_branch
        %340 = sbr.rel (%p338) target = $region24
      $region23: #{tnet_forward.4} parent=11 // pred_region
        _
      $region24: #{tnet_forward.4} parent=11 // pred_fallthru
        _
      // Predicated region
      $region25: #{tnet_forward.4} parent=11 // pred_check
        %p341 = pneg %p142
      $region26: #{tnet_forward.4} parent=11 // pred_check_branch
        %343 = sbr.rel (%p341) target = $region28
      $region27: #{tnet_forward.4} parent=11 // pred_region
        _
      $region28: #{tnet_forward.4} parent=11 // pred_fallthru
        _
      // Predicated region
      $region29: #{tnet_forward.4} parent=11 // pred_check
        %p344 = pneg %p163
      $region30: #{tnet_forward.4} parent=11 // pred_check_branch
        %346 = sbr.rel (%p344) target = $region32
      $region31: #{tnet_forward.4} parent=11 // pred_region
        _
      $region32: #{tnet_forward.4} parent=11 // pred_fallthru
        _
      // Predicated region
      $region33: #{tnet_forward.4} parent=11 // pred_check
        %p347 = pneg %p184
      $region34: #{tnet_forward.4} parent=11 // pred_check_branch
        %349 = sbr.rel (%p347) target = $region36
      $region35: #{tnet_forward.4} parent=11 // pred_region
        _
      $region36: #{tnet_forward.4} parent=11 // pred_fallthru
        _
      // Predicated region
      $region37: #{tnet_forward.4} parent=11 // pred_check
        %p350 = pneg %p205
      $region38: #{tnet_forward.4} parent=11 // pred_check_branch
        %352 = sbr.rel (%p350) target = $region40
      $region39: #{tnet_forward.4} parent=11 // pred_region
        _
      $region40: #{tnet_forward.4} parent=11 // pred_fallthru
        _
    $region12: #{tnet_forward.4} parent=5 // pred_fallthru
      _
    %p353 = scmp.lt.s32.totalorder %s18, 4
    // Predicated region
    $region41: #{tnet_forward.4} parent=5 // pred_check
      %p354 = pneg %p353
    $region42: #{tnet_forward.4} parent=5 // pred_check_branch
      %356 = sbr.rel (%p354) target = $region44
    $region43: #{tnet_forward.4} parent=5 // pred_region
      // Predicated region
      $region45: #{tnet_forward.4} parent=43 // pred_check
        %p357 = pneg %p52
      $region46: #{tnet_forward.4} parent=43 // pred_check_branch
        %359 = sbr.rel (%p357) target = $region48
      $region47: #{tnet_forward.4} parent=43 // pred_region
        %s360 = smul.u32 16, %s26
        %p361 = scmp.lt.s32.totalorder %s25, 1
        %s362 = scalar_select %p361, %s25, 1
        %p363 = scmp.lt.s32.totalorder %s360, 31
        %s364 = scalar_select %p363, %s360, 31
        %s365 = smul.addr %s362, 32
        %s366 = sadd.s32 %s364, %s365
        %s367 = smul.addr %s366, 4
        %s368 = scalar_lea.vmem %s0, %s367
        %s369 = smul.u32 16, %s26
      $region48: #{tnet_forward.4} parent=43 // pred_fallthru
        _
    $region44: #{tnet_forward.4} parent=5 // pred_fallthru
      _
    %p370 = scmp.le.s32.totalorder 1, %s18
    %p371 = scmp.lt.s32.totalorder %s18, 5
    %p372 = pnand %p370, %p371
    %p373 = pneg %p372
    // Predicated region
    $region49: #{tnet_forward.4} parent=5 // pred_check
      _
    $region50: #{tnet_forward.4} parent=5 // pred_check_branch
      %375 = sbr.rel (%p372) target = $region52
    $region51: #{tnet_forward.4} parent=5 // pred_region
      %s376 = ssub.s32 %s18, 1
      %s377 = smul.u32 16, %s28
      %p378 = scmp.lt.s32.totalorder %s27, 1
      %s379 = scalar_select %p378, %s27, 1
      %p380 = scmp.lt.s32.totalorder %s377, 31
      %s381 = scalar_select %p380, %s377, 31
      %s382 = smul.addr %s379, 32
      %s383 = sadd.s32 %s381, %s382
      %s384 = smul.addr %s383, 4
      %s385 = scalar_lea.vmem %s0, %s384
      %p386 = pneg %p58
      %p387 = pneg %p55
      %p388 = pneg %p79
      %p389 = pneg %p76
      %p390 = pneg %p100
      %p391 = pneg %p97
      %p392 = pneg %p121
      %p393 = pneg %p118
      %p394 = pneg %p142
      %p395 = pneg %p139
      %p396 = pneg %p163
      %p397 = pneg %p160
      %p398 = pneg %p184
      %p399 = pneg %p181
      %p400 = pneg %p205
      %p401 = pneg %p202
      %p402 = pneg %p233
      %p403 = pneg %p230
      %p404 = scmp.lt.s32.totalorder %s27, 1
      %s405 = scalar_select %p404, %s27, 1
      %p406 = scmp.lt.s32.totalorder %s28, 1
      %s407 = scalar_select %p406, %s28, 1
      %s408 = smul.addr %s407, 8
      %s409 = smul.addr %s405, 16
      %s410 = sadd.s32 %s408, %s409
      %s411 = scalar_lea.vmem %s8, %s410
      %p412 = pneg %p261
      %p413 = pneg %p258
      %p414 = scmp.lt.s32.totalorder %s27, 1
      %s415 = scalar_select %p414, %s27, 1
      %p416 = scmp.lt.s32.totalorder %s28, 1
      %s417 = scalar_select %p416, %s28, 1
      %s418 = smul.addr %s417, 8
      %s419 = smul.addr %s415, 16
      %s420 = sadd.s32 %s418, %s419
      %s421 = scalar_lea.vmem %s9, %s420
      %p422 = pneg %p289
      %p423 = pneg %p286
      %p424 = scmp.lt.s32.totalorder %s27, 1
      %s425 = scalar_select %p424, %s27, 1
      %p426 = scmp.lt.s32.totalorder %s28, 1
      %s427 = scalar_select %p426, %s28, 1
      %s428 = smul.addr %s427, 8
      %s429 = smul.addr %s425, 16
      %s430 = sadd.s32 %s428, %s429
      %s431 = scalar_lea.vmem %s10, %s430
      %p432 = pneg %p317
      %p433 = pneg %p314
      %p434 = scmp.lt.s32.totalorder %s27, 1
      %s435 = scalar_select %p434, %s27, 1
      %p436 = scmp.lt.s32.totalorder %s28, 1
      %s437 = scalar_select %p436, %s28, 1
      %s438 = smul.addr %s437, 8
      %s439 = smul.addr %s435, 16
      %s440 = sadd.s32 %s438, %s439
      %s441 = scalar_lea.vmem %s11, %s440
      %s442 = smul.u32 16, %s28
      %p443 = scmp.lt.s32.totalorder %s27, 1
      %s444 = scalar_select %p443, %s27, 1
      %p445 = scmp.lt.s32.totalorder %s442, 31
      %s446 = scalar_select %p445, %s442, 31
      %s447 = smul.addr %s444, 32
      %s448 = sadd.s32 %s446, %s447
      %s449 = smul.addr %s448, 4
      %s450 = scalar_lea.vmem %s0, %s449
      %s451 = smul.u32 16, %s28
      %p452 = scmp.lt.s32.totalorder %s27, 1
      %s453 = scalar_select %p452, %s27, 1
      %p454 = scmp.lt.s32.totalorder %s28, 1
      %s455 = scalar_select %p454, %s28, 1
      %s456 = smul.addr %s455, 8
      %s457 = smul.addr %s453, 16
      %s458 = sadd.s32 %s456, %s457
      %s459 = scalar_lea.vmem %s8, %s458
      %p460 = scmp.lt.s32.totalorder %s27, 1
      %s461 = scalar_select %p460, %s27, 1
      %p462 = scmp.lt.s32.totalorder %s28, 1
      %s463 = scalar_select %p462, %s28, 1
      %s464 = smul.addr %s463, 8
      %s465 = smul.addr %s461, 16
      %s466 = sadd.s32 %s464, %s465
      %s467 = scalar_lea.vmem %s9, %s466
      %p468 = scmp.lt.s32.totalorder %s27, 1
      %s469 = scalar_select %p468, %s27, 1
      %p470 = scmp.lt.s32.totalorder %s28, 1
      %s471 = scalar_select %p470, %s28, 1
      %s472 = smul.addr %s471, 8
      %s473 = smul.addr %s469, 16
      %s474 = sadd.s32 %s472, %s473
      %s475 = scalar_lea.vmem %s10, %s474
      %p476 = scmp.lt.s32.totalorder %s27, 1
      %s477 = scalar_select %p476, %s27, 1
      %p478 = scmp.lt.s32.totalorder %s28, 1
      %s479 = scalar_select %p478, %s28, 1
      %s480 = smul.addr %s479, 8
      %s481 = smul.addr %s477, 16
      %s482 = sadd.s32 %s480, %s481
      %s483 = scalar_lea.vmem %s11, %s482
      %v485 = vld [vmem:[%s450] sm:$0xf]
      %v486 = vld [vmem:[%s450 + $0x4] sm:$0xf]
      %v487 = vld [vmem:[%s450 + $0x8] sm:$0xf]
      %v488 = vld [vmem:[%s450 + $0xc] sm:$0xf]
      %v489 = vld [vmem:[%s450 + $0x10] sm:$0xf]
      %v490 = vld [vmem:[%s450 + $0x14] sm:$0xf]
      %v491 = vld [vmem:[%s450 + $0x18] sm:$0xf]
      %v492 = vld [vmem:[%s450 + $0x1c] sm:$0xf]
      %v493 = vld [vmem:[%s450 + $0x20] sm:$0xf]
      %v494 = vld [vmem:[%s450 + $0x24] sm:$0xf]
      %v495 = vld [vmem:[%s450 + $0x28] sm:$0xf]
      %v496 = vld [vmem:[%s450 + $0x2c] sm:$0xf]
      %v497 = vld [vmem:[%s450 + $0x30] sm:$0xf]
      %v498 = vld [vmem:[%s450 + $0x34] sm:$0xf]
      %v499 = vld [vmem:[%s450 + $0x38] sm:$0xf]
      %v500 = vld [vmem:[%s450 + $0x3c] sm:$0xf]
      %v501 = vld [vmem:[%s5] sm:$0xf]
      %v518 = vunpack.c.l.b16 %v485
      %v519 = vunpack.c.l.b16 %v486
      %v520 = vunpack.c.l.b16 %v487
      %v521 = vunpack.c.l.b16 %v488
      %v522 = vunpack.c.l.b16 %v489
      %v523 = vunpack.c.l.b16 %v490
      %v524 = vunpack.c.l.b16 %v491
      %v525 = vunpack.c.l.b16 %v492
      %v526 = vunpack.c.l.b16 %v493
      %v527 = vunpack.c.l.b16 %v494
      %v528 = vunpack.c.l.b16 %v495
      %v529 = vunpack.c.l.b16 %v496
      %v530 = vunpack.c.l.b16 %v497
      %v531 = vunpack.c.l.b16 %v498
      %v532 = vunpack.c.l.b16 %v499
      %v533 = vunpack.c.l.b16 %v500
      %v534 = vpack.c.b16 %v519, %v518
      %v535 = vpack.c.b16 %v521, %v520
      %v536 = vpack.c.b16 %v523, %v522
      %v537 = vpack.c.b16 %v525, %v524
      %v538 = vpack.c.b16 %v527, %v526
      %v539 = vpack.c.b16 %v529, %v528
      %v540 = vpack.c.b16 %v531, %v530
      %v541 = vpack.c.b16 %v533, %v532
      %vm542 = vcmask 64512
      %v544 = vsel %vm542, %v534, 0
      %v547 = vsel %vm542, %v535, 0
      %v550 = vsel %vm542, %v536, 0
      %v553 = vsel %vm542, %v537, 0
      %v556 = vsel %vm542, %v538, 0
      %v559 = vsel %vm542, %v539, 0
      %v562 = vsel %vm542, %v540, 0
      %v565 = vsel %vm542, %v541, 0
      %vm567 = vcmask 1043456
      %v569 = vsel %vm567, %v501, 0
      %571 = vmatpush.bf16.msra.mxu0 0
      %572 = vmatpush.bf16.msra.mxu0 0
      %573 = vmatpush.bf16.msra.mxu0 0
      %574 = vmatpush.bf16.msra.mxu0 0
      %575 = vmatpush.bf16.msra.mxu0 0
      %576 = vmatpush.bf16.msra.mxu0 0
      %577 = vmatpush.bf16.msra.mxu0 0
      %578 = vmatpush.bf16.msra.mxu0 %v569
      %579 = vmatmul.bf16.gmra.mxu0 %v544
      %v580 = vpop.f32.mrf.mxu0
      %v581 = vadd.f32 0.0, %v580
      %v582 = vpop.f32.mrf.mxu0
      %v583 = vadd.f32 0.0, %v582
      %584 = vmatmul.bf16.gmra.mxu0 %v547
      %v585 = vpop.f32.mrf.mxu0
      %v586 = vadd.f32 0.0, %v585
      %v587 = vpop.f32.mrf.mxu0
      %v588 = vadd.f32 0.0, %v587
      %589 = vmatmul.bf16.gmra.mxu0 %v550
      %v590 = vpop.f32.mrf.mxu0
      %v591 = vadd.f32 0.0, %v590
      %v592 = vpop.f32.mrf.mxu0
      %v593 = vadd.f32 0.0, %v592
      %594 = vmatmul.bf16.gmra.mxu0 %v553
      %v595 = vpop.f32.mrf.mxu0
      %v596 = vadd.f32 0.0, %v595
      %v597 = vpop.f32.mrf.mxu0
      %v598 = vadd.f32 0.0, %v597
      %599 = vmatmul.bf16.gmra.mxu0 %v556
      %v600 = vpop.f32.mrf.mxu0
      %v601 = vadd.f32 0.0, %v600
      %v602 = vpop.f32.mrf.mxu0
      %v603 = vadd.f32 0.0, %v602
      %604 = vmatmul.bf16.gmra.mxu0 %v559
      %v605 = vpop.f32.mrf.mxu0
      %v606 = vadd.f32 0.0, %v605
      %v607 = vpop.f32.mrf.mxu0
      %v608 = vadd.f32 0.0, %v607
      %609 = vmatmul.bf16.gmra.mxu0 %v562
      %v610 = vpop.f32.mrf.mxu0
      %v611 = vadd.f32 0.0, %v610
      %v612 = vpop.f32.mrf.mxu0
      %v613 = vadd.f32 0.0, %v612
      %614 = vmatmul.bf16.gmra.mxu0 %v565
      %v615 = vpop.f32.mrf.mxu0
      %v616 = vadd.f32 0.0, %v615
      %v617 = vpop.f32.mrf.mxu0
      %v618 = vadd.f32 0.0, %v617
      %619 = vdwg.mxu0
      %v620 = vld [vmem:[%s1] sm:$0x1]
      %v622 = vperm.slane %v620, 0
      %v624 = vmul.f32 %v581, %v622
      %v625 = vmul.f32 %v583, %v622
      %v626 = vmul.f32 %v586, %v622
      %v627 = vmul.f32 %v588, %v622
      %v628 = vmul.f32 %v591, %v622
      %v629 = vmul.f32 %v593, %v622
      %v630 = vmul.f32 %v596, %v622
      %v631 = vmul.f32 %v598, %v622
      %v632 = vmul.f32 %v601, %v622
      %v633 = vmul.f32 %v603, %v622
      %v634 = vmul.f32 %v606, %v622
      %v635 = vmul.f32 %v608, %v622
      %v636 = vmul.f32 %v611, %v622
      %v637 = vmul.f32 %v613, %v622
      %v638 = vmul.f32 %v616, %v622
      %v639 = vmul.f32 %v618, %v622
      %v640 = vld [vmem:[%s2] sm:$0x1]
      %v642 = vperm.slane %v640, 0
      %v644 = vadd.f32 %v624, %v642
      %v645 = vadd.f32 %v625, %v642
      %v646 = vadd.f32 %v626, %v642
      %v647 = vadd.f32 %v627, %v642
      %v648 = vadd.f32 %v628, %v642
      %v649 = vadd.f32 %v629, %v642
      %v650 = vadd.f32 %v630, %v642
      %v651 = vadd.f32 %v631, %v642
      %v652 = vadd.f32 %v632, %v642
      %v653 = vadd.f32 %v633, %v642
      %v654 = vadd.f32 %v634, %v642
      %v655 = vadd.f32 %v635, %v642
      %v656 = vadd.f32 %v636, %v642
      %v657 = vadd.f32 %v637, %v642
      %v658 = vadd.f32 %v638, %v642
      %v659 = vadd.f32 %v639, %v642
      %v660 = vmax.f32 %v644, 0.0
      %v661 = vmax.f32 %v645, 0.0
      %v662 = vmax.f32 %v646, 0.0
      %v663 = vmax.f32 %v647, 0.0
      %v664 = vmax.f32 %v648, 0.0
      %v665 = vmax.f32 %v649, 0.0
      %v666 = vmax.f32 %v650, 0.0
      %v667 = vmax.f32 %v651, 0.0
      %v668 = vmax.f32 %v652, 0.0
      %v669 = vmax.f32 %v653, 0.0
      %v670 = vmax.f32 %v654, 0.0
      %v671 = vmax.f32 %v655, 0.0
      %v672 = vmax.f32 %v656, 0.0
      %v673 = vmax.f32 %v657, 0.0
      %v674 = vmax.f32 %v658, 0.0
      %v675 = vmax.f32 %v659, 0.0
      %s676 = smul.u32 %s28, 128
      %v677 = vlaneseq
      %v678 = vshrl.u32 %v677, 7
      %v679 = vadd.s32 %v678, 8
      %v680 = vadd.s32 %v678, 16
      %v681 = vadd.s32 %v678, 24
      %v682 = vadd.s32 %v678, 32
      %v683 = vadd.s32 %v678, 40
      %v684 = vadd.s32 %v678, 48
      %v685 = vadd.s32 %v678, 56
      %v686 = vadd.s32 %v678, 64
      %v687 = vadd.s32 %v678, 72
      %v688 = vadd.s32 %v678, 80
      %v689 = vadd.s32 %v678, 88
      %v690 = vadd.s32 %v678, 96
      %v691 = vadd.s32 %v678, 104
      %v692 = vadd.s32 %v678, 112
      %v693 = vadd.s32 %v678, 120
      %v694 = vstv %s676
      %v695 = vadd.s32 %v694, %v678
      %v696 = vadd.s32 %v694, %v679
      %v697 = vadd.s32 %v694, %v680
      %v698 = vadd.s32 %v694, %v681
      %v699 = vadd.s32 %v694, %v682
      %v700 = vadd.s32 %v694, %v683
      %v701 = vadd.s32 %v694, %v684
      %v702 = vadd.s32 %v694, %v685
      %v703 = vadd.s32 %v694, %v686
      %v704 = vadd.s32 %v694, %v687
      %v705 = vadd.s32 %v694, %v688
      %v706 = vadd.s32 %v694, %v689
      %v707 = vadd.s32 %v694, %v690
      %v708 = vadd.s32 %v694, %v691
      %v709 = vadd.s32 %v694, %v692
      %v710 = vadd.s32 %v694, %v693
      %vm711 = vcmp.lt.s32.totalorder %v695, 250
      %vm712 = vcmp.lt.s32.totalorder %v696, 250
      %vm713 = vcmp.lt.s32.totalorder %v697, 250
      %vm714 = vcmp.lt.s32.totalorder %v698, 250
      %vm715 = vcmp.lt.s32.totalorder %v699, 250
      %vm716 = vcmp.lt.s32.totalorder %v700, 250
      %vm717 = vcmp.lt.s32.totalorder %v701, 250
      %vm718 = vcmp.lt.s32.totalorder %v702, 250
      %vm719 = vcmp.lt.s32.totalorder %v703, 250
      %vm720 = vcmp.lt.s32.totalorder %v704, 250
      %vm721 = vcmp.lt.s32.totalorder %v705, 250
      %vm722 = vcmp.lt.s32.totalorder %v706, 250
      %vm723 = vcmp.lt.s32.totalorder %v707, 250
      %vm724 = vcmp.lt.s32.totalorder %v708, 250
      %vm725 = vcmp.lt.s32.totalorder %v709, 250
      %vm726 = vcmp.lt.s32.totalorder %v710, 250
      %v727 = vsel %vm711, 1, 0
      %v728 = vsel %vm712, 1, 0
      %v729 = vsel %vm713, 1, 0
      %v730 = vsel %vm714, 1, 0
      %v731 = vsel %vm715, 1, 0
      %v732 = vsel %vm716, 1, 0
      %v733 = vsel %vm717, 1, 0
      %v734 = vsel %vm718, 1, 0
      %v735 = vsel %vm719, 1, 0
      %v736 = vsel %vm720, 1, 0
      %v737 = vsel %vm721, 1, 0
      %v738 = vsel %vm722, 1, 0
      %v739 = vsel %vm723, 1, 0
      %v740 = vsel %vm724, 1, 0
      %v741 = vsel %vm725, 1, 0
      %v742 = vsel %vm726, 1, 0
      %v743 = vcvt.s32.f32 %v727
      %v744 = vcvt.s32.f32 %v728
      %v745 = vcvt.s32.f32 %v729
      %v746 = vcvt.s32.f32 %v730
      %v747 = vcvt.s32.f32 %v731
      %v748 = vcvt.s32.f32 %v732
      %v749 = vcvt.s32.f32 %v733
      %v750 = vcvt.s32.f32 %v734
      %v751 = vcvt.s32.f32 %v735
      %v752 = vcvt.s32.f32 %v736
      %v753 = vcvt.s32.f32 %v737
      %v754 = vcvt.s32.f32 %v738
      %v755 = vcvt.s32.f32 %v739
      %v756 = vcvt.s32.f32 %v740
      %v757 = vcvt.s32.f32 %v741
      %v758 = vcvt.s32.f32 %v742
      %v759 = vmul.f32 %v660, %v743
      %v760 = vmul.f32 %v661, %v744
      %v761 = vmul.f32 %v662, %v745
      %v762 = vmul.f32 %v663, %v746
      %v763 = vmul.f32 %v664, %v747
      %v764 = vmul.f32 %v665, %v748
      %v765 = vmul.f32 %v666, %v749
      %v766 = vmul.f32 %v667, %v750
      %v767 = vmul.f32 %v668, %v751
      %v768 = vmul.f32 %v669, %v752
      %v769 = vmul.f32 %v670, %v753
      %v770 = vmul.f32 %v671, %v754
      %v771 = vmul.f32 %v672, %v755
      %v772 = vmul.f32 %v673, %v756
      %v773 = vmul.f32 %v674, %v757
      %v774 = vmul.f32 %v675, %v758
      %s775 = ssub.s32 250, %s676
      %p776 = scmp.lt.s32.totalorder %s775, 128
      %s777 = scalar_select %p776, %s775, 128
      %s778 = scvt.s32.f32 %s777
      %v779 = vpack.c.bf16 %v760, %v759
      %v780 = vpack.c.bf16 %v762, %v761
      %v781 = vpack.c.bf16 %v764, %v763
      %v782 = vpack.c.bf16 %v766, %v765
      %v783 = vpack.c.bf16 %v768, %v767
      %v784 = vpack.c.bf16 %v770, %v769
      %v785 = vpack.c.bf16 %v772, %v771
      %v786 = vpack.c.bf16 %v774, %v773
      %v787 = vld [vmem:[%s6] sm:$0xf]
      %v788 = vld [vmem:[%s6 + $0x4] sm:$0xf]
      %v789 = vld [vmem:[%s6 + $0x8] sm:$0xf]
      %v790 = vld [vmem:[%s6 + $0xc] sm:$0xf]
      %v791 = vld [vmem:[%s6 + $0x10] sm:$0xf]
      %v792 = vld [vmem:[%s6 + $0x14] sm:$0xf]
      %v793 = vld [vmem:[%s6 + $0x18] sm:$0xf]
      %v794 = vld [vmem:[%s6 + $0x1c] sm:$0xf]
      %v803 = vunpack.c.l.b16 %v787
      %v804 = vunpack.c.l.b16 %v788
      %v805 = vunpack.c.l.b16 %v789
      %v806 = vunpack.c.l.b16 %v790
      %v807 = vunpack.c.l.b16 %v791
      %v808 = vunpack.c.l.b16 %v792
      %v809 = vunpack.c.l.b16 %v793
      %v810 = vunpack.c.l.b16 %v794
      %v811 = vpack.c.b16 %v804, %v803
      %v812 = vpack.c.b16 %v806, %v805
      %v813 = vpack.c.b16 %v808, %v807
      %v814 = vpack.c.b16 %v810, %v809
      %vm819 = vcmask 523264
      %v821 = vsel %vm819, %v779, 0
      %v824 = vsel %vm819, %v780, 0
      %v827 = vsel %vm819, %v781, 0
      %v830 = vsel %vm819, %v782, 0
      %v833 = vsel %vm819, %v783, 0
      %v836 = vsel %vm819, %v784, 0
      %v839 = vsel %vm819, %v785, 0
      %v842 = vsel %vm819, %v786, 0
      %844 = vmatpush.bf16.msra.mxu0 0
      %845 = vmatpush.bf16.msra.mxu0 0
      %846 = vmatpush.bf16.msra.mxu0 0
      %847 = vmatpush.bf16.msra.mxu0 0
      %848 = vmatpush.bf16.msra.mxu0 %v814
      %849 = vmatpush.bf16.msra.mxu0 %v813
      %850 = vmatpush.bf16.msra.mxu0 %v812
      %851 = vmatpush.bf16.msra.mxu0 %v811
      %852 = vmatmul.bf16.gmra.mxu0 %v821
      %v853 = vpop.f32.mrf.mxu0
      %v854 = vadd.f32 0.0, %v853
      %v855 = vpop.f32.mrf.mxu0
      %v856 = vadd.f32 0.0, %v855
      %857 = vmatmul.bf16.gmra.mxu0 %v824
      %v858 = vpop.f32.mrf.mxu0
      %v859 = vadd.f32 0.0, %v858
      %v860 = vpop.f32.mrf.mxu0
      %v861 = vadd.f32 0.0, %v860
      %862 = vmatmul.bf16.gmra.mxu0 %v827
      %v863 = vpop.f32.mrf.mxu0
      %v864 = vadd.f32 0.0, %v863
      %v865 = vpop.f32.mrf.mxu0
      %v866 = vadd.f32 0.0, %v865
      %867 = vmatmul.bf16.gmra.mxu0 %v830
      %v868 = vpop.f32.mrf.mxu0
      %v869 = vadd.f32 0.0, %v868
      %v870 = vpop.f32.mrf.mxu0
      %v871 = vadd.f32 0.0, %v870
      %872 = vmatmul.bf16.gmra.mxu0 %v833
      %v873 = vpop.f32.mrf.mxu0
      %v874 = vadd.f32 0.0, %v873
      %v875 = vpop.f32.mrf.mxu0
      %v876 = vadd.f32 0.0, %v875
      %877 = vmatmul.bf16.gmra.mxu0 %v836
      %v878 = vpop.f32.mrf.mxu0
      %v879 = vadd.f32 0.0, %v878
      %v880 = vpop.f32.mrf.mxu0
      %v881 = vadd.f32 0.0, %v880
      %882 = vmatmul.bf16.gmra.mxu0 %v839
      %v883 = vpop.f32.mrf.mxu0
      %v884 = vadd.f32 0.0, %v883
      %v885 = vpop.f32.mrf.mxu0
      %v886 = vadd.f32 0.0, %v885
      %887 = vmatmul.bf16.gmra.mxu0 %v842
      %v888 = vpop.f32.mrf.mxu0
      %v889 = vadd.f32 0.0, %v888
      %v890 = vpop.f32.mrf.mxu0
      %v891 = vadd.f32 0.0, %v890
      %892 = vdwg.mxu0
      %v893 = vld [vmem:[%s3] sm:$0x1]
      %v895 = vperm.slane %v893, 0
      %v897 = vmul.f32 %v854, %v895
      %v898 = vmul.f32 %v856, %v895
      %v899 = vmul.f32 %v859, %v895
      %v900 = vmul.f32 %v861, %v895
      %v901 = vmul.f32 %v864, %v895
      %v902 = vmul.f32 %v866, %v895
      %v903 = vmul.f32 %v869, %v895
      %v904 = vmul.f32 %v871, %v895
      %v905 = vmul.f32 %v874, %v895
      %v906 = vmul.f32 %v876, %v895
      %v907 = vmul.f32 %v879, %v895
      %v908 = vmul.f32 %v881, %v895
      %v909 = vmul.f32 %v884, %v895
      %v910 = vmul.f32 %v886, %v895
      %v911 = vmul.f32 %v889, %v895
      %v912 = vmul.f32 %v891, %v895
      %v913 = vld [vmem:[%s4] sm:$0x1]
      %v915 = vperm.slane %v913, 0
      %v917 = vadd.f32 %v897, %v915
      %v918 = vadd.f32 %v898, %v915
      %v919 = vadd.f32 %v899, %v915
      %v920 = vadd.f32 %v900, %v915
      %v921 = vadd.f32 %v901, %v915
      %v922 = vadd.f32 %v902, %v915
      %v923 = vadd.f32 %v903, %v915
      %v924 = vadd.f32 %v904, %v915
      %v925 = vadd.f32 %v905, %v915
      %v926 = vadd.f32 %v906, %v915
      %v927 = vadd.f32 %v907, %v915
      %v928 = vadd.f32 %v908, %v915
      %v929 = vadd.f32 %v909, %v915
      %v930 = vadd.f32 %v910, %v915
      %v931 = vadd.f32 %v911, %v915
      %v932 = vadd.f32 %v912, %v915
      %v933 = vmax.f32 %v917, 0.0
      %v934 = vmax.f32 %v918, 0.0
      %v935 = vmax.f32 %v919, 0.0
      %v936 = vmax.f32 %v920, 0.0
      %v937 = vmax.f32 %v921, 0.0
      %v938 = vmax.f32 %v922, 0.0
      %v939 = vmax.f32 %v923, 0.0
      %v940 = vmax.f32 %v924, 0.0
      %v941 = vmax.f32 %v925, 0.0
      %v942 = vmax.f32 %v926, 0.0
      %v943 = vmax.f32 %v927, 0.0
      %v944 = vmax.f32 %v928, 0.0
      %v945 = vmax.f32 %v929, 0.0
      %v946 = vmax.f32 %v930, 0.0
      %v947 = vmax.f32 %v931, 0.0
      %v948 = vmax.f32 %v932, 0.0
      %v949 = vmul.f32 %v933, %v743
      %v950 = vmul.f32 %v934, %v744
      %v951 = vmul.f32 %v935, %v745
      %v952 = vmul.f32 %v936, %v746
      %v953 = vmul.f32 %v937, %v747
      %v954 = vmul.f32 %v938, %v748
      %v955 = vmul.f32 %v939, %v749
      %v956 = vmul.f32 %v940, %v750
      %v957 = vmul.f32 %v941, %v751
      %v958 = vmul.f32 %v942, %v752
      %v959 = vmul.f32 %v943, %v753
      %v960 = vmul.f32 %v944, %v754
      %v961 = vmul.f32 %v945, %v755
      %v962 = vmul.f32 %v946, %v756
      %v963 = vmul.f32 %v947, %v757
      %v964 = vmul.f32 %v948, %v758
      %v965 = vpack.c.bf16 %v950, %v949
      %v966 = vpack.c.bf16 %v952, %v951
      %v967 = vpack.c.bf16 %v954, %v953
      %v968 = vpack.c.bf16 %v956, %v955
      %v969 = vpack.c.bf16 %v958, %v957
      %v970 = vpack.c.bf16 %v960, %v959
      %v971 = vpack.c.bf16 %v962, %v961
      %v972 = vpack.c.bf16 %v964, %v963
      %v973 = vld [vmem:[%s7] sm:$0xff]
      %v974 = vld [vmem:[%s7 + $0x8] sm:$0xff]
      %v975 = vld [vmem:[%s7 + $0x10] sm:$0xff]
      %v976 = vld [vmem:[%s7 + $0x18] sm:$0xff]
      %v977 = vld [vmem:[%s7 + $0x20] sm:$0xff]
      %v978 = vld [vmem:[%s7 + $0x28] sm:$0xff]
      %v979 = vld [vmem:[%s7 + $0x30] sm:$0xff]
      %v980 = vld [vmem:[%s7 + $0x38] sm:$0xff]
      %v981 = vld [vmem:[%s7 + $0x40] sm:$0xff]
      %v982 = vld [vmem:[%s7 + $0x48] sm:$0xff]
      %v983 = vld [vmem:[%s7 + $0x50] sm:$0xff]
      %v984 = vld [vmem:[%s7 + $0x58] sm:$0xff]
      %v985 = vld [vmem:[%s7 + $0x60] sm:$0xff]
      %v986 = vld [vmem:[%s7 + $0x68] sm:$0xff]
      %v987 = vld [vmem:[%s7 + $0x70] sm:$0xff]
      %v988 = vld [vmem:[%s7 + $0x78] sm:$0xff]
      %v989 = vld [vmem:[%s7 + $0x80] sm:$0xff]
      %v990 = vld [vmem:[%s7 + $0x88] sm:$0xff]
      %v991 = vld [vmem:[%s7 + $0x90] sm:$0xff]
      %v992 = vld [vmem:[%s7 + $0x98] sm:$0xff]
      %v993 = vld [vmem:[%s7 + $0xa0] sm:$0xff]
      %v994 = vld [vmem:[%s7 + $0xa8] sm:$0xff]
      %v995 = vld [vmem:[%s7 + $0xb0] sm:$0xff]
      %v996 = vld [vmem:[%s7 + $0xb8] sm:$0xff]
      %v997 = vld [vmem:[%s7 + $0xc0] sm:$0xff]
      %v998 = vld [vmem:[%s7 + $0xc8] sm:$0xff]
      %v999 = vld [vmem:[%s7 + $0xd0] sm:$0xff]
      %v1000 = vld [vmem:[%s7 + $0xd8] sm:$0xff]
      %v1001 = vld [vmem:[%s7 + $0xe0] sm:$0xff]
      %v1002 = vld [vmem:[%s7 + $0xe8] sm:$0xff]
      %v1003 = vld [vmem:[%s7 + $0xf0] sm:$0xff]
      %v1004 = vld [vmem:[%s7 + $0xf8] sm:$0xff]
      %v1005 = vld [vmem:[%s7 + $0x100] sm:$0xff]
      %v1006 = vld [vmem:[%s7 + $0x108] sm:$0xff]
      %v1007 = vld [vmem:[%s7 + $0x110] sm:$0xff]
      %v1008 = vld [vmem:[%s7 + $0x118] sm:$0xff]
      %v1009 = vld [vmem:[%s7 + $0x120] sm:$0xff]
      %v1010 = vld [vmem:[%s7 + $0x128] sm:$0xff]
      %v1011 = vld [vmem:[%s7 + $0x130] sm:$0xff]
      %v1012 = vld [vmem:[%s7 + $0x138] sm:$0xff]
      %v1013 = vld [vmem:[%s7 + $0x140] sm:$0xff]
      %v1014 = vld [vmem:[%s7 + $0x148] sm:$0xff]
      %v1015 = vld [vmem:[%s7 + $0x150] sm:$0xff]
      %v1016 = vld [vmem:[%s7 + $0x158] sm:$0xff]
      %v1017 = vld [vmem:[%s7 + $0x160] sm:$0xff]
      %v1018 = vld [vmem:[%s7 + $0x168] sm:$0xff]
      %v1019 = vld [vmem:[%s7 + $0x170] sm:$0xff]
      %v1020 = vld [vmem:[%s7 + $0x178] sm:$0xff]
      %v1021 = vld [vmem:[%s7 + $0x180] sm:$0xff]
      %v1022 = vld [vmem:[%s7 + $0x188] sm:$0xff]
      %v1023 = vld [vmem:[%s7 + $0x190] sm:$0xff]
      %v1024 = vld [vmem:[%s7 + $0x198] sm:$0xff]
      %v1025 = vld [vmem:[%s7 + $0x1a0] sm:$0xff]
      %v1026 = vld [vmem:[%s7 + $0x1a8] sm:$0xff]
      %v1027 = vld [vmem:[%s7 + $0x1b0] sm:$0xff]
      %v1028 = vld [vmem:[%s7 + $0x1b8] sm:$0xff]
      %v1029 = vld [vmem:[%s7 + $0x1c0] sm:$0xff]
      %v1030 = vld [vmem:[%s7 + $0x1c8] sm:$0xff]
      %v1031 = vld [vmem:[%s7 + $0x1d0] sm:$0xff]
      %v1032 = vld [vmem:[%s7 + $0x1d8] sm:$0xff]
      %v1033 = vld [vmem:[%s7 + $0x1e0] sm:$0xff]
      %v1034 = vld [vmem:[%s7 + $0x1e8] sm:$0xff]
      %v1035 = vld [vmem:[%s7 + $0x1f0] sm:$0xff]
      %v1036 = vld [vmem:[%s7 + $0x1f8] sm:$0xff]
      %v1101 = vunpack.c.l.b16 %v973
      %v1102 = vunpack.c.h.b16 %v973
      %v1103 = vunpack.c.l.b16 %v974
      %v1104 = vunpack.c.h.b16 %v974
      %v1105 = vunpack.c.l.b16 %v975
      %v1106 = vunpack.c.h.b16 %v975
      %v1107 = vunpack.c.l.b16 %v976
      %v1108 = vunpack.c.h.b16 %v976
      %v1109 = vunpack.c.l.b16 %v977
      %v1110 = vunpack.c.h.b16 %v977
      %v1111 = vunpack.c.l.b16 %v978
      %v1112 = vunpack.c.h.b16 %v978
      %v1113 = vunpack.c.l.b16 %v979
      %v1114 = vunpack.c.h.b16 %v979
      %v1115 = vunpack.c.l.b16 %v980
      %v1116 = vunpack.c.h.b16 %v980
      %v1117 = vunpack.c.l.b16 %v981
      %v1118 = vunpack.c.h.b16 %v981
      %v1119 = vunpack.c.l.b16 %v982
      %v1120 = vunpack.c.h.b16 %v982
      %v1121 = vunpack.c.l.b16 %v983
      %v1122 = vunpack.c.h.b16 %v983
      %v1123 = vunpack.c.l.b16 %v984
      %v1124 = vunpack.c.h.b16 %v984
      %v1125 = vunpack.c.l.b16 %v985
      %v1126 = vunpack.c.h.b16 %v985
      %v1127 = vunpack.c.l.b16 %v986
      %v1128 = vunpack.c.h.b16 %v986
      %v1129 = vunpack.c.l.b16 %v987
      %v1130 = vunpack.c.h.b16 %v987
      %v1131 = vunpack.c.l.b16 %v988
      %v1132 = vunpack.c.h.b16 %v988
      %v1133 = vunpack.c.l.b16 %v989
      %v1134 = vunpack.c.h.b16 %v989
      %v1135 = vunpack.c.l.b16 %v990
      %v1136 = vunpack.c.h.b16 %v990
      %v1137 = vunpack.c.l.b16 %v991
      %v1138 = vunpack.c.h.b16 %v991
      %v1139 = vunpack.c.l.b16 %v992
      %v1140 = vunpack.c.h.b16 %v992
      %v1141 = vunpack.c.l.b16 %v993
      %v1142 = vunpack.c.h.b16 %v993
      %v1143 = vunpack.c.l.b16 %v994
      %v1144 = vunpack.c.h.b16 %v994
      %v1145 = vunpack.c.l.b16 %v995
      %v1146 = vunpack.c.h.b16 %v995
      %v1147 = vunpack.c.l.b16 %v996
      %v1148 = vunpack.c.h.b16 %v996
      %v1149 = vunpack.c.l.b16 %v997
      %v1150 = vunpack.c.h.b16 %v997
      %v1151 = vunpack.c.l.b16 %v998
      %v1152 = vunpack.c.h.b16 %v998
      %v1153 = vunpack.c.l.b16 %v999
      %v1154 = vunpack.c.h.b16 %v999
      %v1155 = vunpack.c.l.b16 %v1000
      %v1156 = vunpack.c.h.b16 %v1000
      %v1157 = vunpack.c.l.b16 %v1001
      %v1158 = vunpack.c.h.b16 %v1001
      %v1159 = vunpack.c.l.b16 %v1002
      %v1160 = vunpack.c.h.b16 %v1002
      %v1161 = vunpack.c.l.b16 %v1003
      %v1162 = vunpack.c.h.b16 %v1003
      %v1163 = vunpack.c.l.b16 %v1004
      %v1164 = vunpack.c.h.b16 %v1004
      %v1165 = vunpack.c.l.b16 %v1005
      %v1166 = vunpack.c.h.b16 %v1005
      %v1167 = vunpack.c.l.b16 %v1006
      %v1168 = vunpack.c.h.b16 %v1006
      %v1169 = vunpack.c.l.b16 %v1007
      %v1170 = vunpack.c.h.b16 %v1007
      %v1171 = vunpack.c.l.b16 %v1008
      %v1172 = vunpack.c.h.b16 %v1008
      %v1173 = vunpack.c.l.b16 %v1009
      %v1174 = vunpack.c.h.b16 %v1009
      %v1175 = vunpack.c.l.b16 %v1010
      %v1176 = vunpack.c.h.b16 %v1010
      %v1177 = vunpack.c.l.b16 %v1011
      %v1178 = vunpack.c.h.b16 %v1011
      %v1179 = vunpack.c.l.b16 %v1012
      %v1180 = vunpack.c.h.b16 %v1012
      %v1181 = vunpack.c.l.b16 %v1013
      %v1182 = vunpack.c.h.b16 %v1013
      %v1183 = vunpack.c.l.b16 %v1014
      %v1184 = vunpack.c.h.b16 %v1014
      %v1185 = vunpack.c.l.b16 %v1015
      %v1186 = vunpack.c.h.b16 %v1015
      %v1187 = vunpack.c.l.b16 %v1016
      %v1188 = vunpack.c.h.b16 %v1016
      %v1189 = vunpack.c.l.b16 %v1017
      %v1190 = vunpack.c.h.b16 %v1017
      %v1191 = vunpack.c.l.b16 %v1018
      %v1192 = vunpack.c.h.b16 %v1018
      %v1193 = vunpack.c.l.b16 %v1019
      %v1194 = vunpack.c.h.b16 %v1019
      %v1195 = vunpack.c.l.b16 %v1020
      %v1196 = vunpack.c.h.b16 %v1020
      %v1197 = vunpack.c.l.b16 %v1021
      %v1198 = vunpack.c.h.b16 %v1021
      %v1199 = vunpack.c.l.b16 %v1022
      %v1200 = vunpack.c.h.b16 %v1022
      %v1201 = vunpack.c.l.b16 %v1023
      %v1202 = vunpack.c.h.b16 %v1023
      %v1203 = vunpack.c.l.b16 %v1024
      %v1204 = vunpack.c.h.b16 %v1024
      %v1205 = vunpack.c.l.b16 %v1025
      %v1206 = vunpack.c.h.b16 %v1025
      %v1207 = vunpack.c.l.b16 %v1026
      %v1208 = vunpack.c.h.b16 %v1026
      %v1209 = vunpack.c.l.b16 %v1027
      %v1210 = vunpack.c.h.b16 %v1027
      %v1211 = vunpack.c.l.b16 %v1028
      %v1212 = vunpack.c.h.b16 %v1028
      %v1213 = vunpack.c.l.b16 %v1029
      %v1214 = vunpack.c.h.b16 %v1029
      %v1215 = vunpack.c.l.b16 %v1030
      %v1216 = vunpack.c.h.b16 %v1030
      %v1217 = vunpack.c.l.b16 %v1031
      %v1218 = vunpack.c.h.b16 %v1031
      %v1219 = vunpack.c.l.b16 %v1032
      %v1220 = vunpack.c.h.b16 %v1032
      %v1221 = vunpack.c.l.b16 %v1033
      %v1222 = vunpack.c.h.b16 %v1033
      %v1223 = vunpack.c.l.b16 %v1034
      %v1224 = vunpack.c.h.b16 %v1034
      %v1225 = vunpack.c.l.b16 %v1035
      %v1226 = vunpack.c.h.b16 %v1035
      %v1227 = vunpack.c.l.b16 %v1036
      %v1228 = vunpack.c.h.b16 %v1036
      %v1229 = vpack.c.b16 %v1109, %v1101
      %v1230 = vpack.c.b16 %v1110, %v1102
      %v1231 = vpack.c.b16 %v1111, %v1103
      %v1232 = vpack.c.b16 %v1112, %v1104
      %v1233 = vpack.c.b16 %v1113, %v1105
      %v1234 = vpack.c.b16 %v1114, %v1106
      %v1235 = vpack.c.b16 %v1115, %v1107
      %v1236 = vpack.c.b16 %v1116, %v1108
      %v1237 = vpack.c.b16 %v1125, %v1117
      %v1238 = vpack.c.b16 %v1126, %v1118
      %v1239 = vpack.c.b16 %v1127, %v1119
      %v1240 = vpack.c.b16 %v1128, %v1120
      %v1241 = vpack.c.b16 %v1129, %v1121
      %v1242 = vpack.c.b16 %v1130, %v1122
      %v1243 = vpack.c.b16 %v1131, %v1123
      %v1244 = vpack.c.b16 %v1132, %v1124
      %v1245 = vpack.c.b16 %v1141, %v1133
      %v1246 = vpack.c.b16 %v1142, %v1134
      %v1247 = vpack.c.b16 %v1143, %v1135
      %v1248 = vpack.c.b16 %v1144, %v1136
      %v1249 = vpack.c.b16 %v1145, %v1137
      %v1250 = vpack.c.b16 %v1146, %v1138
      %v1251 = vpack.c.b16 %v1147, %v1139
      %v1252 = vpack.c.b16 %v1148, %v1140
      %v1253 = vpack.c.b16 %v1157, %v1149
      %v1254 = vpack.c.b16 %v1158, %v1150
      %v1255 = vpack.c.b16 %v1159, %v1151
      %v1256 = vpack.c.b16 %v1160, %v1152
      %v1257 = vpack.c.b16 %v1161, %v1153
      %v1258 = vpack.c.b16 %v1162, %v1154
      %v1259 = vpack.c.b16 %v1163, %v1155
      %v1260 = vpack.c.b16 %v1164, %v1156
      %v1261 = vpack.c.b16 %v1173, %v1165
      %v1262 = vpack.c.b16 %v1174, %v1166
      %v1263 = vpack.c.b16 %v1175, %v1167
      %v1264 = vpack.c.b16 %v1176, %v1168
      %v1265 = vpack.c.b16 %v1177, %v1169
      %v1266 = vpack.c.b16 %v1178, %v1170
      %v1267 = vpack.c.b16 %v1179, %v1171
      %v1268 = vpack.c.b16 %v1180, %v1172
      %v1269 = vpack.c.b16 %v1189, %v1181
      %v1270 = vpack.c.b16 %v1190, %v1182
      %v1271 = vpack.c.b16 %v1191, %v1183
      %v1272 = vpack.c.b16 %v1192, %v1184
      %v1273 = vpack.c.b16 %v1193, %v1185
      %v1274 = vpack.c.b16 %v1194, %v1186
      %v1275 = vpack.c.b16 %v1195, %v1187
      %v1276 = vpack.c.b16 %v1196, %v1188
      %v1277 = vpack.c.b16 %v1205, %v1197
      %v1278 = vpack.c.b16 %v1206, %v1198
      %v1279 = vpack.c.b16 %v1207, %v1199
      %v1280 = vpack.c.b16 %v1208, %v1200
      %v1281 = vpack.c.b16 %v1209, %v1201
      %v1282 = vpack.c.b16 %v1210, %v1202
      %v1283 = vpack.c.b16 %v1211, %v1203
      %v1284 = vpack.c.b16 %v1212, %v1204
      %v1285 = vpack.c.b16 %v1221, %v1213
      %v1286 = vpack.c.b16 %v1222, %v1214
      %v1287 = vpack.c.b16 %v1223, %v1215
      %v1288 = vpack.c.b16 %v1224, %v1216
      %v1289 = vpack.c.b16 %v1225, %v1217
      %v1290 = vpack.c.b16 %v1226, %v1218
      %v1291 = vpack.c.b16 %v1227, %v1219
      %v1292 = vpack.c.b16 %v1228, %v1220
      %1357 = vmatpush.bf16.msra.mxu0 %v1285
      %1358 = vmatpush.bf16.msra.mxu0 %v1277
      %1359 = vmatpush.bf16.msra.mxu0 %v1269
      %1360 = vmatpush.bf16.msra.mxu0 %v1261
      %1361 = vmatpush.bf16.msra.mxu0 %v1253
      %1362 = vmatpush.bf16.msra.mxu0 %v1245
      %1363 = vmatpush.bf16.msra.mxu0 %v1237
      %1364 = vmatpush.bf16.msra.mxu0 %v1229
      %1365 = vmatmul.bf16.gmra.mxu0 %v965
      %v1366 = vpop.f32.mrf.mxu0
      %v1367 = vadd.f32 0.0, %v1366
      %v1368 = vpop.f32.mrf.mxu0
      %v1369 = vadd.f32 0.0, %v1368
      %1370 = vmatmul.bf16.gmra.mxu0 %v966
      %v1371 = vpop.f32.mrf.mxu0
      %v1372 = vadd.f32 0.0, %v1371
      %v1373 = vpop.f32.mrf.mxu0
      %v1374 = vadd.f32 0.0, %v1373
      %1375 = vmatmul.bf16.gmra.mxu0 %v967
      %v1376 = vpop.f32.mrf.mxu0
      %v1377 = vadd.f32 0.0, %v1376
      %v1378 = vpop.f32.mrf.mxu0
      %v1379 = vadd.f32 0.0, %v1378
      %1380 = vmatmul.bf16.gmra.mxu0 %v968
      %v1381 = vpop.f32.mrf.mxu0
      %v1382 = vadd.f32 0.0, %v1381
      %v1383 = vpop.f32.mrf.mxu0
      %v1384 = vadd.f32 0.0, %v1383
      %1385 = vmatmul.bf16.gmra.mxu0 %v969
      %v1386 = vpop.f32.mrf.mxu0
      %v1387 = vadd.f32 0.0, %v1386
      %v1388 = vpop.f32.mrf.mxu0
      %v1389 = vadd.f32 0.0, %v1388
      %1390 = vmatmul.bf16.gmra.mxu0 %v970
      %v1391 = vpop.f32.mrf.mxu0
      %v1392 = vadd.f32 0.0, %v1391
      %v1393 = vpop.f32.mrf.mxu0
      %v1394 = vadd.f32 0.0, %v1393
      %1395 = vmatmul.bf16.gmra.mxu0 %v971
      %v1396 = vpop.f32.mrf.mxu0
      %v1397 = vadd.f32 0.0, %v1396
      %v1398 = vpop.f32.mrf.mxu0
      %v1399 = vadd.f32 0.0, %v1398
      %1400 = vmatmul.bf16.gmra.mxu0 %v972
      %v1401 = vpop.f32.mrf.mxu0
      %v1402 = vadd.f32 0.0, %v1401
      %v1403 = vpop.f32.mrf.mxu0
      %v1404 = vadd.f32 0.0, %v1403
      %1405 = vdwg.mxu0
      %1406 = vmatpush.bf16.msra.mxu0 %v1286
      %1407 = vmatpush.bf16.msra.mxu0 %v1278
      %1408 = vmatpush.bf16.msra.mxu0 %v1270
      %1409 = vmatpush.bf16.msra.mxu0 %v1262
      %1410 = vmatpush.bf16.msra.mxu0 %v1254
      %1411 = vmatpush.bf16.msra.mxu0 %v1246
      %1412 = vmatpush.bf16.msra.mxu0 %v1238
      %1413 = vmatpush.bf16.msra.mxu0 %v1230
      %1414 = vmatmul.bf16.gmra.mxu0 %v965
      %v1415 = vpop.f32.mrf.mxu0
      %v1416 = vadd.f32 0.0, %v1415
      %v1417 = vpop.f32.mrf.mxu0
      %v1418 = vadd.f32 0.0, %v1417
      %1419 = vmatmul.bf16.gmra.mxu0 %v966
      %v1420 = vpop.f32.mrf.mxu0
      %v1421 = vadd.f32 0.0, %v1420
      %v1422 = vpop.f32.mrf.mxu0
      %v1423 = vadd.f32 0.0, %v1422
      %1424 = vmatmul.bf16.gmra.mxu0 %v967
      %v1425 = vpop.f32.mrf.mxu0
      %v1426 = vadd.f32 0.0, %v1425
      %v1427 = vpop.f32.mrf.mxu0
      %v1428 = vadd.f32 0.0, %v1427
      %1429 = vmatmul.bf16.gmra.mxu0 %v968
      %v1430 = vpop.f32.mrf.mxu0
      %v1431 = vadd.f32 0.0, %v1430
      %v1432 = vpop.f32.mrf.mxu0
      %v1433 = vadd.f32 0.0, %v1432
      %1434 = vmatmul.bf16.gmra.mxu0 %v969
      %v1435 = vpop.f32.mrf.mxu0
      %v1436 = vadd.f32 0.0, %v1435
      %v1437 = vpop.f32.mrf.mxu0
      %v1438 = vadd.f32 0.0, %v1437
      %1439 = vmatmul.bf16.gmra.mxu0 %v970
      %v1440 = vpop.f32.mrf.mxu0
      %v1441 = vadd.f32 0.0, %v1440
      %v1442 = vpop.f32.mrf.mxu0
      %v1443 = vadd.f32 0.0, %v1442
      %1444 = vmatmul.bf16.gmra.mxu0 %v971
      %v1445 = vpop.f32.mrf.mxu0
      %v1446 = vadd.f32 0.0, %v1445
      %v1447 = vpop.f32.mrf.mxu0
      %v1448 = vadd.f32 0.0, %v1447
      %1449 = vmatmul.bf16.gmra.mxu0 %v972
      %v1450 = vpop.f32.mrf.mxu0
      %v1451 = vadd.f32 0.0, %v1450
      %v1452 = vpop.f32.mrf.mxu0
      %v1453 = vadd.f32 0.0, %v1452
      %1454 = vdwg.mxu0
      %1455 = vmatpush.bf16.msra.mxu0 %v1287
      %1456 = vmatpush.bf16.msra.mxu0 %v1279
      %1457 = vmatpush.bf16.msra.mxu0 %v1271
      %1458 = vmatpush.bf16.msra.mxu0 %v1263
      %1459 = vmatpush.bf16.msra.mxu0 %v1255
      %1460 = vmatpush.bf16.msra.mxu0 %v1247
      %1461 = vmatpush.bf16.msra.mxu0 %v1239
      %1462 = vmatpush.bf16.msra.mxu0 %v1231
      %1463 = vmatmul.bf16.gmra.mxu0 %v965
      %v1464 = vpop.f32.mrf.mxu0
      %v1465 = vadd.f32 0.0, %v1464
      %v1466 = vpop.f32.mrf.mxu0
      %v1467 = vadd.f32 0.0, %v1466
      %1468 = vmatmul.bf16.gmra.mxu0 %v966
      %v1469 = vpop.f32.mrf.mxu0
      %v1470 = vadd.f32 0.0, %v1469
      %v1471 = vpop.f32.mrf.mxu0
      %v1472 = vadd.f32 0.0, %v1471
      %1473 = vmatmul.bf16.gmra.mxu0 %v967
      %v1474 = vpop.f32.mrf.mxu0
      %v1475 = vadd.f32 0.0, %v1474
      %v1476 = vpop.f32.mrf.mxu0
      %v1477 = vadd.f32 0.0, %v1476
      %1478 = vmatmul.bf16.gmra.mxu0 %v968
      %v1479 = vpop.f32.mrf.mxu0
      %v1480 = vadd.f32 0.0, %v1479
      %v1481 = vpop.f32.mrf.mxu0
      %v1482 = vadd.f32 0.0, %v1481
      %1483 = vmatmul.bf16.gmra.mxu0 %v969
      %v1484 = vpop.f32.mrf.mxu0
      %v1485 = vadd.f32 0.0, %v1484
      %v1486 = vpop.f32.mrf.mxu0
      %v1487 = vadd.f32 0.0, %v1486
      %1488 = vmatmul.bf16.gmra.mxu0 %v970
      %v1489 = vpop.f32.mrf.mxu0
      %v1490 = vadd.f32 0.0, %v1489
      %v1491 = vpop.f32.mrf.mxu0
      %v1492 = vadd.f32 0.0, %v1491
      %1493 = vmatmul.bf16.gmra.mxu0 %v971
      %v1494 = vpop.f32.mrf.mxu0
      %v1495 = vadd.f32 0.0, %v1494
      %v1496 = vpop.f32.mrf.mxu0
      %v1497 = vadd.f32 0.0, %v1496
      %1498 = vmatmul.bf16.gmra.mxu0 %v972
      %v1499 = vpop.f32.mrf.mxu0
      %v1500 = vadd.f32 0.0, %v1499
      %v1501 = vpop.f32.mrf.mxu0
      %v1502 = vadd.f32 0.0, %v1501
      %1503 = vdwg.mxu0
      %1504 = vmatpush.bf16.msra.mxu0 %v1288
      %1505 = vmatpush.bf16.msra.mxu0 %v1280
      %1506 = vmatpush.bf16.msra.mxu0 %v1272
      %1507 = vmatpush.bf16.msra.mxu0 %v1264
      %1508 = vmatpush.bf16.msra.mxu0 %v1256
      %1509 = vmatpush.bf16.msra.mxu0 %v1248
      %1510 = vmatpush.bf16.msra.mxu0 %v1240
      %1511 = vmatpush.bf16.msra.mxu0 %v1232
      %1512 = vmatmul.bf16.gmra.mxu0 %v965
      %v1513 = vpop.f32.mrf.mxu0
      %v1514 = vadd.f32 0.0, %v1513
      %v1515 = vpop.f32.mrf.mxu0
      %v1516 = vadd.f32 0.0, %v1515
      %1517 = vmatmul.bf16.gmra.mxu0 %v966
      %v1518 = vpop.f32.mrf.mxu0
      %v1519 = vadd.f32 0.0, %v1518
      %v1520 = vpop.f32.mrf.mxu0
      %v1521 = vadd.f32 0.0, %v1520
      %1522 = vmatmul.bf16.gmra.mxu0 %v967
      %v1523 = vpop.f32.mrf.mxu0
      %v1524 = vadd.f32 0.0, %v1523
      %v1525 = vpop.f32.mrf.mxu0
      %v1526 = vadd.f32 0.0, %v1525
      %1527 = vmatmul.bf16.gmra.mxu0 %v968
      %v1528 = vpop.f32.mrf.mxu0
      %v1529 = vadd.f32 0.0, %v1528
      %v1530 = vpop.f32.mrf.mxu0
      %v1531 = vadd.f32 0.0, %v1530
      %1532 = vmatmul.bf16.gmra.mxu0 %v969
      %v1533 = vpop.f32.mrf.mxu0
      %v1534 = vadd.f32 0.0, %v1533
      %v1535 = vpop.f32.mrf.mxu0
      %v1536 = vadd.f32 0.0, %v1535
      %1537 = vmatmul.bf16.gmra.mxu0 %v970
      %v1538 = vpop.f32.mrf.mxu0
      %v1539 = vadd.f32 0.0, %v1538
      %v1540 = vpop.f32.mrf.mxu0
      %v1541 = vadd.f32 0.0, %v1540
      %1542 = vmatmul.bf16.gmra.mxu0 %v971
      %v1543 = vpop.f32.mrf.mxu0
      %v1544 = vadd.f32 0.0, %v1543
      %v1545 = vpop.f32.mrf.mxu0
      %v1546 = vadd.f32 0.0, %v1545
      %1547 = vmatmul.bf16.gmra.mxu0 %v972
      %v1548 = vpop.f32.mrf.mxu0
      %v1549 = vadd.f32 0.0, %v1548
      %v1550 = vpop.f32.mrf.mxu0
      %v1551 = vadd.f32 0.0, %v1550
      %1552 = vdwg.mxu0
      %1553 = vmatpush.bf16.msra.mxu0 %v1289
      %1554 = vmatpush.bf16.msra.mxu0 %v1281
      %1555 = vmatpush.bf16.msra.mxu0 %v1273
      %1556 = vmatpush.bf16.msra.mxu0 %v1265
      %1557 = vmatpush.bf16.msra.mxu0 %v1257
      %1558 = vmatpush.bf16.msra.mxu0 %v1249
      %1559 = vmatpush.bf16.msra.mxu0 %v1241
      %1560 = vmatpush.bf16.msra.mxu0 %v1233
      %1561 = vmatmul.bf16.gmra.mxu0 %v965
      %v1562 = vpop.f32.mrf.mxu0
      %v1563 = vadd.f32 0.0, %v1562
      %v1564 = vpop.f32.mrf.mxu0
      %v1565 = vadd.f32 0.0, %v1564
      %1566 = vmatmul.bf16.gmra.mxu0 %v966
      %v1567 = vpop.f32.mrf.mxu0
      %v1568 = vadd.f32 0.0, %v1567
      %v1569 = vpop.f32.mrf.mxu0
      %v1570 = vadd.f32 0.0, %v1569
      %1571 = vmatmul.bf16.gmra.mxu0 %v967
      %v1572 = vpop.f32.mrf.mxu0
      %v1573 = vadd.f32 0.0, %v1572
      %v1574 = vpop.f32.mrf.mxu0
      %v1575 = vadd.f32 0.0, %v1574
      %1576 = vmatmul.bf16.gmra.mxu0 %v968
      %v1577 = vpop.f32.mrf.mxu0
      %v1578 = vadd.f32 0.0, %v1577
      %v1579 = vpop.f32.mrf.mxu0
      %v1580 = vadd.f32 0.0, %v1579
      %1581 = vmatmul.bf16.gmra.mxu0 %v969
      %v1582 = vpop.f32.mrf.mxu0
      %v1583 = vadd.f32 0.0, %v1582
      %v1584 = vpop.f32.mrf.mxu0
      %v1585 = vadd.f32 0.0, %v1584
      %1586 = vmatmul.bf16.gmra.mxu0 %v970
      %v1587 = vpop.f32.mrf.mxu0
      %v1588 = vadd.f32 0.0, %v1587
      %v1589 = vpop.f32.mrf.mxu0
      %v1590 = vadd.f32 0.0, %v1589
      %1591 = vmatmul.bf16.gmra.mxu0 %v971
      %v1592 = vpop.f32.mrf.mxu0
      %v1593 = vadd.f32 0.0, %v1592
      %v1594 = vpop.f32.mrf.mxu0
      %v1595 = vadd.f32 0.0, %v1594
      %1596 = vmatmul.bf16.gmra.mxu0 %v972
      %v1597 = vpop.f32.mrf.mxu0
      %v1598 = vadd.f32 0.0, %v1597
      %v1599 = vpop.f32.mrf.mxu0
      %v1600 = vadd.f32 0.0, %v1599
      %1601 = vdwg.mxu0
      %1602 = vmatpush.bf16.msra.mxu0 %v1290
      %1603 = vmatpush.bf16.msra.mxu0 %v1282
      %1604 = vmatpush.bf16.msra.mxu0 %v1274
      %1605 = vmatpush.bf16.msra.mxu0 %v1266
      %1606 = vmatpush.bf16.msra.mxu0 %v1258
      %1607 = vmatpush.bf16.msra.mxu0 %v1250
      %1608 = vmatpush.bf16.msra.mxu0 %v1242
      %1609 = vmatpush.bf16.msra.mxu0 %v1234
      %1610 = vmatmul.bf16.gmra.mxu0 %v965
      %v1611 = vpop.f32.mrf.mxu0
      %v1612 = vadd.f32 0.0, %v1611
      %v1613 = vpop.f32.mrf.mxu0
      %v1614 = vadd.f32 0.0, %v1613
      %1615 = vmatmul.bf16.gmra.mxu0 %v966
      %v1616 = vpop.f32.mrf.mxu0
      %v1617 = vadd.f32 0.0, %v1616
      %v1618 = vpop.f32.mrf.mxu0
      %v1619 = vadd.f32 0.0, %v1618
      %1620 = vmatmul.bf16.gmra.mxu0 %v967
      %v1621 = vpop.f32.mrf.mxu0
      %v1622 = vadd.f32 0.0, %v1621
      %v1623 = vpop.f32.mrf.mxu0
      %v1624 = vadd.f32 0.0, %v1623
      %1625 = vmatmul.bf16.gmra.mxu0 %v968
      %v1626 = vpop.f32.mrf.mxu0
      %v1627 = vadd.f32 0.0, %v1626
      %v1628 = vpop.f32.mrf.mxu0
      %v1629 = vadd.f32 0.0, %v1628
      %1630 = vmatmul.bf16.gmra.mxu0 %v969
      %v1631 = vpop.f32.mrf.mxu0
      %v1632 = vadd.f32 0.0, %v1631
      %v1633 = vpop.f32.mrf.mxu0
      %v1634 = vadd.f32 0.0, %v1633
      %1635 = vmatmul.bf16.gmra.mxu0 %v970
      %v1636 = vpop.f32.mrf.mxu0
      %v1637 = vadd.f32 0.0, %v1636
      %v1638 = vpop.f32.mrf.mxu0
      %v1639 = vadd.f32 0.0, %v1638
      %1640 = vmatmul.bf16.gmra.mxu0 %v971
      %v1641 = vpop.f32.mrf.mxu0
      %v1642 = vadd.f32 0.0, %v1641
      %v1643 = vpop.f32.mrf.mxu0
      %v1644 = vadd.f32 0.0, %v1643
      %1645 = vmatmul.bf16.gmra.mxu0 %v972
      %v1646 = vpop.f32.mrf.mxu0
      %v1647 = vadd.f32 0.0, %v1646
      %v1648 = vpop.f32.mrf.mxu0
      %v1649 = vadd.f32 0.0, %v1648
      %1650 = vdwg.mxu0
      %1651 = vmatpush.bf16.msra.mxu0 %v1291
      %1652 = vmatpush.bf16.msra.mxu0 %v1283
      %1653 = vmatpush.bf16.msra.mxu0 %v1275
      %1654 = vmatpush.bf16.msra.mxu0 %v1267
      %1655 = vmatpush.bf16.msra.mxu0 %v1259
      %1656 = vmatpush.bf16.msra.mxu0 %v1251
      %1657 = vmatpush.bf16.msra.mxu0 %v1243
      %1658 = vmatpush.bf16.msra.mxu0 %v1235
      %1659 = vmatmul.bf16.gmra.mxu0 %v965
      %v1660 = vpop.f32.mrf.mxu0
      %v1661 = vadd.f32 0.0, %v1660
      %v1662 = vpop.f32.mrf.mxu0
      %v1663 = vadd.f32 0.0, %v1662
      %1664 = vmatmul.bf16.gmra.mxu0 %v966
      %v1665 = vpop.f32.mrf.mxu0
      %v1666 = vadd.f32 0.0, %v1665
      %v1667 = vpop.f32.mrf.mxu0
      %v1668 = vadd.f32 0.0, %v1667
      %1669 = vmatmul.bf16.gmra.mxu0 %v967
      %v1670 = vpop.f32.mrf.mxu0
      %v1671 = vadd.f32 0.0, %v1670
      %v1672 = vpop.f32.mrf.mxu0
      %v1673 = vadd.f32 0.0, %v1672
      %1674 = vmatmul.bf16.gmra.mxu0 %v968
      %v1675 = vpop.f32.mrf.mxu0
      %v1676 = vadd.f32 0.0, %v1675
      %v1677 = vpop.f32.mrf.mxu0
      %v1678 = vadd.f32 0.0, %v1677
      %1679 = vmatmul.bf16.gmra.mxu0 %v969
      %v1680 = vpop.f32.mrf.mxu0
      %v1681 = vadd.f32 0.0, %v1680
      %v1682 = vpop.f32.mrf.mxu0
      %v1683 = vadd.f32 0.0, %v1682
      %1684 = vmatmul.bf16.gmra.mxu0 %v970
      %v1685 = vpop.f32.mrf.mxu0
      %v1686 = vadd.f32 0.0, %v1685
      %v1687 = vpop.f32.mrf.mxu0
      %v1688 = vadd.f32 0.0, %v1687
      %1689 = vmatmul.bf16.gmra.mxu0 %v971
      %v1690 = vpop.f32.mrf.mxu0
      %v1691 = vadd.f32 0.0, %v1690
      %v1692 = vpop.f32.mrf.mxu0
      %v1693 = vadd.f32 0.0, %v1692
      %1694 = vmatmul.bf16.gmra.mxu0 %v972
      %v1695 = vpop.f32.mrf.mxu0
      %v1696 = vadd.f32 0.0, %v1695
      %v1697 = vpop.f32.mrf.mxu0
      %v1698 = vadd.f32 0.0, %v1697
      %1699 = vdwg.mxu0
      %1700 = vmatpush.bf16.msra.mxu0 %v1292
      %1701 = vmatpush.bf16.msra.mxu0 %v1284
      %1702 = vmatpush.bf16.msra.mxu0 %v1276
      %1703 = vmatpush.bf16.msra.mxu0 %v1268
      %1704 = vmatpush.bf16.msra.mxu0 %v1260
      %1705 = vmatpush.bf16.msra.mxu0 %v1252
      %1706 = vmatpush.bf16.msra.mxu0 %v1244
      %1707 = vmatpush.bf16.msra.mxu0 %v1236
      %1708 = vmatmul.bf16.gmra.mxu0 %v965
      %v1709 = vpop.f32.mrf.mxu0
      %v1710 = vadd.f32 0.0, %v1709
      %v1711 = vpop.f32.mrf.mxu0
      %v1712 = vadd.f32 0.0, %v1711
      %1713 = vmatmul.bf16.gmra.mxu0 %v966
      %v1714 = vpop.f32.mrf.mxu0
      %v1715 = vadd.f32 0.0, %v1714
      %v1716 = vpop.f32.mrf.mxu0
      %v1717 = vadd.f32 0.0, %v1716
      %1718 = vmatmul.bf16.gmra.mxu0 %v967
      %v1719 = vpop.f32.mrf.mxu0
      %v1720 = vadd.f32 0.0, %v1719
      %v1721 = vpop.f32.mrf.mxu0
      %v1722 = vadd.f32 0.0, %v1721
      %1723 = vmatmul.bf16.gmra.mxu0 %v968
      %v1724 = vpop.f32.mrf.mxu0
      %v1725 = vadd.f32 0.0, %v1724
      %v1726 = vpop.f32.mrf.mxu0
      %v1727 = vadd.f32 0.0, %v1726
      %1728 = vmatmul.bf16.gmra.mxu0 %v969
      %v1729 = vpop.f32.mrf.mxu0
      %v1730 = vadd.f32 0.0, %v1729
      %v1731 = vpop.f32.mrf.mxu0
      %v1732 = vadd.f32 0.0, %v1731
      %1733 = vmatmul.bf16.gmra.mxu0 %v970
      %v1734 = vpop.f32.mrf.mxu0
      %v1735 = vadd.f32 0.0, %v1734
      %v1736 = vpop.f32.mrf.mxu0
      %v1737 = vadd.f32 0.0, %v1736
      %1738 = vmatmul.bf16.gmra.mxu0 %v971
      %v1739 = vpop.f32.mrf.mxu0
      %v1740 = vadd.f32 0.0, %v1739
      %v1741 = vpop.f32.mrf.mxu0
      %v1742 = vadd.f32 0.0, %v1741
      %1743 = vmatmul.bf16.gmra.mxu0 %v972
      %v1744 = vpop.f32.mrf.mxu0
      %v1745 = vadd.f32 0.0, %v1744
      %v1746 = vpop.f32.mrf.mxu0
      %v1747 = vadd.f32 0.0, %v1746
      %1748 = vdwg.mxu0
      %v1749 = vadd.f32 %v1367, %v1369
      %v1750 = vadd.f32 %v1749, %v1372
      %v1751 = vadd.f32 %v1750, %v1374
      %v1752 = vadd.f32 %v1751, %v1377
      %v1753 = vadd.f32 %v1752, %v1379
      %v1754 = vadd.f32 %v1753, %v1382
      %v1755 = vadd.f32 %v1754, %v1384
      %v1756 = vadd.f32 %v1755, %v1387
      %v1757 = vadd.f32 %v1756, %v1389
      %v1758 = vadd.f32 %v1757, %v1392
      %v1759 = vadd.f32 %v1758, %v1394
      %v1760 = vadd.f32 %v1759, %v1397
      %v1761 = vadd.f32 %v1760, %v1399
      %v1762 = vadd.f32 %v1761, %v1402
      %v1763 = vadd.f32 %v1762, %v1404
      %v1764 = vrot.slane %v1763, 4
      %v1765 = vadd.f32 %v1763, %v1764
      %v1766 = vrot.slane %v1765, 2
      %v1767 = vadd.f32 %v1765, %v1766
      %v1768 = vrot.slane %v1767, 1
      %v1769 = vadd.f32 %v1767, %v1768
      %v1770 = vadd.f32 %v1416, %v1418
      %v1771 = vadd.f32 %v1770, %v1421
      %v1772 = vadd.f32 %v1771, %v1423
      %v1773 = vadd.f32 %v1772, %v1426
      %v1774 = vadd.f32 %v1773, %v1428
      %v1775 = vadd.f32 %v1774, %v1431
      %v1776 = vadd.f32 %v1775, %v1433
      %v1777 = vadd.f32 %v1776, %v1436
      %v1778 = vadd.f32 %v1777, %v1438
      %v1779 = vadd.f32 %v1778, %v1441
      %v1780 = vadd.f32 %v1779, %v1443
      %v1781 = vadd.f32 %v1780, %v1446
      %v1782 = vadd.f32 %v1781, %v1448
      %v1783 = vadd.f32 %v1782, %v1451
      %v1784 = vadd.f32 %v1783, %v1453
      %v1785 = vrot.slane %v1784, 4
      %v1786 = vadd.f32 %v1784, %v1785
      %v1787 = vrot.slane %v1786, 2
      %v1788 = vadd.f32 %v1786, %v1787
      %v1789 = vrot.slane %v1788, 1
      %v1790 = vadd.f32 %v1788, %v1789
      %v1791 = vadd.f32 %v1465, %v1467
      %v1792 = vadd.f32 %v1791, %v1470
      %v1793 = vadd.f32 %v1792, %v1472
      %v1794 = vadd.f32 %v1793, %v1475
      %v1795 = vadd.f32 %v1794, %v1477
      %v1796 = vadd.f32 %v1795, %v1480
      %v1797 = vadd.f32 %v1796, %v1482
      %v1798 = vadd.f32 %v1797, %v1485
      %v1799 = vadd.f32 %v1798, %v1487
      %v1800 = vadd.f32 %v1799, %v1490
      %v1801 = vadd.f32 %v1800, %v1492
      %v1802 = vadd.f32 %v1801, %v1495
      %v1803 = vadd.f32 %v1802, %v1497
      %v1804 = vadd.f32 %v1803, %v1500
      %v1805 = vadd.f32 %v1804, %v1502
      %v1806 = vrot.slane %v1805, 4
      %v1807 = vadd.f32 %v1805, %v1806
      %v1808 = vrot.slane %v1807, 2
      %v1809 = vadd.f32 %v1807, %v1808
      %v1810 = vrot.slane %v1809, 1
      %v1811 = vadd.f32 %v1809, %v1810
      %v1812 = vadd.f32 %v1514, %v1516
      %v1813 = vadd.f32 %v1812, %v1519
      %v1814 = vadd.f32 %v1813, %v1521
      %v1815 = vadd.f32 %v1814, %v1524
      %v1816 = vadd.f32 %v1815, %v1526
      %v1817 = vadd.f32 %v1816, %v1529
      %v1818 = vadd.f32 %v1817, %v1531
      %v1819 = vadd.f32 %v1818, %v1534
      %v1820 = vadd.f32 %v1819, %v1536
      %v1821 = vadd.f32 %v1820, %v1539
      %v1822 = vadd.f32 %v1821, %v1541
      %v1823 = vadd.f32 %v1822, %v1544
      %v1824 = vadd.f32 %v1823, %v1546
      %v1825 = vadd.f32 %v1824, %v1549
      %v1826 = vadd.f32 %v1825, %v1551
      %v1827 = vrot.slane %v1826, 4
      %v1828 = vadd.f32 %v1826, %v1827
      %v1829 = vrot.slane %v1828, 2
      %v1830 = vadd.f32 %v1828, %v1829
      %v1831 = vrot.slane %v1830, 1
      %v1832 = vadd.f32 %v1830, %v1831
      %v1833 = vadd.f32 %v1563, %v1565
      %v1834 = vadd.f32 %v1833, %v1568
      %v1835 = vadd.f32 %v1834, %v1570
      %v1836 = vadd.f32 %v1835, %v1573
      %v1837 = vadd.f32 %v1836, %v1575
      %v1838 = vadd.f32 %v1837, %v1578
      %v1839 = vadd.f32 %v1838, %v1580
      %v1840 = vadd.f32 %v1839, %v1583
      %v1841 = vadd.f32 %v1840, %v1585
      %v1842 = vadd.f32 %v1841, %v1588
      %v1843 = vadd.f32 %v1842, %v1590
      %v1844 = vadd.f32 %v1843, %v1593
      %v1845 = vadd.f32 %v1844, %v1595
      %v1846 = vadd.f32 %v1845, %v1598
      %v1847 = vadd.f32 %v1846, %v1600
      %v1848 = vrot.slane %v1847, 4
      %v1849 = vadd.f32 %v1847, %v1848
      %v1850 = vrot.slane %v1849, 2
      %v1851 = vadd.f32 %v1849, %v1850
      %v1852 = vrot.slane %v1851, 1
      %v1853 = vadd.f32 %v1851, %v1852
      %v1854 = vadd.f32 %v1612, %v1614
      %v1855 = vadd.f32 %v1854, %v1617
      %v1856 = vadd.f32 %v1855, %v1619
      %v1857 = vadd.f32 %v1856, %v1622
      %v1858 = vadd.f32 %v1857, %v1624
      %v1859 = vadd.f32 %v1858, %v1627
      %v1860 = vadd.f32 %v1859, %v1629
      %v1861 = vadd.f32 %v1860, %v1632
      %v1862 = vadd.f32 %v1861, %v1634
      %v1863 = vadd.f32 %v1862, %v1637
      %v1864 = vadd.f32 %v1863, %v1639
      %v1865 = vadd.f32 %v1864, %v1642
      %v1866 = vadd.f32 %v1865, %v1644
      %v1867 = vadd.f32 %v1866, %v1647
      %v1868 = vadd.f32 %v1867, %v1649
      %v1869 = vrot.slane %v1868, 4
      %v1870 = vadd.f32 %v1868, %v1869
      %v1871 = vrot.slane %v1870, 2
      %v1872 = vadd.f32 %v1870, %v1871
      %v1873 = vrot.slane %v1872, 1
      %v1874 = vadd.f32 %v1872, %v1873
      %v1875 = vadd.f32 %v1661, %v1663
      %v1876 = vadd.f32 %v1875, %v1666
      %v1877 = vadd.f32 %v1876, %v1668
      %v1878 = vadd.f32 %v1877, %v1671
      %v1879 = vadd.f32 %v1878, %v1673
      %v1880 = vadd.f32 %v1879, %v1676
      %v1881 = vadd.f32 %v1880, %v1678
      %v1882 = vadd.f32 %v1881, %v1681
      %v1883 = vadd.f32 %v1882, %v1683
      %v1884 = vadd.f32 %v1883, %v1686
      %v1885 = vadd.f32 %v1884, %v1688
      %v1886 = vadd.f32 %v1885, %v1691
      %v1887 = vadd.f32 %v1886, %v1693
      %v1888 = vadd.f32 %v1887, %v1696
      %v1889 = vadd.f32 %v1888, %v1698
      %v1890 = vrot.slane %v1889, 4
      %v1891 = vadd.f32 %v1889, %v1890
      %v1892 = vrot.slane %v1891, 2
      %v1893 = vadd.f32 %v1891, %v1892
      %v1894 = vrot.slane %v1893, 1
      %v1895 = vadd.f32 %v1893, %v1894
      %v1896 = vadd.f32 %v1710, %v1712
      %v1897 = vadd.f32 %v1896, %v1715
      %v1898 = vadd.f32 %v1897, %v1717
      %v1899 = vadd.f32 %v1898, %v1720
      %v1900 = vadd.f32 %v1899, %v1722
      %v1901 = vadd.f32 %v1900, %v1725
      %v1902 = vadd.f32 %v1901, %v1727
      %v1903 = vadd.f32 %v1902, %v1730
      %v1904 = vadd.f32 %v1903, %v1732
      %v1905 = vadd.f32 %v1904, %v1735
      %v1906 = vadd.f32 %v1905, %v1737
      %v1907 = vadd.f32 %v1906, %v1740
      %v1908 = vadd.f32 %v1907, %v1742
      %v1909 = vadd.f32 %v1908, %v1745
      %v1910 = vadd.f32 %v1909, %v1747
      %v1911 = vrot.slane %v1910, 4
      %v1912 = vadd.f32 %v1910, %v1911
      %v1913 = vrot.slane %v1912, 2
      %v1914 = vadd.f32 %v1912, %v1913
      %v1915 = vrot.slane %v1914, 1
      %v1916 = vadd.f32 %v1914, %v1915
      %v1917 = vstv %s778
      %v1918 = vrcp.pop %v1917
      %v1919 = vmul.f32 %v1917, %v1918
      %v1920 = vsub.f32 1.0, %v1919
      %v1921 = vmul.f32 %v1918, %v1920
      %v1922 = vadd.f32 %v1918, %v1921
      %vm1923 = vweird.f32 %v1917
      %vm1924 = vweird.f32 %v1918
      %vm1925 = vmor %vm1923, %vm1924
      %v1926 = vsel %vm1925, %v1918, %v1922
      %v1927 = vand.u32 2147483647, %v1917
      %vm1928 = vcmp.eq.f32.partialorder %v1927, 8.507059e+37
      %v1929 = vand.u32 %v1917, 2147483648
      %v1930 = vor.u32 1.1754944e-38, %v1929
      %v1931 = vsel %vm1928, %v1930, %v1926
      %v1932 = vmul.f32 %v1769, %v1931
      %v1933 = vmul.f32 %v1790, %v1931
      %v1934 = vmul.f32 %v1811, %v1931
      %v1935 = vmul.f32 %v1832, %v1931
      %v1936 = vmul.f32 %v1853, %v1931
      %v1937 = vmul.f32 %v1874, %v1931
      %v1938 = vmul.f32 %v1895, %v1931
      %v1939 = vmul.f32 %v1916, %v1931
      %v1940 = vsub.f32 %v1367, %v1932
      %v1941 = vsub.f32 %v1416, %v1933
      %v1942 = vsub.f32 %v1465, %v1934
      %v1943 = vsub.f32 %v1514, %v1935
      %v1944 = vsub.f32 %v1563, %v1936
      %v1945 = vsub.f32 %v1612, %v1937
      %v1946 = vsub.f32 %v1661, %v1938
      %v1947 = vsub.f32 %v1710, %v1939
      %v1948 = vsub.f32 %v1369, %v1932
      %v1949 = vsub.f32 %v1418, %v1933
      %v1950 = vsub.f32 %v1467, %v1934
      %v1951 = vsub.f32 %v1516, %v1935
      %v1952 = vsub.f32 %v1565, %v1936
      %v1953 = vsub.f32 %v1614, %v1937
      %v1954 = vsub.f32 %v1663, %v1938
      %v1955 = vsub.f32 %v1712, %v1939
      %v1956 = vsub.f32 %v1372, %v1932
      %v1957 = vsub.f32 %v1421, %v1933
      %v1958 = vsub.f32 %v1470, %v1934
      %v1959 = vsub.f32 %v1519, %v1935
      %v1960 = vsub.f32 %v1568, %v1936
      %v1961 = vsub.f32 %v1617, %v1937
      %v1962 = vsub.f32 %v1666, %v1938
      %v1963 = vsub.f32 %v1715, %v1939
      %v1964 = vsub.f32 %v1374, %v1932
      %v1965 = vsub.f32 %v1423, %v1933
      %v1966 = vsub.f32 %v1472, %v1934
      %v1967 = vsub.f32 %v1521, %v1935
      %v1968 = vsub.f32 %v1570, %v1936
      %v1969 = vsub.f32 %v1619, %v1937
      %v1970 = vsub.f32 %v1668, %v1938
      %v1971 = vsub.f32 %v1717, %v1939
      %v1972 = vsub.f32 %v1377, %v1932
      %v1973 = vsub.f32 %v1426, %v1933
      %v1974 = vsub.f32 %v1475, %v1934
      %v1975 = vsub.f32 %v1524, %v1935
      %v1976 = vsub.f32 %v1573, %v1936
      %v1977 = vsub.f32 %v1622, %v1937
      %v1978 = vsub.f32 %v1671, %v1938
      %v1979 = vsub.f32 %v1720, %v1939
      %v1980 = vsub.f32 %v1379, %v1932
      %v1981 = vsub.f32 %v1428, %v1933
      %v1982 = vsub.f32 %v1477, %v1934
      %v1983 = vsub.f32 %v1526, %v1935
      %v1984 = vsub.f32 %v1575, %v1936
      %v1985 = vsub.f32 %v1624, %v1937
      %v1986 = vsub.f32 %v1673, %v1938
      %v1987 = vsub.f32 %v1722, %v1939
      %v1988 = vsub.f32 %v1382, %v1932
      %v1989 = vsub.f32 %v1431, %v1933
      %v1990 = vsub.f32 %v1480, %v1934
      %v1991 = vsub.f32 %v1529, %v1935
      %v1992 = vsub.f32 %v1578, %v1936
      %v1993 = vsub.f32 %v1627, %v1937
      %v1994 = vsub.f32 %v1676, %v1938
      %v1995 = vsub.f32 %v1725, %v1939
      %v1996 = vsub.f32 %v1384, %v1932
      %v1997 = vsub.f32 %v1433, %v1933
      %v1998 = vsub.f32 %v1482, %v1934
      %v1999 = vsub.f32 %v1531, %v1935
      %v2000 = vsub.f32 %v1580, %v1936
      %v2001 = vsub.f32 %v1629, %v1937
      %v2002 = vsub.f32 %v1678, %v1938
      %v2003 = vsub.f32 %v1727, %v1939
      %v2004 = vsub.f32 %v1387, %v1932
      %v2005 = vsub.f32 %v1436, %v1933
      %v2006 = vsub.f32 %v1485, %v1934
      %v2007 = vsub.f32 %v1534, %v1935
      %v2008 = vsub.f32 %v1583, %v1936
      %v2009 = vsub.f32 %v1632, %v1937
      %v2010 = vsub.f32 %v1681, %v1938
      %v2011 = vsub.f32 %v1730, %v1939
      %v2012 = vsub.f32 %v1389, %v1932
      %v2013 = vsub.f32 %v1438, %v1933
      %v2014 = vsub.f32 %v1487, %v1934
      %v2015 = vsub.f32 %v1536, %v1935
      %v2016 = vsub.f32 %v1585, %v1936
      %v2017 = vsub.f32 %v1634, %v1937
      %v2018 = vsub.f32 %v1683, %v1938
      %v2019 = vsub.f32 %v1732, %v1939
      %v2020 = vsub.f32 %v1392, %v1932
      %v2021 = vsub.f32 %v1441, %v1933
      %v2022 = vsub.f32 %v1490, %v1934
      %v2023 = vsub.f32 %v1539, %v1935
      %v2024 = vsub.f32 %v1588, %v1936
      %v2025 = vsub.f32 %v1637, %v1937
      %v2026 = vsub.f32 %v1686, %v1938
      %v2027 = vsub.f32 %v1735, %v1939
      %v2028 = vsub.f32 %v1394, %v1932
      %v2029 = vsub.f32 %v1443, %v1933
      %v2030 = vsub.f32 %v1492, %v1934
      %v2031 = vsub.f32 %v1541, %v1935
      %v2032 = vsub.f32 %v1590, %v1936
      %v2033 = vsub.f32 %v1639, %v1937
      %v2034 = vsub.f32 %v1688, %v1938
      %v2035 = vsub.f32 %v1737, %v1939
      %v2036 = vsub.f32 %v1397, %v1932
      %v2037 = vsub.f32 %v1446, %v1933
      %v2038 = vsub.f32 %v1495, %v1934
      %v2039 = vsub.f32 %v1544, %v1935
      %v2040 = vsub.f32 %v1593, %v1936
      %v2041 = vsub.f32 %v1642, %v1937
      %v2042 = vsub.f32 %v1691, %v1938
      %v2043 = vsub.f32 %v1740, %v1939
      %v2044 = vsub.f32 %v1399, %v1932
      %v2045 = vsub.f32 %v1448, %v1933
      %v2046 = vsub.f32 %v1497, %v1934
      %v2047 = vsub.f32 %v1546, %v1935
      %v2048 = vsub.f32 %v1595, %v1936
      %v2049 = vsub.f32 %v1644, %v1937
      %v2050 = vsub.f32 %v1693, %v1938
      %v2051 = vsub.f32 %v1742, %v1939
      %v2052 = vsub.f32 %v1402, %v1932
      %v2053 = vsub.f32 %v1451, %v1933
      %v2054 = vsub.f32 %v1500, %v1934
      %v2055 = vsub.f32 %v1549, %v1935
      %v2056 = vsub.f32 %v1598, %v1936
      %v2057 = vsub.f32 %v1647, %v1937
      %v2058 = vsub.f32 %v1696, %v1938
      %v2059 = vsub.f32 %v1745, %v1939
      %v2060 = vsub.f32 %v1404, %v1932
      %v2061 = vsub.f32 %v1453, %v1933
      %v2062 = vsub.f32 %v1502, %v1934
      %v2063 = vsub.f32 %v1551, %v1935
      %v2064 = vsub.f32 %v1600, %v1936
      %v2065 = vsub.f32 %v1649, %v1937
      %v2066 = vsub.f32 %v1698, %v1938
      %v2067 = vsub.f32 %v1747, %v1939
      %v2068 = vmul.f32 %v1940, %v743
      %v2069 = vmul.f32 %v1941, %v743
      %v2070 = vmul.f32 %v1942, %v743
      %v2071 = vmul.f32 %v1943, %v743
      %v2072 = vmul.f32 %v1944, %v743
      %v2073 = vmul.f32 %v1945, %v743
      %v2074 = vmul.f32 %v1946, %v743
      %v2075 = vmul.f32 %v1947, %v743
      %v2076 = vmul.f32 %v1948, %v744
      %v2077 = vmul.f32 %v1949, %v744
      %v2078 = vmul.f32 %v1950, %v744
      %v2079 = vmul.f32 %v1951, %v744
      %v2080 = vmul.f32 %v1952, %v744
      %v2081 = vmul.f32 %v1953, %v744
      %v2082 = vmul.f32 %v1954, %v744
      %v2083 = vmul.f32 %v1955, %v744
      %v2084 = vmul.f32 %v1956, %v745
      %v2085 = vmul.f32 %v1957, %v745
      %v2086 = vmul.f32 %v1958, %v745
      %v2087 = vmul.f32 %v1959, %v745
      %v2088 = vmul.f32 %v1960, %v745
      %v2089 = vmul.f32 %v1961, %v745
      %v2090 = vmul.f32 %v1962, %v745
      %v2091 = vmul.f32 %v1963, %v745
      %v2092 = vmul.f32 %v1964, %v746
      %v2093 = vmul.f32 %v1965, %v746
      %v2094 = vmul.f32 %v1966, %v746
      %v2095 = vmul.f32 %v1967, %v746
      %v2096 = vmul.f32 %v1968, %v746
      %v2097 = vmul.f32 %v1969, %v746
      %v2098 = vmul.f32 %v1970, %v746
      %v2099 = vmul.f32 %v1971, %v746
      %v2100 = vmul.f32 %v1972, %v747
      %v2101 = vmul.f32 %v1973, %v747
      %v2102 = vmul.f32 %v1974, %v747
      %v2103 = vmul.f32 %v1975, %v747
      %v2104 = vmul.f32 %v1976, %v747
      %v2105 = vmul.f32 %v1977, %v747
      %v2106 = vmul.f32 %v1978, %v747
      %v2107 = vmul.f32 %v1979, %v747
      %v2108 = vmul.f32 %v1980, %v748
      %v2109 = vmul.f32 %v1981, %v748
      %v2110 = vmul.f32 %v1982, %v748
      %v2111 = vmul.f32 %v1983, %v748
      %v2112 = vmul.f32 %v1984, %v748
      %v2113 = vmul.f32 %v1985, %v748
      %v2114 = vmul.f32 %v1986, %v748
      %v2115 = vmul.f32 %v1987, %v748
      %v2116 = vmul.f32 %v1988, %v749
      %v2117 = vmul.f32 %v1989, %v749
      %v2118 = vmul.f32 %v1990, %v749
      %v2119 = vmul.f32 %v1991, %v749
      %v2120 = vmul.f32 %v1992, %v749
      %v2121 = vmul.f32 %v1993, %v749
      %v2122 = vmul.f32 %v1994, %v749
      %v2123 = vmul.f32 %v1995, %v749
      %v2124 = vmul.f32 %v1996, %v750
      %v2125 = vmul.f32 %v1997, %v750
      %v2126 = vmul.f32 %v1998, %v750
      %v2127 = vmul.f32 %v1999, %v750
      %v2128 = vmul.f32 %v2000, %v750
      %v2129 = vmul.f32 %v2001, %v750
      %v2130 = vmul.f32 %v2002, %v750
      %v2131 = vmul.f32 %v2003, %v750
      %v2132 = vmul.f32 %v2004, %v751
      %v2133 = vmul.f32 %v2005, %v751
      %v2134 = vmul.f32 %v2006, %v751
      %v2135 = vmul.f32 %v2007, %v751
      %v2136 = vmul.f32 %v2008, %v751
      %v2137 = vmul.f32 %v2009, %v751
      %v2138 = vmul.f32 %v2010, %v751
      %v2139 = vmul.f32 %v2011, %v751
      %v2140 = vmul.f32 %v2012, %v752
      %v2141 = vmul.f32 %v2013, %v752
      %v2142 = vmul.f32 %v2014, %v752
      %v2143 = vmul.f32 %v2015, %v752
      %v2144 = vmul.f32 %v2016, %v752
      %v2145 = vmul.f32 %v2017, %v752
      %v2146 = vmul.f32 %v2018, %v752
      %v2147 = vmul.f32 %v2019, %v752
      %v2148 = vmul.f32 %v2020, %v753
      %v2149 = vmul.f32 %v2021, %v753
      %v2150 = vmul.f32 %v2022, %v753
      %v2151 = vmul.f32 %v2023, %v753
      %v2152 = vmul.f32 %v2024, %v753
      %v2153 = vmul.f32 %v2025, %v753
      %v2154 = vmul.f32 %v2026, %v753
      %v2155 = vmul.f32 %v2027, %v753
      %v2156 = vmul.f32 %v2028, %v754
      %v2157 = vmul.f32 %v2029, %v754
      %v2158 = vmul.f32 %v2030, %v754
      %v2159 = vmul.f32 %v2031, %v754
      %v2160 = vmul.f32 %v2032, %v754
      %v2161 = vmul.f32 %v2033, %v754
      %v2162 = vmul.f32 %v2034, %v754
      %v2163 = vmul.f32 %v2035, %v754
      %v2164 = vmul.f32 %v2036, %v755
      %v2165 = vmul.f32 %v2037, %v755
      %v2166 = vmul.f32 %v2038, %v755
      %v2167 = vmul.f32 %v2039, %v755
      %v2168 = vmul.f32 %v2040, %v755
      %v2169 = vmul.f32 %v2041, %v755
      %v2170 = vmul.f32 %v2042, %v755
      %v2171 = vmul.f32 %v2043, %v755
      %v2172 = vmul.f32 %v2044, %v756
      %v2173 = vmul.f32 %v2045, %v756
      %v2174 = vmul.f32 %v2046, %v756
      %v2175 = vmul.f32 %v2047, %v756
      %v2176 = vmul.f32 %v2048, %v756
      %v2177 = vmul.f32 %v2049, %v756
      %v2178 = vmul.f32 %v2050, %v756
      %v2179 = vmul.f32 %v2051, %v756
      %v2180 = vmul.f32 %v2052, %v757
      %v2181 = vmul.f32 %v2053, %v757
      %v2182 = vmul.f32 %v2054, %v757
      %v2183 = vmul.f32 %v2055, %v757
      %v2184 = vmul.f32 %v2056, %v757
      %v2185 = vmul.f32 %v2057, %v757
      %v2186 = vmul.f32 %v2058, %v757
      %v2187 = vmul.f32 %v2059, %v757
      %v2188 = vmul.f32 %v2060, %v758
      %v2189 = vmul.f32 %v2061, %v758
      %v2190 = vmul.f32 %v2062, %v758
      %v2191 = vmul.f32 %v2063, %v758
      %v2192 = vmul.f32 %v2064, %v758
      %v2193 = vmul.f32 %v2065, %v758
      %v2194 = vmul.f32 %v2066, %v758
      %v2195 = vmul.f32 %v2067, %v758
      %vm2196 = vcmp.gt.f32.partialorder %v743, 0.0
      %vm2197 = vcmp.gt.f32.partialorder %v744, 0.0
      %vm2198 = vcmp.gt.f32.partialorder %v745, 0.0
      %vm2199 = vcmp.gt.f32.partialorder %v746, 0.0
      %vm2200 = vcmp.gt.f32.partialorder %v747, 0.0
      %vm2201 = vcmp.gt.f32.partialorder %v748, 0.0
      %vm2202 = vcmp.gt.f32.partialorder %v749, 0.0
      %vm2203 = vcmp.gt.f32.partialorder %v750, 0.0
      %vm2204 = vcmp.gt.f32.partialorder %v751, 0.0
      %vm2205 = vcmp.gt.f32.partialorder %v752, 0.0
      %vm2206 = vcmp.gt.f32.partialorder %v753, 0.0
      %vm2207 = vcmp.gt.f32.partialorder %v754, 0.0
      %vm2208 = vcmp.gt.f32.partialorder %v755, 0.0
      %vm2209 = vcmp.gt.f32.partialorder %v756, 0.0
      %vm2210 = vcmp.gt.f32.partialorder %v757, 0.0
      %vm2211 = vcmp.gt.f32.partialorder %v758, 0.0
      %v2212 = vsel %vm2196, 1, 0
      %v2213 = vsel %vm2197, 1, 0
      %v2214 = vsel %vm2198, 1, 0
      %v2215 = vsel %vm2199, 1, 0
      %v2216 = vsel %vm2200, 1, 0
      %v2217 = vsel %vm2201, 1, 0
      %v2218 = vsel %vm2202, 1, 0
      %v2219 = vsel %vm2203, 1, 0
      %v2220 = vsel %vm2204, 1, 0
      %v2221 = vsel %vm2205, 1, 0
      %v2222 = vsel %vm2206, 1, 0
      %v2223 = vsel %vm2207, 1, 0
      %v2224 = vsel %vm2208, 1, 0
      %v2225 = vsel %vm2209, 1, 0
      %v2226 = vsel %vm2210, 1, 0
      %v2227 = vsel %vm2211, 1, 0
      %vm2228 = vcmp.eq.s32.totalorder %v2212, 1
      %vm2229 = vcmp.eq.s32.totalorder %v2213, 1
      %vm2230 = vcmp.eq.s32.totalorder %v2214, 1
      %vm2231 = vcmp.eq.s32.totalorder %v2215, 1
      %vm2232 = vcmp.eq.s32.totalorder %v2216, 1
      %vm2233 = vcmp.eq.s32.totalorder %v2217, 1
      %vm2234 = vcmp.eq.s32.totalorder %v2218, 1
      %vm2235 = vcmp.eq.s32.totalorder %v2219, 1
      %vm2236 = vcmp.eq.s32.totalorder %v2220, 1
      %vm2237 = vcmp.eq.s32.totalorder %v2221, 1
      %vm2238 = vcmp.eq.s32.totalorder %v2222, 1
      %vm2239 = vcmp.eq.s32.totalorder %v2223, 1
      %vm2240 = vcmp.eq.s32.totalorder %v2224, 1
      %vm2241 = vcmp.eq.s32.totalorder %v2225, 1
      %vm2242 = vcmp.eq.s32.totalorder %v2226, 1
      %vm2243 = vcmp.eq.s32.totalorder %v2227, 1
      %v2244 = vsel %vm2228, %v1367, -inf
      %v2245 = vsel %vm2228, %v1416, -inf
      %v2246 = vsel %vm2228, %v1465, -inf
      %v2247 = vsel %vm2228, %v1514, -inf
      %v2248 = vsel %vm2228, %v1563, -inf
      %v2249 = vsel %vm2228, %v1612, -inf
      %v2250 = vsel %vm2228, %v1661, -inf
      %v2251 = vsel %vm2228, %v1710, -inf
      %v2252 = vsel %vm2229, %v1369, -inf
      %v2253 = vsel %vm2229, %v1418, -inf
      %v2254 = vsel %vm2229, %v1467, -inf
      %v2255 = vsel %vm2229, %v1516, -inf
      %v2256 = vsel %vm2229, %v1565, -inf
      %v2257 = vsel %vm2229, %v1614, -inf
      %v2258 = vsel %vm2229, %v1663, -inf
      %v2259 = vsel %vm2229, %v1712, -inf
      %v2260 = vsel %vm2230, %v1372, -inf
      %v2261 = vsel %vm2230, %v1421, -inf
      %v2262 = vsel %vm2230, %v1470, -inf
      %v2263 = vsel %vm2230, %v1519, -inf
      %v2264 = vsel %vm2230, %v1568, -inf
      %v2265 = vsel %vm2230, %v1617, -inf
      %v2266 = vsel %vm2230, %v1666, -inf
      %v2267 = vsel %vm2230, %v1715, -inf
      %v2268 = vsel %vm2231, %v1374, -inf
      %v2269 = vsel %vm2231, %v1423, -inf
      %v2270 = vsel %vm2231, %v1472, -inf
      %v2271 = vsel %vm2231, %v1521, -inf
      %v2272 = vsel %vm2231, %v1570, -inf
      %v2273 = vsel %vm2231, %v1619, -inf
      %v2274 = vsel %vm2231, %v1668, -inf
      %v2275 = vsel %vm2231, %v1717, -inf
      %v2276 = vsel %vm2232, %v1377, -inf
      %v2277 = vsel %vm2232, %v1426, -inf
      %v2278 = vsel %vm2232, %v1475, -inf
      %v2279 = vsel %vm2232, %v1524, -inf
      %v2280 = vsel %vm2232, %v1573, -inf
      %v2281 = vsel %vm2232, %v1622, -inf
      %v2282 = vsel %vm2232, %v1671, -inf
      %v2283 = vsel %vm2232, %v1720, -inf
      %v2284 = vsel %vm2233, %v1379, -inf
      %v2285 = vsel %vm2233, %v1428, -inf
      %v2286 = vsel %vm2233, %v1477, -inf
      %v2287 = vsel %vm2233, %v1526, -inf
      %v2288 = vsel %vm2233, %v1575, -inf
      %v2289 = vsel %vm2233, %v1624, -inf
      %v2290 = vsel %vm2233, %v1673, -inf
      %v2291 = vsel %vm2233, %v1722, -inf
      %v2292 = vsel %vm2234, %v1382, -inf
      %v2293 = vsel %vm2234, %v1431, -inf
      %v2294 = vsel %vm2234, %v1480, -inf
      %v2295 = vsel %vm2234, %v1529, -inf
      %v2296 = vsel %vm2234, %v1578, -inf
      %v2297 = vsel %vm2234, %v1627, -inf
      %v2298 = vsel %vm2234, %v1676, -inf
      %v2299 = vsel %vm2234, %v1725, -inf
      %v2300 = vsel %vm2235, %v1384, -inf
      %v2301 = vsel %vm2235, %v1433, -inf
      %v2302 = vsel %vm2235, %v1482, -inf
      %v2303 = vsel %vm2235, %v1531, -inf
      %v2304 = vsel %vm2235, %v1580, -inf
      %v2305 = vsel %vm2235, %v1629, -inf
      %v2306 = vsel %vm2235, %v1678, -inf
      %v2307 = vsel %vm2235, %v1727, -inf
      %v2308 = vsel %vm2236, %v1387, -inf
      %v2309 = vsel %vm2236, %v1436, -inf
      %v2310 = vsel %vm2236, %v1485, -inf
      %v2311 = vsel %vm2236, %v1534, -inf
      %v2312 = vsel %vm2236, %v1583, -inf
      %v2313 = vsel %vm2236, %v1632, -inf
      %v2314 = vsel %vm2236, %v1681, -inf
      %v2315 = vsel %vm2236, %v1730, -inf
      %v2316 = vsel %vm2237, %v1389, -inf
      %v2317 = vsel %vm2237, %v1438, -inf
      %v2318 = vsel %vm2237, %v1487, -inf
      %v2319 = vsel %vm2237, %v1536, -inf
      %v2320 = vsel %vm2237, %v1585, -inf
      %v2321 = vsel %vm2237, %v1634, -inf
      %v2322 = vsel %vm2237, %v1683, -inf
      %v2323 = vsel %vm2237, %v1732, -inf
      %v2324 = vsel %vm2238, %v1392, -inf
      %v2325 = vsel %vm2238, %v1441, -inf
      %v2326 = vsel %vm2238, %v1490, -inf
      %v2327 = vsel %vm2238, %v1539, -inf
      %v2328 = vsel %vm2238, %v1588, -inf
      %v2329 = vsel %vm2238, %v1637, -inf
      %v2330 = vsel %vm2238, %v1686, -inf
      %v2331 = vsel %vm2238, %v1735, -inf
      %v2332 = vsel %vm2239, %v1394, -inf
      %v2333 = vsel %vm2239, %v1443, -inf
      %v2334 = vsel %vm2239, %v1492, -inf
      %v2335 = vsel %vm2239, %v1541, -inf
      %v2336 = vsel %vm2239, %v1590, -inf
      %v2337 = vsel %vm2239, %v1639, -inf
      %v2338 = vsel %vm2239, %v1688, -inf
      %v2339 = vsel %vm2239, %v1737, -inf
      %v2340 = vsel %vm2240, %v1397, -inf
      %v2341 = vsel %vm2240, %v1446, -inf
      %v2342 = vsel %vm2240, %v1495, -inf
      %v2343 = vsel %vm2240, %v1544, -inf
      %v2344 = vsel %vm2240, %v1593, -inf
      %v2345 = vsel %vm2240, %v1642, -inf
      %v2346 = vsel %vm2240, %v1691, -inf
      %v2347 = vsel %vm2240, %v1740, -inf
      %v2348 = vsel %vm2241, %v1399, -inf
      %v2349 = vsel %vm2241, %v1448, -inf
      %v2350 = vsel %vm2241, %v1497, -inf
      %v2351 = vsel %vm2241, %v1546, -inf
      %v2352 = vsel %vm2241, %v1595, -inf
      %v2353 = vsel %vm2241, %v1644, -inf
      %v2354 = vsel %vm2241, %v1693, -inf
      %v2355 = vsel %vm2241, %v1742, -inf
      %v2356 = vsel %vm2242, %v1402, -inf
      %v2357 = vsel %vm2242, %v1451, -inf
      %v2358 = vsel %vm2242, %v1500, -inf
      %v2359 = vsel %vm2242, %v1549, -inf
      %v2360 = vsel %vm2242, %v1598, -inf
      %v2361 = vsel %vm2242, %v1647, -inf
      %v2362 = vsel %vm2242, %v1696, -inf
      %v2363 = vsel %vm2242, %v1745, -inf
      %v2364 = vsel %vm2243, %v1404, -inf
      %v2365 = vsel %vm2243, %v1453, -inf
      %v2366 = vsel %vm2243, %v1502, -inf
      %v2367 = vsel %vm2243, %v1551, -inf
      %v2368 = vsel %vm2243, %v1600, -inf
      %v2369 = vsel %vm2243, %v1649, -inf
      %v2370 = vsel %vm2243, %v1698, -inf
      %v2371 = vsel %vm2243, %v1747, -inf
      %v2372 = vmax.f32 %v2244, %v2252
      %v2373 = vmax.f32 %v2372, %v2260
      %v2374 = vmax.f32 %v2373, %v2268
      %v2375 = vmax.f32 %v2374, %v2276
      %v2376 = vmax.f32 %v2375, %v2284
      %v2377 = vmax.f32 %v2376, %v2292
      %v2378 = vmax.f32 %v2377, %v2300
      %v2379 = vmax.f32 %v2378, %v2308
      %v2380 = vmax.f32 %v2379, %v2316
      %v2381 = vmax.f32 %v2380, %v2324
      %v2382 = vmax.f32 %v2381, %v2332
      %v2383 = vmax.f32 %v2382, %v2340
      %v2384 = vmax.f32 %v2383, %v2348
      %v2385 = vmax.f32 %v2384, %v2356
      %v2386 = vmax.f32 %v2385, %v2364
      %v2387 = vrot.slane %v2386, 4
      %v2388 = vmax.f32 %v2386, %v2387
      %v2389 = vrot.slane %v2388, 2
      %v2390 = vmax.f32 %v2388, %v2389
      %v2391 = vrot.slane %v2390, 1
      %v2392 = vmax.f32 %v2390, %v2391
      %v2393 = vmax.f32 %v2245, %v2253
      %v2394 = vmax.f32 %v2393, %v2261
      %v2395 = vmax.f32 %v2394, %v2269
      %v2396 = vmax.f32 %v2395, %v2277
      %v2397 = vmax.f32 %v2396, %v2285
      %v2398 = vmax.f32 %v2397, %v2293
      %v2399 = vmax.f32 %v2398, %v2301
      %v2400 = vmax.f32 %v2399, %v2309
      %v2401 = vmax.f32 %v2400, %v2317
      %v2402 = vmax.f32 %v2401, %v2325
      %v2403 = vmax.f32 %v2402, %v2333
      %v2404 = vmax.f32 %v2403, %v2341
      %v2405 = vmax.f32 %v2404, %v2349
      %v2406 = vmax.f32 %v2405, %v2357
      %v2407 = vmax.f32 %v2406, %v2365
      %v2408 = vrot.slane %v2407, 4
      %v2409 = vmax.f32 %v2407, %v2408
      %v2410 = vrot.slane %v2409, 2
      %v2411 = vmax.f32 %v2409, %v2410
      %v2412 = vrot.slane %v2411, 1
      %v2413 = vmax.f32 %v2411, %v2412
      %v2414 = vmax.f32 %v2246, %v2254
      %v2415 = vmax.f32 %v2414, %v2262
      %v2416 = vmax.f32 %v2415, %v2270
      %v2417 = vmax.f32 %v2416, %v2278
      %v2418 = vmax.f32 %v2417, %v2286
      %v2419 = vmax.f32 %v2418, %v2294
      %v2420 = vmax.f32 %v2419, %v2302
      %v2421 = vmax.f32 %v2420, %v2310
      %v2422 = vmax.f32 %v2421, %v2318
      %v2423 = vmax.f32 %v2422, %v2326
      %v2424 = vmax.f32 %v2423, %v2334
      %v2425 = vmax.f32 %v2424, %v2342
      %v2426 = vmax.f32 %v2425, %v2350
      %v2427 = vmax.f32 %v2426, %v2358
      %v2428 = vmax.f32 %v2427, %v2366
      %v2429 = vrot.slane %v2428, 4
      %v2430 = vmax.f32 %v2428, %v2429
      %v2431 = vrot.slane %v2430, 2
      %v2432 = vmax.f32 %v2430, %v2431
      %v2433 = vrot.slane %v2432, 1
      %v2434 = vmax.f32 %v2432, %v2433
      %v2435 = vmax.f32 %v2247, %v2255
      %v2436 = vmax.f32 %v2435, %v2263
      %v2437 = vmax.f32 %v2436, %v2271
      %v2438 = vmax.f32 %v2437, %v2279
      %v2439 = vmax.f32 %v2438, %v2287
      %v2440 = vmax.f32 %v2439, %v2295
      %v2441 = vmax.f32 %v2440, %v2303
      %v2442 = vmax.f32 %v2441, %v2311
      %v2443 = vmax.f32 %v2442, %v2319
      %v2444 = vmax.f32 %v2443, %v2327
      %v2445 = vmax.f32 %v2444, %v2335
      %v2446 = vmax.f32 %v2445, %v2343
      %v2447 = vmax.f32 %v2446, %v2351
      %v2448 = vmax.f32 %v2447, %v2359
      %v2449 = vmax.f32 %v2448, %v2367
      %v2450 = vrot.slane %v2449, 4
      %v2451 = vmax.f32 %v2449, %v2450
      %v2452 = vrot.slane %v2451, 2
      %v2453 = vmax.f32 %v2451, %v2452
      %v2454 = vrot.slane %v2453, 1
      %v2455 = vmax.f32 %v2453, %v2454
      %v2456 = vmax.f32 %v2248, %v2256
      %v2457 = vmax.f32 %v2456, %v2264
      %v2458 = vmax.f32 %v2457, %v2272
      %v2459 = vmax.f32 %v2458, %v2280
      %v2460 = vmax.f32 %v2459, %v2288
      %v2461 = vmax.f32 %v2460, %v2296
      %v2462 = vmax.f32 %v2461, %v2304
      %v2463 = vmax.f32 %v2462, %v2312
      %v2464 = vmax.f32 %v2463, %v2320
      %v2465 = vmax.f32 %v2464, %v2328
      %v2466 = vmax.f32 %v2465, %v2336
      %v2467 = vmax.f32 %v2466, %v2344
      %v2468 = vmax.f32 %v2467, %v2352
      %v2469 = vmax.f32 %v2468, %v2360
      %v2470 = vmax.f32 %v2469, %v2368
      %v2471 = vrot.slane %v2470, 4
      %v2472 = vmax.f32 %v2470, %v2471
      %v2473 = vrot.slane %v2472, 2
      %v2474 = vmax.f32 %v2472, %v2473
      %v2475 = vrot.slane %v2474, 1
      %v2476 = vmax.f32 %v2474, %v2475
      %v2477 = vmax.f32 %v2249, %v2257
      %v2478 = vmax.f32 %v2477, %v2265
      %v2479 = vmax.f32 %v2478, %v2273
      %v2480 = vmax.f32 %v2479, %v2281
      %v2481 = vmax.f32 %v2480, %v2289
      %v2482 = vmax.f32 %v2481, %v2297
      %v2483 = vmax.f32 %v2482, %v2305
      %v2484 = vmax.f32 %v2483, %v2313
      %v2485 = vmax.f32 %v2484, %v2321
      %v2486 = vmax.f32 %v2485, %v2329
      %v2487 = vmax.f32 %v2486, %v2337
      %v2488 = vmax.f32 %v2487, %v2345
      %v2489 = vmax.f32 %v2488, %v2353
      %v2490 = vmax.f32 %v2489, %v2361
      %v2491 = vmax.f32 %v2490, %v2369
      %v2492 = vrot.slane %v2491, 4
      %v2493 = vmax.f32 %v2491, %v2492
      %v2494 = vrot.slane %v2493, 2
      %v2495 = vmax.f32 %v2493, %v2494
      %v2496 = vrot.slane %v2495, 1
      %v2497 = vmax.f32 %v2495, %v2496
      %v2498 = vmax.f32 %v2250, %v2258
      %v2499 = vmax.f32 %v2498, %v2266
      %v2500 = vmax.f32 %v2499, %v2274
      %v2501 = vmax.f32 %v2500, %v2282
      %v2502 = vmax.f32 %v2501, %v2290
      %v2503 = vmax.f32 %v2502, %v2298
      %v2504 = vmax.f32 %v2503, %v2306
      %v2505 = vmax.f32 %v2504, %v2314
      %v2506 = vmax.f32 %v2505, %v2322
      %v2507 = vmax.f32 %v2506, %v2330
      %v2508 = vmax.f32 %v2507, %v2338
      %v2509 = vmax.f32 %v2508, %v2346
      %v2510 = vmax.f32 %v2509, %v2354
      %v2511 = vmax.f32 %v2510, %v2362
      %v2512 = vmax.f32 %v2511, %v2370
      %v2513 = vrot.slane %v2512, 4
      %v2514 = vmax.f32 %v2512, %v2513
      %v2515 = vrot.slane %v2514, 2
      %v2516 = vmax.f32 %v2514, %v2515
      %v2517 = vrot.slane %v2516, 1
      %v2518 = vmax.f32 %v2516, %v2517
      %v2519 = vmax.f32 %v2251, %v2259
      %v2520 = vmax.f32 %v2519, %v2267
      %v2521 = vmax.f32 %v2520, %v2275
      %v2522 = vmax.f32 %v2521, %v2283
      %v2523 = vmax.f32 %v2522, %v2291
      %v2524 = vmax.f32 %v2523, %v2299
      %v2525 = vmax.f32 %v2524, %v2307
      %v2526 = vmax.f32 %v2525, %v2315
      %v2527 = vmax.f32 %v2526, %v2323
      %v2528 = vmax.f32 %v2527, %v2331
      %v2529 = vmax.f32 %v2528, %v2339
      %v2530 = vmax.f32 %v2529, %v2347
      %v2531 = vmax.f32 %v2530, %v2355
      %v2532 = vmax.f32 %v2531, %v2363
      %v2533 = vmax.f32 %v2532, %v2371
      %v2534 = vrot.slane %v2533, 4
      %v2535 = vmax.f32 %v2533, %v2534
      %v2536 = vrot.slane %v2535, 2
      %v2537 = vmax.f32 %v2535, %v2536
      %v2538 = vrot.slane %v2537, 1
      %v2539 = vmax.f32 %v2537, %v2538
      %v2540 = vsel %vm2228, %v1367, inf
      %v2541 = vsel %vm2228, %v1416, inf
      %v2542 = vsel %vm2228, %v1465, inf
      %v2543 = vsel %vm2228, %v1514, inf
      %v2544 = vsel %vm2228, %v1563, inf
      %v2545 = vsel %vm2228, %v1612, inf
      %v2546 = vsel %vm2228, %v1661, inf
      %v2547 = vsel %vm2228, %v1710, inf
      %v2548 = vsel %vm2229, %v1369, inf
      %v2549 = vsel %vm2229, %v1418, inf
      %v2550 = vsel %vm2229, %v1467, inf
      %v2551 = vsel %vm2229, %v1516, inf
      %v2552 = vsel %vm2229, %v1565, inf
      %v2553 = vsel %vm2229, %v1614, inf
      %v2554 = vsel %vm2229, %v1663, inf
      %v2555 = vsel %vm2229, %v1712, inf
      %v2556 = vsel %vm2230, %v1372, inf
      %v2557 = vsel %vm2230, %v1421, inf
      %v2558 = vsel %vm2230, %v1470, inf
      %v2559 = vsel %vm2230, %v1519, inf
      %v2560 = vsel %vm2230, %v1568, inf
      %v2561 = vsel %vm2230, %v1617, inf
      %v2562 = vsel %vm2230, %v1666, inf
      %v2563 = vsel %vm2230, %v1715, inf
      %v2564 = vsel %vm2231, %v1374, inf
      %v2565 = vsel %vm2231, %v1423, inf
      %v2566 = vsel %vm2231, %v1472, inf
      %v2567 = vsel %vm2231, %v1521, inf
      %v2568 = vsel %vm2231, %v1570, inf
      %v2569 = vsel %vm2231, %v1619, inf
      %v2570 = vsel %vm2231, %v1668, inf
      %v2571 = vsel %vm2231, %v1717, inf
      %v2572 = vsel %vm2232, %v1377, inf
      %v2573 = vsel %vm2232, %v1426, inf
      %v2574 = vsel %vm2232, %v1475, inf
      %v2575 = vsel %vm2232, %v1524, inf
      %v2576 = vsel %vm2232, %v1573, inf
      %v2577 = vsel %vm2232, %v1622, inf
      %v2578 = vsel %vm2232, %v1671, inf
      %v2579 = vsel %vm2232, %v1720, inf
      %v2580 = vsel %vm2233, %v1379, inf
      %v2581 = vsel %vm2233, %v1428, inf
      %v2582 = vsel %vm2233, %v1477, inf
      %v2583 = vsel %vm2233, %v1526, inf
      %v2584 = vsel %vm2233, %v1575, inf
      %v2585 = vsel %vm2233, %v1624, inf
      %v2586 = vsel %vm2233, %v1673, inf
      %v2587 = vsel %vm2233, %v1722, inf
      %v2588 = vsel %vm2234, %v1382, inf
      %v2589 = vsel %vm2234, %v1431, inf
      %v2590 = vsel %vm2234, %v1480, inf
      %v2591 = vsel %vm2234, %v1529, inf
      %v2592 = vsel %vm2234, %v1578, inf
      %v2593 = vsel %vm2234, %v1627, inf
      %v2594 = vsel %vm2234, %v1676, inf
      %v2595 = vsel %vm2234, %v1725, inf
      %v2596 = vsel %vm2235, %v1384, inf
      %v2597 = vsel %vm2235, %v1433, inf
      %v2598 = vsel %vm2235, %v1482, inf
      %v2599 = vsel %vm2235, %v1531, inf
      %v2600 = vsel %vm2235, %v1580, inf
      %v2601 = vsel %vm2235, %v1629, inf
      %v2602 = vsel %vm2235, %v1678, inf
      %v2603 = vsel %vm2235, %v1727, inf
      %v2604 = vsel %vm2236, %v1387, inf
      %v2605 = vsel %vm2236, %v1436, inf
      %v2606 = vsel %vm2236, %v1485, inf
      %v2607 = vsel %vm2236, %v1534, inf
      %v2608 = vsel %vm2236, %v1583, inf
      %v2609 = vsel %vm2236, %v1632, inf
      %v2610 = vsel %vm2236, %v1681, inf
      %v2611 = vsel %vm2236, %v1730, inf
      %v2612 = vsel %vm2237, %v1389, inf
      %v2613 = vsel %vm2237, %v1438, inf
      %v2614 = vsel %vm2237, %v1487, inf
      %v2615 = vsel %vm2237, %v1536, inf
      %v2616 = vsel %vm2237, %v1585, inf
      %v2617 = vsel %vm2237, %v1634, inf
      %v2618 = vsel %vm2237, %v1683, inf
      %v2619 = vsel %vm2237, %v1732, inf
      %v2620 = vsel %vm2238, %v1392, inf
      %v2621 = vsel %vm2238, %v1441, inf
      %v2622 = vsel %vm2238, %v1490, inf
      %v2623 = vsel %vm2238, %v1539, inf
      %v2624 = vsel %vm2238, %v1588, inf
      %v2625 = vsel %vm2238, %v1637, inf
      %v2626 = vsel %vm2238, %v1686, inf
      %v2627 = vsel %vm2238, %v1735, inf
      %v2628 = vsel %vm2239, %v1394, inf
      %v2629 = vsel %vm2239, %v1443, inf
      %v2630 = vsel %vm2239, %v1492, inf
      %v2631 = vsel %vm2239, %v1541, inf
      %v2632 = vsel %vm2239, %v1590, inf
      %v2633 = vsel %vm2239, %v1639, inf
      %v2634 = vsel %vm2239, %v1688, inf
      %v2635 = vsel %vm2239, %v1737, inf
      %v2636 = vsel %vm2240, %v1397, inf
      %v2637 = vsel %vm2240, %v1446, inf
      %v2638 = vsel %vm2240, %v1495, inf
      %v2639 = vsel %vm2240, %v1544, inf
      %v2640 = vsel %vm2240, %v1593, inf
      %v2641 = vsel %vm2240, %v1642, inf
      %v2642 = vsel %vm2240, %v1691, inf
      %v2643 = vsel %vm2240, %v1740, inf
      %v2644 = vsel %vm2241, %v1399, inf
      %v2645 = vsel %vm2241, %v1448, inf
      %v2646 = vsel %vm2241, %v1497, inf
      %v2647 = vsel %vm2241, %v1546, inf
      %v2648 = vsel %vm2241, %v1595, inf
      %v2649 = vsel %vm2241, %v1644, inf
      %v2650 = vsel %vm2241, %v1693, inf
      %v2651 = vsel %vm2241, %v1742, inf
      %v2652 = vsel %vm2242, %v1402, inf
      %v2653 = vsel %vm2242, %v1451, inf
      %v2654 = vsel %vm2242, %v1500, inf
      %v2655 = vsel %vm2242, %v1549, inf
      %v2656 = vsel %vm2242, %v1598, inf
      %v2657 = vsel %vm2242, %v1647, inf
      %v2658 = vsel %vm2242, %v1696, inf
      %v2659 = vsel %vm2242, %v1745, inf
      %v2660 = vsel %vm2243, %v1404, inf
      %v2661 = vsel %vm2243, %v1453, inf
      %v2662 = vsel %vm2243, %v1502, inf
      %v2663 = vsel %vm2243, %v1551, inf
      %v2664 = vsel %vm2243, %v1600, inf
      %v2665 = vsel %vm2243, %v1649, inf
      %v2666 = vsel %vm2243, %v1698, inf
      %v2667 = vsel %vm2243, %v1747, inf
      %v2668 = vmin.f32 %v2540, %v2548
      %v2669 = vmin.f32 %v2668, %v2556
      %v2670 = vmin.f32 %v2669, %v2564
      %v2671 = vmin.f32 %v2670, %v2572
      %v2672 = vmin.f32 %v2671, %v2580
      %v2673 = vmin.f32 %v2672, %v2588
      %v2674 = vmin.f32 %v2673, %v2596
      %v2675 = vmin.f32 %v2674, %v2604
      %v2676 = vmin.f32 %v2675, %v2612
      %v2677 = vmin.f32 %v2676, %v2620
      %v2678 = vmin.f32 %v2677, %v2628
      %v2679 = vmin.f32 %v2678, %v2636
      %v2680 = vmin.f32 %v2679, %v2644
      %v2681 = vmin.f32 %v2680, %v2652
      %v2682 = vmin.f32 %v2681, %v2660
      %v2683 = vrot.slane %v2682, 4
      %v2684 = vmin.f32 %v2682, %v2683
      %v2685 = vrot.slane %v2684, 2
      %v2686 = vmin.f32 %v2684, %v2685
      %v2687 = vrot.slane %v2686, 1
      %v2688 = vmin.f32 %v2686, %v2687
      %v2689 = vmin.f32 %v2541, %v2549
      %v2690 = vmin.f32 %v2689, %v2557
      %v2691 = vmin.f32 %v2690, %v2565
      %v2692 = vmin.f32 %v2691, %v2573
      %v2693 = vmin.f32 %v2692, %v2581
      %v2694 = vmin.f32 %v2693, %v2589
      %v2695 = vmin.f32 %v2694, %v2597
      %v2696 = vmin.f32 %v2695, %v2605
      %v2697 = vmin.f32 %v2696, %v2613
      %v2698 = vmin.f32 %v2697, %v2621
      %v2699 = vmin.f32 %v2698, %v2629
      %v2700 = vmin.f32 %v2699, %v2637
      %v2701 = vmin.f32 %v2700, %v2645
      %v2702 = vmin.f32 %v2701, %v2653
      %v2703 = vmin.f32 %v2702, %v2661
      %v2704 = vrot.slane %v2703, 4
      %v2705 = vmin.f32 %v2703, %v2704
      %v2706 = vrot.slane %v2705, 2
      %v2707 = vmin.f32 %v2705, %v2706
      %v2708 = vrot.slane %v2707, 1
      %v2709 = vmin.f32 %v2707, %v2708
      %v2710 = vmin.f32 %v2542, %v2550
      %v2711 = vmin.f32 %v2710, %v2558
      %v2712 = vmin.f32 %v2711, %v2566
      %v2713 = vmin.f32 %v2712, %v2574
      %v2714 = vmin.f32 %v2713, %v2582
      %v2715 = vmin.f32 %v2714, %v2590
      %v2716 = vmin.f32 %v2715, %v2598
      %v2717 = vmin.f32 %v2716, %v2606
      %v2718 = vmin.f32 %v2717, %v2614
      %v2719 = vmin.f32 %v2718, %v2622
      %v2720 = vmin.f32 %v2719, %v2630
      %v2721 = vmin.f32 %v2720, %v2638
      %v2722 = vmin.f32 %v2721, %v2646
      %v2723 = vmin.f32 %v2722, %v2654
      %v2724 = vmin.f32 %v2723, %v2662
      %v2725 = vrot.slane %v2724, 4
      %v2726 = vmin.f32 %v2724, %v2725
      %v2727 = vrot.slane %v2726, 2
      %v2728 = vmin.f32 %v2726, %v2727
      %v2729 = vrot.slane %v2728, 1
      %v2730 = vmin.f32 %v2728, %v2729
      %v2731 = vmin.f32 %v2543, %v2551
      %v2732 = vmin.f32 %v2731, %v2559
      %v2733 = vmin.f32 %v2732, %v2567
      %v2734 = vmin.f32 %v2733, %v2575
      %v2735 = vmin.f32 %v2734, %v2583
      %v2736 = vmin.f32 %v2735, %v2591
      %v2737 = vmin.f32 %v2736, %v2599
      %v2738 = vmin.f32 %v2737, %v2607
      %v2739 = vmin.f32 %v2738, %v2615
      %v2740 = vmin.f32 %v2739, %v2623
      %v2741 = vmin.f32 %v2740, %v2631
      %v2742 = vmin.f32 %v2741, %v2639
      %v2743 = vmin.f32 %v2742, %v2647
      %v2744 = vmin.f32 %v2743, %v2655
      %v2745 = vmin.f32 %v2744, %v2663
      %v2746 = vrot.slane %v2745, 4
      %v2747 = vmin.f32 %v2745, %v2746
      %v2748 = vrot.slane %v2747, 2
      %v2749 = vmin.f32 %v2747, %v2748
      %v2750 = vrot.slane %v2749, 1
      %v2751 = vmin.f32 %v2749, %v2750
      %v2752 = vmin.f32 %v2544, %v2552
      %v2753 = vmin.f32 %v2752, %v2560
      %v2754 = vmin.f32 %v2753, %v2568
      %v2755 = vmin.f32 %v2754, %v2576
      %v2756 = vmin.f32 %v2755, %v2584
      %v2757 = vmin.f32 %v2756, %v2592
      %v2758 = vmin.f32 %v2757, %v2600
      %v2759 = vmin.f32 %v2758, %v2608
      %v2760 = vmin.f32 %v2759, %v2616
      %v2761 = vmin.f32 %v2760, %v2624
      %v2762 = vmin.f32 %v2761, %v2632
      %v2763 = vmin.f32 %v2762, %v2640
      %v2764 = vmin.f32 %v2763, %v2648
      %v2765 = vmin.f32 %v2764, %v2656
      %v2766 = vmin.f32 %v2765, %v2664
      %v2767 = vrot.slane %v2766, 4
      %v2768 = vmin.f32 %v2766, %v2767
      %v2769 = vrot.slane %v2768, 2
      %v2770 = vmin.f32 %v2768, %v2769
      %v2771 = vrot.slane %v2770, 1
      %v2772 = vmin.f32 %v2770, %v2771
      %v2773 = vmin.f32 %v2545, %v2553
      %v2774 = vmin.f32 %v2773, %v2561
      %v2775 = vmin.f32 %v2774, %v2569
      %v2776 = vmin.f32 %v2775, %v2577
      %v2777 = vmin.f32 %v2776, %v2585
      %v2778 = vmin.f32 %v2777, %v2593
      %v2779 = vmin.f32 %v2778, %v2601
      %v2780 = vmin.f32 %v2779, %v2609
      %v2781 = vmin.f32 %v2780, %v2617
      %v2782 = vmin.f32 %v2781, %v2625
      %v2783 = vmin.f32 %v2782, %v2633
      %v2784 = vmin.f32 %v2783, %v2641
      %v2785 = vmin.f32 %v2784, %v2649
      %v2786 = vmin.f32 %v2785, %v2657
      %v2787 = vmin.f32 %v2786, %v2665
      %v2788 = vrot.slane %v2787, 4
      %v2789 = vmin.f32 %v2787, %v2788
      %v2790 = vrot.slane %v2789, 2
      %v2791 = vmin.f32 %v2789, %v2790
      %v2792 = vrot.slane %v2791, 1
      %v2793 = vmin.f32 %v2791, %v2792
      %v2794 = vmin.f32 %v2546, %v2554
      %v2795 = vmin.f32 %v2794, %v2562
      %v2796 = vmin.f32 %v2795, %v2570
      %v2797 = vmin.f32 %v2796, %v2578
      %v2798 = vmin.f32 %v2797, %v2586
      %v2799 = vmin.f32 %v2798, %v2594
      %v2800 = vmin.f32 %v2799, %v2602
      %v2801 = vmin.f32 %v2800, %v2610
      %v2802 = vmin.f32 %v2801, %v2618
      %v2803 = vmin.f32 %v2802, %v2626
      %v2804 = vmin.f32 %v2803, %v2634
      %v2805 = vmin.f32 %v2804, %v2642
      %v2806 = vmin.f32 %v2805, %v2650
      %v2807 = vmin.f32 %v2806, %v2658
      %v2808 = vmin.f32 %v2807, %v2666
      %v2809 = vrot.slane %v2808, 4
      %v2810 = vmin.f32 %v2808, %v2809
      %v2811 = vrot.slane %v2810, 2
      %v2812 = vmin.f32 %v2810, %v2811
      %v2813 = vrot.slane %v2812, 1
      %v2814 = vmin.f32 %v2812, %v2813
      %v2815 = vmin.f32 %v2547, %v2555
      %v2816 = vmin.f32 %v2815, %v2563
      %v2817 = vmin.f32 %v2816, %v2571
      %v2818 = vmin.f32 %v2817, %v2579
      %v2819 = vmin.f32 %v2818, %v2587
      %v2820 = vmin.f32 %v2819, %v2595
      %v2821 = vmin.f32 %v2820, %v2603
      %v2822 = vmin.f32 %v2821, %v2611
      %v2823 = vmin.f32 %v2822, %v2619
      %v2824 = vmin.f32 %v2823, %v2627
      %v2825 = vmin.f32 %v2824, %v2635
      %v2826 = vmin.f32 %v2825, %v2643
      %v2827 = vmin.f32 %v2826, %v2651
      %v2828 = vmin.f32 %v2827, %v2659
      %v2829 = vmin.f32 %v2828, %v2667
      %v2830 = vrot.slane %v2829, 4
      %v2831 = vmin.f32 %v2829, %v2830
      %v2832 = vrot.slane %v2831, 2
      %v2833 = vmin.f32 %v2831, %v2832
      %v2834 = vrot.slane %v2833, 1
      %v2835 = vmin.f32 %v2833, %v2834
      %v2844 = vrot.slane %v1790, 7
      %v2845 = vrot.slane %v1811, 6
      %v2846 = vrot.slane %v1832, 5
      %v2847 = vrot.slane %v1853, 4
      %v2848 = vrot.slane %v1874, 3
      %v2849 = vrot.slane %v1895, 2
      %v2850 = vrot.slane %v1916, 1
      %vm2851 = vcmask 1040384
      %v2852 = vsel %vm2851, %v1769, %v2844
      %vm2853 = vcmask 1042434
      %v2854 = vsel %vm2853, %v2845, %v2846
      %vm2855 = vcmask 1041408
      %v2856 = vsel %vm2855, %v2852, %v2854
      %vm2857 = vcmask 1044484
      %v2858 = vsel %vm2857, %v2847, %v2848
      %vm2859 = vcmask 1046534
      %v2860 = vsel %vm2859, %v2849, %v2850
      %vm2861 = vcmask 1045508
      %v2862 = vsel %vm2861, %v2858, %v2860
      %v2863 = vsel %vm567, %v2856, %v2862
      %2865 = vst [vmem:[%s459] sm:$0xff] %v2863
      %v2866 = vmul.f32 %v2068, %v2068
      %v2867 = vmul.f32 %v2069, %v2069
      %v2868 = vmul.f32 %v2070, %v2070
      %v2869 = vmul.f32 %v2071, %v2071
      %v2870 = vmul.f32 %v2072, %v2072
      %v2871 = vmul.f32 %v2073, %v2073
      %v2872 = vmul.f32 %v2074, %v2074
      %v2873 = vmul.f32 %v2075, %v2075
      %v2874 = vmul.f32 %v2076, %v2076
      %v2875 = vmul.f32 %v2077, %v2077
      %v2876 = vmul.f32 %v2078, %v2078
      %v2877 = vmul.f32 %v2079, %v2079
      %v2878 = vmul.f32 %v2080, %v2080
      %v2879 = vmul.f32 %v2081, %v2081
      %v2880 = vmul.f32 %v2082, %v2082
      %v2881 = vmul.f32 %v2083, %v2083
      %v2882 = vmul.f32 %v2084, %v2084
      %v2883 = vmul.f32 %v2085, %v2085
      %v2884 = vmul.f32 %v2086, %v2086
      %v2885 = vmul.f32 %v2087, %v2087
      %v2886 = vmul.f32 %v2088, %v2088
      %v2887 = vmul.f32 %v2089, %v2089
      %v2888 = vmul.f32 %v2090, %v2090
      %v2889 = vmul.f32 %v2091, %v2091
      %v2890 = vmul.f32 %v2092, %v2092
      %v2891 = vmul.f32 %v2093, %v2093
      %v2892 = vmul.f32 %v2094, %v2094
      %v2893 = vmul.f32 %v2095, %v2095
      %v2894 = vmul.f32 %v2096, %v2096
      %v2895 = vmul.f32 %v2097, %v2097
      %v2896 = vmul.f32 %v2098, %v2098
      %v2897 = vmul.f32 %v2099, %v2099
      %v2898 = vmul.f32 %v2100, %v2100
      %v2899 = vmul.f32 %v2101, %v2101
      %v2900 = vmul.f32 %v2102, %v2102
      %v2901 = vmul.f32 %v2103, %v2103
      %v2902 = vmul.f32 %v2104, %v2104
      %v2903 = vmul.f32 %v2105, %v2105
      %v2904 = vmul.f32 %v2106, %v2106
      %v2905 = vmul.f32 %v2107, %v2107
      %v2906 = vmul.f32 %v2108, %v2108
      %v2907 = vmul.f32 %v2109, %v2109
      %v2908 = vmul.f32 %v2110, %v2110
      %v2909 = vmul.f32 %v2111, %v2111
      %v2910 = vmul.f32 %v2112, %v2112
      %v2911 = vmul.f32 %v2113, %v2113
      %v2912 = vmul.f32 %v2114, %v2114
      %v2913 = vmul.f32 %v2115, %v2115
      %v2914 = vmul.f32 %v2116, %v2116
      %v2915 = vmul.f32 %v2117, %v2117
      %v2916 = vmul.f32 %v2118, %v2118
      %v2917 = vmul.f32 %v2119, %v2119
      %v2918 = vmul.f32 %v2120, %v2120
      %v2919 = vmul.f32 %v2121, %v2121
      %v2920 = vmul.f32 %v2122, %v2122
      %v2921 = vmul.f32 %v2123, %v2123
      %v2922 = vmul.f32 %v2124, %v2124
      %v2923 = vmul.f32 %v2125, %v2125
      %v2924 = vmul.f32 %v2126, %v2126
      %v2925 = vmul.f32 %v2127, %v2127
      %v2926 = vmul.f32 %v2128, %v2128
      %v2927 = vmul.f32 %v2129, %v2129
      %v2928 = vmul.f32 %v2130, %v2130
      %v2929 = vmul.f32 %v2131, %v2131
      %v2930 = vmul.f32 %v2132, %v2132
      %v2931 = vmul.f32 %v2133, %v2133
      %v2932 = vmul.f32 %v2134, %v2134
      %v2933 = vmul.f32 %v2135, %v2135
      %v2934 = vmul.f32 %v2136, %v2136
      %v2935 = vmul.f32 %v2137, %v2137
      %v2936 = vmul.f32 %v2138, %v2138
      %v2937 = vmul.f32 %v2139, %v2139
      %v2938 = vmul.f32 %v2140, %v2140
      %v2939 = vmul.f32 %v2141, %v2141
      %v2940 = vmul.f32 %v2142, %v2142
      %v2941 = vmul.f32 %v2143, %v2143
      %v2942 = vmul.f32 %v2144, %v2144
      %v2943 = vmul.f32 %v2145, %v2145
      %v2944 = vmul.f32 %v2146, %v2146
      %v2945 = vmul.f32 %v2147, %v2147
      %v2946 = vmul.f32 %v2148, %v2148
      %v2947 = vmul.f32 %v2149, %v2149
      %v2948 = vmul.f32 %v2150, %v2150
      %v2949 = vmul.f32 %v2151, %v2151
      %v2950 = vmul.f32 %v2152, %v2152
      %v2951 = vmul.f32 %v2153, %v2153
      %v2952 = vmul.f32 %v2154, %v2154
      %v2953 = vmul.f32 %v2155, %v2155
      %v2954 = vmul.f32 %v2156, %v2156
      %v2955 = vmul.f32 %v2157, %v2157
      %v2956 = vmul.f32 %v2158, %v2158
      %v2957 = vmul.f32 %v2159, %v2159
      %v2958 = vmul.f32 %v2160, %v2160
      %v2959 = vmul.f32 %v2161, %v2161
      %v2960 = vmul.f32 %v2162, %v2162
      %v2961 = vmul.f32 %v2163, %v2163
      %v2962 = vmul.f32 %v2164, %v2164
      %v2963 = vmul.f32 %v2165, %v2165
      %v2964 = vmul.f32 %v2166, %v2166
      %v2965 = vmul.f32 %v2167, %v2167
      %v2966 = vmul.f32 %v2168, %v2168
      %v2967 = vmul.f32 %v2169, %v2169
      %v2968 = vmul.f32 %v2170, %v2170
      %v2969 = vmul.f32 %v2171, %v2171
      %v2970 = vmul.f32 %v2172, %v2172
      %v2971 = vmul.f32 %v2173, %v2173
      %v2972 = vmul.f32 %v2174, %v2174
      %v2973 = vmul.f32 %v2175, %v2175
      %v2974 = vmul.f32 %v2176, %v2176
      %v2975 = vmul.f32 %v2177, %v2177
      %v2976 = vmul.f32 %v2178, %v2178
      %v2977 = vmul.f32 %v2179, %v2179
      %v2978 = vmul.f32 %v2180, %v2180
      %v2979 = vmul.f32 %v2181, %v2181
      %v2980 = vmul.f32 %v2182, %v2182
      %v2981 = vmul.f32 %v2183, %v2183
      %v2982 = vmul.f32 %v2184, %v2184
      %v2983 = vmul.f32 %v2185, %v2185
      %v2984 = vmul.f32 %v2186, %v2186
      %v2985 = vmul.f32 %v2187, %v2187
      %v2986 = vmul.f32 %v2188, %v2188
      %v2987 = vmul.f32 %v2189, %v2189
      %v2988 = vmul.f32 %v2190, %v2190
      %v2989 = vmul.f32 %v2191, %v2191
      %v2990 = vmul.f32 %v2192, %v2192
      %v2991 = vmul.f32 %v2193, %v2193
      %v2992 = vmul.f32 %v2194, %v2194
      %v2993 = vmul.f32 %v2195, %v2195
      %v2994 = vadd.f32 %v2866, %v2874
      %v2995 = vadd.f32 %v2994, %v2882
      %v2996 = vadd.f32 %v2995, %v2890
      %v2997 = vadd.f32 %v2996, %v2898
      %v2998 = vadd.f32 %v2997, %v2906
      %v2999 = vadd.f32 %v2998, %v2914
      %v3000 = vadd.f32 %v2999, %v2922
      %v3001 = vadd.f32 %v3000, %v2930
      %v3002 = vadd.f32 %v3001, %v2938
      %v3003 = vadd.f32 %v3002, %v2946
      %v3004 = vadd.f32 %v3003, %v2954
      %v3005 = vadd.f32 %v3004, %v2962
      %v3006 = vadd.f32 %v3005, %v2970
      %v3007 = vadd.f32 %v3006, %v2978
      %v3008 = vadd.f32 %v3007, %v2986
      %v3009 = vrot.slane %v3008, 4
      %v3010 = vadd.f32 %v3008, %v3009
      %v3011 = vrot.slane %v3010, 2
      %v3012 = vadd.f32 %v3010, %v3011
      %v3013 = vrot.slane %v3012, 1
      %v3014 = vadd.f32 %v3012, %v3013
      %v3015 = vadd.f32 %v2867, %v2875
      %v3016 = vadd.f32 %v3015, %v2883
      %v3017 = vadd.f32 %v3016, %v2891
      %v3018 = vadd.f32 %v3017, %v2899
      %v3019 = vadd.f32 %v3018, %v2907
      %v3020 = vadd.f32 %v3019, %v2915
      %v3021 = vadd.f32 %v3020, %v2923
      %v3022 = vadd.f32 %v3021, %v2931
      %v3023 = vadd.f32 %v3022, %v2939
      %v3024 = vadd.f32 %v3023, %v2947
      %v3025 = vadd.f32 %v3024, %v2955
      %v3026 = vadd.f32 %v3025, %v2963
      %v3027 = vadd.f32 %v3026, %v2971
      %v3028 = vadd.f32 %v3027, %v2979
      %v3029 = vadd.f32 %v3028, %v2987
      %v3030 = vrot.slane %v3029, 4
      %v3031 = vadd.f32 %v3029, %v3030
      %v3032 = vrot.slane %v3031, 2
      %v3033 = vadd.f32 %v3031, %v3032
      %v3034 = vrot.slane %v3033, 1
      %v3035 = vadd.f32 %v3033, %v3034
      %v3036 = vadd.f32 %v2868, %v2876
      %v3037 = vadd.f32 %v3036, %v2884
      %v3038 = vadd.f32 %v3037, %v2892
      %v3039 = vadd.f32 %v3038, %v2900
      %v3040 = vadd.f32 %v3039, %v2908
      %v3041 = vadd.f32 %v3040, %v2916
      %v3042 = vadd.f32 %v3041, %v2924
      %v3043 = vadd.f32 %v3042, %v2932
      %v3044 = vadd.f32 %v3043, %v2940
      %v3045 = vadd.f32 %v3044, %v2948
      %v3046 = vadd.f32 %v3045, %v2956
      %v3047 = vadd.f32 %v3046, %v2964
      %v3048 = vadd.f32 %v3047, %v2972
      %v3049 = vadd.f32 %v3048, %v2980
      %v3050 = vadd.f32 %v3049, %v2988
      %v3051 = vrot.slane %v3050, 4
      %v3052 = vadd.f32 %v3050, %v3051
      %v3053 = vrot.slane %v3052, 2
      %v3054 = vadd.f32 %v3052, %v3053
      %v3055 = vrot.slane %v3054, 1
      %v3056 = vadd.f32 %v3054, %v3055
      %v3057 = vadd.f32 %v2869, %v2877
      %v3058 = vadd.f32 %v3057, %v2885
      %v3059 = vadd.f32 %v3058, %v2893
      %v3060 = vadd.f32 %v3059, %v2901
      %v3061 = vadd.f32 %v3060, %v2909
      %v3062 = vadd.f32 %v3061, %v2917
      %v3063 = vadd.f32 %v3062, %v2925
      %v3064 = vadd.f32 %v3063, %v2933
      %v3065 = vadd.f32 %v3064, %v2941
      %v3066 = vadd.f32 %v3065, %v2949
      %v3067 = vadd.f32 %v3066, %v2957
      %v3068 = vadd.f32 %v3067, %v2965
      %v3069 = vadd.f32 %v3068, %v2973
      %v3070 = vadd.f32 %v3069, %v2981
      %v3071 = vadd.f32 %v3070, %v2989
      %v3072 = vrot.slane %v3071, 4
      %v3073 = vadd.f32 %v3071, %v3072
      %v3074 = vrot.slane %v3073, 2
      %v3075 = vadd.f32 %v3073, %v3074
      %v3076 = vrot.slane %v3075, 1
      %v3077 = vadd.f32 %v3075, %v3076
      %v3078 = vadd.f32 %v2870, %v2878
      %v3079 = vadd.f32 %v3078, %v2886
      %v3080 = vadd.f32 %v3079, %v2894
      %v3081 = vadd.f32 %v3080, %v2902
      %v3082 = vadd.f32 %v3081, %v2910
      %v3083 = vadd.f32 %v3082, %v2918
      %v3084 = vadd.f32 %v3083, %v2926
      %v3085 = vadd.f32 %v3084, %v2934
      %v3086 = vadd.f32 %v3085, %v2942
      %v3087 = vadd.f32 %v3086, %v2950
      %v3088 = vadd.f32 %v3087, %v2958
      %v3089 = vadd.f32 %v3088, %v2966
      %v3090 = vadd.f32 %v3089, %v2974
      %v3091 = vadd.f32 %v3090, %v2982
      %v3092 = vadd.f32 %v3091, %v2990
      %v3093 = vrot.slane %v3092, 4
      %v3094 = vadd.f32 %v3092, %v3093
      %v3095 = vrot.slane %v3094, 2
      %v3096 = vadd.f32 %v3094, %v3095
      %v3097 = vrot.slane %v3096, 1
      %v3098 = vadd.f32 %v3096, %v3097
      %v3099 = vadd.f32 %v2871, %v2879
      %v3100 = vadd.f32 %v3099, %v2887
      %v3101 = vadd.f32 %v3100, %v2895
      %v3102 = vadd.f32 %v3101, %v2903
      %v3103 = vadd.f32 %v3102, %v2911
      %v3104 = vadd.f32 %v3103, %v2919
      %v3105 = vadd.f32 %v3104, %v2927
      %v3106 = vadd.f32 %v3105, %v2935
      %v3107 = vadd.f32 %v3106, %v2943
      %v3108 = vadd.f32 %v3107, %v2951
      %v3109 = vadd.f32 %v3108, %v2959
      %v3110 = vadd.f32 %v3109, %v2967
      %v3111 = vadd.f32 %v3110, %v2975
      %v3112 = vadd.f32 %v3111, %v2983
      %v3113 = vadd.f32 %v3112, %v2991
      %v3114 = vrot.slane %v3113, 4
      %v3115 = vadd.f32 %v3113, %v3114
      %v3116 = vrot.slane %v3115, 2
      %v3117 = vadd.f32 %v3115, %v3116
      %v3118 = vrot.slane %v3117, 1
      %v3119 = vadd.f32 %v3117, %v3118
      %v3120 = vadd.f32 %v2872, %v2880
      %v3121 = vadd.f32 %v3120, %v2888
      %v3122 = vadd.f32 %v3121, %v2896
      %v3123 = vadd.f32 %v3122, %v2904
      %v3124 = vadd.f32 %v3123, %v2912
      %v3125 = vadd.f32 %v3124, %v2920
      %v3126 = vadd.f32 %v3125, %v2928
      %v3127 = vadd.f32 %v3126, %v2936
      %v3128 = vadd.f32 %v3127, %v2944
      %v3129 = vadd.f32 %v3128, %v2952
      %v3130 = vadd.f32 %v3129, %v2960
      %v3131 = vadd.f32 %v3130, %v2968
      %v3132 = vadd.f32 %v3131, %v2976
      %v3133 = vadd.f32 %v3132, %v2984
      %v3134 = vadd.f32 %v3133, %v2992
      %v3135 = vrot.slane %v3134, 4
      %v3136 = vadd.f32 %v3134, %v3135
      %v3137 = vrot.slane %v3136, 2
      %v3138 = vadd.f32 %v3136, %v3137
      %v3139 = vrot.slane %v3138, 1
      %v3140 = vadd.f32 %v3138, %v3139
      %v3141 = vadd.f32 %v2873, %v2881
      %v3142 = vadd.f32 %v3141, %v2889
      %v3143 = vadd.f32 %v3142, %v2897
      %v3144 = vadd.f32 %v3143, %v2905
      %v3145 = vadd.f32 %v3144, %v2913
      %v3146 = vadd.f32 %v3145, %v2921
      %v3147 = vadd.f32 %v3146, %v2929
      %v3148 = vadd.f32 %v3147, %v2937
      %v3149 = vadd.f32 %v3148, %v2945
      %v3150 = vadd.f32 %v3149, %v2953
      %v3151 = vadd.f32 %v3150, %v2961
      %v3152 = vadd.f32 %v3151, %v2969
      %v3153 = vadd.f32 %v3152, %v2977
      %v3154 = vadd.f32 %v3153, %v2985
      %v3155 = vadd.f32 %v3154, %v2993
      %v3156 = vrot.slane %v3155, 4
      %v3157 = vadd.f32 %v3155, %v3156
      %v3158 = vrot.slane %v3157, 2
      %v3159 = vadd.f32 %v3157, %v3158
      %v3160 = vrot.slane %v3159, 1
      %v3161 = vadd.f32 %v3159, %v3160
      %v3170 = vrot.slane %v3035, 7
      %v3171 = vrot.slane %v3056, 6
      %v3172 = vrot.slane %v3077, 5
      %v3173 = vrot.slane %v3098, 4
      %v3174 = vrot.slane %v3119, 3
      %v3175 = vrot.slane %v3140, 2
      %v3176 = vrot.slane %v3161, 1
      %v3177 = vsel %vm2851, %v3014, %v3170
      %v3178 = vsel %vm2853, %v3171, %v3172
      %v3179 = vsel %vm2855, %v3177, %v3178
      %v3180 = vsel %vm2857, %v3173, %v3174
      %v3181 = vsel %vm2859, %v3175, %v3176
      %v3182 = vsel %vm2861, %v3180, %v3181
      %v3183 = vsel %vm567, %v3179, %v3182
      %3185 = vst [vmem:[%s467] sm:$0xff] %v3183
      %v3194 = vrot.slane %v2413, 7
      %v3195 = vrot.slane %v2434, 6
      %v3196 = vrot.slane %v2455, 5
      %v3197 = vrot.slane %v2476, 4
      %v3198 = vrot.slane %v2497, 3
      %v3199 = vrot.slane %v2518, 2
      %v3200 = vrot.slane %v2539, 1
      %v3201 = vsel %vm2851, %v2392, %v3194
      %v3202 = vsel %vm2853, %v3195, %v3196
      %v3203 = vsel %vm2855, %v3201, %v3202
      %v3204 = vsel %vm2857, %v3197, %v3198
      %v3205 = vsel %vm2859, %v3199, %v3200
      %v3206 = vsel %vm2861, %v3204, %v3205
      %v3207 = vsel %vm567, %v3203, %v3206
      %3209 = vst [vmem:[%s475] sm:$0xff] %v3207
      %v3218 = vrot.slane %v2709, 7
      %v3219 = vrot.slane %v2730, 6
      %v3220 = vrot.slane %v2751, 5
      %v3221 = vrot.slane %v2772, 4
      %v3222 = vrot.slane %v2793, 3
      %v3223 = vrot.slane %v2814, 2
      %v3224 = vrot.slane %v2835, 1
      %v3225 = vsel %vm2851, %v2688, %v3218
      %v3226 = vsel %vm2853, %v3219, %v3220
      %v3227 = vsel %vm2855, %v3225, %v3226
      %v3228 = vsel %vm2857, %v3221, %v3222
      %v3229 = vsel %vm2859, %v3223, %v3224
      %v3230 = vsel %vm2861, %v3228, %v3229
      %v3231 = vsel %vm567, %v3227, %v3230
      %3233 = vst [vmem:[%s483] sm:$0xff] %v3231
      %p3234 = scmp.lt.s32.totalorder %s27, 1
      %s3235 = scalar_select %p3234, %s27, 1
      %p3236 = scmp.lt.s32.totalorder %s28, 1
      %s3237 = scalar_select %p3236, %s28, 1
      %s3238 = smul.addr %s3237, 8
      %s3239 = smul.addr %s3235, 16
      %s3240 = sadd.s32 %s3238, %s3239
      %s3241 = scalar_lea.vmem %s8, %s3240
      %p3242 = scmp.lt.s32.totalorder %s27, 1
      %s3243 = scalar_select %p3242, %s27, 1
      %p3244 = scmp.lt.s32.totalorder %s28, 1
      %s3245 = scalar_select %p3244, %s28, 1
      %s3246 = smul.addr %s3245, 8
      %s3247 = smul.addr %s3243, 16
      %s3248 = sadd.s32 %s3246, %s3247
      %s3249 = scalar_lea.vmem %s9, %s3248
      %p3250 = scmp.lt.s32.totalorder %s27, 1
      %s3251 = scalar_select %p3250, %s27, 1
      %p3252 = scmp.lt.s32.totalorder %s28, 1
      %s3253 = scalar_select %p3252, %s28, 1
      %s3254 = smul.addr %s3253, 8
      %s3255 = smul.addr %s3251, 16
      %s3256 = sadd.s32 %s3254, %s3255
      %s3257 = scalar_lea.vmem %s10, %s3256
      %p3258 = scmp.lt.s32.totalorder %s27, 1
      %s3259 = scalar_select %p3258, %s27, 1
      %p3260 = scmp.lt.s32.totalorder %s28, 1
      %s3261 = scalar_select %p3260, %s28, 1
      %s3262 = smul.addr %s3261, 8
      %s3263 = smul.addr %s3259, 16
      %s3264 = sadd.s32 %s3262, %s3263
      %s3265 = scalar_lea.vmem %s11, %s3264
      // Predicated region
      $region53: #{tnet_forward.4} parent=51 // pred_check
        %p3266 = pneg %p230
      $region54: #{tnet_forward.4} parent=51 // pred_check_branch
        %3268 = sbr.rel (%p3266) target = $region56
      $region55: #{tnet_forward.4} parent=51 // pred_region
        _
      $region56: #{tnet_forward.4} parent=51 // pred_fallthru
        _
      // Predicated region
      $region57: #{tnet_forward.4} parent=51 // pred_check
        %p3269 = pneg %p258
      $region58: #{tnet_forward.4} parent=51 // pred_check_branch
        %3271 = sbr.rel (%p3269) target = $region60
      $region59: #{tnet_forward.4} parent=51 // pred_region
        _
      $region60: #{tnet_forward.4} parent=51 // pred_fallthru
        _
      // Predicated region
      $region61: #{tnet_forward.4} parent=51 // pred_check
        %p3272 = pneg %p286
      $region62: #{tnet_forward.4} parent=51 // pred_check_branch
        %3274 = sbr.rel (%p3272) target = $region64
      $region63: #{tnet_forward.4} parent=51 // pred_region
        _
      $region64: #{tnet_forward.4} parent=51 // pred_fallthru
        _
      // Predicated region
      $region65: #{tnet_forward.4} parent=51 // pred_check
        %p3275 = pneg %p314
      $region66: #{tnet_forward.4} parent=51 // pred_check_branch
        %3277 = sbr.rel (%p3275) target = $region68
      $region67: #{tnet_forward.4} parent=51 // pred_region
        _
      $region68: #{tnet_forward.4} parent=51 // pred_fallthru
        _
    $region52: #{tnet_forward.4} parent=5 // pred_fallthru
      _
    %p3278 = scmp.le.s32.totalorder 2, %s18
    // Predicated region
    $region69: #{tnet_forward.4} parent=5 // pred_check
      %p3279 = pneg %p3278
    $region70: #{tnet_forward.4} parent=5 // pred_check_branch
      %3281 = sbr.rel (%p3279) target = $region72
    $region71: #{tnet_forward.4} parent=5 // pred_region
      %s3282 = ssub.s32 %s18, 2
      // Predicated region
      $region73: #{tnet_forward.4} parent=71 // pred_check
        %p3283 = pneg %p236
      $region74: #{tnet_forward.4} parent=71 // pred_check_branch
        %3285 = sbr.rel (%p3283) target = $region76
      $region75: #{tnet_forward.4} parent=71 // pred_region
        %p3286 = scmp.lt.s32.totalorder %s29, 1
        %s3287 = scalar_select %p3286, %s29, 1
        %p3288 = scmp.lt.s32.totalorder %s30, 1
        %s3289 = scalar_select %p3288, %s30, 1
        %s3290 = smul.addr %s3289, 8
        %s3291 = smul.addr %s3287, 16
        %s3292 = sadd.s32 %s3290, %s3291
        %s3293 = scalar_lea.vmem %s8, %s3292
      $region76: #{tnet_forward.4} parent=71 // pred_fallthru
        _
      // Predicated region
      $region77: #{tnet_forward.4} parent=71 // pred_check
        %p3294 = pneg %p264
      $region78: #{tnet_forward.4} parent=71 // pred_check_branch
        %3296 = sbr.rel (%p3294) target = $region80
      $region79: #{tnet_forward.4} parent=71 // pred_region
        %p3297 = scmp.lt.s32.totalorder %s29, 1
        %s3298 = scalar_select %p3297, %s29, 1
        %p3299 = scmp.lt.s32.totalorder %s30, 1
        %s3300 = scalar_select %p3299, %s30, 1
        %s3301 = smul.addr %s3300, 8
        %s3302 = smul.addr %s3298, 16
        %s3303 = sadd.s32 %s3301, %s3302
        %s3304 = scalar_lea.vmem %s9, %s3303
      $region80: #{tnet_forward.4} parent=71 // pred_fallthru
        _
      // Predicated region
      $region81: #{tnet_forward.4} parent=71 // pred_check
        %p3305 = pneg %p292
      $region82: #{tnet_forward.4} parent=71 // pred_check_branch
        %3307 = sbr.rel (%p3305) target = $region84
      $region83: #{tnet_forward.4} parent=71 // pred_region
        %p3308 = scmp.lt.s32.totalorder %s29, 1
        %s3309 = scalar_select %p3308, %s29, 1
        %p3310 = scmp.lt.s32.totalorder %s30, 1
        %s3311 = scalar_select %p3310, %s30, 1
        %s3312 = smul.addr %s3311, 8
        %s3313 = smul.addr %s3309, 16
        %s3314 = sadd.s32 %s3312, %s3313
        %s3315 = scalar_lea.vmem %s10, %s3314
      $region84: #{tnet_forward.4} parent=71 // pred_fallthru
        _
      // Predicated region
      $region85: #{tnet_forward.4} parent=71 // pred_check
        %p3316 = pneg %p320
      $region86: #{tnet_forward.4} parent=71 // pred_check_branch
        %3318 = sbr.rel (%p3316) target = $region88
      $region87: #{tnet_forward.4} parent=71 // pred_region
        %p3319 = scmp.lt.s32.totalorder %s29, 1
        %s3320 = scalar_select %p3319, %s29, 1
        %p3321 = scmp.lt.s32.totalorder %s30, 1
        %s3322 = scalar_select %p3321, %s30, 1
        %s3323 = smul.addr %s3322, 8
        %s3324 = smul.addr %s3320, 16
        %s3325 = sadd.s32 %s3323, %s3324
        %s3326 = scalar_lea.vmem %s11, %s3325
      $region88: #{tnet_forward.4} parent=71 // pred_fallthru
        _
    $region72: #{tnet_forward.4} parent=5 // pred_fallthru
      _
  $region6: #{tnet_forward.4} parent=0 // loop_footer
    %s22 = sadd.s32 1, %s18
  $region7: #{tnet_forward.4} parent=0 // loop_footer_branch
    %17 = sbr.rel target = $region3
  $region8: #{tnet_forward.4} parent=0 // loop_exit
    _

// kernel: tnet_forward.5
$region0: #{tnet_forward.5}
  #allocation0 [shape = 'u32[]', space=smem, size = 0x4, offset = 0x4, fixed_abs, tag = 'smem constant byte address 0x4 - core index']
  #allocation1 [shape = 'u32[72,128]{1,0:T(1,128)}', space=vmem, size = 0x9000, scoped, tag = 'internal scratch']
  %s0 = inlined_call_operand.vmem [shape: f32[2,1024], index: 0, kind: input, shape index: {}]
  %s1 = inlined_call_operand.vmem [shape: f32[2,1024], index: 1, kind: input, shape index: {}]
  %s2 = inlined_call_operand.vmem [shape: f32[1,1024], index: 2, kind: input, shape index: {}]
  %s3 = inlined_call_operand.vmem [shape: f32[1,1024], index: 3, kind: input, shape index: {}]
  %s4 = inlined_call_operand.vmem [shape: bf16[1024,512], index: 4, kind: input, shape index: {}]
  %s5 = inlined_call_operand.vmem [shape: f32[1,512], index: 5, kind: input, shape index: {}]
  %s6 = inlined_call_operand.vmem [shape: f32[1,512], index: 6, kind: input, shape index: {}]
  %s7 = inlined_call_operand.vmem [shape: bf16[512,256], index: 7, kind: input, shape index: {}]
  %s8 = inlined_call_operand.vmem [shape: f32[1,256], index: 8, kind: input, shape index: {}]
  %s9 = inlined_call_operand.vmem [shape: f32[1,256], index: 9, kind: input, shape index: {}]
  %s10 = inlined_call_operand.vmem [shape: bf16[256,9], index: 10, kind: input, shape index: {}]
  %s11 = inlined_call_operand.vmem [shape: f32[1,9], index: 11, kind: input, shape index: {}]
  %s12 = inlined_call_operand.vmem [shape: f32[2,9], index: 12, kind: output, shape index: {}]
  %s13 = sld [smem:[#allocation0]]
  $region58: #{tnet_forward.5} parent=0
    _
  %s15 = ssub.s32 1, %s13
  %s16 = scalar_select 0, %s15, %s13
  // Predicated region
  $region2: #{tnet_forward.5} parent=0 // pred_check
    _
  $region3: #{tnet_forward.5} parent=0 // pred_check_branch
    %18 = sbr.rel (0) target = $region5
  $region4: #{tnet_forward.5} parent=0 // pred_region
    _
  $region5: #{tnet_forward.5} parent=0 // pred_fallthru
    _
  // Predicated region
  $region6: #{tnet_forward.5} parent=0 // pred_check
    _
  $region7: #{tnet_forward.5} parent=0 // pred_check_branch
    %20 = sbr.rel (0) target = $region9
  $region8: #{tnet_forward.5} parent=0 // pred_region
    _
  $region9: #{tnet_forward.5} parent=0 // pred_fallthru
    _
  // Predicated region
  $region10: #{tnet_forward.5} parent=0 // pred_check
    _
  $region11: #{tnet_forward.5} parent=0 // pred_check_branch
    %22 = sbr.rel (0) target = $region13
  $region12: #{tnet_forward.5} parent=0 // pred_region
    _
  $region13: #{tnet_forward.5} parent=0 // pred_fallthru
    _
  // Predicated region
  $region14: #{tnet_forward.5} parent=0 // pred_check
    _
  $region15: #{tnet_forward.5} parent=0 // pred_check_branch
    %24 = sbr.rel (0) target = $region17
  $region16: #{tnet_forward.5} parent=0 // pred_region
    _
  $region17: #{tnet_forward.5} parent=0 // pred_fallthru
    _
  // Predicated region
  $region18: #{tnet_forward.5} parent=0 // pred_check
    _
  $region19: #{tnet_forward.5} parent=0 // pred_check_branch
    %26 = sbr.rel (0) target = $region21
  $region20: #{tnet_forward.5} parent=0 // pred_region
    _
  $region21: #{tnet_forward.5} parent=0 // pred_fallthru
    _
  // Predicated region
  $region22: #{tnet_forward.5} parent=0 // pred_check
    _
  $region23: #{tnet_forward.5} parent=0 // pred_check_branch
    %28 = sbr.rel (0) target = $region25
  $region24: #{tnet_forward.5} parent=0 // pred_region
    _
  $region25: #{tnet_forward.5} parent=0 // pred_fallthru
    _
  // Predicated region
  $region26: #{tnet_forward.5} parent=0 // pred_check
    _
  $region27: #{tnet_forward.5} parent=0 // pred_check_branch
    %30 = sbr.rel (0) target = $region29
  $region28: #{tnet_forward.5} parent=0 // pred_region
    _
  $region29: #{tnet_forward.5} parent=0 // pred_fallthru
    _
  // Predicated region
  $region30: #{tnet_forward.5} parent=0 // pred_check
    _
  $region31: #{tnet_forward.5} parent=0 // pred_check_branch
    %32 = sbr.rel (0) target = $region33
  $region32: #{tnet_forward.5} parent=0 // pred_region
    _
  $region33: #{tnet_forward.5} parent=0 // pred_fallthru
    _
  // Predicated region
  $region34: #{tnet_forward.5} parent=0 // pred_check
    _
  $region35: #{tnet_forward.5} parent=0 // pred_check_branch
    %34 = sbr.rel (0) target = $region37
  $region36: #{tnet_forward.5} parent=0 // pred_region
    _
  $region37: #{tnet_forward.5} parent=0 // pred_fallthru
    _
  // Predicated region
  $region38: #{tnet_forward.5} parent=0 // pred_check
    _
  $region39: #{tnet_forward.5} parent=0 // pred_check_branch
    %36 = sbr.rel (0) target = $region41
  $region40: #{tnet_forward.5} parent=0 // pred_region
    _
  $region41: #{tnet_forward.5} parent=0 // pred_fallthru
    _
  // Predicated region
  $region42: #{tnet_forward.5} parent=0 // pred_check
    _
  $region43: #{tnet_forward.5} parent=0 // pred_check_branch
    %38 = sbr.rel (0) target = $region45
  $region44: #{tnet_forward.5} parent=0 // pred_region
    _
  $region45: #{tnet_forward.5} parent=0 // pred_fallthru
    _
  // Predicated region
  $region46: #{tnet_forward.5} parent=0 // pred_check
    _
  $region47: #{tnet_forward.5} parent=0 // pred_check_branch
    %40 = sbr.rel (0) target = $region49
  $region48: #{tnet_forward.5} parent=0 // pred_region
    _
  $region49: #{tnet_forward.5} parent=0 // pred_fallthru
    _
  %v41 = vld [vmem:[%s2] sm:$0xff]
  %vm42 = vcmp.ge.f32.partialorder %v41, 0.0
  %v43 = vld [vmem:[%s0] sm:$0xff]
  %v44 = vld [vmem:[%s0 + $0x8] sm:$0xff]
  %v45 = vld [vmem:[%s1] sm:$0xff]
  %v46 = vld [vmem:[%s1 + $0x8] sm:$0xff]
  %v47 = vsel %vm42, 1, 0
  %v48 = vperm.slane %v47, 0
  %v49 = vperm.slane %v47, 1
  %v50 = vperm.slane %v47, 2
  %v51 = vperm.slane %v47, 3
  %v52 = vperm.slane %v47, 4
  %v53 = vperm.slane %v47, 5
  %v54 = vperm.slane %v47, 6
  %v55 = vperm.slane %v47, 7
  %vm56 = vcmp.eq.s32.totalorder %v48, 1
  %vm57 = vcmp.eq.s32.totalorder %v49, 1
  %vm58 = vcmp.eq.s32.totalorder %v50, 1
  %vm59 = vcmp.eq.s32.totalorder %v51, 1
  %vm60 = vcmp.eq.s32.totalorder %v52, 1
  %vm61 = vcmp.eq.s32.totalorder %v53, 1
  %vm62 = vcmp.eq.s32.totalorder %v54, 1
  %vm63 = vcmp.eq.s32.totalorder %v55, 1
  %66 = vst [vmem:[#allocation1] ss:$4 sm:$0xff] %v43
  %s67 = scalar_lea.vmem [#allocation1], 32
  %68 = vst [vmem:[%s67] ss:$4 sm:$0xff] %v44
  %v69 = vld.sshfl [vmem:[#allocation1] sm:$0xff pattern:$0x73625140]
  %v70 = vld.sshfl [vmem:[#allocation1 + $0x8] sm:$0xff pattern:$0x73625140]
  %v71 = vld.sshfl [vmem:[#allocation1 + $0x10] sm:$0xff pattern:$0x73625140]
  %v72 = vld.sshfl [vmem:[#allocation1 + $0x18] sm:$0xff pattern:$0x73625140]
  %v73 = vld.sshfl [vmem:[#allocation1 + $0x20] sm:$0xff pattern:$0x73625140]
  %v74 = vld.sshfl [vmem:[#allocation1 + $0x28] sm:$0xff pattern:$0x73625140]
  %v75 = vld.sshfl [vmem:[#allocation1 + $0x30] sm:$0xff pattern:$0x73625140]
  %v76 = vld.sshfl [vmem:[#allocation1 + $0x38] sm:$0xff pattern:$0x73625140]
  %87 = vst [vmem:[#allocation1] ss:$4 sm:$0xff] %v45
  %s88 = scalar_lea.vmem [#allocation1], 32
  %89 = vst [vmem:[%s88] ss:$4 sm:$0xff] %v46
  %v90 = vld.sshfl [vmem:[#allocation1] sm:$0xff pattern:$0x73625140]
  %v91 = vld.sshfl [vmem:[#allocation1 + $0x8] sm:$0xff pattern:$0x73625140]
  %v92 = vld.sshfl [vmem:[#allocation1 + $0x10] sm:$0xff pattern:$0x73625140]
  %v93 = vld.sshfl [vmem:[#allocation1 + $0x18] sm:$0xff pattern:$0x73625140]
  %v94 = vld.sshfl [vmem:[#allocation1 + $0x20] sm:$0xff pattern:$0x73625140]
  %v95 = vld.sshfl [vmem:[#allocation1 + $0x28] sm:$0xff pattern:$0x73625140]
  %v96 = vld.sshfl [vmem:[#allocation1 + $0x30] sm:$0xff pattern:$0x73625140]
  %v97 = vld.sshfl [vmem:[#allocation1 + $0x38] sm:$0xff pattern:$0x73625140]
  %v106 = vsel %vm56, %v69, %v90
  %v107 = vsel %vm57, %v70, %v91
  %v108 = vsel %vm58, %v71, %v92
  %v109 = vsel %vm59, %v72, %v93
  %v110 = vsel %vm60, %v73, %v94
  %v111 = vsel %vm61, %v74, %v95
  %v112 = vsel %vm62, %v75, %v96
  %v113 = vsel %vm63, %v76, %v97
  %v115 = vperm.slane %v41, 0
  %v116 = vperm.slane %v41, 1
  %v117 = vperm.slane %v41, 2
  %v118 = vperm.slane %v41, 3
  %v119 = vperm.slane %v41, 4
  %v120 = vperm.slane %v41, 5
  %v121 = vperm.slane %v41, 6
  %v122 = vperm.slane %v41, 7
  %v131 = vmul.f32 %v106, %v115
  %v132 = vmul.f32 %v107, %v116
  %v133 = vmul.f32 %v108, %v117
  %v134 = vmul.f32 %v109, %v118
  %v135 = vmul.f32 %v110, %v119
  %v136 = vmul.f32 %v111, %v120
  %v137 = vmul.f32 %v112, %v121
  %v138 = vmul.f32 %v113, %v122
  %v139 = vld [vmem:[%s3] sm:$0xff]
  %v141 = vperm.slane %v139, 0
  %v142 = vperm.slane %v139, 1
  %v143 = vperm.slane %v139, 2
  %v144 = vperm.slane %v139, 3
  %v145 = vperm.slane %v139, 4
  %v146 = vperm.slane %v139, 5
  %v147 = vperm.slane %v139, 6
  %v148 = vperm.slane %v139, 7
  %v157 = vadd.f32 %v131, %v141
  %v158 = vadd.f32 %v132, %v142
  %v159 = vadd.f32 %v133, %v143
  %v160 = vadd.f32 %v134, %v144
  %v161 = vadd.f32 %v135, %v145
  %v162 = vadd.f32 %v136, %v146
  %v163 = vadd.f32 %v137, %v147
  %v164 = vadd.f32 %v138, %v148
  %v165 = vmax.f32 %v157, 0.0
  %v166 = vmax.f32 %v158, 0.0
  %v167 = vmax.f32 %v159, 0.0
  %v168 = vmax.f32 %v160, 0.0
  %v169 = vmax.f32 %v161, 0.0
  %v170 = vmax.f32 %v162, 0.0
  %v171 = vmax.f32 %v163, 0.0
  %v172 = vmax.f32 %v164, 0.0
  %v173 = vpack.c.bf16 %v165, %v165
  %v174 = vpack.c.bf16 %v166, %v166
  %v175 = vpack.c.bf16 %v167, %v167
  %v176 = vpack.c.bf16 %v168, %v168
  %v177 = vpack.c.bf16 %v169, %v169
  %v178 = vpack.c.bf16 %v170, %v170
  %v179 = vpack.c.bf16 %v171, %v171
  %v180 = vpack.c.bf16 %v172, %v172
  %v181 = vld [vmem:[%s4] sm:$0xff]
  %v182 = vld [vmem:[%s4 + $0x8] sm:$0xff]
  %v183 = vld [vmem:[%s4 + $0x10] sm:$0xff]
  %v184 = vld [vmem:[%s4 + $0x18] sm:$0xff]
  %v185 = vld [vmem:[%s4 + $0x20] sm:$0xff]
  %v186 = vld [vmem:[%s4 + $0x28] sm:$0xff]
  %v187 = vld [vmem:[%s4 + $0x30] sm:$0xff]
  %v188 = vld [vmem:[%s4 + $0x38] sm:$0xff]
  %v189 = vld [vmem:[%s4 + $0x40] sm:$0xff]
  %v190 = vld [vmem:[%s4 + $0x48] sm:$0xff]
  %v191 = vld [vmem:[%s4 + $0x50] sm:$0xff]
  %v192 = vld [vmem:[%s4 + $0x58] sm:$0xff]
  %v193 = vld [vmem:[%s4 + $0x60] sm:$0xff]
  %v194 = vld [vmem:[%s4 + $0x68] sm:$0xff]
  %v195 = vld [vmem:[%s4 + $0x70] sm:$0xff]
  %v196 = vld [vmem:[%s4 + $0x78] sm:$0xff]
  %v197 = vld [vmem:[%s4 + $0x80] sm:$0xff]
  %v198 = vld [vmem:[%s4 + $0x88] sm:$0xff]
  %v199 = vld [vmem:[%s4 + $0x90] sm:$0xff]
  %v200 = vld [vmem:[%s4 + $0x98] sm:$0xff]
  %v201 = vld [vmem:[%s4 + $0xa0] sm:$0xff]
  %v202 = vld [vmem:[%s4 + $0xa8] sm:$0xff]
  %v203 = vld [vmem:[%s4 + $0xb0] sm:$0xff]
  %v204 = vld [vmem:[%s4 + $0xb8] sm:$0xff]
  %v205 = vld [vmem:[%s4 + $0xc0] sm:$0xff]
  %v206 = vld [vmem:[%s4 + $0xc8] sm:$0xff]
  %v207 = vld [vmem:[%s4 + $0xd0] sm:$0xff]
  %v208 = vld [vmem:[%s4 + $0xd8] sm:$0xff]
  %v209 = vld [vmem:[%s4 + $0xe0] sm:$0xff]
  %v210 = vld [vmem:[%s4 + $0xe8] sm:$0xff]
  %v211 = vld [vmem:[%s4 + $0xf0] sm:$0xff]
  %v212 = vld [vmem:[%s4 + $0xf8] sm:$0xff]
  %v213 = vld [vmem:[%s4 + $0x100] sm:$0xff]
  %v214 = vld [vmem:[%s4 + $0x108] sm:$0xff]
  %v215 = vld [vmem:[%s4 + $0x110] sm:$0xff]
  %v216 = vld [vmem:[%s4 + $0x118] sm:$0xff]
  %v217 = vld [vmem:[%s4 + $0x120] sm:$0xff]
  %v218 = vld [vmem:[%s4 + $0x128] sm:$0xff]
  %v219 = vld [vmem:[%s4 + $0x130] sm:$0xff]
  %v220 = vld [vmem:[%s4 + $0x138] sm:$0xff]
  %v221 = vld [vmem:[%s4 + $0x140] sm:$0xff]
  %v222 = vld [vmem:[%s4 + $0x148] sm:$0xff]
  %v223 = vld [vmem:[%s4 + $0x150] sm:$0xff]
  %v224 = vld [vmem:[%s4 + $0x158] sm:$0xff]
  %v225 = vld [vmem:[%s4 + $0x160] sm:$0xff]
  %v226 = vld [vmem:[%s4 + $0x168] sm:$0xff]
  %v227 = vld [vmem:[%s4 + $0x170] sm:$0xff]
  %v228 = vld [vmem:[%s4 + $0x178] sm:$0xff]
  %v229 = vld [vmem:[%s4 + $0x180] sm:$0xff]
  %v230 = vld [vmem:[%s4 + $0x188] sm:$0xff]
  %v231 = vld [vmem:[%s4 + $0x190] sm:$0xff]
  %v232 = vld [vmem:[%s4 + $0x198] sm:$0xff]
  %v233 = vld [vmem:[%s4 + $0x1a0] sm:$0xff]
  %v234 = vld [vmem:[%s4 + $0x1a8] sm:$0xff]
  %v235 = vld [vmem:[%s4 + $0x1b0] sm:$0xff]
  %v236 = vld [vmem:[%s4 + $0x1b8] sm:$0xff]
  %v237 = vld [vmem:[%s4 + $0x1c0] sm:$0xff]
  %v238 = vld [vmem:[%s4 + $0x1c8] sm:$0xff]
  %v239 = vld [vmem:[%s4 + $0x1d0] sm:$0xff]
  %v240 = vld [vmem:[%s4 + $0x1d8] sm:$0xff]
  %v241 = vld [vmem:[%s4 + $0x1e0] sm:$0xff]
  %v242 = vld [vmem:[%s4 + $0x1e8] sm:$0xff]
  %v243 = vld [vmem:[%s4 + $0x1f0] sm:$0xff]
  %v244 = vld [vmem:[%s4 + $0x1f8] sm:$0xff]
  %v245 = vld [vmem:[%s4 + $0x200] sm:$0xff]
  %v246 = vld [vmem:[%s4 + $0x208] sm:$0xff]
  %v247 = vld [vmem:[%s4 + $0x210] sm:$0xff]
  %v248 = vld [vmem:[%s4 + $0x218] sm:$0xff]
  %v249 = vld [vmem:[%s4 + $0x220] sm:$0xff]
  %v250 = vld [vmem:[%s4 + $0x228] sm:$0xff]
  %v251 = vld [vmem:[%s4 + $0x230] sm:$0xff]
  %v252 = vld [vmem:[%s4 + $0x238] sm:$0xff]
  %v253 = vld [vmem:[%s4 + $0x240] sm:$0xff]
  %v254 = vld [vmem:[%s4 + $0x248] sm:$0xff]
  %v255 = vld [vmem:[%s4 + $0x250] sm:$0xff]
  %v256 = vld [vmem:[%s4 + $0x258] sm:$0xff]
  %v257 = vld [vmem:[%s4 + $0x260] sm:$0xff]
  %v258 = vld [vmem:[%s4 + $0x268] sm:$0xff]
  %v259 = vld [vmem:[%s4 + $0x270] sm:$0xff]
  %v260 = vld [vmem:[%s4 + $0x278] sm:$0xff]
  %v261 = vld [vmem:[%s4 + $0x280] sm:$0xff]
  %v262 = vld [vmem:[%s4 + $0x288] sm:$0xff]
  %v263 = vld [vmem:[%s4 + $0x290] sm:$0xff]
  %v264 = vld [vmem:[%s4 + $0x298] sm:$0xff]
  %v265 = vld [vmem:[%s4 + $0x2a0] sm:$0xff]
  %v266 = vld [vmem:[%s4 + $0x2a8] sm:$0xff]
  %v267 = vld [vmem:[%s4 + $0x2b0] sm:$0xff]
  %v268 = vld [vmem:[%s4 + $0x2b8] sm:$0xff]
  %v269 = vld [vmem:[%s4 + $0x2c0] sm:$0xff]
  %v270 = vld [vmem:[%s4 + $0x2c8] sm:$0xff]
  %v271 = vld [vmem:[%s4 + $0x2d0] sm:$0xff]
  %v272 = vld [vmem:[%s4 + $0x2d8] sm:$0xff]
  %v273 = vld [vmem:[%s4 + $0x2e0] sm:$0xff]
  %v274 = vld [vmem:[%s4 + $0x2e8] sm:$0xff]
  %v275 = vld [vmem:[%s4 + $0x2f0] sm:$0xff]
  %v276 = vld [vmem:[%s4 + $0x2f8] sm:$0xff]
  %v277 = vld [vmem:[%s4 + $0x300] sm:$0xff]
  %v278 = vld [vmem:[%s4 + $0x308] sm:$0xff]
  %v279 = vld [vmem:[%s4 + $0x310] sm:$0xff]
  %v280 = vld [vmem:[%s4 + $0x318] sm:$0xff]
  %v281 = vld [vmem:[%s4 + $0x320] sm:$0xff]
  %v282 = vld [vmem:[%s4 + $0x328] sm:$0xff]
  %v283 = vld [vmem:[%s4 + $0x330] sm:$0xff]
  %v284 = vld [vmem:[%s4 + $0x338] sm:$0xff]
  %v285 = vld [vmem:[%s4 + $0x340] sm:$0xff]
  %v286 = vld [vmem:[%s4 + $0x348] sm:$0xff]
  %v287 = vld [vmem:[%s4 + $0x350] sm:$0xff]
  %v288 = vld [vmem:[%s4 + $0x358] sm:$0xff]
  %v289 = vld [vmem:[%s4 + $0x360] sm:$0xff]
  %v290 = vld [vmem:[%s4 + $0x368] sm:$0xff]
  %v291 = vld [vmem:[%s4 + $0x370] sm:$0xff]
  %v292 = vld [vmem:[%s4 + $0x378] sm:$0xff]
  %v293 = vld [vmem:[%s4 + $0x380] sm:$0xff]
  %v294 = vld [vmem:[%s4 + $0x388] sm:$0xff]
  %v295 = vld [vmem:[%s4 + $0x390] sm:$0xff]
  %v296 = vld [vmem:[%s4 + $0x398] sm:$0xff]
  %v297 = vld [vmem:[%s4 + $0x3a0] sm:$0xff]
  %v298 = vld [vmem:[%s4 + $0x3a8] sm:$0xff]
  %v299 = vld [vmem:[%s4 + $0x3b0] sm:$0xff]
  %v300 = vld [vmem:[%s4 + $0x3b8] sm:$0xff]
  %v301 = vld [vmem:[%s4 + $0x3c0] sm:$0xff]
  %v302 = vld [vmem:[%s4 + $0x3c8] sm:$0xff]
  %v303 = vld [vmem:[%s4 + $0x3d0] sm:$0xff]
  %v304 = vld [vmem:[%s4 + $0x3d8] sm:$0xff]
  %v305 = vld [vmem:[%s4 + $0x3e0] sm:$0xff]
  %v306 = vld [vmem:[%s4 + $0x3e8] sm:$0xff]
  %v307 = vld [vmem:[%s4 + $0x3f0] sm:$0xff]
  %v308 = vld [vmem:[%s4 + $0x3f8] sm:$0xff]
  %v309 = vld [vmem:[%s4 + $0x400] sm:$0xff]
  %v310 = vld [vmem:[%s4 + $0x408] sm:$0xff]
  %v311 = vld [vmem:[%s4 + $0x410] sm:$0xff]
  %v312 = vld [vmem:[%s4 + $0x418] sm:$0xff]
  %v313 = vld [vmem:[%s4 + $0x420] sm:$0xff]
  %v314 = vld [vmem:[%s4 + $0x428] sm:$0xff]
  %v315 = vld [vmem:[%s4 + $0x430] sm:$0xff]
  %v316 = vld [vmem:[%s4 + $0x438] sm:$0xff]
  %v317 = vld [vmem:[%s4 + $0x440] sm:$0xff]
  %v318 = vld [vmem:[%s4 + $0x448] sm:$0xff]
  %v319 = vld [vmem:[%s4 + $0x450] sm:$0xff]
  %v320 = vld [vmem:[%s4 + $0x458] sm:$0xff]
  %v321 = vld [vmem:[%s4 + $0x460] sm:$0xff]
  %v322 = vld [vmem:[%s4 + $0x468] sm:$0xff]
  %v323 = vld [vmem:[%s4 + $0x470] sm:$0xff]
  %v324 = vld [vmem:[%s4 + $0x478] sm:$0xff]
  %v325 = vld [vmem:[%s4 + $0x480] sm:$0xff]
  %v326 = vld [vmem:[%s4 + $0x488] sm:$0xff]
  %v327 = vld [vmem:[%s4 + $0x490] sm:$0xff]
  %v328 = vld [vmem:[%s4 + $0x498] sm:$0xff]
  %v329 = vld [vmem:[%s4 + $0x4a0] sm:$0xff]
  %v330 = vld [vmem:[%s4 + $0x4a8] sm:$0xff]
  %v331 = vld [vmem:[%s4 + $0x4b0] sm:$0xff]
  %v332 = vld [vmem:[%s4 + $0x4b8] sm:$0xff]
  %v333 = vld [vmem:[%s4 + $0x4c0] sm:$0xff]
  %v334 = vld [vmem:[%s4 + $0x4c8] sm:$0xff]
  %v335 = vld [vmem:[%s4 + $0x4d0] sm:$0xff]
  %v336 = vld [vmem:[%s4 + $0x4d8] sm:$0xff]
  %v337 = vld [vmem:[%s4 + $0x4e0] sm:$0xff]
  %v338 = vld [vmem:[%s4 + $0x4e8] sm:$0xff]
  %v339 = vld [vmem:[%s4 + $0x4f0] sm:$0xff]
  %v340 = vld [vmem:[%s4 + $0x4f8] sm:$0xff]
  %v341 = vld [vmem:[%s4 + $0x500] sm:$0xff]
  %v342 = vld [vmem:[%s4 + $0x508] sm:$0xff]
  %v343 = vld [vmem:[%s4 + $0x510] sm:$0xff]
  %v344 = vld [vmem:[%s4 + $0x518] sm:$0xff]
  %v345 = vld [vmem:[%s4 + $0x520] sm:$0xff]
  %v346 = vld [vmem:[%s4 + $0x528] sm:$0xff]
  %v347 = vld [vmem:[%s4 + $0x530] sm:$0xff]
  %v348 = vld [vmem:[%s4 + $0x538] sm:$0xff]
  %v349 = vld [vmem:[%s4 + $0x540] sm:$0xff]
  %v350 = vld [vmem:[%s4 + $0x548] sm:$0xff]
  %v351 = vld [vmem:[%s4 + $0x550] sm:$0xff]
  %v352 = vld [vmem:[%s4 + $0x558] sm:$0xff]
  %v353 = vld [vmem:[%s4 + $0x560] sm:$0xff]
  %v354 = vld [vmem:[%s4 + $0x568] sm:$0xff]
  %v355 = vld [vmem:[%s4 + $0x570] sm:$0xff]
  %v356 = vld [vmem:[%s4 + $0x578] sm:$0xff]
  %v357 = vld [vmem:[%s4 + $0x580] sm:$0xff]
  %v358 = vld [vmem:[%s4 + $0x588] sm:$0xff]
  %v359 = vld [vmem:[%s4 + $0x590] sm:$0xff]
  %v360 = vld [vmem:[%s4 + $0x598] sm:$0xff]
  %v361 = vld [vmem:[%s4 + $0x5a0] sm:$0xff]
  %v362 = vld [vmem:[%s4 + $0x5a8] sm:$0xff]
  %v363 = vld [vmem:[%s4 + $0x5b0] sm:$0xff]
  %v364 = vld [vmem:[%s4 + $0x5b8] sm:$0xff]
  %v365 = vld [vmem:[%s4 + $0x5c0] sm:$0xff]
  %v366 = vld [vmem:[%s4 + $0x5c8] sm:$0xff]
  %v367 = vld [vmem:[%s4 + $0x5d0] sm:$0xff]
  %v368 = vld [vmem:[%s4 + $0x5d8] sm:$0xff]
  %v369 = vld [vmem:[%s4 + $0x5e0] sm:$0xff]
  %v370 = vld [vmem:[%s4 + $0x5e8] sm:$0xff]
  %v371 = vld [vmem:[%s4 + $0x5f0] sm:$0xff]
  %v372 = vld [vmem:[%s4 + $0x5f8] sm:$0xff]
  %v373 = vld [vmem:[%s4 + $0x600] sm:$0xff]
  %v374 = vld [vmem:[%s4 + $0x608] sm:$0xff]
  %v375 = vld [vmem:[%s4 + $0x610] sm:$0xff]
  %v376 = vld [vmem:[%s4 + $0x618] sm:$0xff]
  %v377 = vld [vmem:[%s4 + $0x620] sm:$0xff]
  %v378 = vld [vmem:[%s4 + $0x628] sm:$0xff]
  %v379 = vld [vmem:[%s4 + $0x630] sm:$0xff]
  %v380 = vld [vmem:[%s4 + $0x638] sm:$0xff]
  %v381 = vld [vmem:[%s4 + $0x640] sm:$0xff]
  %v382 = vld [vmem:[%s4 + $0x648] sm:$0xff]
  %v383 = vld [vmem:[%s4 + $0x650] sm:$0xff]
  %v384 = vld [vmem:[%s4 + $0x658] sm:$0xff]
  %v385 = vld [vmem:[%s4 + $0x660] sm:$0xff]
  %v386 = vld [vmem:[%s4 + $0x668] sm:$0xff]
  %v387 = vld [vmem:[%s4 + $0x670] sm:$0xff]
  %v388 = vld [vmem:[%s4 + $0x678] sm:$0xff]
  %v389 = vld [vmem:[%s4 + $0x680] sm:$0xff]
  %v390 = vld [vmem:[%s4 + $0x688] sm:$0xff]
  %v391 = vld [vmem:[%s4 + $0x690] sm:$0xff]
  %v392 = vld [vmem:[%s4 + $0x698] sm:$0xff]
  %v393 = vld [vmem:[%s4 + $0x6a0] sm:$0xff]
  %v394 = vld [vmem:[%s4 + $0x6a8] sm:$0xff]
  %v395 = vld [vmem:[%s4 + $0x6b0] sm:$0xff]
  %v396 = vld [vmem:[%s4 + $0x6b8] sm:$0xff]
  %v397 = vld [vmem:[%s4 + $0x6c0] sm:$0xff]
  %v398 = vld [vmem:[%s4 + $0x6c8] sm:$0xff]
  %v399 = vld [vmem:[%s4 + $0x6d0] sm:$0xff]
  %v400 = vld [vmem:[%s4 + $0x6d8] sm:$0xff]
  %v401 = vld [vmem:[%s4 + $0x6e0] sm:$0xff]
  %v402 = vld [vmem:[%s4 + $0x6e8] sm:$0xff]
  %v403 = vld [vmem:[%s4 + $0x6f0] sm:$0xff]
  %v404 = vld [vmem:[%s4 + $0x6f8] sm:$0xff]
  %v405 = vld [vmem:[%s4 + $0x700] sm:$0xff]
  %v406 = vld [vmem:[%s4 + $0x708] sm:$0xff]
  %v407 = vld [vmem:[%s4 + $0x710] sm:$0xff]
  %v408 = vld [vmem:[%s4 + $0x718] sm:$0xff]
  %v409 = vld [vmem:[%s4 + $0x720] sm:$0xff]
  %v410 = vld [vmem:[%s4 + $0x728] sm:$0xff]
  %v411 = vld [vmem:[%s4 + $0x730] sm:$0xff]
  %v412 = vld [vmem:[%s4 + $0x738] sm:$0xff]
  %v413 = vld [vmem:[%s4 + $0x740] sm:$0xff]
  %v414 = vld [vmem:[%s4 + $0x748] sm:$0xff]
  %v415 = vld [vmem:[%s4 + $0x750] sm:$0xff]
  %v416 = vld [vmem:[%s4 + $0x758] sm:$0xff]
  %v417 = vld [vmem:[%s4 + $0x760] sm:$0xff]
  %v418 = vld [vmem:[%s4 + $0x768] sm:$0xff]
  %v419 = vld [vmem:[%s4 + $0x770] sm:$0xff]
  %v420 = vld [vmem:[%s4 + $0x778] sm:$0xff]
  %v421 = vld [vmem:[%s4 + $0x780] sm:$0xff]
  %v422 = vld [vmem:[%s4 + $0x788] sm:$0xff]
  %v423 = vld [vmem:[%s4 + $0x790] sm:$0xff]
  %v424 = vld [vmem:[%s4 + $0x798] sm:$0xff]
  %v425 = vld [vmem:[%s4 + $0x7a0] sm:$0xff]
  %v426 = vld [vmem:[%s4 + $0x7a8] sm:$0xff]
  %v427 = vld [vmem:[%s4 + $0x7b0] sm:$0xff]
  %v428 = vld [vmem:[%s4 + $0x7b8] sm:$0xff]
  %v429 = vld [vmem:[%s4 + $0x7c0] sm:$0xff]
  %v430 = vld [vmem:[%s4 + $0x7c8] sm:$0xff]
  %v431 = vld [vmem:[%s4 + $0x7d0] sm:$0xff]
  %v432 = vld [vmem:[%s4 + $0x7d8] sm:$0xff]
  %v433 = vld [vmem:[%s4 + $0x7e0] sm:$0xff]
  %v434 = vld [vmem:[%s4 + $0x7e8] sm:$0xff]
  %v435 = vld [vmem:[%s4 + $0x7f0] sm:$0xff]
  %v436 = vld [vmem:[%s4 + $0x7f8] sm:$0xff]
  %v693 = vunpack.c.l.b16 %v181
  %v694 = vunpack.c.h.b16 %v181
  %v695 = vunpack.c.l.b16 %v182
  %v696 = vunpack.c.h.b16 %v182
  %v697 = vunpack.c.l.b16 %v183
  %v698 = vunpack.c.h.b16 %v183
  %v699 = vunpack.c.l.b16 %v184
  %v700 = vunpack.c.h.b16 %v184
  %v701 = vunpack.c.l.b16 %v185
  %v702 = vunpack.c.h.b16 %v185
  %v703 = vunpack.c.l.b16 %v186
  %v704 = vunpack.c.h.b16 %v186
  %v705 = vunpack.c.l.b16 %v187
  %v706 = vunpack.c.h.b16 %v187
  %v707 = vunpack.c.l.b16 %v188
  %v708 = vunpack.c.h.b16 %v188
  %v709 = vunpack.c.l.b16 %v189
  %v710 = vunpack.c.h.b16 %v189
  %v711 = vunpack.c.l.b16 %v190
  %v712 = vunpack.c.h.b16 %v190
  %v713 = vunpack.c.l.b16 %v191
  %v714 = vunpack.c.h.b16 %v191
  %v715 = vunpack.c.l.b16 %v192
  %v716 = vunpack.c.h.b16 %v192
  %v717 = vunpack.c.l.b16 %v193
  %v718 = vunpack.c.h.b16 %v193
  %v719 = vunpack.c.l.b16 %v194
  %v720 = vunpack.c.h.b16 %v194
  %v721 = vunpack.c.l.b16 %v195
  %v722 = vunpack.c.h.b16 %v195
  %v723 = vunpack.c.l.b16 %v196
  %v724 = vunpack.c.h.b16 %v196
  %v725 = vunpack.c.l.b16 %v197
  %v726 = vunpack.c.h.b16 %v197
  %v727 = vunpack.c.l.b16 %v198
  %v728 = vunpack.c.h.b16 %v198
  %v729 = vunpack.c.l.b16 %v199
  %v730 = vunpack.c.h.b16 %v199
  %v731 = vunpack.c.l.b16 %v200
  %v732 = vunpack.c.h.b16 %v200
  %v733 = vunpack.c.l.b16 %v201
  %v734 = vunpack.c.h.b16 %v201
  %v735 = vunpack.c.l.b16 %v202
  %v736 = vunpack.c.h.b16 %v202
  %v737 = vunpack.c.l.b16 %v203
  %v738 = vunpack.c.h.b16 %v203
  %v739 = vunpack.c.l.b16 %v204
  %v740 = vunpack.c.h.b16 %v204
  %v741 = vunpack.c.l.b16 %v205
  %v742 = vunpack.c.h.b16 %v205
  %v743 = vunpack.c.l.b16 %v206
  %v744 = vunpack.c.h.b16 %v206
  %v745 = vunpack.c.l.b16 %v207
  %v746 = vunpack.c.h.b16 %v207
  %v747 = vunpack.c.l.b16 %v208
  %v748 = vunpack.c.h.b16 %v208
  %v749 = vunpack.c.l.b16 %v209
  %v750 = vunpack.c.h.b16 %v209
  %v751 = vunpack.c.l.b16 %v210
  %v752 = vunpack.c.h.b16 %v210
  %v753 = vunpack.c.l.b16 %v211
  %v754 = vunpack.c.h.b16 %v211
  %v755 = vunpack.c.l.b16 %v212
  %v756 = vunpack.c.h.b16 %v212
  %v757 = vunpack.c.l.b16 %v213
  %v758 = vunpack.c.h.b16 %v213
  %v759 = vunpack.c.l.b16 %v214
  %v760 = vunpack.c.h.b16 %v214
  %v761 = vunpack.c.l.b16 %v215
  %v762 = vunpack.c.h.b16 %v215
  %v763 = vunpack.c.l.b16 %v216
  %v764 = vunpack.c.h.b16 %v216
  %v765 = vunpack.c.l.b16 %v217
  %v766 = vunpack.c.h.b16 %v217
  %v767 = vunpack.c.l.b16 %v218
  %v768 = vunpack.c.h.b16 %v218
  %v769 = vunpack.c.l.b16 %v219
  %v770 = vunpack.c.h.b16 %v219
  %v771 = vunpack.c.l.b16 %v220
  %v772 = vunpack.c.h.b16 %v220
  %v773 = vunpack.c.l.b16 %v221
  %v774 = vunpack.c.h.b16 %v221
  %v775 = vunpack.c.l.b16 %v222
  %v776 = vunpack.c.h.b16 %v222
  %v777 = vunpack.c.l.b16 %v223
  %v778 = vunpack.c.h.b16 %v223
  %v779 = vunpack.c.l.b16 %v224
  %v780 = vunpack.c.h.b16 %v224
  %v781 = vunpack.c.l.b16 %v225
  %v782 = vunpack.c.h.b16 %v225
  %v783 = vunpack.c.l.b16 %v226
  %v784 = vunpack.c.h.b16 %v226
  %v785 = vunpack.c.l.b16 %v227
  %v786 = vunpack.c.h.b16 %v227
  %v787 = vunpack.c.l.b16 %v228
  %v788 = vunpack.c.h.b16 %v228
  %v789 = vunpack.c.l.b16 %v229
  %v790 = vunpack.c.h.b16 %v229
  %v791 = vunpack.c.l.b16 %v230
  %v792 = vunpack.c.h.b16 %v230
  %v793 = vunpack.c.l.b16 %v231
  %v794 = vunpack.c.h.b16 %v231
  %v795 = vunpack.c.l.b16 %v232
  %v796 = vunpack.c.h.b16 %v232
  %v797 = vunpack.c.l.b16 %v233
  %v798 = vunpack.c.h.b16 %v233
  %v799 = vunpack.c.l.b16 %v234
  %v800 = vunpack.c.h.b16 %v234
  %v801 = vunpack.c.l.b16 %v235
  %v802 = vunpack.c.h.b16 %v235
  %v803 = vunpack.c.l.b16 %v236
  %v804 = vunpack.c.h.b16 %v236
  %v805 = vunpack.c.l.b16 %v237
  %v806 = vunpack.c.h.b16 %v237
  %v807 = vunpack.c.l.b16 %v238
  %v808 = vunpack.c.h.b16 %v238
  %v809 = vunpack.c.l.b16 %v239
  %v810 = vunpack.c.h.b16 %v239
  %v811 = vunpack.c.l.b16 %v240
  %v812 = vunpack.c.h.b16 %v240
  %v813 = vunpack.c.l.b16 %v241
  %v814 = vunpack.c.h.b16 %v241
  %v815 = vunpack.c.l.b16 %v242
  %v816 = vunpack.c.h.b16 %v242
  %v817 = vunpack.c.l.b16 %v243
  %v818 = vunpack.c.h.b16 %v243
  %v819 = vunpack.c.l.b16 %v244
  %v820 = vunpack.c.h.b16 %v244
  %v821 = vunpack.c.l.b16 %v245
  %v822 = vunpack.c.h.b16 %v245
  %v823 = vunpack.c.l.b16 %v246
  %v824 = vunpack.c.h.b16 %v246
  %v825 = vunpack.c.l.b16 %v247
  %v826 = vunpack.c.h.b16 %v247
  %v827 = vunpack.c.l.b16 %v248
  %v828 = vunpack.c.h.b16 %v248
  %v829 = vunpack.c.l.b16 %v249
  %v830 = vunpack.c.h.b16 %v249
  %v831 = vunpack.c.l.b16 %v250
  %v832 = vunpack.c.h.b16 %v250
  %v833 = vunpack.c.l.b16 %v251
  %v834 = vunpack.c.h.b16 %v251
  %v835 = vunpack.c.l.b16 %v252
  %v836 = vunpack.c.h.b16 %v252
  %v837 = vunpack.c.l.b16 %v253
  %v838 = vunpack.c.h.b16 %v253
  %v839 = vunpack.c.l.b16 %v254
  %v840 = vunpack.c.h.b16 %v254
  %v841 = vunpack.c.l.b16 %v255
  %v842 = vunpack.c.h.b16 %v255
  %v843 = vunpack.c.l.b16 %v256
  %v844 = vunpack.c.h.b16 %v256
  %v845 = vunpack.c.l.b16 %v257
  %v846 = vunpack.c.h.b16 %v257
  %v847 = vunpack.c.l.b16 %v258
  %v848 = vunpack.c.h.b16 %v258
  %v849 = vunpack.c.l.b16 %v259
  %v850 = vunpack.c.h.b16 %v259
  %v851 = vunpack.c.l.b16 %v260
  %v852 = vunpack.c.h.b16 %v260
  %v853 = vunpack.c.l.b16 %v261
  %v854 = vunpack.c.h.b16 %v261
  %v855 = vunpack.c.l.b16 %v262
  %v856 = vunpack.c.h.b16 %v262
  %v857 = vunpack.c.l.b16 %v263
  %v858 = vunpack.c.h.b16 %v263
  %v859 = vunpack.c.l.b16 %v264
  %v860 = vunpack.c.h.b16 %v264
  %v861 = vunpack.c.l.b16 %v265
  %v862 = vunpack.c.h.b16 %v265
  %v863 = vunpack.c.l.b16 %v266
  %v864 = vunpack.c.h.b16 %v266
  %v865 = vunpack.c.l.b16 %v267
  %v866 = vunpack.c.h.b16 %v267
  %v867 = vunpack.c.l.b16 %v268
  %v868 = vunpack.c.h.b16 %v268
  %v869 = vunpack.c.l.b16 %v269
  %v870 = vunpack.c.h.b16 %v269
  %v871 = vunpack.c.l.b16 %v270
  %v872 = vunpack.c.h.b16 %v270
  %v873 = vunpack.c.l.b16 %v271
  %v874 = vunpack.c.h.b16 %v271
  %v875 = vunpack.c.l.b16 %v272
  %v876 = vunpack.c.h.b16 %v272
  %v877 = vunpack.c.l.b16 %v273
  %v878 = vunpack.c.h.b16 %v273
  %v879 = vunpack.c.l.b16 %v274
  %v880 = vunpack.c.h.b16 %v274
  %v881 = vunpack.c.l.b16 %v275
  %v882 = vunpack.c.h.b16 %v275
  %v883 = vunpack.c.l.b16 %v276
  %v884 = vunpack.c.h.b16 %v276
  %v885 = vunpack.c.l.b16 %v277
  %v886 = vunpack.c.h.b16 %v277
  %v887 = vunpack.c.l.b16 %v278
  %v888 = vunpack.c.h.b16 %v278
  %v889 = vunpack.c.l.b16 %v279
  %v890 = vunpack.c.h.b16 %v279
  %v891 = vunpack.c.l.b16 %v280
  %v892 = vunpack.c.h.b16 %v280
  %v893 = vunpack.c.l.b16 %v281
  %v894 = vunpack.c.h.b16 %v281
  %v895 = vunpack.c.l.b16 %v282
  %v896 = vunpack.c.h.b16 %v282
  %v897 = vunpack.c.l.b16 %v283
  %v898 = vunpack.c.h.b16 %v283
  %v899 = vunpack.c.l.b16 %v284
  %v900 = vunpack.c.h.b16 %v284
  %v901 = vunpack.c.l.b16 %v285
  %v902 = vunpack.c.h.b16 %v285
  %v903 = vunpack.c.l.b16 %v286
  %v904 = vunpack.c.h.b16 %v286
  %v905 = vunpack.c.l.b16 %v287
  %v906 = vunpack.c.h.b16 %v287
  %v907 = vunpack.c.l.b16 %v288
  %v908 = vunpack.c.h.b16 %v288
  %v909 = vunpack.c.l.b16 %v289
  %v910 = vunpack.c.h.b16 %v289
  %v911 = vunpack.c.l.b16 %v290
  %v912 = vunpack.c.h.b16 %v290
  %v913 = vunpack.c.l.b16 %v291
  %v914 = vunpack.c.h.b16 %v291
  %v915 = vunpack.c.l.b16 %v292
  %v916 = vunpack.c.h.b16 %v292
  %v917 = vunpack.c.l.b16 %v293
  %v918 = vunpack.c.h.b16 %v293
  %v919 = vunpack.c.l.b16 %v294
  %v920 = vunpack.c.h.b16 %v294
  %v921 = vunpack.c.l.b16 %v295
  %v922 = vunpack.c.h.b16 %v295
  %v923 = vunpack.c.l.b16 %v296
  %v924 = vunpack.c.h.b16 %v296
  %v925 = vunpack.c.l.b16 %v297
  %v926 = vunpack.c.h.b16 %v297
  %v927 = vunpack.c.l.b16 %v298
  %v928 = vunpack.c.h.b16 %v298
  %v929 = vunpack.c.l.b16 %v299
  %v930 = vunpack.c.h.b16 %v299
  %v931 = vunpack.c.l.b16 %v300
  %v932 = vunpack.c.h.b16 %v300
  %v933 = vunpack.c.l.b16 %v301
  %v934 = vunpack.c.h.b16 %v301
  %v935 = vunpack.c.l.b16 %v302
  %v936 = vunpack.c.h.b16 %v302
  %v937 = vunpack.c.l.b16 %v303
  %v938 = vunpack.c.h.b16 %v303
  %v939 = vunpack.c.l.b16 %v304
  %v940 = vunpack.c.h.b16 %v304
  %v941 = vunpack.c.l.b16 %v305
  %v942 = vunpack.c.h.b16 %v305
  %v943 = vunpack.c.l.b16 %v306
  %v944 = vunpack.c.h.b16 %v306
  %v945 = vunpack.c.l.b16 %v307
  %v946 = vunpack.c.h.b16 %v307
  %v947 = vunpack.c.l.b16 %v308
  %v948 = vunpack.c.h.b16 %v308
  %v949 = vunpack.c.l.b16 %v309
  %v950 = vunpack.c.h.b16 %v309
  %v951 = vunpack.c.l.b16 %v310
  %v952 = vunpack.c.h.b16 %v310
  %v953 = vunpack.c.l.b16 %v311
  %v954 = vunpack.c.h.b16 %v311
  %v955 = vunpack.c.l.b16 %v312
  %v956 = vunpack.c.h.b16 %v312
  %v957 = vunpack.c.l.b16 %v313
  %v958 = vunpack.c.h.b16 %v313
  %v959 = vunpack.c.l.b16 %v314
  %v960 = vunpack.c.h.b16 %v314
  %v961 = vunpack.c.l.b16 %v315
  %v962 = vunpack.c.h.b16 %v315
  %v963 = vunpack.c.l.b16 %v316
  %v964 = vunpack.c.h.b16 %v316
  %v965 = vunpack.c.l.b16 %v317
  %v966 = vunpack.c.h.b16 %v317
  %v967 = vunpack.c.l.b16 %v318
  %v968 = vunpack.c.h.b16 %v318
  %v969 = vunpack.c.l.b16 %v319
  %v970 = vunpack.c.h.b16 %v319
  %v971 = vunpack.c.l.b16 %v320
  %v972 = vunpack.c.h.b16 %v320
  %v973 = vunpack.c.l.b16 %v321
  %v974 = vunpack.c.h.b16 %v321
  %v975 = vunpack.c.l.b16 %v322
  %v976 = vunpack.c.h.b16 %v322
  %v977 = vunpack.c.l.b16 %v323
  %v978 = vunpack.c.h.b16 %v323
  %v979 = vunpack.c.l.b16 %v324
  %v980 = vunpack.c.h.b16 %v324
  %v981 = vunpack.c.l.b16 %v325
  %v982 = vunpack.c.h.b16 %v325
  %v983 = vunpack.c.l.b16 %v326
  %v984 = vunpack.c.h.b16 %v326
  %v985 = vunpack.c.l.b16 %v327
  %v986 = vunpack.c.h.b16 %v327
  %v987 = vunpack.c.l.b16 %v328
  %v988 = vunpack.c.h.b16 %v328
  %v989 = vunpack.c.l.b16 %v329
  %v990 = vunpack.c.h.b16 %v329
  %v991 = vunpack.c.l.b16 %v330
  %v992 = vunpack.c.h.b16 %v330
  %v993 = vunpack.c.l.b16 %v331
  %v994 = vunpack.c.h.b16 %v331
  %v995 = vunpack.c.l.b16 %v332
  %v996 = vunpack.c.h.b16 %v332
  %v997 = vunpack.c.l.b16 %v333
  %v998 = vunpack.c.h.b16 %v333
  %v999 = vunpack.c.l.b16 %v334
  %v1000 = vunpack.c.h.b16 %v334
  %v1001 = vunpack.c.l.b16 %v335
  %v1002 = vunpack.c.h.b16 %v335
  %v1003 = vunpack.c.l.b16 %v336
  %v1004 = vunpack.c.h.b16 %v336
  %v1005 = vunpack.c.l.b16 %v337
  %v1006 = vunpack.c.h.b16 %v337
  %v1007 = vunpack.c.l.b16 %v338
  %v1008 = vunpack.c.h.b16 %v338
  %v1009 = vunpack.c.l.b16 %v339
  %v1010 = vunpack.c.h.b16 %v339
  %v1011 = vunpack.c.l.b16 %v340
  %v1012 = vunpack.c.h.b16 %v340
  %v1013 = vunpack.c.l.b16 %v341
  %v1014 = vunpack.c.h.b16 %v341
  %v1015 = vunpack.c.l.b16 %v342
  %v1016 = vunpack.c.h.b16 %v342
  %v1017 = vunpack.c.l.b16 %v343
  %v1018 = vunpack.c.h.b16 %v343
  %v1019 = vunpack.c.l.b16 %v344
  %v1020 = vunpack.c.h.b16 %v344
  %v1021 = vunpack.c.l.b16 %v345
  %v1022 = vunpack.c.h.b16 %v345
  %v1023 = vunpack.c.l.b16 %v346
  %v1024 = vunpack.c.h.b16 %v346
  %v1025 = vunpack.c.l.b16 %v347
  %v1026 = vunpack.c.h.b16 %v347
  %v1027 = vunpack.c.l.b16 %v348
  %v1028 = vunpack.c.h.b16 %v348
  %v1029 = vunpack.c.l.b16 %v349
  %v1030 = vunpack.c.h.b16 %v349
  %v1031 = vunpack.c.l.b16 %v350
  %v1032 = vunpack.c.h.b16 %v350
  %v1033 = vunpack.c.l.b16 %v351
  %v1034 = vunpack.c.h.b16 %v351
  %v1035 = vunpack.c.l.b16 %v352
  %v1036 = vunpack.c.h.b16 %v352
  %v1037 = vunpack.c.l.b16 %v353
  %v1038 = vunpack.c.h.b16 %v353
  %v1039 = vunpack.c.l.b16 %v354
  %v1040 = vunpack.c.h.b16 %v354
  %v1041 = vunpack.c.l.b16 %v355
  %v1042 = vunpack.c.h.b16 %v355
  %v1043 = vunpack.c.l.b16 %v356
  %v1044 = vunpack.c.h.b16 %v356
  %v1045 = vunpack.c.l.b16 %v357
  %v1046 = vunpack.c.h.b16 %v357
  %v1047 = vunpack.c.l.b16 %v358
  %v1048 = vunpack.c.h.b16 %v358
  %v1049 = vunpack.c.l.b16 %v359
  %v1050 = vunpack.c.h.b16 %v359
  %v1051 = vunpack.c.l.b16 %v360
  %v1052 = vunpack.c.h.b16 %v360
  %v1053 = vunpack.c.l.b16 %v361
  %v1054 = vunpack.c.h.b16 %v361
  %v1055 = vunpack.c.l.b16 %v362
  %v1056 = vunpack.c.h.b16 %v362
  %v1057 = vunpack.c.l.b16 %v363
  %v1058 = vunpack.c.h.b16 %v363
  %v1059 = vunpack.c.l.b16 %v364
  %v1060 = vunpack.c.h.b16 %v364
  %v1061 = vunpack.c.l.b16 %v365
  %v1062 = vunpack.c.h.b16 %v365
  %v1063 = vunpack.c.l.b16 %v366
  %v1064 = vunpack.c.h.b16 %v366
  %v1065 = vunpack.c.l.b16 %v367
  %v1066 = vunpack.c.h.b16 %v367
  %v1067 = vunpack.c.l.b16 %v368
  %v1068 = vunpack.c.h.b16 %v368
  %v1069 = vunpack.c.l.b16 %v369
  %v1070 = vunpack.c.h.b16 %v369
  %v1071 = vunpack.c.l.b16 %v370
  %v1072 = vunpack.c.h.b16 %v370
  %v1073 = vunpack.c.l.b16 %v371
  %v1074 = vunpack.c.h.b16 %v371
  %v1075 = vunpack.c.l.b16 %v372
  %v1076 = vunpack.c.h.b16 %v372
  %v1077 = vunpack.c.l.b16 %v373
  %v1078 = vunpack.c.h.b16 %v373
  %v1079 = vunpack.c.l.b16 %v374
  %v1080 = vunpack.c.h.b16 %v374
  %v1081 = vunpack.c.l.b16 %v375
  %v1082 = vunpack.c.h.b16 %v375
  %v1083 = vunpack.c.l.b16 %v376
  %v1084 = vunpack.c.h.b16 %v376
  %v1085 = vunpack.c.l.b16 %v377
  %v1086 = vunpack.c.h.b16 %v377
  %v1087 = vunpack.c.l.b16 %v378
  %v1088 = vunpack.c.h.b16 %v378
  %v1089 = vunpack.c.l.b16 %v379
  %v1090 = vunpack.c.h.b16 %v379
  %v1091 = vunpack.c.l.b16 %v380
  %v1092 = vunpack.c.h.b16 %v380
  %v1093 = vunpack.c.l.b16 %v381
  %v1094 = vunpack.c.h.b16 %v381
  %v1095 = vunpack.c.l.b16 %v382
  %v1096 = vunpack.c.h.b16 %v382
  %v1097 = vunpack.c.l.b16 %v383
  %v1098 = vunpack.c.h.b16 %v383
  %v1099 = vunpack.c.l.b16 %v384
  %v1100 = vunpack.c.h.b16 %v384
  %v1101 = vunpack.c.l.b16 %v385
  %v1102 = vunpack.c.h.b16 %v385
  %v1103 = vunpack.c.l.b16 %v386
  %v1104 = vunpack.c.h.b16 %v386
  %v1105 = vunpack.c.l.b16 %v387
  %v1106 = vunpack.c.h.b16 %v387
  %v1107 = vunpack.c.l.b16 %v388
  %v1108 = vunpack.c.h.b16 %v388
  %v1109 = vunpack.c.l.b16 %v389
  %v1110 = vunpack.c.h.b16 %v389
  %v1111 = vunpack.c.l.b16 %v390
  %v1112 = vunpack.c.h.b16 %v390
  %v1113 = vunpack.c.l.b16 %v391
  %v1114 = vunpack.c.h.b16 %v391
  %v1115 = vunpack.c.l.b16 %v392
  %v1116 = vunpack.c.h.b16 %v392
  %v1117 = vunpack.c.l.b16 %v393
  %v1118 = vunpack.c.h.b16 %v393
  %v1119 = vunpack.c.l.b16 %v394
  %v1120 = vunpack.c.h.b16 %v394
  %v1121 = vunpack.c.l.b16 %v395
  %v1122 = vunpack.c.h.b16 %v395
  %v1123 = vunpack.c.l.b16 %v396
  %v1124 = vunpack.c.h.b16 %v396
  %v1125 = vunpack.c.l.b16 %v397
  %v1126 = vunpack.c.h.b16 %v397
  %v1127 = vunpack.c.l.b16 %v398
  %v1128 = vunpack.c.h.b16 %v398
  %v1129 = vunpack.c.l.b16 %v399
  %v1130 = vunpack.c.h.b16 %v399
  %v1131 = vunpack.c.l.b16 %v400
  %v1132 = vunpack.c.h.b16 %v400
  %v1133 = vunpack.c.l.b16 %v401
  %v1134 = vunpack.c.h.b16 %v401
  %v1135 = vunpack.c.l.b16 %v402
  %v1136 = vunpack.c.h.b16 %v402
  %v1137 = vunpack.c.l.b16 %v403
  %v1138 = vunpack.c.h.b16 %v403
  %v1139 = vunpack.c.l.b16 %v404
  %v1140 = vunpack.c.h.b16 %v404
  %v1141 = vunpack.c.l.b16 %v405
  %v1142 = vunpack.c.h.b16 %v405
  %v1143 = vunpack.c.l.b16 %v406
  %v1144 = vunpack.c.h.b16 %v406
  %v1145 = vunpack.c.l.b16 %v407
  %v1146 = vunpack.c.h.b16 %v407
  %v1147 = vunpack.c.l.b16 %v408
  %v1148 = vunpack.c.h.b16 %v408
  %v1149 = vunpack.c.l.b16 %v409
  %v1150 = vunpack.c.h.b16 %v409
  %v1151 = vunpack.c.l.b16 %v410
  %v1152 = vunpack.c.h.b16 %v410
  %v1153 = vunpack.c.l.b16 %v411
  %v1154 = vunpack.c.h.b16 %v411
  %v1155 = vunpack.c.l.b16 %v412
  %v1156 = vunpack.c.h.b16 %v412
  %v1157 = vunpack.c.l.b16 %v413
  %v1158 = vunpack.c.h.b16 %v413
  %v1159 = vunpack.c.l.b16 %v414
  %v1160 = vunpack.c.h.b16 %v414
  %v1161 = vunpack.c.l.b16 %v415
  %v1162 = vunpack.c.h.b16 %v415
  %v1163 = vunpack.c.l.b16 %v416
  %v1164 = vunpack.c.h.b16 %v416
  %v1165 = vunpack.c.l.b16 %v417
  %v1166 = vunpack.c.h.b16 %v417
  %v1167 = vunpack.c.l.b16 %v418
  %v1168 = vunpack.c.h.b16 %v418
  %v1169 = vunpack.c.l.b16 %v419
  %v1170 = vunpack.c.h.b16 %v419
  %v1171 = vunpack.c.l.b16 %v420
  %v1172 = vunpack.c.h.b16 %v420
  %v1173 = vunpack.c.l.b16 %v421
  %v1174 = vunpack.c.h.b16 %v421
  %v1175 = vunpack.c.l.b16 %v422
  %v1176 = vunpack.c.h.b16 %v422
  %v1177 = vunpack.c.l.b16 %v423
  %v1178 = vunpack.c.h.b16 %v423
  %v1179 = vunpack.c.l.b16 %v424
  %v1180 = vunpack.c.h.b16 %v424
  %v1181 = vunpack.c.l.b16 %v425
  %v1182 = vunpack.c.h.b16 %v425
  %v1183 = vunpack.c.l.b16 %v426
  %v1184 = vunpack.c.h.b16 %v426
  %v1185 = vunpack.c.l.b16 %v427
  %v1186 = vunpack.c.h.b16 %v427
  %v1187 = vunpack.c.l.b16 %v428
  %v1188 = vunpack.c.h.b16 %v428
  %v1189 = vunpack.c.l.b16 %v429
  %v1190 = vunpack.c.h.b16 %v429
  %v1191 = vunpack.c.l.b16 %v430
  %v1192 = vunpack.c.h.b16 %v430
  %v1193 = vunpack.c.l.b16 %v431
  %v1194 = vunpack.c.h.b16 %v431
  %v1195 = vunpack.c.l.b16 %v432
  %v1196 = vunpack.c.h.b16 %v432
  %v1197 = vunpack.c.l.b16 %v433
  %v1198 = vunpack.c.h.b16 %v433
  %v1199 = vunpack.c.l.b16 %v434
  %v1200 = vunpack.c.h.b16 %v434
  %v1201 = vunpack.c.l.b16 %v435
  %v1202 = vunpack.c.h.b16 %v435
  %v1203 = vunpack.c.l.b16 %v436
  %v1204 = vunpack.c.h.b16 %v436
  %v1205 = vpack.c.b16 %v697, %v693
  %v1206 = vpack.c.b16 %v698, %v694
  %v1207 = vpack.c.b16 %v699, %v695
  %v1208 = vpack.c.b16 %v700, %v696
  %v1209 = vpack.c.b16 %v705, %v701
  %v1210 = vpack.c.b16 %v706, %v702
  %v1211 = vpack.c.b16 %v707, %v703
  %v1212 = vpack.c.b16 %v708, %v704
  %v1213 = vpack.c.b16 %v713, %v709
  %v1214 = vpack.c.b16 %v714, %v710
  %v1215 = vpack.c.b16 %v715, %v711
  %v1216 = vpack.c.b16 %v716, %v712
  %v1217 = vpack.c.b16 %v721, %v717
  %v1218 = vpack.c.b16 %v722, %v718
  %v1219 = vpack.c.b16 %v723, %v719
  %v1220 = vpack.c.b16 %v724, %v720
  %v1221 = vpack.c.b16 %v729, %v725
  %v1222 = vpack.c.b16 %v730, %v726
  %v1223 = vpack.c.b16 %v731, %v727
  %v1224 = vpack.c.b16 %v732, %v728
  %v1225 = vpack.c.b16 %v737, %v733
  %v1226 = vpack.c.b16 %v738, %v734
  %v1227 = vpack.c.b16 %v739, %v735
  %v1228 = vpack.c.b16 %v740, %v736
  %v1229 = vpack.c.b16 %v745, %v741
  %v1230 = vpack.c.b16 %v746, %v742
  %v1231 = vpack.c.b16 %v747, %v743
  %v1232 = vpack.c.b16 %v748, %v744
  %v1233 = vpack.c.b16 %v753, %v749
  %v1234 = vpack.c.b16 %v754, %v750
  %v1235 = vpack.c.b16 %v755, %v751
  %v1236 = vpack.c.b16 %v756, %v752
  %v1237 = vpack.c.b16 %v761, %v757
  %v1238 = vpack.c.b16 %v762, %v758
  %v1239 = vpack.c.b16 %v763, %v759
  %v1240 = vpack.c.b16 %v764, %v760
  %v1241 = vpack.c.b16 %v769, %v765
  %v1242 = vpack.c.b16 %v770, %v766
  %v1243 = vpack.c.b16 %v771, %v767
  %v1244 = vpack.c.b16 %v772, %v768
  %v1245 = vpack.c.b16 %v777, %v773
  %v1246 = vpack.c.b16 %v778, %v774
  %v1247 = vpack.c.b16 %v779, %v775
  %v1248 = vpack.c.b16 %v780, %v776
  %v1249 = vpack.c.b16 %v785, %v781
  %v1250 = vpack.c.b16 %v786, %v782
  %v1251 = vpack.c.b16 %v787, %v783
  %v1252 = vpack.c.b16 %v788, %v784
  %v1253 = vpack.c.b16 %v793, %v789
  %v1254 = vpack.c.b16 %v794, %v790
  %v1255 = vpack.c.b16 %v795, %v791
  %v1256 = vpack.c.b16 %v796, %v792
  %v1257 = vpack.c.b16 %v801, %v797
  %v1258 = vpack.c.b16 %v802, %v798
  %v1259 = vpack.c.b16 %v803, %v799
  %v1260 = vpack.c.b16 %v804, %v800
  %v1261 = vpack.c.b16 %v809, %v805
  %v1262 = vpack.c.b16 %v810, %v806
  %v1263 = vpack.c.b16 %v811, %v807
  %v1264 = vpack.c.b16 %v812, %v808
  %v1265 = vpack.c.b16 %v817, %v813
  %v1266 = vpack.c.b16 %v818, %v814
  %v1267 = vpack.c.b16 %v819, %v815
  %v1268 = vpack.c.b16 %v820, %v816
  %v1269 = vpack.c.b16 %v825, %v821
  %v1270 = vpack.c.b16 %v826, %v822
  %v1271 = vpack.c.b16 %v827, %v823
  %v1272 = vpack.c.b16 %v828, %v824
  %v1273 = vpack.c.b16 %v833, %v829
  %v1274 = vpack.c.b16 %v834, %v830
  %v1275 = vpack.c.b16 %v835, %v831
  %v1276 = vpack.c.b16 %v836, %v832
  %v1277 = vpack.c.b16 %v841, %v837
  %v1278 = vpack.c.b16 %v842, %v838
  %v1279 = vpack.c.b16 %v843, %v839
  %v1280 = vpack.c.b16 %v844, %v840
  %v1281 = vpack.c.b16 %v849, %v845
  %v1282 = vpack.c.b16 %v850, %v846
  %v1283 = vpack.c.b16 %v851, %v847
  %v1284 = vpack.c.b16 %v852, %v848
  %v1285 = vpack.c.b16 %v857, %v853
  %v1286 = vpack.c.b16 %v858, %v854
  %v1287 = vpack.c.b16 %v859, %v855
  %v1288 = vpack.c.b16 %v860, %v856
  %v1289 = vpack.c.b16 %v865, %v861
  %v1290 = vpack.c.b16 %v866, %v862
  %v1291 = vpack.c.b16 %v867, %v863
  %v1292 = vpack.c.b16 %v868, %v864
  %v1293 = vpack.c.b16 %v873, %v869
  %v1294 = vpack.c.b16 %v874, %v870
  %v1295 = vpack.c.b16 %v875, %v871
  %v1296 = vpack.c.b16 %v876, %v872
  %v1297 = vpack.c.b16 %v881, %v877
  %v1298 = vpack.c.b16 %v882, %v878
  %v1299 = vpack.c.b16 %v883, %v879
  %v1300 = vpack.c.b16 %v884, %v880
  %v1301 = vpack.c.b16 %v889, %v885
  %v1302 = vpack.c.b16 %v890, %v886
  %v1303 = vpack.c.b16 %v891, %v887
  %v1304 = vpack.c.b16 %v892, %v888
  %v1305 = vpack.c.b16 %v897, %v893
  %v1306 = vpack.c.b16 %v898, %v894
  %v1307 = vpack.c.b16 %v899, %v895
  %v1308 = vpack.c.b16 %v900, %v896
  %v1309 = vpack.c.b16 %v905, %v901
  %v1310 = vpack.c.b16 %v906, %v902
  %v1311 = vpack.c.b16 %v907, %v903
  %v1312 = vpack.c.b16 %v908, %v904
  %v1313 = vpack.c.b16 %v913, %v909
  %v1314 = vpack.c.b16 %v914, %v910
  %v1315 = vpack.c.b16 %v915, %v911
  %v1316 = vpack.c.b16 %v916, %v912
  %v1317 = vpack.c.b16 %v921, %v917
  %v1318 = vpack.c.b16 %v922, %v918
  %v1319 = vpack.c.b16 %v923, %v919
  %v1320 = vpack.c.b16 %v924, %v920
  %v1321 = vpack.c.b16 %v929, %v925
  %v1322 = vpack.c.b16 %v930, %v926
  %v1323 = vpack.c.b16 %v931, %v927
  %v1324 = vpack.c.b16 %v932, %v928
  %v1325 = vpack.c.b16 %v937, %v933
  %v1326 = vpack.c.b16 %v938, %v934
  %v1327 = vpack.c.b16 %v939, %v935
  %v1328 = vpack.c.b16 %v940, %v936
  %v1329 = vpack.c.b16 %v945, %v941
  %v1330 = vpack.c.b16 %v946, %v942
  %v1331 = vpack.c.b16 %v947, %v943
  %v1332 = vpack.c.b16 %v948, %v944
  %v1333 = vpack.c.b16 %v953, %v949
  %v1334 = vpack.c.b16 %v954, %v950
  %v1335 = vpack.c.b16 %v955, %v951
  %v1336 = vpack.c.b16 %v956, %v952
  %v1337 = vpack.c.b16 %v961, %v957
  %v1338 = vpack.c.b16 %v962, %v958
  %v1339 = vpack.c.b16 %v963, %v959
  %v1340 = vpack.c.b16 %v964, %v960
  %v1341 = vpack.c.b16 %v969, %v965
  %v1342 = vpack.c.b16 %v970, %v966
  %v1343 = vpack.c.b16 %v971, %v967
  %v1344 = vpack.c.b16 %v972, %v968
  %v1345 = vpack.c.b16 %v977, %v973
  %v1346 = vpack.c.b16 %v978, %v974
  %v1347 = vpack.c.b16 %v979, %v975
  %v1348 = vpack.c.b16 %v980, %v976
  %v1349 = vpack.c.b16 %v985, %v981
  %v1350 = vpack.c.b16 %v986, %v982
  %v1351 = vpack.c.b16 %v987, %v983
  %v1352 = vpack.c.b16 %v988, %v984
  %v1353 = vpack.c.b16 %v993, %v989
  %v1354 = vpack.c.b16 %v994, %v990
  %v1355 = vpack.c.b16 %v995, %v991
  %v1356 = vpack.c.b16 %v996, %v992
  %v1357 = vpack.c.b16 %v1001, %v997
  %v1358 = vpack.c.b16 %v1002, %v998
  %v1359 = vpack.c.b16 %v1003, %v999
  %v1360 = vpack.c.b16 %v1004, %v1000
  %v1361 = vpack.c.b16 %v1009, %v1005
  %v1362 = vpack.c.b16 %v1010, %v1006
  %v1363 = vpack.c.b16 %v1011, %v1007
  %v1364 = vpack.c.b16 %v1012, %v1008
  %v1365 = vpack.c.b16 %v1017, %v1013
  %v1366 = vpack.c.b16 %v1018, %v1014
  %v1367 = vpack.c.b16 %v1019, %v1015
  %v1368 = vpack.c.b16 %v1020, %v1016
  %v1369 = vpack.c.b16 %v1025, %v1021
  %v1370 = vpack.c.b16 %v1026, %v1022
  %v1371 = vpack.c.b16 %v1027, %v1023
  %v1372 = vpack.c.b16 %v1028, %v1024
  %v1373 = vpack.c.b16 %v1033, %v1029
  %v1374 = vpack.c.b16 %v1034, %v1030
  %v1375 = vpack.c.b16 %v1035, %v1031
  %v1376 = vpack.c.b16 %v1036, %v1032
  %v1377 = vpack.c.b16 %v1041, %v1037
  %v1378 = vpack.c.b16 %v1042, %v1038
  %v1379 = vpack.c.b16 %v1043, %v1039
  %v1380 = vpack.c.b16 %v1044, %v1040
  %v1381 = vpack.c.b16 %v1049, %v1045
  %v1382 = vpack.c.b16 %v1050, %v1046
  %v1383 = vpack.c.b16 %v1051, %v1047
  %v1384 = vpack.c.b16 %v1052, %v1048
  %v1385 = vpack.c.b16 %v1057, %v1053
  %v1386 = vpack.c.b16 %v1058, %v1054
  %v1387 = vpack.c.b16 %v1059, %v1055
  %v1388 = vpack.c.b16 %v1060, %v1056
  %v1389 = vpack.c.b16 %v1065, %v1061
  %v1390 = vpack.c.b16 %v1066, %v1062
  %v1391 = vpack.c.b16 %v1067, %v1063
  %v1392 = vpack.c.b16 %v1068, %v1064
  %v1393 = vpack.c.b16 %v1073, %v1069
  %v1394 = vpack.c.b16 %v1074, %v1070
  %v1395 = vpack.c.b16 %v1075, %v1071
  %v1396 = vpack.c.b16 %v1076, %v1072
  %v1397 = vpack.c.b16 %v1081, %v1077
  %v1398 = vpack.c.b16 %v1082, %v1078
  %v1399 = vpack.c.b16 %v1083, %v1079
  %v1400 = vpack.c.b16 %v1084, %v1080
  %v1401 = vpack.c.b16 %v1089, %v1085
  %v1402 = vpack.c.b16 %v1090, %v1086
  %v1403 = vpack.c.b16 %v1091, %v1087
  %v1404 = vpack.c.b16 %v1092, %v1088
  %v1405 = vpack.c.b16 %v1097, %v1093
  %v1406 = vpack.c.b16 %v1098, %v1094
  %v1407 = vpack.c.b16 %v1099, %v1095
  %v1408 = vpack.c.b16 %v1100, %v1096
  %v1409 = vpack.c.b16 %v1105, %v1101
  %v1410 = vpack.c.b16 %v1106, %v1102
  %v1411 = vpack.c.b16 %v1107, %v1103
  %v1412 = vpack.c.b16 %v1108, %v1104
  %v1413 = vpack.c.b16 %v1113, %v1109
  %v1414 = vpack.c.b16 %v1114, %v1110
  %v1415 = vpack.c.b16 %v1115, %v1111
  %v1416 = vpack.c.b16 %v1116, %v1112
  %v1417 = vpack.c.b16 %v1121, %v1117
  %v1418 = vpack.c.b16 %v1122, %v1118
  %v1419 = vpack.c.b16 %v1123, %v1119
  %v1420 = vpack.c.b16 %v1124, %v1120
  %v1421 = vpack.c.b16 %v1129, %v1125
  %v1422 = vpack.c.b16 %v1130, %v1126
  %v1423 = vpack.c.b16 %v1131, %v1127
  %v1424 = vpack.c.b16 %v1132, %v1128
  %v1425 = vpack.c.b16 %v1137, %v1133
  %v1426 = vpack.c.b16 %v1138, %v1134
  %v1427 = vpack.c.b16 %v1139, %v1135
  %v1428 = vpack.c.b16 %v1140, %v1136
  %v1429 = vpack.c.b16 %v1145, %v1141
  %v1430 = vpack.c.b16 %v1146, %v1142
  %v1431 = vpack.c.b16 %v1147, %v1143
  %v1432 = vpack.c.b16 %v1148, %v1144
  %v1433 = vpack.c.b16 %v1153, %v1149
  %v1434 = vpack.c.b16 %v1154, %v1150
  %v1435 = vpack.c.b16 %v1155, %v1151
  %v1436 = vpack.c.b16 %v1156, %v1152
  %v1437 = vpack.c.b16 %v1161, %v1157
  %v1438 = vpack.c.b16 %v1162, %v1158
  %v1439 = vpack.c.b16 %v1163, %v1159
  %v1440 = vpack.c.b16 %v1164, %v1160
  %v1441 = vpack.c.b16 %v1169, %v1165
  %v1442 = vpack.c.b16 %v1170, %v1166
  %v1443 = vpack.c.b16 %v1171, %v1167
  %v1444 = vpack.c.b16 %v1172, %v1168
  %v1445 = vpack.c.b16 %v1177, %v1173
  %v1446 = vpack.c.b16 %v1178, %v1174
  %v1447 = vpack.c.b16 %v1179, %v1175
  %v1448 = vpack.c.b16 %v1180, %v1176
  %v1449 = vpack.c.b16 %v1185, %v1181
  %v1450 = vpack.c.b16 %v1186, %v1182
  %v1451 = vpack.c.b16 %v1187, %v1183
  %v1452 = vpack.c.b16 %v1188, %v1184
  %v1453 = vpack.c.b16 %v1193, %v1189
  %v1454 = vpack.c.b16 %v1194, %v1190
  %v1455 = vpack.c.b16 %v1195, %v1191
  %v1456 = vpack.c.b16 %v1196, %v1192
  %v1457 = vpack.c.b16 %v1201, %v1197
  %v1458 = vpack.c.b16 %v1202, %v1198
  %v1459 = vpack.c.b16 %v1203, %v1199
  %v1460 = vpack.c.b16 %v1204, %v1200
  %1717 = vmatpush.bf16.msra.mxu0 %v1233
  %1718 = vmatpush.bf16.msra.mxu0 %v1229
  %1719 = vmatpush.bf16.msra.mxu0 %v1225
  %1720 = vmatpush.bf16.msra.mxu0 %v1221
  %1721 = vmatpush.bf16.msra.mxu0 %v1217
  %1722 = vmatpush.bf16.msra.mxu0 %v1213
  %1723 = vmatpush.bf16.msra.mxu0 %v1209
  %1724 = vmatpush.bf16.msra.mxu0 %v1205
  %1725 = vmatmul.bf16.gmra.mxu0 %v173
  %v1726 = vpop.f32.mrf.mxu0
  %v1727 = vadd.f32 0.0, %v1726
  %v1728 = vpop.f32.mrf.mxu0
  %1729 = vdwg.mxu0
  %1730 = vmatpush.bf16.msra.mxu0 %v1265
  %1731 = vmatpush.bf16.msra.mxu0 %v1261
  %1732 = vmatpush.bf16.msra.mxu0 %v1257
  %1733 = vmatpush.bf16.msra.mxu0 %v1253
  %1734 = vmatpush.bf16.msra.mxu0 %v1249
  %1735 = vmatpush.bf16.msra.mxu0 %v1245
  %1736 = vmatpush.bf16.msra.mxu0 %v1241
  %1737 = vmatpush.bf16.msra.mxu0 %v1237
  %1738 = vmatmul.bf16.gmra.mxu0 %v174
  %v1739 = vpop.f32.mrf.mxu0
  %v1740 = vadd.f32 %v1727, %v1739
  %v1741 = vpop.f32.mrf.mxu0
  %1742 = vdwg.mxu0
  %1743 = vmatpush.bf16.msra.mxu0 %v1297
  %1744 = vmatpush.bf16.msra.mxu0 %v1293
  %1745 = vmatpush.bf16.msra.mxu0 %v1289
  %1746 = vmatpush.bf16.msra.mxu0 %v1285
  %1747 = vmatpush.bf16.msra.mxu0 %v1281
  %1748 = vmatpush.bf16.msra.mxu0 %v1277
  %1749 = vmatpush.bf16.msra.mxu0 %v1273
  %1750 = vmatpush.bf16.msra.mxu0 %v1269
  %1751 = vmatmul.bf16.gmra.mxu0 %v175
  %v1752 = vpop.f32.mrf.mxu0
  %v1753 = vadd.f32 %v1740, %v1752
  %v1754 = vpop.f32.mrf.mxu0
  %1755 = vdwg.mxu0
  %1756 = vmatpush.bf16.msra.mxu0 %v1329
  %1757 = vmatpush.bf16.msra.mxu0 %v1325
  %1758 = vmatpush.bf16.msra.mxu0 %v1321
  %1759 = vmatpush.bf16.msra.mxu0 %v1317
  %1760 = vmatpush.bf16.msra.mxu0 %v1313
  %1761 = vmatpush.bf16.msra.mxu0 %v1309
  %1762 = vmatpush.bf16.msra.mxu0 %v1305
  %1763 = vmatpush.bf16.msra.mxu0 %v1301
  %1764 = vmatmul.bf16.gmra.mxu0 %v176
  %v1765 = vpop.f32.mrf.mxu0
  %v1766 = vadd.f32 %v1753, %v1765
  %v1767 = vpop.f32.mrf.mxu0
  %1768 = vdwg.mxu0
  %1769 = vmatpush.bf16.msra.mxu0 %v1361
  %1770 = vmatpush.bf16.msra.mxu0 %v1357
  %1771 = vmatpush.bf16.msra.mxu0 %v1353
  %1772 = vmatpush.bf16.msra.mxu0 %v1349
  %1773 = vmatpush.bf16.msra.mxu0 %v1345
  %1774 = vmatpush.bf16.msra.mxu0 %v1341
  %1775 = vmatpush.bf16.msra.mxu0 %v1337
  %1776 = vmatpush.bf16.msra.mxu0 %v1333
  %1777 = vmatmul.bf16.gmra.mxu0 %v177
  %v1778 = vpop.f32.mrf.mxu0
  %v1779 = vadd.f32 %v1766, %v1778
  %v1780 = vpop.f32.mrf.mxu0
  %1781 = vdwg.mxu0
  %1782 = vmatpush.bf16.msra.mxu0 %v1393
  %1783 = vmatpush.bf16.msra.mxu0 %v1389
  %1784 = vmatpush.bf16.msra.mxu0 %v1385
  %1785 = vmatpush.bf16.msra.mxu0 %v1381
  %1786 = vmatpush.bf16.msra.mxu0 %v1377
  %1787 = vmatpush.bf16.msra.mxu0 %v1373
  %1788 = vmatpush.bf16.msra.mxu0 %v1369
  %1789 = vmatpush.bf16.msra.mxu0 %v1365
  %1790 = vmatmul.bf16.gmra.mxu0 %v178
  %v1791 = vpop.f32.mrf.mxu0
  %v1792 = vadd.f32 %v1779, %v1791
  %v1793 = vpop.f32.mrf.mxu0
  %1794 = vdwg.mxu0
  %1795 = vmatpush.bf16.msra.mxu0 %v1425
  %1796 = vmatpush.bf16.msra.mxu0 %v1421
  %1797 = vmatpush.bf16.msra.mxu0 %v1417
  %1798 = vmatpush.bf16.msra.mxu0 %v1413
  %1799 = vmatpush.bf16.msra.mxu0 %v1409
  %1800 = vmatpush.bf16.msra.mxu0 %v1405
  %1801 = vmatpush.bf16.msra.mxu0 %v1401
  %1802 = vmatpush.bf16.msra.mxu0 %v1397
  %1803 = vmatmul.bf16.gmra.mxu0 %v179
  %v1804 = vpop.f32.mrf.mxu0
  %v1805 = vadd.f32 %v1792, %v1804
  %v1806 = vpop.f32.mrf.mxu0
  %1807 = vdwg.mxu0
  %1808 = vmatpush.bf16.msra.mxu0 %v1457
  %1809 = vmatpush.bf16.msra.mxu0 %v1453
  %1810 = vmatpush.bf16.msra.mxu0 %v1449
  %1811 = vmatpush.bf16.msra.mxu0 %v1445
  %1812 = vmatpush.bf16.msra.mxu0 %v1441
  %1813 = vmatpush.bf16.msra.mxu0 %v1437
  %1814 = vmatpush.bf16.msra.mxu0 %v1433
  %1815 = vmatpush.bf16.msra.mxu0 %v1429
  %1816 = vmatmul.bf16.gmra.mxu0 %v180
  %v1817 = vpop.f32.mrf.mxu0
  %v1818 = vadd.f32 %v1805, %v1817
  %v1819 = vpop.f32.mrf.mxu0
  %1820 = vdwg.mxu0
  %1821 = vmatpush.bf16.msra.mxu0 %v1234
  %1822 = vmatpush.bf16.msra.mxu0 %v1230
  %1823 = vmatpush.bf16.msra.mxu0 %v1226
  %1824 = vmatpush.bf16.msra.mxu0 %v1222
  %1825 = vmatpush.bf16.msra.mxu0 %v1218
  %1826 = vmatpush.bf16.msra.mxu0 %v1214
  %1827 = vmatpush.bf16.msra.mxu0 %v1210
  %1828 = vmatpush.bf16.msra.mxu0 %v1206
  %1829 = vmatmul.bf16.gmra.mxu0 %v173
  %v1830 = vpop.f32.mrf.mxu0
  %v1831 = vadd.f32 0.0, %v1830
  %v1832 = vpop.f32.mrf.mxu0
  %1833 = vdwg.mxu0
  %1834 = vmatpush.bf16.msra.mxu0 %v1266
  %1835 = vmatpush.bf16.msra.mxu0 %v1262
  %1836 = vmatpush.bf16.msra.mxu0 %v1258
  %1837 = vmatpush.bf16.msra.mxu0 %v1254
  %1838 = vmatpush.bf16.msra.mxu0 %v1250
  %1839 = vmatpush.bf16.msra.mxu0 %v1246
  %1840 = vmatpush.bf16.msra.mxu0 %v1242
  %1841 = vmatpush.bf16.msra.mxu0 %v1238
  %1842 = vmatmul.bf16.gmra.mxu0 %v174
  %v1843 = vpop.f32.mrf.mxu0
  %v1844 = vadd.f32 %v1831, %v1843
  %v1845 = vpop.f32.mrf.mxu0
  %1846 = vdwg.mxu0
  %1847 = vmatpush.bf16.msra.mxu0 %v1298
  %1848 = vmatpush.bf16.msra.mxu0 %v1294
  %1849 = vmatpush.bf16.msra.mxu0 %v1290
  %1850 = vmatpush.bf16.msra.mxu0 %v1286
  %1851 = vmatpush.bf16.msra.mxu0 %v1282
  %1852 = vmatpush.bf16.msra.mxu0 %v1278
  %1853 = vmatpush.bf16.msra.mxu0 %v1274
  %1854 = vmatpush.bf16.msra.mxu0 %v1270
  %1855 = vmatmul.bf16.gmra.mxu0 %v175
  %v1856 = vpop.f32.mrf.mxu0
  %v1857 = vadd.f32 %v1844, %v1856
  %v1858 = vpop.f32.mrf.mxu0
  %1859 = vdwg.mxu0
  %1860 = vmatpush.bf16.msra.mxu0 %v1330
  %1861 = vmatpush.bf16.msra.mxu0 %v1326
  %1862 = vmatpush.bf16.msra.mxu0 %v1322
  %1863 = vmatpush.bf16.msra.mxu0 %v1318
  %1864 = vmatpush.bf16.msra.mxu0 %v1314
  %1865 = vmatpush.bf16.msra.mxu0 %v1310
  %1866 = vmatpush.bf16.msra.mxu0 %v1306
  %1867 = vmatpush.bf16.msra.mxu0 %v1302
  %1868 = vmatmul.bf16.gmra.mxu0 %v176
  %v1869 = vpop.f32.mrf.mxu0
  %v1870 = vadd.f32 %v1857, %v1869
  %v1871 = vpop.f32.mrf.mxu0
  %1872 = vdwg.mxu0
  %1873 = vmatpush.bf16.msra.mxu0 %v1362
  %1874 = vmatpush.bf16.msra.mxu0 %v1358
  %1875 = vmatpush.bf16.msra.mxu0 %v1354
  %1876 = vmatpush.bf16.msra.mxu0 %v1350
  %1877 = vmatpush.bf16.msra.mxu0 %v1346
  %1878 = vmatpush.bf16.msra.mxu0 %v1342
  %1879 = vmatpush.bf16.msra.mxu0 %v1338
  %1880 = vmatpush.bf16.msra.mxu0 %v1334
  %1881 = vmatmul.bf16.gmra.mxu0 %v177
  %v1882 = vpop.f32.mrf.mxu0
  %v1883 = vadd.f32 %v1870, %v1882
  %v1884 = vpop.f32.mrf.mxu0
  %1885 = vdwg.mxu0
  %1886 = vmatpush.bf16.msra.mxu0 %v1394
  %1887 = vmatpush.bf16.msra.mxu0 %v1390
  %1888 = vmatpush.bf16.msra.mxu0 %v1386
  %1889 = vmatpush.bf16.msra.mxu0 %v1382
  %1890 = vmatpush.bf16.msra.mxu0 %v1378
  %1891 = vmatpush.bf16.msra.mxu0 %v1374
  %1892 = vmatpush.bf16.msra.mxu0 %v1370
  %1893 = vmatpush.bf16.msra.mxu0 %v1366
  %1894 = vmatmul.bf16.gmra.mxu0 %v178
  %v1895 = vpop.f32.mrf.mxu0
  %v1896 = vadd.f32 %v1883, %v1895
  %v1897 = vpop.f32.mrf.mxu0
  %1898 = vdwg.mxu0
  %1899 = vmatpush.bf16.msra.mxu0 %v1426
  %1900 = vmatpush.bf16.msra.mxu0 %v1422
  %1901 = vmatpush.bf16.msra.mxu0 %v1418
  %1902 = vmatpush.bf16.msra.mxu0 %v1414
  %1903 = vmatpush.bf16.msra.mxu0 %v1410
  %1904 = vmatpush.bf16.msra.mxu0 %v1406
  %1905 = vmatpush.bf16.msra.mxu0 %v1402
  %1906 = vmatpush.bf16.msra.mxu0 %v1398
  %1907 = vmatmul.bf16.gmra.mxu0 %v179
  %v1908 = vpop.f32.mrf.mxu0
  %v1909 = vadd.f32 %v1896, %v1908
  %v1910 = vpop.f32.mrf.mxu0
  %1911 = vdwg.mxu0
  %1912 = vmatpush.bf16.msra.mxu0 %v1458
  %1913 = vmatpush.bf16.msra.mxu0 %v1454
  %1914 = vmatpush.bf16.msra.mxu0 %v1450
  %1915 = vmatpush.bf16.msra.mxu0 %v1446
  %1916 = vmatpush.bf16.msra.mxu0 %v1442
  %1917 = vmatpush.bf16.msra.mxu0 %v1438
  %1918 = vmatpush.bf16.msra.mxu0 %v1434
  %1919 = vmatpush.bf16.msra.mxu0 %v1430
  %1920 = vmatmul.bf16.gmra.mxu0 %v180
  %v1921 = vpop.f32.mrf.mxu0
  %v1922 = vadd.f32 %v1909, %v1921
  %v1923 = vpop.f32.mrf.mxu0
  %1924 = vdwg.mxu0
  %1925 = vmatpush.bf16.msra.mxu0 %v1235
  %1926 = vmatpush.bf16.msra.mxu0 %v1231
  %1927 = vmatpush.bf16.msra.mxu0 %v1227
  %1928 = vmatpush.bf16.msra.mxu0 %v1223
  %1929 = vmatpush.bf16.msra.mxu0 %v1219
  %1930 = vmatpush.bf16.msra.mxu0 %v1215
  %1931 = vmatpush.bf16.msra.mxu0 %v1211
  %1932 = vmatpush.bf16.msra.mxu0 %v1207
  %1933 = vmatmul.bf16.gmra.mxu0 %v173
  %v1934 = vpop.f32.mrf.mxu0
  %v1935 = vadd.f32 0.0, %v1934
  %v1936 = vpop.f32.mrf.mxu0
  %1937 = vdwg.mxu0
  %1938 = vmatpush.bf16.msra.mxu0 %v1267
  %1939 = vmatpush.bf16.msra.mxu0 %v1263
  %1940 = vmatpush.bf16.msra.mxu0 %v1259
  %1941 = vmatpush.bf16.msra.mxu0 %v1255
  %1942 = vmatpush.bf16.msra.mxu0 %v1251
  %1943 = vmatpush.bf16.msra.mxu0 %v1247
  %1944 = vmatpush.bf16.msra.mxu0 %v1243
  %1945 = vmatpush.bf16.msra.mxu0 %v1239
  %1946 = vmatmul.bf16.gmra.mxu0 %v174
  %v1947 = vpop.f32.mrf.mxu0
  %v1948 = vadd.f32 %v1935, %v1947
  %v1949 = vpop.f32.mrf.mxu0
  %1950 = vdwg.mxu0
  %1951 = vmatpush.bf16.msra.mxu0 %v1299
  %1952 = vmatpush.bf16.msra.mxu0 %v1295
  %1953 = vmatpush.bf16.msra.mxu0 %v1291
  %1954 = vmatpush.bf16.msra.mxu0 %v1287
  %1955 = vmatpush.bf16.msra.mxu0 %v1283
  %1956 = vmatpush.bf16.msra.mxu0 %v1279
  %1957 = vmatpush.bf16.msra.mxu0 %v1275
  %1958 = vmatpush.bf16.msra.mxu0 %v1271
  %1959 = vmatmul.bf16.gmra.mxu0 %v175
  %v1960 = vpop.f32.mrf.mxu0
  %v1961 = vadd.f32 %v1948, %v1960
  %v1962 = vpop.f32.mrf.mxu0
  %1963 = vdwg.mxu0
  %1964 = vmatpush.bf16.msra.mxu0 %v1331
  %1965 = vmatpush.bf16.msra.mxu0 %v1327
  %1966 = vmatpush.bf16.msra.mxu0 %v1323
  %1967 = vmatpush.bf16.msra.mxu0 %v1319
  %1968 = vmatpush.bf16.msra.mxu0 %v1315
  %1969 = vmatpush.bf16.msra.mxu0 %v1311
  %1970 = vmatpush.bf16.msra.mxu0 %v1307
  %1971 = vmatpush.bf16.msra.mxu0 %v1303
  %1972 = vmatmul.bf16.gmra.mxu0 %v176
  %v1973 = vpop.f32.mrf.mxu0
  %v1974 = vadd.f32 %v1961, %v1973
  %v1975 = vpop.f32.mrf.mxu0
  %1976 = vdwg.mxu0
  %1977 = vmatpush.bf16.msra.mxu0 %v1363
  %1978 = vmatpush.bf16.msra.mxu0 %v1359
  %1979 = vmatpush.bf16.msra.mxu0 %v1355
  %1980 = vmatpush.bf16.msra.mxu0 %v1351
  %1981 = vmatpush.bf16.msra.mxu0 %v1347
  %1982 = vmatpush.bf16.msra.mxu0 %v1343
  %1983 = vmatpush.bf16.msra.mxu0 %v1339
  %1984 = vmatpush.bf16.msra.mxu0 %v1335
  %1985 = vmatmul.bf16.gmra.mxu0 %v177
  %v1986 = vpop.f32.mrf.mxu0
  %v1987 = vadd.f32 %v1974, %v1986
  %v1988 = vpop.f32.mrf.mxu0
  %1989 = vdwg.mxu0
  %1990 = vmatpush.bf16.msra.mxu0 %v1395
  %1991 = vmatpush.bf16.msra.mxu0 %v1391
  %1992 = vmatpush.bf16.msra.mxu0 %v1387
  %1993 = vmatpush.bf16.msra.mxu0 %v1383
  %1994 = vmatpush.bf16.msra.mxu0 %v1379
  %1995 = vmatpush.bf16.msra.mxu0 %v1375
  %1996 = vmatpush.bf16.msra.mxu0 %v1371
  %1997 = vmatpush.bf16.msra.mxu0 %v1367
  %1998 = vmatmul.bf16.gmra.mxu0 %v178
  %v1999 = vpop.f32.mrf.mxu0
  %v2000 = vadd.f32 %v1987, %v1999
  %v2001 = vpop.f32.mrf.mxu0
  %2002 = vdwg.mxu0
  %2003 = vmatpush.bf16.msra.mxu0 %v1427
  %2004 = vmatpush.bf16.msra.mxu0 %v1423
  %2005 = vmatpush.bf16.msra.mxu0 %v1419
  %2006 = vmatpush.bf16.msra.mxu0 %v1415
  %2007 = vmatpush.bf16.msra.mxu0 %v1411
  %2008 = vmatpush.bf16.msra.mxu0 %v1407
  %2009 = vmatpush.bf16.msra.mxu0 %v1403
  %2010 = vmatpush.bf16.msra.mxu0 %v1399
  %2011 = vmatmul.bf16.gmra.mxu0 %v179
  %v2012 = vpop.f32.mrf.mxu0
  %v2013 = vadd.f32 %v2000, %v2012
  %v2014 = vpop.f32.mrf.mxu0
  %2015 = vdwg.mxu0
  %2016 = vmatpush.bf16.msra.mxu0 %v1459
  %2017 = vmatpush.bf16.msra.mxu0 %v1455
  %2018 = vmatpush.bf16.msra.mxu0 %v1451
  %2019 = vmatpush.bf16.msra.mxu0 %v1447
  %2020 = vmatpush.bf16.msra.mxu0 %v1443
  %2021 = vmatpush.bf16.msra.mxu0 %v1439
  %2022 = vmatpush.bf16.msra.mxu0 %v1435
  %2023 = vmatpush.bf16.msra.mxu0 %v1431
  %2024 = vmatmul.bf16.gmra.mxu0 %v180
  %v2025 = vpop.f32.mrf.mxu0
  %v2026 = vadd.f32 %v2013, %v2025
  %v2027 = vpop.f32.mrf.mxu0
  %2028 = vdwg.mxu0
  %2029 = vmatpush.bf16.msra.mxu0 %v1236
  %2030 = vmatpush.bf16.msra.mxu0 %v1232
  %2031 = vmatpush.bf16.msra.mxu0 %v1228
  %2032 = vmatpush.bf16.msra.mxu0 %v1224
  %2033 = vmatpush.bf16.msra.mxu0 %v1220
  %2034 = vmatpush.bf16.msra.mxu0 %v1216
  %2035 = vmatpush.bf16.msra.mxu0 %v1212
  %2036 = vmatpush.bf16.msra.mxu0 %v1208
  %2037 = vmatmul.bf16.gmra.mxu0 %v173
  %v2038 = vpop.f32.mrf.mxu0
  %v2039 = vadd.f32 0.0, %v2038
  %v2040 = vpop.f32.mrf.mxu0
  %2041 = vdwg.mxu0
  %2042 = vmatpush.bf16.msra.mxu0 %v1268
  %2043 = vmatpush.bf16.msra.mxu0 %v1264
  %2044 = vmatpush.bf16.msra.mxu0 %v1260
  %2045 = vmatpush.bf16.msra.mxu0 %v1256
  %2046 = vmatpush.bf16.msra.mxu0 %v1252
  %2047 = vmatpush.bf16.msra.mxu0 %v1248
  %2048 = vmatpush.bf16.msra.mxu0 %v1244
  %2049 = vmatpush.bf16.msra.mxu0 %v1240
  %2050 = vmatmul.bf16.gmra.mxu0 %v174
  %v2051 = vpop.f32.mrf.mxu0
  %v2052 = vadd.f32 %v2039, %v2051
  %v2053 = vpop.f32.mrf.mxu0
  %2054 = vdwg.mxu0
  %2055 = vmatpush.bf16.msra.mxu0 %v1300
  %2056 = vmatpush.bf16.msra.mxu0 %v1296
  %2057 = vmatpush.bf16.msra.mxu0 %v1292
  %2058 = vmatpush.bf16.msra.mxu0 %v1288
  %2059 = vmatpush.bf16.msra.mxu0 %v1284
  %2060 = vmatpush.bf16.msra.mxu0 %v1280
  %2061 = vmatpush.bf16.msra.mxu0 %v1276
  %2062 = vmatpush.bf16.msra.mxu0 %v1272
  %2063 = vmatmul.bf16.gmra.mxu0 %v175
  %v2064 = vpop.f32.mrf.mxu0
  %v2065 = vadd.f32 %v2052, %v2064
  %v2066 = vpop.f32.mrf.mxu0
  %2067 = vdwg.mxu0
  %2068 = vmatpush.bf16.msra.mxu0 %v1332
  %2069 = vmatpush.bf16.msra.mxu0 %v1328
  %2070 = vmatpush.bf16.msra.mxu0 %v1324
  %2071 = vmatpush.bf16.msra.mxu0 %v1320
  %2072 = vmatpush.bf16.msra.mxu0 %v1316
  %2073 = vmatpush.bf16.msra.mxu0 %v1312
  %2074 = vmatpush.bf16.msra.mxu0 %v1308
  %2075 = vmatpush.bf16.msra.mxu0 %v1304
  %2076 = vmatmul.bf16.gmra.mxu0 %v176
  %v2077 = vpop.f32.mrf.mxu0
  %v2078 = vadd.f32 %v2065, %v2077
  %v2079 = vpop.f32.mrf.mxu0
  %2080 = vdwg.mxu0
  %2081 = vmatpush.bf16.msra.mxu0 %v1364
  %2082 = vmatpush.bf16.msra.mxu0 %v1360
  %2083 = vmatpush.bf16.msra.mxu0 %v1356
  %2084 = vmatpush.bf16.msra.mxu0 %v1352
  %2085 = vmatpush.bf16.msra.mxu0 %v1348
  %2086 = vmatpush.bf16.msra.mxu0 %v1344
  %2087 = vmatpush.bf16.msra.mxu0 %v1340
  %2088 = vmatpush.bf16.msra.mxu0 %v1336
  %2089 = vmatmul.bf16.gmra.mxu0 %v177
  %v2090 = vpop.f32.mrf.mxu0
  %v2091 = vadd.f32 %v2078, %v2090
  %v2092 = vpop.f32.mrf.mxu0
  %2093 = vdwg.mxu0
  %2094 = vmatpush.bf16.msra.mxu0 %v1396
  %2095 = vmatpush.bf16.msra.mxu0 %v1392
  %2096 = vmatpush.bf16.msra.mxu0 %v1388
  %2097 = vmatpush.bf16.msra.mxu0 %v1384
  %2098 = vmatpush.bf16.msra.mxu0 %v1380
  %2099 = vmatpush.bf16.msra.mxu0 %v1376
  %2100 = vmatpush.bf16.msra.mxu0 %v1372
  %2101 = vmatpush.bf16.msra.mxu0 %v1368
  %2102 = vmatmul.bf16.gmra.mxu0 %v178
  %v2103 = vpop.f32.mrf.mxu0
  %v2104 = vadd.f32 %v2091, %v2103
  %v2105 = vpop.f32.mrf.mxu0
  %2106 = vdwg.mxu0
  %2107 = vmatpush.bf16.msra.mxu0 %v1428
  %2108 = vmatpush.bf16.msra.mxu0 %v1424
  %2109 = vmatpush.bf16.msra.mxu0 %v1420
  %2110 = vmatpush.bf16.msra.mxu0 %v1416
  %2111 = vmatpush.bf16.msra.mxu0 %v1412
  %2112 = vmatpush.bf16.msra.mxu0 %v1408
  %2113 = vmatpush.bf16.msra.mxu0 %v1404
  %2114 = vmatpush.bf16.msra.mxu0 %v1400
  %2115 = vmatmul.bf16.gmra.mxu0 %v179
  %v2116 = vpop.f32.mrf.mxu0
  %v2117 = vadd.f32 %v2104, %v2116
  %v2118 = vpop.f32.mrf.mxu0
  %2119 = vdwg.mxu0
  %2120 = vmatpush.bf16.msra.mxu0 %v1460
  %2121 = vmatpush.bf16.msra.mxu0 %v1456
  %2122 = vmatpush.bf16.msra.mxu0 %v1452
  %2123 = vmatpush.bf16.msra.mxu0 %v1448
  %2124 = vmatpush.bf16.msra.mxu0 %v1444
  %2125 = vmatpush.bf16.msra.mxu0 %v1440
  %2126 = vmatpush.bf16.msra.mxu0 %v1436
  %2127 = vmatpush.bf16.msra.mxu0 %v1432
  %2128 = vmatmul.bf16.gmra.mxu0 %v180
  %v2129 = vpop.f32.mrf.mxu0
  %v2130 = vadd.f32 %v2117, %v2129
  %v2131 = vpop.f32.mrf.mxu0
  %2132 = vdwg.mxu0
  %v2133 = vld [vmem:[%s5] sm:$0xf]
  %v2134 = vld [vmem:[%s6] sm:$0xf]
  %vm2135 = vcmask 1041408
  %v2136 = vsel %vm2135, %v1818, 0.0
  %v2137 = vrot.slane %v2136, 4
  %v2138 = vadd.f32 %v2136, %v2137
  %v2139 = vrot.slane %v2138, 2
  %v2140 = vadd.f32 %v2138, %v2139
  %v2141 = vrot.slane %v2140, 1
  %v2142 = vadd.f32 %v2140, %v2141
  %v2143 = vsel %vm2135, %v1922, 0.0
  %v2144 = vrot.slane %v2143, 4
  %v2145 = vadd.f32 %v2143, %v2144
  %v2146 = vrot.slane %v2145, 2
  %v2147 = vadd.f32 %v2145, %v2146
  %v2148 = vrot.slane %v2147, 1
  %v2149 = vadd.f32 %v2147, %v2148
  %v2150 = vsel %vm2135, %v2026, 0.0
  %v2151 = vrot.slane %v2150, 4
  %v2152 = vadd.f32 %v2150, %v2151
  %v2153 = vrot.slane %v2152, 2
  %v2154 = vadd.f32 %v2152, %v2153
  %v2155 = vrot.slane %v2154, 1
  %v2156 = vadd.f32 %v2154, %v2155
  %v2157 = vsel %vm2135, %v2130, 0.0
  %v2158 = vrot.slane %v2157, 4
  %v2159 = vadd.f32 %v2157, %v2158
  %v2160 = vrot.slane %v2159, 2
  %v2161 = vadd.f32 %v2159, %v2160
  %v2162 = vrot.slane %v2161, 1
  %v2163 = vadd.f32 %v2161, %v2162
  %v2164 = vrcp.pop 2.0
  %v2165 = vmul.f32 2.0, %v2164
  %v2166 = vsub.f32 1.0, %v2165
  %v2167 = vmul.f32 %v2164, %v2166
  %v2168 = vadd.f32 %v2164, %v2167
  %vm2169 = vweird.f32 %v2164
  %v2170 = vsel %vm2169, %v2164, %v2168
  %v2171 = vmul.f32 %v2142, %v2170
  %v2172 = vmul.f32 %v2149, %v2170
  %v2173 = vmul.f32 %v2156, %v2170
  %v2174 = vmul.f32 %v2163, %v2170
  %v2175 = vsub.f32 %v1818, %v2171
  %v2176 = vsub.f32 %v1922, %v2172
  %v2177 = vsub.f32 %v2026, %v2173
  %v2178 = vsub.f32 %v2130, %v2174
  %v2179 = vmul.f32 %v2175, %v2175
  %v2180 = vmul.f32 %v2176, %v2176
  %v2181 = vmul.f32 %v2177, %v2177
  %v2182 = vmul.f32 %v2178, %v2178
  %v2183 = vsel %vm2135, %v2179, 0.0
  %v2184 = vrot.slane %v2183, 4
  %v2185 = vadd.f32 %v2183, %v2184
  %v2186 = vrot.slane %v2185, 2
  %v2187 = vadd.f32 %v2185, %v2186
  %v2188 = vrot.slane %v2187, 1
  %v2189 = vadd.f32 %v2187, %v2188
  %v2190 = vsel %vm2135, %v2180, 0.0
  %v2191 = vrot.slane %v2190, 4
  %v2192 = vadd.f32 %v2190, %v2191
  %v2193 = vrot.slane %v2192, 2
  %v2194 = vadd.f32 %v2192, %v2193
  %v2195 = vrot.slane %v2194, 1
  %v2196 = vadd.f32 %v2194, %v2195
  %v2197 = vsel %vm2135, %v2181, 0.0
  %v2198 = vrot.slane %v2197, 4
  %v2199 = vadd.f32 %v2197, %v2198
  %v2200 = vrot.slane %v2199, 2
  %v2201 = vadd.f32 %v2199, %v2200
  %v2202 = vrot.slane %v2201, 1
  %v2203 = vadd.f32 %v2201, %v2202
  %v2204 = vsel %vm2135, %v2182, 0.0
  %v2205 = vrot.slane %v2204, 4
  %v2206 = vadd.f32 %v2204, %v2205
  %v2207 = vrot.slane %v2206, 2
  %v2208 = vadd.f32 %v2206, %v2207
  %v2209 = vrot.slane %v2208, 1
  %v2210 = vadd.f32 %v2208, %v2209
  %v2211 = vmul.f32 %v2189, %v2170
  %v2212 = vmul.f32 %v2196, %v2170
  %v2213 = vmul.f32 %v2203, %v2170
  %v2214 = vmul.f32 %v2210, %v2170
  %v2215 = vadd.f32 %v2211, 1e-05
  %v2216 = vadd.f32 %v2212, 1e-05
  %v2217 = vadd.f32 %v2213, 1e-05
  %v2218 = vadd.f32 %v2214, 1e-05
  %v2219 = vrsqrt.pop %v2215
  %v2220 = vmul.f32 %v2219, %v2215
  %v2221 = vmul.f32 %v2220, %v2219
  %v2222 = vmul.f32 0.5, %v2221
  %v2223 = vsub.f32 1.5, %v2222
  %v2224 = vmul.f32 %v2219, %v2223
  %vm2225 = vweird.f32 %v2215
  %vm2226 = vweird.f32 %v2219
  %vm2227 = vmor %vm2225, %vm2226
  %v2228 = vsel %vm2227, %v2219, %v2224
  %v2229 = vrsqrt.pop %v2216
  %v2230 = vmul.f32 %v2229, %v2216
  %v2231 = vmul.f32 %v2230, %v2229
  %v2232 = vmul.f32 0.5, %v2231
  %v2233 = vsub.f32 1.5, %v2232
  %v2234 = vmul.f32 %v2229, %v2233
  %vm2235 = vweird.f32 %v2216
  %vm2236 = vweird.f32 %v2229
  %vm2237 = vmor %vm2235, %vm2236
  %v2238 = vsel %vm2237, %v2229, %v2234
  %v2239 = vrsqrt.pop %v2217
  %v2240 = vmul.f32 %v2239, %v2217
  %v2241 = vmul.f32 %v2240, %v2239
  %v2242 = vmul.f32 0.5, %v2241
  %v2243 = vsub.f32 1.5, %v2242
  %v2244 = vmul.f32 %v2239, %v2243
  %vm2245 = vweird.f32 %v2217
  %vm2246 = vweird.f32 %v2239
  %vm2247 = vmor %vm2245, %vm2246
  %v2248 = vsel %vm2247, %v2239, %v2244
  %v2249 = vrsqrt.pop %v2218
  %v2250 = vmul.f32 %v2249, %v2218
  %v2251 = vmul.f32 %v2250, %v2249
  %v2252 = vmul.f32 0.5, %v2251
  %v2253 = vsub.f32 1.5, %v2252
  %v2254 = vmul.f32 %v2249, %v2253
  %vm2255 = vweird.f32 %v2218
  %vm2256 = vweird.f32 %v2249
  %vm2257 = vmor %vm2255, %vm2256
  %v2258 = vsel %vm2257, %v2249, %v2254
  %v2263 = vrot.slane %v2238, 7
  %v2264 = vrot.slane %v2248, 6
  %v2265 = vrot.slane %v2258, 5
  %vm2266 = vcmask 1040384
  %v2267 = vsel %vm2266, %v2228, %v2263
  %vm2268 = vcmask 1042434
  %v2269 = vsel %vm2268, %v2264, %v2265
  %v2270 = vsel %vm2135, %v2267, %v2269
  %v2272 = vmul.f32 %v2133, %v2270
  %v2274 = vperm.slane %v2272, 0
  %v2275 = vperm.slane %v2272, 1
  %v2276 = vperm.slane %v2272, 2
  %v2277 = vperm.slane %v2272, 3
  %v2282 = vmul.f32 %v1818, %v2274
  %v2283 = vmul.f32 %v1922, %v2275
  %v2284 = vmul.f32 %v2026, %v2276
  %v2285 = vmul.f32 %v2130, %v2277
  %v2286 = vmul.f32 %v2171, %v2274
  %v2287 = vmul.f32 %v2172, %v2275
  %v2288 = vmul.f32 %v2173, %v2276
  %v2289 = vmul.f32 %v2174, %v2277
  %v2294 = vrot.slane %v2287, 7
  %v2295 = vrot.slane %v2288, 6
  %v2296 = vrot.slane %v2289, 5
  %v2297 = vsel %vm2266, %v2286, %v2294
  %v2298 = vsel %vm2268, %v2295, %v2296
  %v2299 = vsel %vm2135, %v2297, %v2298
  %v2301 = vsub.f32 %v2134, %v2299
  %v2303 = vperm.slane %v2301, 0
  %v2304 = vperm.slane %v2301, 1
  %v2305 = vperm.slane %v2301, 2
  %v2306 = vperm.slane %v2301, 3
  %v2311 = vadd.f32 %v2282, %v2303
  %v2312 = vadd.f32 %v2283, %v2304
  %v2313 = vadd.f32 %v2284, %v2305
  %v2314 = vadd.f32 %v2285, %v2306
  %v2315 = vmax.f32 %v2311, 0.0
  %v2316 = vmax.f32 %v2312, 0.0
  %v2317 = vmax.f32 %v2313, 0.0
  %v2318 = vmax.f32 %v2314, 0.0
  %v2319 = vpack.c.bf16 %v2315, %v2315
  %v2320 = vpack.c.bf16 %v2316, %v2316
  %v2321 = vpack.c.bf16 %v2317, %v2317
  %v2322 = vpack.c.bf16 %v2318, %v2318
  %v2323 = vld [vmem:[%s7] sm:$0xff]
  %v2324 = vld [vmem:[%s7 + $0x8] sm:$0xff]
  %v2325 = vld [vmem:[%s7 + $0x10] sm:$0xff]
  %v2326 = vld [vmem:[%s7 + $0x18] sm:$0xff]
  %v2327 = vld [vmem:[%s7 + $0x20] sm:$0xff]
  %v2328 = vld [vmem:[%s7 + $0x28] sm:$0xff]
  %v2329 = vld [vmem:[%s7 + $0x30] sm:$0xff]
  %v2330 = vld [vmem:[%s7 + $0x38] sm:$0xff]
  %v2331 = vld [vmem:[%s7 + $0x40] sm:$0xff]
  %v2332 = vld [vmem:[%s7 + $0x48] sm:$0xff]
  %v2333 = vld [vmem:[%s7 + $0x50] sm:$0xff]
  %v2334 = vld [vmem:[%s7 + $0x58] sm:$0xff]
  %v2335 = vld [vmem:[%s7 + $0x60] sm:$0xff]
  %v2336 = vld [vmem:[%s7 + $0x68] sm:$0xff]
  %v2337 = vld [vmem:[%s7 + $0x70] sm:$0xff]
  %v2338 = vld [vmem:[%s7 + $0x78] sm:$0xff]
  %v2339 = vld [vmem:[%s7 + $0x80] sm:$0xff]
  %v2340 = vld [vmem:[%s7 + $0x88] sm:$0xff]
  %v2341 = vld [vmem:[%s7 + $0x90] sm:$0xff]
  %v2342 = vld [vmem:[%s7 + $0x98] sm:$0xff]
  %v2343 = vld [vmem:[%s7 + $0xa0] sm:$0xff]
  %v2344 = vld [vmem:[%s7 + $0xa8] sm:$0xff]
  %v2345 = vld [vmem:[%s7 + $0xb0] sm:$0xff]
  %v2346 = vld [vmem:[%s7 + $0xb8] sm:$0xff]
  %v2347 = vld [vmem:[%s7 + $0xc0] sm:$0xff]
  %v2348 = vld [vmem:[%s7 + $0xc8] sm:$0xff]
  %v2349 = vld [vmem:[%s7 + $0xd0] sm:$0xff]
  %v2350 = vld [vmem:[%s7 + $0xd8] sm:$0xff]
  %v2351 = vld [vmem:[%s7 + $0xe0] sm:$0xff]
  %v2352 = vld [vmem:[%s7 + $0xe8] sm:$0xff]
  %v2353 = vld [vmem:[%s7 + $0xf0] sm:$0xff]
  %v2354 = vld [vmem:[%s7 + $0xf8] sm:$0xff]
  %v2355 = vld [vmem:[%s7 + $0x100] sm:$0xff]
  %v2356 = vld [vmem:[%s7 + $0x108] sm:$0xff]
  %v2357 = vld [vmem:[%s7 + $0x110] sm:$0xff]
  %v2358 = vld [vmem:[%s7 + $0x118] sm:$0xff]
  %v2359 = vld [vmem:[%s7 + $0x120] sm:$0xff]
  %v2360 = vld [vmem:[%s7 + $0x128] sm:$0xff]
  %v2361 = vld [vmem:[%s7 + $0x130] sm:$0xff]
  %v2362 = vld [vmem:[%s7 + $0x138] sm:$0xff]
  %v2363 = vld [vmem:[%s7 + $0x140] sm:$0xff]
  %v2364 = vld [vmem:[%s7 + $0x148] sm:$0xff]
  %v2365 = vld [vmem:[%s7 + $0x150] sm:$0xff]
  %v2366 = vld [vmem:[%s7 + $0x158] sm:$0xff]
  %v2367 = vld [vmem:[%s7 + $0x160] sm:$0xff]
  %v2368 = vld [vmem:[%s7 + $0x168] sm:$0xff]
  %v2369 = vld [vmem:[%s7 + $0x170] sm:$0xff]
  %v2370 = vld [vmem:[%s7 + $0x178] sm:$0xff]
  %v2371 = vld [vmem:[%s7 + $0x180] sm:$0xff]
  %v2372 = vld [vmem:[%s7 + $0x188] sm:$0xff]
  %v2373 = vld [vmem:[%s7 + $0x190] sm:$0xff]
  %v2374 = vld [vmem:[%s7 + $0x198] sm:$0xff]
  %v2375 = vld [vmem:[%s7 + $0x1a0] sm:$0xff]
  %v2376 = vld [vmem:[%s7 + $0x1a8] sm:$0xff]
  %v2377 = vld [vmem:[%s7 + $0x1b0] sm:$0xff]
  %v2378 = vld [vmem:[%s7 + $0x1b8] sm:$0xff]
  %v2379 = vld [vmem:[%s7 + $0x1c0] sm:$0xff]
  %v2380 = vld [vmem:[%s7 + $0x1c8] sm:$0xff]
  %v2381 = vld [vmem:[%s7 + $0x1d0] sm:$0xff]
  %v2382 = vld [vmem:[%s7 + $0x1d8] sm:$0xff]
  %v2383 = vld [vmem:[%s7 + $0x1e0] sm:$0xff]
  %v2384 = vld [vmem:[%s7 + $0x1e8] sm:$0xff]
  %v2385 = vld [vmem:[%s7 + $0x1f0] sm:$0xff]
  %v2386 = vld [vmem:[%s7 + $0x1f8] sm:$0xff]
  %v2451 = vunpack.c.l.b16 %v2323
  %v2452 = vunpack.c.h.b16 %v2323
  %v2453 = vunpack.c.l.b16 %v2324
  %v2454 = vunpack.c.h.b16 %v2324
  %v2455 = vunpack.c.l.b16 %v2325
  %v2456 = vunpack.c.h.b16 %v2325
  %v2457 = vunpack.c.l.b16 %v2326
  %v2458 = vunpack.c.h.b16 %v2326
  %v2459 = vunpack.c.l.b16 %v2327
  %v2460 = vunpack.c.h.b16 %v2327
  %v2461 = vunpack.c.l.b16 %v2328
  %v2462 = vunpack.c.h.b16 %v2328
  %v2463 = vunpack.c.l.b16 %v2329
  %v2464 = vunpack.c.h.b16 %v2329
  %v2465 = vunpack.c.l.b16 %v2330
  %v2466 = vunpack.c.h.b16 %v2330
  %v2467 = vunpack.c.l.b16 %v2331
  %v2468 = vunpack.c.h.b16 %v2331
  %v2469 = vunpack.c.l.b16 %v2332
  %v2470 = vunpack.c.h.b16 %v2332
  %v2471 = vunpack.c.l.b16 %v2333
  %v2472 = vunpack.c.h.b16 %v2333
  %v2473 = vunpack.c.l.b16 %v2334
  %v2474 = vunpack.c.h.b16 %v2334
  %v2475 = vunpack.c.l.b16 %v2335
  %v2476 = vunpack.c.h.b16 %v2335
  %v2477 = vunpack.c.l.b16 %v2336
  %v2478 = vunpack.c.h.b16 %v2336
  %v2479 = vunpack.c.l.b16 %v2337
  %v2480 = vunpack.c.h.b16 %v2337
  %v2481 = vunpack.c.l.b16 %v2338
  %v2482 = vunpack.c.h.b16 %v2338
  %v2483 = vunpack.c.l.b16 %v2339
  %v2484 = vunpack.c.h.b16 %v2339
  %v2485 = vunpack.c.l.b16 %v2340
  %v2486 = vunpack.c.h.b16 %v2340
  %v2487 = vunpack.c.l.b16 %v2341
  %v2488 = vunpack.c.h.b16 %v2341
  %v2489 = vunpack.c.l.b16 %v2342
  %v2490 = vunpack.c.h.b16 %v2342
  %v2491 = vunpack.c.l.b16 %v2343
  %v2492 = vunpack.c.h.b16 %v2343
  %v2493 = vunpack.c.l.b16 %v2344
  %v2494 = vunpack.c.h.b16 %v2344
  %v2495 = vunpack.c.l.b16 %v2345
  %v2496 = vunpack.c.h.b16 %v2345
  %v2497 = vunpack.c.l.b16 %v2346
  %v2498 = vunpack.c.h.b16 %v2346
  %v2499 = vunpack.c.l.b16 %v2347
  %v2500 = vunpack.c.h.b16 %v2347
  %v2501 = vunpack.c.l.b16 %v2348
  %v2502 = vunpack.c.h.b16 %v2348
  %v2503 = vunpack.c.l.b16 %v2349
  %v2504 = vunpack.c.h.b16 %v2349
  %v2505 = vunpack.c.l.b16 %v2350
  %v2506 = vunpack.c.h.b16 %v2350
  %v2507 = vunpack.c.l.b16 %v2351
  %v2508 = vunpack.c.h.b16 %v2351
  %v2509 = vunpack.c.l.b16 %v2352
  %v2510 = vunpack.c.h.b16 %v2352
  %v2511 = vunpack.c.l.b16 %v2353
  %v2512 = vunpack.c.h.b16 %v2353
  %v2513 = vunpack.c.l.b16 %v2354
  %v2514 = vunpack.c.h.b16 %v2354
  %v2515 = vunpack.c.l.b16 %v2355
  %v2516 = vunpack.c.h.b16 %v2355
  %v2517 = vunpack.c.l.b16 %v2356
  %v2518 = vunpack.c.h.b16 %v2356
  %v2519 = vunpack.c.l.b16 %v2357
  %v2520 = vunpack.c.h.b16 %v2357
  %v2521 = vunpack.c.l.b16 %v2358
  %v2522 = vunpack.c.h.b16 %v2358
  %v2523 = vunpack.c.l.b16 %v2359
  %v2524 = vunpack.c.h.b16 %v2359
  %v2525 = vunpack.c.l.b16 %v2360
  %v2526 = vunpack.c.h.b16 %v2360
  %v2527 = vunpack.c.l.b16 %v2361
  %v2528 = vunpack.c.h.b16 %v2361
  %v2529 = vunpack.c.l.b16 %v2362
  %v2530 = vunpack.c.h.b16 %v2362
  %v2531 = vunpack.c.l.b16 %v2363
  %v2532 = vunpack.c.h.b16 %v2363
  %v2533 = vunpack.c.l.b16 %v2364
  %v2534 = vunpack.c.h.b16 %v2364
  %v2535 = vunpack.c.l.b16 %v2365
  %v2536 = vunpack.c.h.b16 %v2365
  %v2537 = vunpack.c.l.b16 %v2366
  %v2538 = vunpack.c.h.b16 %v2366
  %v2539 = vunpack.c.l.b16 %v2367
  %v2540 = vunpack.c.h.b16 %v2367
  %v2541 = vunpack.c.l.b16 %v2368
  %v2542 = vunpack.c.h.b16 %v2368
  %v2543 = vunpack.c.l.b16 %v2369
  %v2544 = vunpack.c.h.b16 %v2369
  %v2545 = vunpack.c.l.b16 %v2370
  %v2546 = vunpack.c.h.b16 %v2370
  %v2547 = vunpack.c.l.b16 %v2371
  %v2548 = vunpack.c.h.b16 %v2371
  %v2549 = vunpack.c.l.b16 %v2372
  %v2550 = vunpack.c.h.b16 %v2372
  %v2551 = vunpack.c.l.b16 %v2373
  %v2552 = vunpack.c.h.b16 %v2373
  %v2553 = vunpack.c.l.b16 %v2374
  %v2554 = vunpack.c.h.b16 %v2374
  %v2555 = vunpack.c.l.b16 %v2375
  %v2556 = vunpack.c.h.b16 %v2375
  %v2557 = vunpack.c.l.b16 %v2376
  %v2558 = vunpack.c.h.b16 %v2376
  %v2559 = vunpack.c.l.b16 %v2377
  %v2560 = vunpack.c.h.b16 %v2377
  %v2561 = vunpack.c.l.b16 %v2378
  %v2562 = vunpack.c.h.b16 %v2378
  %v2563 = vunpack.c.l.b16 %v2379
  %v2564 = vunpack.c.h.b16 %v2379
  %v2565 = vunpack.c.l.b16 %v2380
  %v2566 = vunpack.c.h.b16 %v2380
  %v2567 = vunpack.c.l.b16 %v2381
  %v2568 = vunpack.c.h.b16 %v2381
  %v2569 = vunpack.c.l.b16 %v2382
  %v2570 = vunpack.c.h.b16 %v2382
  %v2571 = vunpack.c.l.b16 %v2383
  %v2572 = vunpack.c.h.b16 %v2383
  %v2573 = vunpack.c.l.b16 %v2384
  %v2574 = vunpack.c.h.b16 %v2384
  %v2575 = vunpack.c.l.b16 %v2385
  %v2576 = vunpack.c.h.b16 %v2385
  %v2577 = vunpack.c.l.b16 %v2386
  %v2578 = vunpack.c.h.b16 %v2386
  %v2579 = vpack.c.b16 %v2453, %v2451
  %v2580 = vpack.c.b16 %v2454, %v2452
  %v2581 = vpack.c.b16 %v2457, %v2455
  %v2582 = vpack.c.b16 %v2458, %v2456
  %v2583 = vpack.c.b16 %v2461, %v2459
  %v2584 = vpack.c.b16 %v2462, %v2460
  %v2585 = vpack.c.b16 %v2465, %v2463
  %v2586 = vpack.c.b16 %v2466, %v2464
  %v2587 = vpack.c.b16 %v2469, %v2467
  %v2588 = vpack.c.b16 %v2470, %v2468
  %v2589 = vpack.c.b16 %v2473, %v2471
  %v2590 = vpack.c.b16 %v2474, %v2472
  %v2591 = vpack.c.b16 %v2477, %v2475
  %v2592 = vpack.c.b16 %v2478, %v2476
  %v2593 = vpack.c.b16 %v2481, %v2479
  %v2594 = vpack.c.b16 %v2482, %v2480
  %v2595 = vpack.c.b16 %v2485, %v2483
  %v2596 = vpack.c.b16 %v2486, %v2484
  %v2597 = vpack.c.b16 %v2489, %v2487
  %v2598 = vpack.c.b16 %v2490, %v2488
  %v2599 = vpack.c.b16 %v2493, %v2491
  %v2600 = vpack.c.b16 %v2494, %v2492
  %v2601 = vpack.c.b16 %v2497, %v2495
  %v2602 = vpack.c.b16 %v2498, %v2496
  %v2603 = vpack.c.b16 %v2501, %v2499
  %v2604 = vpack.c.b16 %v2502, %v2500
  %v2605 = vpack.c.b16 %v2505, %v2503
  %v2606 = vpack.c.b16 %v2506, %v2504
  %v2607 = vpack.c.b16 %v2509, %v2507
  %v2608 = vpack.c.b16 %v2510, %v2508
  %v2609 = vpack.c.b16 %v2513, %v2511
  %v2610 = vpack.c.b16 %v2514, %v2512
  %v2611 = vpack.c.b16 %v2517, %v2515
  %v2612 = vpack.c.b16 %v2518, %v2516
  %v2613 = vpack.c.b16 %v2521, %v2519
  %v2614 = vpack.c.b16 %v2522, %v2520
  %v2615 = vpack.c.b16 %v2525, %v2523
  %v2616 = vpack.c.b16 %v2526, %v2524
  %v2617 = vpack.c.b16 %v2529, %v2527
  %v2618 = vpack.c.b16 %v2530, %v2528
  %v2619 = vpack.c.b16 %v2533, %v2531
  %v2620 = vpack.c.b16 %v2534, %v2532
  %v2621 = vpack.c.b16 %v2537, %v2535
  %v2622 = vpack.c.b16 %v2538, %v2536
  %v2623 = vpack.c.b16 %v2541, %v2539
  %v2624 = vpack.c.b16 %v2542, %v2540
  %v2625 = vpack.c.b16 %v2545, %v2543
  %v2626 = vpack.c.b16 %v2546, %v2544
  %v2627 = vpack.c.b16 %v2549, %v2547
  %v2628 = vpack.c.b16 %v2550, %v2548
  %v2629 = vpack.c.b16 %v2553, %v2551
  %v2630 = vpack.c.b16 %v2554, %v2552
  %v2631 = vpack.c.b16 %v2557, %v2555
  %v2632 = vpack.c.b16 %v2558, %v2556
  %v2633 = vpack.c.b16 %v2561, %v2559
  %v2634 = vpack.c.b16 %v2562, %v2560
  %v2635 = vpack.c.b16 %v2565, %v2563
  %v2636 = vpack.c.b16 %v2566, %v2564
  %v2637 = vpack.c.b16 %v2569, %v2567
  %v2638 = vpack.c.b16 %v2570, %v2568
  %v2639 = vpack.c.b16 %v2573, %v2571
  %v2640 = vpack.c.b16 %v2574, %v2572
  %v2641 = vpack.c.b16 %v2577, %v2575
  %v2642 = vpack.c.b16 %v2578, %v2576
  %2707 = vmatpush.bf16.msra.mxu0 %v2593
  %2708 = vmatpush.bf16.msra.mxu0 %v2591
  %2709 = vmatpush.bf16.msra.mxu0 %v2589
  %2710 = vmatpush.bf16.msra.mxu0 %v2587
  %2711 = vmatpush.bf16.msra.mxu0 %v2585
  %2712 = vmatpush.bf16.msra.mxu0 %v2583
  %2713 = vmatpush.bf16.msra.mxu0 %v2581
  %2714 = vmatpush.bf16.msra.mxu0 %v2579
  %2715 = vmatmul.bf16.gmra.mxu0 %v2319
  %v2716 = vpop.f32.mrf.mxu0
  %v2717 = vadd.f32 0.0, %v2716
  %v2718 = vpop.f32.mrf.mxu0
  %2719 = vdwg.mxu0
  %2720 = vmatpush.bf16.msra.mxu0 %v2609
  %2721 = vmatpush.bf16.msra.mxu0 %v2607
  %2722 = vmatpush.bf16.msra.mxu0 %v2605
  %2723 = vmatpush.bf16.msra.mxu0 %v2603
  %2724 = vmatpush.bf16.msra.mxu0 %v2601
  %2725 = vmatpush.bf16.msra.mxu0 %v2599
  %2726 = vmatpush.bf16.msra.mxu0 %v2597
  %2727 = vmatpush.bf16.msra.mxu0 %v2595
  %2728 = vmatmul.bf16.gmra.mxu0 %v2320
  %v2729 = vpop.f32.mrf.mxu0
  %v2730 = vadd.f32 %v2717, %v2729
  %v2731 = vpop.f32.mrf.mxu0
  %2732 = vdwg.mxu0
  %2733 = vmatpush.bf16.msra.mxu0 %v2625
  %2734 = vmatpush.bf16.msra.mxu0 %v2623
  %2735 = vmatpush.bf16.msra.mxu0 %v2621
  %2736 = vmatpush.bf16.msra.mxu0 %v2619
  %2737 = vmatpush.bf16.msra.mxu0 %v2617
  %2738 = vmatpush.bf16.msra.mxu0 %v2615
  %2739 = vmatpush.bf16.msra.mxu0 %v2613
  %2740 = vmatpush.bf16.msra.mxu0 %v2611
  %2741 = vmatmul.bf16.gmra.mxu0 %v2321
  %v2742 = vpop.f32.mrf.mxu0
  %v2743 = vadd.f32 %v2730, %v2742
  %v2744 = vpop.f32.mrf.mxu0
  %2745 = vdwg.mxu0
  %2746 = vmatpush.bf16.msra.mxu0 %v2641
  %2747 = vmatpush.bf16.msra.mxu0 %v2639
  %2748 = vmatpush.bf16.msra.mxu0 %v2637
  %2749 = vmatpush.bf16.msra.mxu0 %v2635
  %2750 = vmatpush.bf16.msra.mxu0 %v2633
  %2751 = vmatpush.bf16.msra.mxu0 %v2631
  %2752 = vmatpush.bf16.msra.mxu0 %v2629
  %2753 = vmatpush.bf16.msra.mxu0 %v2627
  %2754 = vmatmul.bf16.gmra.mxu0 %v2322
  %v2755 = vpop.f32.mrf.mxu0
  %v2756 = vadd.f32 %v2743, %v2755
  %v2757 = vpop.f32.mrf.mxu0
  %2758 = vdwg.mxu0
  %2759 = vmatpush.bf16.msra.mxu0 %v2594
  %2760 = vmatpush.bf16.msra.mxu0 %v2592
  %2761 = vmatpush.bf16.msra.mxu0 %v2590
  %2762 = vmatpush.bf16.msra.mxu0 %v2588
  %2763 = vmatpush.bf16.msra.mxu0 %v2586
  %2764 = vmatpush.bf16.msra.mxu0 %v2584
  %2765 = vmatpush.bf16.msra.mxu0 %v2582
  %2766 = vmatpush.bf16.msra.mxu0 %v2580
  %2767 = vmatmul.bf16.gmra.mxu0 %v2319
  %v2768 = vpop.f32.mrf.mxu0
  %v2769 = vadd.f32 0.0, %v2768
  %v2770 = vpop.f32.mrf.mxu0
  %2771 = vdwg.mxu0
  %2772 = vmatpush.bf16.msra.mxu0 %v2610
  %2773 = vmatpush.bf16.msra.mxu0 %v2608
  %2774 = vmatpush.bf16.msra.mxu0 %v2606
  %2775 = vmatpush.bf16.msra.mxu0 %v2604
  %2776 = vmatpush.bf16.msra.mxu0 %v2602
  %2777 = vmatpush.bf16.msra.mxu0 %v2600
  %2778 = vmatpush.bf16.msra.mxu0 %v2598
  %2779 = vmatpush.bf16.msra.mxu0 %v2596
  %2780 = vmatmul.bf16.gmra.mxu0 %v2320
  %v2781 = vpop.f32.mrf.mxu0
  %v2782 = vadd.f32 %v2769, %v2781
  %v2783 = vpop.f32.mrf.mxu0
  %2784 = vdwg.mxu0
  %2785 = vmatpush.bf16.msra.mxu0 %v2626
  %2786 = vmatpush.bf16.msra.mxu0 %v2624
  %2787 = vmatpush.bf16.msra.mxu0 %v2622
  %2788 = vmatpush.bf16.msra.mxu0 %v2620
  %2789 = vmatpush.bf16.msra.mxu0 %v2618
  %2790 = vmatpush.bf16.msra.mxu0 %v2616
  %2791 = vmatpush.bf16.msra.mxu0 %v2614
  %2792 = vmatpush.bf16.msra.mxu0 %v2612
  %2793 = vmatmul.bf16.gmra.mxu0 %v2321
  %v2794 = vpop.f32.mrf.mxu0
  %v2795 = vadd.f32 %v2782, %v2794
  %v2796 = vpop.f32.mrf.mxu0
  %2797 = vdwg.mxu0
  %2798 = vmatpush.bf16.msra.mxu0 %v2642
  %2799 = vmatpush.bf16.msra.mxu0 %v2640
  %2800 = vmatpush.bf16.msra.mxu0 %v2638
  %2801 = vmatpush.bf16.msra.mxu0 %v2636
  %2802 = vmatpush.bf16.msra.mxu0 %v2634
  %2803 = vmatpush.bf16.msra.mxu0 %v2632
  %2804 = vmatpush.bf16.msra.mxu0 %v2630
  %2805 = vmatpush.bf16.msra.mxu0 %v2628
  %2806 = vmatmul.bf16.gmra.mxu0 %v2322
  %v2807 = vpop.f32.mrf.mxu0
  %v2808 = vadd.f32 %v2795, %v2807
  %v2809 = vpop.f32.mrf.mxu0
  %2810 = vdwg.mxu0
  %v2811 = vld [vmem:[%s8] sm:$0x3]
  %v2812 = vld [vmem:[%s9] sm:$0x3]
  %v2813 = vsel %vm2135, %v2756, 0.0
  %v2814 = vrot.slane %v2813, 4
  %v2815 = vadd.f32 %v2813, %v2814
  %v2816 = vrot.slane %v2815, 2
  %v2817 = vadd.f32 %v2815, %v2816
  %v2818 = vrot.slane %v2817, 1
  %v2819 = vadd.f32 %v2817, %v2818
  %v2820 = vsel %vm2135, %v2808, 0.0
  %v2821 = vrot.slane %v2820, 4
  %v2822 = vadd.f32 %v2820, %v2821
  %v2823 = vrot.slane %v2822, 2
  %v2824 = vadd.f32 %v2822, %v2823
  %v2825 = vrot.slane %v2824, 1
  %v2826 = vadd.f32 %v2824, %v2825
  %v2827 = vmul.f32 %v2819, %v2170
  %v2828 = vmul.f32 %v2826, %v2170
  %v2829 = vsub.f32 %v2756, %v2827
  %v2830 = vsub.f32 %v2808, %v2828
  %v2831 = vmul.f32 %v2829, %v2829
  %v2832 = vmul.f32 %v2830, %v2830
  %v2833 = vsel %vm2135, %v2831, 0.0
  %v2834 = vrot.slane %v2833, 4
  %v2835 = vadd.f32 %v2833, %v2834
  %v2836 = vrot.slane %v2835, 2
  %v2837 = vadd.f32 %v2835, %v2836
  %v2838 = vrot.slane %v2837, 1
  %v2839 = vadd.f32 %v2837, %v2838
  %v2840 = vsel %vm2135, %v2832, 0.0
  %v2841 = vrot.slane %v2840, 4
  %v2842 = vadd.f32 %v2840, %v2841
  %v2843 = vrot.slane %v2842, 2
  %v2844 = vadd.f32 %v2842, %v2843
  %v2845 = vrot.slane %v2844, 1
  %v2846 = vadd.f32 %v2844, %v2845
  %v2847 = vmul.f32 %v2839, %v2170
  %v2848 = vmul.f32 %v2846, %v2170
  %v2849 = vadd.f32 %v2847, 1e-05
  %v2850 = vadd.f32 %v2848, 1e-05
  %v2851 = vrsqrt.pop %v2849
  %v2852 = vmul.f32 %v2851, %v2849
  %v2853 = vmul.f32 %v2852, %v2851
  %v2854 = vmul.f32 0.5, %v2853
  %v2855 = vsub.f32 1.5, %v2854
  %v2856 = vmul.f32 %v2851, %v2855
  %vm2857 = vweird.f32 %v2849
  %vm2858 = vweird.f32 %v2851
  %vm2859 = vmor %vm2857, %vm2858
  %v2860 = vsel %vm2859, %v2851, %v2856
  %v2861 = vrsqrt.pop %v2850
  %v2862 = vmul.f32 %v2861, %v2850
  %v2863 = vmul.f32 %v2862, %v2861
  %v2864 = vmul.f32 0.5, %v2863
  %v2865 = vsub.f32 1.5, %v2864
  %v2866 = vmul.f32 %v2861, %v2865
  %vm2867 = vweird.f32 %v2850
  %vm2868 = vweird.f32 %v2861
  %vm2869 = vmor %vm2867, %vm2868
  %v2870 = vsel %vm2869, %v2861, %v2866
  %v2873 = vrot.slane %v2870, 7
  %v2874 = vsel %vm2266, %v2860, %v2873
  %v2876 = vmul.f32 %v2811, %v2874
  %v2878 = vperm.slane %v2876, 0
  %v2879 = vperm.slane %v2876, 1
  %v2882 = vmul.f32 %v2756, %v2878
  %v2883 = vmul.f32 %v2808, %v2879
  %v2884 = vmul.f32 %v2827, %v2878
  %v2885 = vmul.f32 %v2828, %v2879
  %v2888 = vrot.slane %v2885, 7
  %v2889 = vsel %vm2266, %v2884, %v2888
  %v2891 = vsub.f32 %v2812, %v2889
  %v2893 = vperm.slane %v2891, 0
  %v2894 = vperm.slane %v2891, 1
  %v2897 = vadd.f32 %v2882, %v2893
  %v2898 = vadd.f32 %v2883, %v2894
  %v2899 = vmax.f32 %v2897, 0.0
  %v2900 = vmax.f32 %v2898, 0.0
  %v2901 = vpack.c.bf16 %v2899, %v2899
  %v2902 = vpack.c.bf16 %v2900, %v2900
  %v2903 = vld [vmem:[%s10] sm:$0xf]
  %v2904 = vld [vmem:[%s10 + $0x4] sm:$0xf]
  %v2905 = vld [vmem:[%s10 + $0x8] sm:$0xf]
  %v2906 = vld [vmem:[%s10 + $0xc] sm:$0xf]
  %v2907 = vld [vmem:[%s10 + $0x10] sm:$0xf]
  %v2908 = vld [vmem:[%s10 + $0x14] sm:$0xf]
  %v2909 = vld [vmem:[%s10 + $0x18] sm:$0xf]
  %v2910 = vld [vmem:[%s10 + $0x1c] sm:$0xf]
  %v2911 = vld [vmem:[%s10 + $0x20] sm:$0xf]
  %v2912 = vld [vmem:[%s10 + $0x24] sm:$0xf]
  %v2913 = vld [vmem:[%s10 + $0x28] sm:$0xf]
  %v2914 = vld [vmem:[%s10 + $0x2c] sm:$0xf]
  %v2915 = vld [vmem:[%s10 + $0x30] sm:$0xf]
  %v2916 = vld [vmem:[%s10 + $0x34] sm:$0xf]
  %v2917 = vld [vmem:[%s10 + $0x38] sm:$0xf]
  %v2918 = vld [vmem:[%s10 + $0x3c] sm:$0xf]
  %v2919 = vld [vmem:[%s10 + $0x40] sm:$0xf]
  %v2920 = vld [vmem:[%s10 + $0x44] sm:$0xf]
  %v2921 = vld [vmem:[%s10 + $0x48] sm:$0xf]
  %v2922 = vld [vmem:[%s10 + $0x4c] sm:$0xf]
  %v2923 = vld [vmem:[%s10 + $0x50] sm:$0xf]
  %v2924 = vld [vmem:[%s10 + $0x54] sm:$0xf]
  %v2925 = vld [vmem:[%s10 + $0x58] sm:$0xf]
  %v2926 = vld [vmem:[%s10 + $0x5c] sm:$0xf]
  %v2927 = vld [vmem:[%s10 + $0x60] sm:$0xf]
  %v2928 = vld [vmem:[%s10 + $0x64] sm:$0xf]
  %v2929 = vld [vmem:[%s10 + $0x68] sm:$0xf]
  %v2930 = vld [vmem:[%s10 + $0x6c] sm:$0xf]
  %v2931 = vld [vmem:[%s10 + $0x70] sm:$0xf]
  %v2932 = vld [vmem:[%s10 + $0x74] sm:$0xf]
  %v2933 = vld [vmem:[%s10 + $0x78] sm:$0xf]
  %v2934 = vld [vmem:[%s10 + $0x7c] sm:$0xf]
  %v2935 = vld [vmem:[%s11] sm:$0x1]
  %v2937 = vperm.slane %v2935, 0
  %v2971 = vunpack.c.l.b16 %v2903
  %v2972 = vunpack.c.l.b16 %v2904
  %v2973 = vunpack.c.l.b16 %v2905
  %v2974 = vunpack.c.l.b16 %v2906
  %v2975 = vunpack.c.l.b16 %v2907
  %v2976 = vunpack.c.l.b16 %v2908
  %v2977 = vunpack.c.l.b16 %v2909
  %v2978 = vunpack.c.l.b16 %v2910
  %v2979 = vunpack.c.l.b16 %v2911
  %v2980 = vunpack.c.l.b16 %v2912
  %v2981 = vunpack.c.l.b16 %v2913
  %v2982 = vunpack.c.l.b16 %v2914
  %v2983 = vunpack.c.l.b16 %v2915
  %v2984 = vunpack.c.l.b16 %v2916
  %v2985 = vunpack.c.l.b16 %v2917
  %v2986 = vunpack.c.l.b16 %v2918
  %v2987 = vunpack.c.l.b16 %v2919
  %v2988 = vunpack.c.l.b16 %v2920
  %v2989 = vunpack.c.l.b16 %v2921
  %v2990 = vunpack.c.l.b16 %v2922
  %v2991 = vunpack.c.l.b16 %v2923
  %v2992 = vunpack.c.l.b16 %v2924
  %v2993 = vunpack.c.l.b16 %v2925
  %v2994 = vunpack.c.l.b16 %v2926
  %v2995 = vunpack.c.l.b16 %v2927
  %v2996 = vunpack.c.l.b16 %v2928
  %v2997 = vunpack.c.l.b16 %v2929
  %v2998 = vunpack.c.l.b16 %v2930
  %v2999 = vunpack.c.l.b16 %v2931
  %v3000 = vunpack.c.l.b16 %v2932
  %v3001 = vunpack.c.l.b16 %v2933
  %v3002 = vunpack.c.l.b16 %v2934
  %v3003 = vpack.c.b16 %v2972, %v2971
  %v3004 = vpack.c.b16 %v2974, %v2973
  %v3005 = vpack.c.b16 %v2976, %v2975
  %v3006 = vpack.c.b16 %v2978, %v2977
  %v3007 = vpack.c.b16 %v2980, %v2979
  %v3008 = vpack.c.b16 %v2982, %v2981
  %v3009 = vpack.c.b16 %v2984, %v2983
  %v3010 = vpack.c.b16 %v2986, %v2985
  %v3011 = vpack.c.b16 %v2988, %v2987
  %v3012 = vpack.c.b16 %v2990, %v2989
  %v3013 = vpack.c.b16 %v2992, %v2991
  %v3014 = vpack.c.b16 %v2994, %v2993
  %v3015 = vpack.c.b16 %v2996, %v2995
  %v3016 = vpack.c.b16 %v2998, %v2997
  %v3017 = vpack.c.b16 %v3000, %v2999
  %v3018 = vpack.c.b16 %v3002, %v3001
  %3035 = vmatpush.bf16.msra.mxu0 %v3010
  %3036 = vmatpush.bf16.msra.mxu0 %v3009
  %3037 = vmatpush.bf16.msra.mxu0 %v3008
  %3038 = vmatpush.bf16.msra.mxu0 %v3007
  %3039 = vmatpush.bf16.msra.mxu0 %v3006
  %3040 = vmatpush.bf16.msra.mxu0 %v3005
  %3041 = vmatpush.bf16.msra.mxu0 %v3004
  %3042 = vmatpush.bf16.msra.mxu0 %v3003
  %3043 = vmatmul.bf16.gmra.mxu0 %v2901
  %v3044 = vpop.f32.mrf.mxu0
  %v3045 = vadd.f32 %v2937, %v3044
  %v3046 = vpop.f32.mrf.mxu0
  %3047 = vdwg.mxu0
  %3048 = vmatpush.bf16.msra.mxu0 %v3018
  %3049 = vmatpush.bf16.msra.mxu0 %v3017
  %3050 = vmatpush.bf16.msra.mxu0 %v3016
  %3051 = vmatpush.bf16.msra.mxu0 %v3015
  %3052 = vmatpush.bf16.msra.mxu0 %v3014
  %3053 = vmatpush.bf16.msra.mxu0 %v3013
  %3054 = vmatpush.bf16.msra.mxu0 %v3012
  %3055 = vmatpush.bf16.msra.mxu0 %v3011
  %3056 = vmatmul.bf16.gmra.mxu0 %v2902
  %v3057 = vpop.f32.mrf.mxu0
  %v3058 = vadd.f32 %v3045, %v3057
  %v3059 = vpop.f32.mrf.mxu0
  %3060 = vdwg.mxu0
  %v3061 = vlaneseq
  %v3062 = vand.u32 %v3061, 127
  %vm3063 = vcmp.lt.s32.totalorder %v3062, 0
  %v3064 = vsub.s32 0, %v3062
  %v3065 = vsel %vm3063, %v3064, %v3062
  %v3066 = vshrl.u32 %v3065, 2
  %v3067 = vand.u32 %v3065, 3
  %v3068 = vsub.s32 0, %v3067
  %v3069 = vsel %vm3063, %v3068, %v3067
  %vm3070 = vcmp.ne.s32.totalorder %v3069, 0
  %vm3071 = vcmp.lt.s32.totalorder %v3069, 0
  %vm3072 = vmand %vm3071, %vm3070
  %v3073 = vadd.s32 %v3069, 4
  %v3074 = vsel %vm3072, %v3073, %v3069
  %vm3075 = vcmp.eq.s32.totalorder %v3074, 0
  %v3076 = vsel %vm3075, 1.0, 0.0
  %v3077 = vadd.f32 %v3058, %v3076
  %vm3078 = vcmask 66560
  %3079 = vst.msk [vmem:[%s12] sm:$0x3] %vm3078, %v3077
  // Predicated region
  $region50: #{tnet_forward.5} parent=0 // pred_check
    _
  $region51: #{tnet_forward.5} parent=0 // pred_check_branch
    %3081 = sbr.rel (0) target = $region53
  $region52: #{tnet_forward.5} parent=0 // pred_region
    _
  $region53: #{tnet_forward.5} parent=0 // pred_fallthru
    _
  // Predicated region
  $region54: #{tnet_forward.5} parent=0 // pred_check
    _
  $region55: #{tnet_forward.5} parent=0 // pred_check_branch
    %3083 = sbr.rel (0) target = $region57
  $region56: #{tnet_forward.5} parent=0 // pred_region
    _
  $region57: #{tnet_forward.5} parent=0 // pred_fallthru
    _

</llo_original>
